<compile_context>
chip_gen: v6e
topology: v6e:2x2x1
jax: 0.10.0
libtpu: 0.0.40
codegen_flags: <defaults>
</compile_context>

<pallas_src>
import math

import jax
import jax.numpy as jnp
from jax.experimental import pallas as pl
from jax.experimental.pallas import tpu as pltpu


# ----------------------------- parameter init --------------------------------

def _init_conv(key, k, cin, cout):
    # PyTorch-style default Conv2d init: U(-1/sqrt(fan_in), 1/sqrt(fan_in)).
    wk, bk = jax.random.split(key)
    bound = 1.0 / math.sqrt(cin * k * k)
    w = jax.random.uniform(wk, (k, k, cin, cout), jnp.float32, -bound, bound)
    b = jax.random.uniform(bk, (cout,), jnp.float32, -bound, bound)
    return w, b


def init_unet_params(key, in_channels, base_channels=32,
                     channel_mult=(1, 2, 4), kernel_size=3):
    params = {}
    key, sub = jax.random.split(key)
    params["in_conv"] = _init_conv(sub, kernel_size, in_channels, base_channels)
    for i in range(len(channel_mult) - 1):
        cin = base_channels * channel_mult[i]
        cout = base_channels * channel_mult[i + 1]
        key, k0, k1, k2 = jax.random.split(key, 4)
        params[f"block{i}"] = {
            "down": _init_conv(k0, kernel_size, cin, cout),
            "conv0": _init_conv(k1, kernel_size, cout, cout),
            "conv1": _init_conv(k2, kernel_size, cout, cout),
        }
    return params


# ------------------------------ forward --------------------------------------

def unet_forward(params, x_nchw, *, base_channels=32, channel_mult=(1, 2, 4),
                 kernel_size=3):
    K = kernel_size
    assert K % 2 == 1, "odd kernel size assumed (PyTorch 'same' padding)"
    pad = K // 2
    nblk = len(channel_mult) - 1
    assert channel_mult[0] == 1, "in_conv emits base_channels == block0 input"

    N, cin_img, H, W = x_nchw.shape
    assert H == W and H % (2 ** nblk) == 0

    c_in = base_channels
    rin = [H // (2 ** i) for i in range(nblk)]            # block input resolution
    rout = [H // (2 ** (i + 1)) for i in range(nblk)]     # block output resolution
    cinb = [base_channels * channel_mult[i] for i in range(nblk)]
    coutb = [base_channels * channel_mult[i + 1] for i in range(nblk)]
    out_r, out_c = rout[-1], coutb[-1]

    # ----------------- wrapper-side glue (tiny, runs once in XLA) -------------
    x = jnp.transpose(x_nchw, (0, 2, 3, 1)).astype(jnp.float32)     # NCHW -> NHWC
    xp = jnp.pad(x, ((0, 0), (pad, pad), (pad, pad), (0, 0)))
    # im2col of the *network input* only (all intermediates are im2col'd
    # inside the fused kernel) -> the first conv is a single matmul too.
    taps = [xp[:, kh:kh + H, kw:kw + W, :] for kh in range(K) for kw in range(K)]
    col0 = jnp.concatenate(taps, axis=-1).reshape(N, H * W, K * K * cin_img)
    col0 = col0.astype(jnp.bfloat16)

    def flat_w(w):                       # (K,K,Cin,Cout) -> (K*K*Cin, Cout) bf16
        kh, kw, ci, co = w.shape
        return w.reshape(kh * kw * ci, co).astype(jnp.bfloat16)

    def row_b(b):                        # (Cout,) -> (1, Cout) f32
        return b.reshape(1, -1).astype(jnp.float32)

    def subsample_matrix(r):
        # (r//2)^2 x r^2 row-selection matrix picking the even (row, col) sites
        # of an r x r map (row-major flat) -> stride-2 conv via one MXU matmul.
        ro = r // 2
        rows = jnp.arange(ro * ro)
        ii, jj = rows // ro, rows % ro
        cols = (2 * ii) * r + 2 * jj
        sel = jnp.zeros((ro * ro, r * r), jnp.float32).at[rows, cols].set(1.0)
        return sel.astype(jnp.bfloat16)

    def const_spec(shape):               # batch-invariant, fully-resident block
        nd = len(shape)
        return pl.BlockSpec(shape, lambda n, _nd=nd: (0,) * _nd)

    w_in, b_in = params["in_conv"]
    args = [col0, flat_w(w_in), row_b(b_in)]
    in_specs = [
        pl.BlockSpec((None, H * W, K * K * cin_img), lambda n: (n, 0, 0)),
        const_spec((K * K * cin_img, c_in)),
        const_spec((1, c_in)),
    ]
    for i in range(nblk):
        blk = params[f"block{i}"]
        args += [
            subsample_matrix(rin[i]),
            flat_w(blk["down"][0]), row_b(blk["down"][1]),
            flat_w(blk["conv0"][0]), row_b(blk["conv0"][1]),
            flat_w(blk["conv1"][0]), row_b(blk["conv1"][1]),
        ]
        in_specs += [
            const_spec((rout[i] ** 2, rin[i] ** 2)),
            const_spec((K * K * cinb[i], coutb[i])), const_spec((1, coutb[i])),
            const_spec((K * K * coutb[i], coutb[i])), const_spec((1, coutb[i])),
            const_spec((K * K * coutb[i], coutb[i])), const_spec((1, coutb[i])),
        ]

    # VMEM scratch: padded activation buffers + im2col buffers (all f32).
    scratch = []
    for i in range(nblk):    # padded input to block i's stride-2 conv
        scratch.append(pltpu.VMEM(
            (rin[i] + 2 * pad, rin[i] + 2 * pad, cinb[i]), jnp.float32))
    for i in range(nblk):    # per block: padded skip, padded h, im2col buffers
        scratch.append(pltpu.VMEM(
            (rout[i] + 2 * pad, rout[i] + 2 * pad, coutb[i]), jnp.float32))
        scratch.append(pltpu.VMEM(
            (rout[i] + 2 * pad, rout[i] + 2 * pad, coutb[i]), jnp.float32))
        scratch.append(pltpu.VMEM((rin[i] ** 2, K * K * cinb[i]), jnp.float32))
        scratch.append(pltpu.VMEM((rout[i] ** 2, K * K * coutb[i]), jnp.float32))

    # ------------------------------ fused kernel ------------------------------
    def kernel(*refs):
        it = iter(refs)
        col0_ref = next(it)
        w_in_ref = next(it)
        b_in_ref = next(it)
        blk_in = [[next(it) for _ in range(7)] for _ in range(nblk)]
        o_ref = next(it)
        pad_x = [next(it) for _ in range(nblk)]
        blk_sc = [[next(it) for _ in range(4)] for _ in range(nblk)]
        assert not list(it)

        def conv_same(p_ref, col_ref, w_ref):
            """'same' KxK conv: gather im2col into VMEM once, one MXU matmul."""
            hp, wp, ci = p_ref.shape
            ho, wo = hp - 2 * pad, wp - 2 * pad
            for kh in range(K):
                for kw in range(K):
                    off = (kh * K + kw) * ci
                    col_ref[:, off:off + ci] = (
                        p_ref[kh:kh + ho, kw:kw + wo, :].reshape(ho * wo, ci))
            return jnp.dot(col_ref[...].astype(jnp.bfloat16), w_ref[...],
                           preferred_element_type=jnp.float32)

        def store_padded(p_ref, flat, relu):
            hp, wp, ci = p_ref.shape
            ho, wo = hp - 2 * pad, wp - 2 * pad
            v = jnp.maximum(flat, 0.0) if relu else flat
            p_ref[pad:pad + ho, pad:pad + wo, :] = v.reshape(ho, wo, ci)

        # Zero the padded buffers so the halo is a proper zero padding.
        for r in pad_x:
            r[...] = jnp.zeros(r.shape, r.dtype)
        for sc in blk_sc:
            sc[0][...] = jnp.zeros(sc[0].shape, sc[0].dtype)
            sc[1][...] = jnp.zeros(sc[1].shape, sc[1].dtype)

        # ---- in_conv (stride 1, no activation): im2col prebuilt in wrapper ---
        y = jnp.dot(col0_ref[...], w_in_ref[...],
                    preferred_element_type=jnp.float32) + b_in_ref[...]
        store_padded(pad_x[0], y, relu=False)

        # ---- UNet blocks (down path) -----------------------------------------
        for i in range(nblk):
            sel_ref, w_d, b_d, w_c0, b_c0, w_c1, b_c1 = blk_in[i]
            p_s, p_h, col_d, col_m = blk_sc[i]

            # downsample conv (stride 2): full-res stride-1 conv, then pick the
            # even (row, col) sites with a small selection matmul.
            y_full = conv_same(pad_x[i], col_d, w_d)               # (rin^2, cout)
            skip = jnp.dot(sel_ref[...], y_full.astype(jnp.bfloat16),
                           preferred_element_type=jnp.float32) + b_d[...]
            store_padded(p_s, skip, relu=False)

            # conv0 + ReLU (dropout: identity in eval mode)
            h = conv_same(p_s, col_m, w_c0) + b_c0[...]
            store_padded(p_h, h, relu=True)

            # conv1 + residual + ReLU
            r1 = conv_same(p_h, col_m, w_c1) + b_c1[...]
            out = jnp.maximum(skip + r1, 0.0)                      # (rout^2, cout)

            if i + 1 < nblk:
                store_padded(pad_x[i + 1], out, relu=False)
            else:
                o_ref[...] = out.reshape(out_r, out_r, out_c)

    y_nhwc = pl.pallas_call(
        kernel,
        grid=(N,),
        in_specs=in_specs,
        out_specs=pl.BlockSpec((None, out_r, out_r, out_c),
                               lambda n: (n, 0, 0, 0)),
        out_shape=jax.ShapeDtypeStruct((N, out_r, out_r, out_c), jnp.float32),
        scratch_shapes=scratch,
        compiler_params=pltpu.CompilerParams(
            dimension_semantics=("parallel",)),
    )(*args)

    return jnp.transpose(y_nhwc, (0, 3, 1, 2))                     # NHWC -> NCHW


if __name__ == "__main__":
    resolution, in_channels, batch = 16, 4, 2
    base_channels, channel_mult = 32, (1, 2, 4)

    key = jax.random.PRNGKey(0)
    pkey, xkey = jax.random.split(key)
    params = init_unet_params(pkey, in_channels, base_channels, channel_mult)
    x = jax.random.normal(xkey, (batch, in_channels, resolution, resolution),
                          jnp.float32)

    fwd = jax.jit(lambda p, xx: unet_forward(
        p, xx, base_channels=base_channels, channel_mult=channel_mult))
    y = jax.block_until_ready(fwd(params, x))

    expected = (batch, base_channels * channel_mult[-1],
                resolution // 2 ** (len(channel_mult) - 1),
                resolution // 2 ** (len(channel_mult) - 1))
    assert y.shape == expected, (y.shape, expected)
    assert bool(jnp.all(jnp.isfinite(y)))
    print("KERNEL_OK")
</pallas_src>

<mosaic_0001>
module attributes {stable_mosaic.version = 11 : i64} {
  func.func @kernel(%arg0: i32, %arg1: memref<1x256x36xbf16, #tpu.memory_space<vmem>>, %arg2: memref<36x32xbf16, #tpu.memory_space<vmem>>, %arg3: memref<1x32xf32, #tpu.memory_space<vmem>>, %arg4: memref<64x256xbf16, #tpu.memory_space<vmem>>, %arg5: memref<288x64xbf16, #tpu.memory_space<vmem>>, %arg6: memref<1x64xf32, #tpu.memory_space<vmem>>, %arg7: memref<576x64xbf16, #tpu.memory_space<vmem>>, %arg8: memref<1x64xf32, #tpu.memory_space<vmem>>, %arg9: memref<576x64xbf16, #tpu.memory_space<vmem>>, %arg10: memref<1x64xf32, #tpu.memory_space<vmem>>, %arg11: memref<16x64xbf16, #tpu.memory_space<vmem>>, %arg12: memref<576x128xbf16, #tpu.memory_space<vmem>>, %arg13: memref<1x128xf32, #tpu.memory_space<vmem>>, %arg14: memref<1152x128xbf16, #tpu.memory_space<vmem>>, %arg15: memref<1x128xf32, #tpu.memory_space<vmem>>, %arg16: memref<1152x128xbf16, #tpu.memory_space<vmem>>, %arg17: memref<1x128xf32, #tpu.memory_space<vmem>>, %arg18: memref<1x4x4x128xf32, #tpu.memory_space<vmem>>, %arg19: memref<18x18x32xf32, #tpu.memory_space<vmem>>, %arg20: memref<10x10x64xf32, #tpu.memory_space<vmem>>, %arg21: memref<10x10x64xf32, #tpu.memory_space<vmem>>, %arg22: memref<10x10x64xf32, #tpu.memory_space<vmem>>, %arg23: memref<256x288xf32, #tpu.memory_space<vmem>>, %arg24: memref<64x576xf32, #tpu.memory_space<vmem>>, %arg25: memref<6x6x128xf32, #tpu.memory_space<vmem>>, %arg26: memref<6x6x128xf32, #tpu.memory_space<vmem>>, %arg27: memref<64x576xf32, #tpu.memory_space<vmem>>, %arg28: memref<16x1152xf32, #tpu.memory_space<vmem>>) attributes {dimension_semantics = [#tpu.dimension_semantics<parallel>], iteration_bounds = array<i64: 2>, scalar_prefetch = 0 : i64, scratch_operands = 10 : i64, tpu.core_type = #tpu.core_type<tc>, window_params = [{transform_indices = @transform_0, window_bounds = array<i64: 1, 256, 36>}, {pipeline_mode = #tpu.pipeline_mode<synchronous>, transform_indices = @transform_1, window_bounds = array<i64: 36, 32>}, {pipeline_mode = #tpu.pipeline_mode<synchronous>, transform_indices = @transform_2, window_bounds = array<i64: 1, 32>}, {pipeline_mode = #tpu.pipeline_mode<synchronous>, transform_indices = @transform_3, window_bounds = array<i64: 64, 256>}, {pipeline_mode = #tpu.pipeline_mode<synchronous>, transform_indices = @transform_4, window_bounds = array<i64: 288, 64>}, {pipeline_mode = #tpu.pipeline_mode<synchronous>, transform_indices = @transform_5, window_bounds = array<i64: 1, 64>}, {pipeline_mode = #tpu.pipeline_mode<synchronous>, transform_indices = @transform_6, window_bounds = array<i64: 576, 64>}, {pipeline_mode = #tpu.pipeline_mode<synchronous>, transform_indices = @transform_7, window_bounds = array<i64: 1, 64>}, {pipeline_mode = #tpu.pipeline_mode<synchronous>, transform_indices = @transform_8, window_bounds = array<i64: 576, 64>}, {pipeline_mode = #tpu.pipeline_mode<synchronous>, transform_indices = @transform_9, window_bounds = array<i64: 1, 64>}, {pipeline_mode = #tpu.pipeline_mode<synchronous>, transform_indices = @transform_10, window_bounds = array<i64: 16, 64>}, {pipeline_mode = #tpu.pipeline_mode<synchronous>, transform_indices = @transform_11, window_bounds = array<i64: 576, 128>}, {pipeline_mode = #tpu.pipeline_mode<synchronous>, transform_indices = @transform_12, window_bounds = array<i64: 1, 128>}, {pipeline_mode = #tpu.pipeline_mode<synchronous>, transform_indices = @transform_13, window_bounds = array<i64: 1152, 128>}, {pipeline_mode = #tpu.pipeline_mode<synchronous>, transform_indices = @transform_14, window_bounds = array<i64: 1, 128>}, {pipeline_mode = #tpu.pipeline_mode<synchronous>, transform_indices = @transform_15, window_bounds = array<i64: 1152, 128>}, {pipeline_mode = #tpu.pipeline_mode<synchronous>, transform_indices = @transform_16, window_bounds = array<i64: 1, 128>}, {transform_indices = @transform_17, window_bounds = array<i64: 1, 4, 4, 128>}]} {
    %cst = arith.constant 0.000000e+00 : f32
    %0 = vector.broadcast %cst : f32 to vector<18x18x32xf32>
    %c0 = arith.constant 0 : index
    %c0_0 = arith.constant 0 : index
    %c0_1 = arith.constant 0 : index
    %1 = vector.load %arg19[%c0, %c0_0, %c0_1] : memref<18x18x32xf32, #tpu.memory_space<vmem>>, vector<18x18x32xf32>
    tpu.vector_store %arg19[%c0, %c0_0, %c0_1], %0 {strides = array<i32>} : memref<18x18x32xf32, #tpu.memory_space<vmem>>, vector<18x18x32xf32>,
    %cst_2 = arith.constant 0.000000e+00 : f32
    %2 = vector.broadcast %cst_2 : f32 to vector<10x10x64xf32>
    %c0_3 = arith.constant 0 : index
    %c0_4 = arith.constant 0 : index
    %c0_5 = arith.constant 0 : index
    %3 = vector.load %arg20[%c0_3, %c0_4, %c0_5] : memref<10x10x64xf32, #tpu.memory_space<vmem>>, vector<10x10x64xf32>
    tpu.vector_store %arg20[%c0_3, %c0_4, %c0_5], %2 {strides = array<i32>} : memref<10x10x64xf32, #tpu.memory_space<vmem>>, vector<10x10x64xf32>,
    %cst_6 = arith.constant 0.000000e+00 : f32
    %4 = vector.broadcast %cst_6 : f32 to vector<10x10x64xf32>
    %c0_7 = arith.constant 0 : index
    %c0_8 = arith.constant 0 : index
    %c0_9 = arith.constant 0 : index
    %5 = vector.load %arg21[%c0_7, %c0_8, %c0_9] : memref<10x10x64xf32, #tpu.memory_space<vmem>>, vector<10x10x64xf32>
    tpu.vector_store %arg21[%c0_7, %c0_8, %c0_9], %4 {strides = array<i32>} : memref<10x10x64xf32, #tpu.memory_space<vmem>>, vector<10x10x64xf32>,
    %cst_10 = arith.constant 0.000000e+00 : f32
    %6 = vector.broadcast %cst_10 : f32 to vector<10x10x64xf32>
    %c0_11 = arith.constant 0 : index
    %c0_12 = arith.constant 0 : index
    %c0_13 = arith.constant 0 : index
    %7 = vector.load %arg22[%c0_11, %c0_12, %c0_13] : memref<10x10x64xf32, #tpu.memory_space<vmem>>, vector<10x10x64xf32>
    tpu.vector_store %arg22[%c0_11, %c0_12, %c0_13], %6 {strides = array<i32>} : memref<10x10x64xf32, #tpu.memory_space<vmem>>, vector<10x10x64xf32>,
    %cst_14 = arith.constant 0.000000e+00 : f32
    %8 = vector.broadcast %cst_14 : f32 to vector<6x6x128xf32>
    %c0_15 = arith.constant 0 : index
    %c0_16 = arith.constant 0 : index
    %c0_17 = arith.constant 0 : index
    %9 = vector.load %arg25[%c0_15, %c0_16, %c0_17] : memref<6x6x128xf32, #tpu.memory_space<vmem>>, vector<6x6x128xf32>
    tpu.vector_store %arg25[%c0_15, %c0_16, %c0_17], %8 {strides = array<i32>} : memref<6x6x128xf32, #tpu.memory_space<vmem>>, vector<6x6x128xf32>,
    %cst_18 = arith.constant 0.000000e+00 : f32
    %10 = vector.broadcast %cst_18 : f32 to vector<6x6x128xf32>
    %c0_19 = arith.constant 0 : index
    %c0_20 = arith.constant 0 : index
    %c0_21 = arith.constant 0 : index
    %11 = vector.load %arg26[%c0_19, %c0_20, %c0_21] : memref<6x6x128xf32, #tpu.memory_space<vmem>>, vector<6x6x128xf32>
    tpu.vector_store %arg26[%c0_19, %c0_20, %c0_21], %10 {strides = array<i32>} : memref<6x6x128xf32, #tpu.memory_space<vmem>>, vector<6x6x128xf32>,
    %c0_22 = arith.constant 0 : index
    %c0_23 = arith.constant 0 : index
    %c0_24 = arith.constant 0 : index
    %12 = vector.load %arg1[%c0_22, %c0_23, %c0_24] : memref<1x256x36xbf16, #tpu.memory_space<vmem>>, vector<1x256x36xbf16>
    %13 = vector.shape_cast %12 : vector<1x256x36xbf16> to vector<256x36xbf16>
    %c0_25 = arith.constant 0 : index
    %c0_26 = arith.constant 0 : index
    %14 = vector.load %arg2[%c0_25, %c0_26] : memref<36x32xbf16, #tpu.memory_space<vmem>>, vector<36x32xbf16>
    %cst_27 = arith.constant dense<0.000000e+00> : vector<256x32xf32>
    %15 = tpu.matmul %13, %14, %cst_27 {dimension_numbers = #tpu.dot_dimension_numbers<[1], [0], [0], [1], [0, 0, 1, 1], [], []>} : vector<256x36xbf16>, vector<36x32xbf16>, vector<256x32xf32> -> vector<256x32xf32>
    %c0_28 = arith.constant 0 : index
    %c0_29 = arith.constant 0 : index
    %16 = vector.load %arg3[%c0_28, %c0_29] : memref<1x32xf32, #tpu.memory_space<vmem>>, vector<1x32xf32>
    %17 = vector.broadcast %16 : vector<1x32xf32> to vector<256x32xf32>
    %18 = arith.addf %15, %17 : vector<256x32xf32>
    %19 = vector.shape_cast %18 : vector<256x32xf32> to vector<16x16x32xf32>
    %c1 = arith.constant 1 : index
    %c1_30 = arith.constant 1 : index
    %c0_31 = arith.constant 0 : index
    %20 = vector.load %arg19[%c1, %c1_30, %c0_31] : memref<18x18x32xf32, #tpu.memory_space<vmem>>, vector<16x16x32xf32>
    tpu.vector_store %arg19[%c1, %c1_30, %c0_31], %19 {strides = array<i32>} : memref<18x18x32xf32, #tpu.memory_space<vmem>>, vector<16x16x32xf32>,
    %c0_32 = arith.constant 0 : index
    %c0_33 = arith.constant 0 : index
    %c0_34 = arith.constant 0 : index
    %21 = vector.load %arg19[%c0_32, %c0_33, %c0_34] : memref<18x18x32xf32, #tpu.memory_space<vmem>>, vector<16x16x32xf32>
    %22 = vector.shape_cast %21 : vector<16x16x32xf32> to vector<256x32xf32>
    %c0_35 = arith.constant 0 : index
    %c0_36 = arith.constant 0 : index
    %23 = vector.load %arg23[%c0_35, %c0_36] : memref<256x288xf32, #tpu.memory_space<vmem>>, vector<256x32xf32>
    tpu.vector_store %arg23[%c0_35, %c0_36], %22 {strides = array<i32>} : memref<256x288xf32, #tpu.memory_space<vmem>>, vector<256x32xf32>,
    %c0_37 = arith.constant 0 : index
    %c1_38 = arith.constant 1 : index
    %c0_39 = arith.constant 0 : index
    %24 = vector.load %arg19[%c0_37, %c1_38, %c0_39] : memref<18x18x32xf32, #tpu.memory_space<vmem>>, vector<16x16x32xf32>
    %25 = vector.shape_cast %24 : vector<16x16x32xf32> to vector<256x32xf32>
    %c0_40 = arith.constant 0 : index
    %c32 = arith.constant 32 : index
    %26 = vector.load %arg23[%c0_40, %c32] : memref<256x288xf32, #tpu.memory_space<vmem>>, vector<256x32xf32>
    tpu.vector_store %arg23[%c0_40, %c32], %25 {strides = array<i32>} : memref<256x288xf32, #tpu.memory_space<vmem>>, vector<256x32xf32>,
    %c0_41 = arith.constant 0 : index
    %c2 = arith.constant 2 : index
    %c0_42 = arith.constant 0 : index
    %27 = vector.load %arg19[%c0_41, %c2, %c0_42] : memref<18x18x32xf32, #tpu.memory_space<vmem>>, vector<16x16x32xf32>
    %28 = vector.shape_cast %27 : vector<16x16x32xf32> to vector<256x32xf32>
    %c0_43 = arith.constant 0 : index
    %c64 = arith.constant 64 : index
    %29 = vector.load %arg23[%c0_43, %c64] : memref<256x288xf32, #tpu.memory_space<vmem>>, vector<256x32xf32>
    tpu.vector_store %arg23[%c0_43, %c64], %28 {strides = array<i32>} : memref<256x288xf32, #tpu.memory_space<vmem>>, vector<256x32xf32>,
    %c1_44 = arith.constant 1 : index
    %c0_45 = arith.constant 0 : index
    %c0_46 = arith.constant 0 : index
    %30 = vector.load %arg19[%c1_44, %c0_45, %c0_46] : memref<18x18x32xf32, #tpu.memory_space<vmem>>, vector<16x16x32xf32>
    %31 = vector.shape_cast %30 : vector<16x16x32xf32> to vector<256x32xf32>
    %c0_47 = arith.constant 0 : index
    %c96 = arith.constant 96 : index
    %32 = vector.load %arg23[%c0_47, %c96] : memref<256x288xf32, #tpu.memory_space<vmem>>, vector<256x32xf32>
    tpu.vector_store %arg23[%c0_47, %c96], %31 {strides = array<i32>} : memref<256x288xf32, #tpu.memory_space<vmem>>, vector<256x32xf32>,
    %c1_48 = arith.constant 1 : index
    %c1_49 = arith.constant 1 : index
    %c0_50 = arith.constant 0 : index
    %33 = vector.load %arg19[%c1_48, %c1_49, %c0_50] : memref<18x18x32xf32, #tpu.memory_space<vmem>>, vector<16x16x32xf32>
    %34 = vector.shape_cast %33 : vector<16x16x32xf32> to vector<256x32xf32>
    %c0_51 = arith.constant 0 : index
    %c128 = arith.constant 128 : index
    %35 = vector.load %arg23[%c0_51, %c128] : memref<256x288xf32, #tpu.memory_space<vmem>>, vector<256x32xf32>
    tpu.vector_store %arg23[%c0_51, %c128], %34 {strides = array<i32>} : memref<256x288xf32, #tpu.memory_space<vmem>>, vector<256x32xf32>,
    %c1_52 = arith.constant 1 : index
    %c2_53 = arith.constant 2 : index
    %c0_54 = arith.constant 0 : index
    %36 = vector.load %arg19[%c1_52, %c2_53, %c0_54] : memref<18x18x32xf32, #tpu.memory_space<vmem>>, vector<16x16x32xf32>
    %37 = vector.shape_cast %36 : vector<16x16x32xf32> to vector<256x32xf32>
    %c0_55 = arith.constant 0 : index
    %c160 = arith.constant 160 : index
    %38 = vector.load %arg23[%c0_55, %c160] : memref<256x288xf32, #tpu.memory_space<vmem>>, vector<256x32xf32>
    tpu.vector_store %arg23[%c0_55, %c160], %37 {strides = array<i32>} : memref<256x288xf32, #tpu.memory_space<vmem>>, vector<256x32xf32>,
    %c2_56 = arith.constant 2 : index
    %c0_57 = arith.constant 0 : index
    %c0_58 = arith.constant 0 : index
    %39 = vector.load %arg19[%c2_56, %c0_57, %c0_58] : memref<18x18x32xf32, #tpu.memory_space<vmem>>, vector<16x16x32xf32>
    %40 = vector.shape_cast %39 : vector<16x16x32xf32> to vector<256x32xf32>
    %c0_59 = arith.constant 0 : index
    %c192 = arith.constant 192 : index
    %41 = vector.load %arg23[%c0_59, %c192] : memref<256x288xf32, #tpu.memory_space<vmem>>, vector<256x32xf32>
    tpu.vector_store %arg23[%c0_59, %c192], %40 {strides = array<i32>} : memref<256x288xf32, #tpu.memory_space<vmem>>, vector<256x32xf32>,
    %c2_60 = arith.constant 2 : index
    %c1_61 = arith.constant 1 : index
    %c0_62 = arith.constant 0 : index
    %42 = vector.load %arg19[%c2_60, %c1_61, %c0_62] : memref<18x18x32xf32, #tpu.memory_space<vmem>>, vector<16x16x32xf32>
    %43 = vector.shape_cast %42 : vector<16x16x32xf32> to vector<256x32xf32>
    %c0_63 = arith.constant 0 : index
    %c224 = arith.constant 224 : index
    %44 = vector.load %arg23[%c0_63, %c224] : memref<256x288xf32, #tpu.memory_space<vmem>>, vector<256x32xf32>
    tpu.vector_store %arg23[%c0_63, %c224], %43 {strides = array<i32>} : memref<256x288xf32, #tpu.memory_space<vmem>>, vector<256x32xf32>,
    %c2_64 = arith.constant 2 : index
    %c2_65 = arith.constant 2 : index
    %c0_66 = arith.constant 0 : index
    %45 = vector.load %arg19[%c2_64, %c2_65, %c0_66] : memref<18x18x32xf32, #tpu.memory_space<vmem>>, vector<16x16x32xf32>
    %46 = vector.shape_cast %45 : vector<16x16x32xf32> to vector<256x32xf32>
    %c0_67 = arith.constant 0 : index
    %c256 = arith.constant 256 : index
    %47 = vector.load %arg23[%c0_67, %c256] : memref<256x288xf32, #tpu.memory_space<vmem>>, vector<256x32xf32>
    tpu.vector_store %arg23[%c0_67, %c256], %46 {strides = array<i32>} : memref<256x288xf32, #tpu.memory_space<vmem>>, vector<256x32xf32>,
    %c0_68 = arith.constant 0 : index
    %c0_69 = arith.constant 0 : index
    %48 = vector.load %arg23[%c0_68, %c0_69] : memref<256x288xf32, #tpu.memory_space<vmem>>, vector<256x288xf32>
    %49 = arith.truncf %48 : vector<256x288xf32> to vector<256x288xbf16>
    %c0_70 = arith.constant 0 : index
    %c0_71 = arith.constant 0 : index
    %50 = vector.load %arg5[%c0_70, %c0_71] : memref<288x64xbf16, #tpu.memory_space<vmem>>, vector<288x64xbf16>
    %cst_72 = arith.constant dense<0.000000e+00> : vector<256x64xf32>
    %51 = tpu.matmul %49, %50, %cst_72 {dimension_numbers = #tpu.dot_dimension_numbers<[1], [0], [0], [1], [0, 0, 1, 1], [], []>} : vector<256x288xbf16>, vector<288x64xbf16>, vector<256x64xf32> -> vector<256x64xf32>
    %c0_73 = arith.constant 0 : index
    %c0_74 = arith.constant 0 : index
    %52 = vector.load %arg4[%c0_73, %c0_74] : memref<64x256xbf16, #tpu.memory_space<vmem>>, vector<64x256xbf16>
    %53 = arith.truncf %51 : vector<256x64xf32> to vector<256x64xbf16>
    %cst_75 = arith.constant dense<0.000000e+00> : vector<64x64xf32>
    %54 = tpu.matmul %52, %53, %cst_75 {dimension_numbers = #tpu.dot_dimension_numbers<[1], [0], [0], [1], [0, 0, 1, 1], [], []>} : vector<64x256xbf16>, vector<256x64xbf16>, vector<64x64xf32> -> vector<64x64xf32>
    %c0_76 = arith.constant 0 : index
    %c0_77 = arith.constant 0 : index
    %55 = vector.load %arg6[%c0_76, %c0_77] : memref<1x64xf32, #tpu.memory_space<vmem>>, vector<1x64xf32>
    %56 = vector.broadcast %55 : vector<1x64xf32> to vector<64x64xf32>
    %57 = arith.addf %54, %56 : vector<64x64xf32>
    %58 = vector.shape_cast %57 : vector<64x64xf32> to vector<8x8x64xf32>
    %c1_78 = arith.constant 1 : index
    %c1_79 = arith.constant 1 : index
    %c0_80 = arith.constant 0 : index
    %59 = vector.load %arg21[%c1_78, %c1_79, %c0_80] : memref<10x10x64xf32, #tpu.memory_space<vmem>>, vector<8x8x64xf32>
    tpu.vector_store %arg21[%c1_78, %c1_79, %c0_80], %58 {strides = array<i32>} : memref<10x10x64xf32, #tpu.memory_space<vmem>>, vector<8x8x64xf32>,
    %c0_81 = arith.constant 0 : index
    %c0_82 = arith.constant 0 : index
    %c0_83 = arith.constant 0 : index
    %60 = vector.load %arg21[%c0_81, %c0_82, %c0_83] : memref<10x10x64xf32, #tpu.memory_space<vmem>>, vector<8x8x64xf32>
    %61 = vector.shape_cast %60 : vector<8x8x64xf32> to vector<64x64xf32>
    %c0_84 = arith.constant 0 : index
    %c0_85 = arith.constant 0 : index
    %62 = vector.load %arg24[%c0_84, %c0_85] : memref<64x576xf32, #tpu.memory_space<vmem>>, vector<64x64xf32>
    tpu.vector_store %arg24[%c0_84, %c0_85], %61 {strides = array<i32>} : memref<64x576xf32, #tpu.memory_space<vmem>>, vector<64x64xf32>,
    %c0_86 = arith.constant 0 : index
    %c1_87 = arith.constant 1 : index
    %c0_88 = arith.constant 0 : index
    %63 = vector.load %arg21[%c0_86, %c1_87, %c0_88] : memref<10x10x64xf32, #tpu.memory_space<vmem>>, vector<8x8x64xf32>
    %64 = vector.shape_cast %63 : vector<8x8x64xf32> to vector<64x64xf32>
    %c0_89 = arith.constant 0 : index
    %c64_90 = arith.constant 64 : index
    %65 = vector.load %arg24[%c0_89, %c64_90] : memref<64x576xf32, #tpu.memory_space<vmem>>, vector<64x64xf32>
    tpu.vector_store %arg24[%c0_89, %c64_90], %64 {strides = array<i32>} : memref<64x576xf32, #tpu.memory_space<vmem>>, vector<64x64xf32>,
    %c0_91 = arith.constant 0 : index
    %c2_92 = arith.constant 2 : index
    %c0_93 = arith.constant 0 : index
    %66 = vector.load %arg21[%c0_91, %c2_92, %c0_93] : memref<10x10x64xf32, #tpu.memory_space<vmem>>, vector<8x8x64xf32>
    %67 = vector.shape_cast %66 : vector<8x8x64xf32> to vector<64x64xf32>
    %c0_94 = arith.constant 0 : index
    %c128_95 = arith.constant 128 : index
    %68 = vector.load %arg24[%c0_94, %c128_95] : memref<64x576xf32, #tpu.memory_space<vmem>>, vector<64x64xf32>
    tpu.vector_store %arg24[%c0_94, %c128_95], %67 {strides = array<i32>} : memref<64x576xf32, #tpu.memory_space<vmem>>, vector<64x64xf32>,
    %c1_96 = arith.constant 1 : index
    %c0_97 = arith.constant 0 : index
    %c0_98 = arith.constant 0 : index
    %69 = vector.load %arg21[%c1_96, %c0_97, %c0_98] : memref<10x10x64xf32, #tpu.memory_space<vmem>>, vector<8x8x64xf32>
    %70 = vector.shape_cast %69 : vector<8x8x64xf32> to vector<64x64xf32>
    %c0_99 = arith.constant 0 : index
    %c192_100 = arith.constant 192 : index
    %71 = vector.load %arg24[%c0_99, %c192_100] : memref<64x576xf32, #tpu.memory_space<vmem>>, vector<64x64xf32>
    tpu.vector_store %arg24[%c0_99, %c192_100], %70 {strides = array<i32>} : memref<64x576xf32, #tpu.memory_space<vmem>>, vector<64x64xf32>,
    %c1_101 = arith.constant 1 : index
    %c1_102 = arith.constant 1 : index
    %c0_103 = arith.constant 0 : index
    %72 = vector.load %arg21[%c1_101, %c1_102, %c0_103] : memref<10x10x64xf32, #tpu.memory_space<vmem>>, vector<8x8x64xf32>
    %73 = vector.shape_cast %72 : vector<8x8x64xf32> to vector<64x64xf32>
    %c0_104 = arith.constant 0 : index
    %c256_105 = arith.constant 256 : index
    %74 = vector.load %arg24[%c0_104, %c256_105] : memref<64x576xf32, #tpu.memory_space<vmem>>, vector<64x64xf32>
    tpu.vector_store %arg24[%c0_104, %c256_105], %73 {strides = array<i32>} : memref<64x576xf32, #tpu.memory_space<vmem>>, vector<64x64xf32>,
    %c1_106 = arith.constant 1 : index
    %c2_107 = arith.constant 2 : index
    %c0_108 = arith.constant 0 : index
    %75 = vector.load %arg21[%c1_106, %c2_107, %c0_108] : memref<10x10x64xf32, #tpu.memory_space<vmem>>, vector<8x8x64xf32>
    %76 = vector.shape_cast %75 : vector<8x8x64xf32> to vector<64x64xf32>
    %c0_109 = arith.constant 0 : index
    %c320 = arith.constant 320 : index
    %77 = vector.load %arg24[%c0_109, %c320] : memref<64x576xf32, #tpu.memory_space<vmem>>, vector<64x64xf32>
    tpu.vector_store %arg24[%c0_109, %c320], %76 {strides = array<i32>} : memref<64x576xf32, #tpu.memory_space<vmem>>, vector<64x64xf32>,
    %c2_110 = arith.constant 2 : index
    %c0_111 = arith.constant 0 : index
    %c0_112 = arith.constant 0 : index
    %78 = vector.load %arg21[%c2_110, %c0_111, %c0_112] : memref<10x10x64xf32, #tpu.memory_space<vmem>>, vector<8x8x64xf32>
    %79 = vector.shape_cast %78 : vector<8x8x64xf32> to vector<64x64xf32>
    %c0_113 = arith.constant 0 : index
    %c384 = arith.constant 384 : index
    %80 = vector.load %arg24[%c0_113, %c384] : memref<64x576xf32, #tpu.memory_space<vmem>>, vector<64x64xf32>
    tpu.vector_store %arg24[%c0_113, %c384], %79 {strides = array<i32>} : memref<64x576xf32, #tpu.memory_space<vmem>>, vector<64x64xf32>,
    %c2_114 = arith.constant 2 : index
    %c1_115 = arith.constant 1 : index
    %c0_116 = arith.constant 0 : index
    %81 = vector.load %arg21[%c2_114, %c1_115, %c0_116] : memref<10x10x64xf32, #tpu.memory_space<vmem>>, vector<8x8x64xf32>
    %82 = vector.shape_cast %81 : vector<8x8x64xf32> to vector<64x64xf32>
    %c0_117 = arith.constant 0 : index
    %c448 = arith.constant 448 : index
    %83 = vector.load %arg24[%c0_117, %c448] : memref<64x576xf32, #tpu.memory_space<vmem>>, vector<64x64xf32>
    tpu.vector_store %arg24[%c0_117, %c448], %82 {strides = array<i32>} : memref<64x576xf32, #tpu.memory_space<vmem>>, vector<64x64xf32>,
    %c2_118 = arith.constant 2 : index
    %c2_119 = arith.constant 2 : index
    %c0_120 = arith.constant 0 : index
    %84 = vector.load %arg21[%c2_118, %c2_119, %c0_120] : memref<10x10x64xf32, #tpu.memory_space<vmem>>, vector<8x8x64xf32>
    %85 = vector.shape_cast %84 : vector<8x8x64xf32> to vector<64x64xf32>
    %c0_121 = arith.constant 0 : index
    %c512 = arith.constant 512 : index
    %86 = vector.load %arg24[%c0_121, %c512] : memref<64x576xf32, #tpu.memory_space<vmem>>, vector<64x64xf32>
    tpu.vector_store %arg24[%c0_121, %c512], %85 {strides = array<i32>} : memref<64x576xf32, #tpu.memory_space<vmem>>, vector<64x64xf32>,
    %c0_122 = arith.constant 0 : index
    %c0_123 = arith.constant 0 : index
    %87 = vector.load %arg24[%c0_122, %c0_123] : memref<64x576xf32, #tpu.memory_space<vmem>>, vector<64x576xf32>
    %88 = arith.truncf %87 : vector<64x576xf32> to vector<64x576xbf16>
    %c0_124 = arith.constant 0 : index
    %c0_125 = arith.constant 0 : index
    %89 = vector.load %arg7[%c0_124, %c0_125] : memref<576x64xbf16, #tpu.memory_space<vmem>>, vector<576x64xbf16>
    %cst_126 = arith.constant dense<0.000000e+00> : vector<64x64xf32>
    %90 = tpu.matmul %88, %89, %cst_126 {dimension_numbers = #tpu.dot_dimension_numbers<[1], [0], [0], [1], [0, 0, 1, 1], [], []>} : vector<64x576xbf16>, vector<576x64xbf16>, vector<64x64xf32> -> vector<64x64xf32>
    %c0_127 = arith.constant 0 : index
    %c0_128 = arith.constant 0 : index
    %91 = vector.load %arg8[%c0_127, %c0_128] : memref<1x64xf32, #tpu.memory_space<vmem>>, vector<1x64xf32>
    %92 = vector.broadcast %91 : vector<1x64xf32> to vector<64x64xf32>
    %93 = arith.addf %90, %92 : vector<64x64xf32>
    %cst_129 = arith.constant 0.000000e+00 : f32
    %94 = vector.broadcast %cst_129 : f32 to vector<64x64xf32>
    %95 = arith.maximumf %93, %94 : vector<64x64xf32>
    %96 = vector.shape_cast %95 : vector<64x64xf32> to vector<8x8x64xf32>
    %c1_130 = arith.constant 1 : index
    %c1_131 = arith.constant 1 : index
    %c0_132 = arith.constant 0 : index
    %97 = vector.load %arg22[%c1_130, %c1_131, %c0_132] : memref<10x10x64xf32, #tpu.memory_space<vmem>>, vector<8x8x64xf32>
    tpu.vector_store %arg22[%c1_130, %c1_131, %c0_132], %96 {strides = array<i32>} : memref<10x10x64xf32, #tpu.memory_space<vmem>>, vector<8x8x64xf32>,
    %c0_133 = arith.constant 0 : index
    %c0_134 = arith.constant 0 : index
    %c0_135 = arith.constant 0 : index
    %98 = vector.load %arg22[%c0_133, %c0_134, %c0_135] : memref<10x10x64xf32, #tpu.memory_space<vmem>>, vector<8x8x64xf32>
    %99 = vector.shape_cast %98 : vector<8x8x64xf32> to vector<64x64xf32>
    %c0_136 = arith.constant 0 : index
    %c0_137 = arith.constant 0 : index
    %100 = vector.load %arg24[%c0_136, %c0_137] : memref<64x576xf32, #tpu.memory_space<vmem>>, vector<64x64xf32>
    tpu.vector_store %arg24[%c0_136, %c0_137], %99 {strides = array<i32>} : memref<64x576xf32, #tpu.memory_space<vmem>>, vector<64x64xf32>,
    %c0_138 = arith.constant 0 : index
    %c1_139 = arith.constant 1 : index
    %c0_140 = arith.constant 0 : index
    %101 = vector.load %arg22[%c0_138, %c1_139, %c0_140] : memref<10x10x64xf32, #tpu.memory_space<vmem>>, vector<8x8x64xf32>
    %102 = vector.shape_cast %101 : vector<8x8x64xf32> to vector<64x64xf32>
    %c0_141 = arith.constant 0 : index
    %c64_142 = arith.constant 64 : index
    %103 = vector.load %arg24[%c0_141, %c64_142] : memref<64x576xf32, #tpu.memory_space<vmem>>, vector<64x64xf32>
    tpu.vector_store %arg24[%c0_141, %c64_142], %102 {strides = array<i32>} : memref<64x576xf32, #tpu.memory_space<vmem>>, vector<64x64xf32>,
    %c0_143 = arith.constant 0 : index
    %c2_144 = arith.constant 2 : index
    %c0_145 = arith.constant 0 : index
    %104 = vector.load %arg22[%c0_143, %c2_144, %c0_145] : memref<10x10x64xf32, #tpu.memory_space<vmem>>, vector<8x8x64xf32>
    %105 = vector.shape_cast %104 : vector<8x8x64xf32> to vector<64x64xf32>
    %c0_146 = arith.constant 0 : index
    %c128_147 = arith.constant 128 : index
    %106 = vector.load %arg24[%c0_146, %c128_147] : memref<64x576xf32, #tpu.memory_space<vmem>>, vector<64x64xf32>
    tpu.vector_store %arg24[%c0_146, %c128_147], %105 {strides = array<i32>} : memref<64x576xf32, #tpu.memory_space<vmem>>, vector<64x64xf32>,
    %c1_148 = arith.constant 1 : index
    %c0_149 = arith.constant 0 : index
    %c0_150 = arith.constant 0 : index
    %107 = vector.load %arg22[%c1_148, %c0_149, %c0_150] : memref<10x10x64xf32, #tpu.memory_space<vmem>>, vector<8x8x64xf32>
    %108 = vector.shape_cast %107 : vector<8x8x64xf32> to vector<64x64xf32>
    %c0_151 = arith.constant 0 : index
    %c192_152 = arith.constant 192 : index
    %109 = vector.load %arg24[%c0_151, %c192_152] : memref<64x576xf32, #tpu.memory_space<vmem>>, vector<64x64xf32>
    tpu.vector_store %arg24[%c0_151, %c192_152], %108 {strides = array<i32>} : memref<64x576xf32, #tpu.memory_space<vmem>>, vector<64x64xf32>,
    %c1_153 = arith.constant 1 : index
    %c1_154 = arith.constant 1 : index
    %c0_155 = arith.constant 0 : index
    %110 = vector.load %arg22[%c1_153, %c1_154, %c0_155] : memref<10x10x64xf32, #tpu.memory_space<vmem>>, vector<8x8x64xf32>
    %111 = vector.shape_cast %110 : vector<8x8x64xf32> to vector<64x64xf32>
    %c0_156 = arith.constant 0 : index
    %c256_157 = arith.constant 256 : index
    %112 = vector.load %arg24[%c0_156, %c256_157] : memref<64x576xf32, #tpu.memory_space<vmem>>, vector<64x64xf32>
    tpu.vector_store %arg24[%c0_156, %c256_157], %111 {strides = array<i32>} : memref<64x576xf32, #tpu.memory_space<vmem>>, vector<64x64xf32>,
    %c1_158 = arith.constant 1 : index
    %c2_159 = arith.constant 2 : index
    %c0_160 = arith.constant 0 : index
    %113 = vector.load %arg22[%c1_158, %c2_159, %c0_160] : memref<10x10x64xf32, #tpu.memory_space<vmem>>, vector<8x8x64xf32>
    %114 = vector.shape_cast %113 : vector<8x8x64xf32> to vector<64x64xf32>
    %c0_161 = arith.constant 0 : index
    %c320_162 = arith.constant 320 : index
    %115 = vector.load %arg24[%c0_161, %c320_162] : memref<64x576xf32, #tpu.memory_space<vmem>>, vector<64x64xf32>
    tpu.vector_store %arg24[%c0_161, %c320_162], %114 {strides = array<i32>} : memref<64x576xf32, #tpu.memory_space<vmem>>, vector<64x64xf32>,
    %c2_163 = arith.constant 2 : index
    %c0_164 = arith.constant 0 : index
    %c0_165 = arith.constant 0 : index
    %116 = vector.load %arg22[%c2_163, %c0_164, %c0_165] : memref<10x10x64xf32, #tpu.memory_space<vmem>>, vector<8x8x64xf32>
    %117 = vector.shape_cast %116 : vector<8x8x64xf32> to vector<64x64xf32>
    %c0_166 = arith.constant 0 : index
    %c384_167 = arith.constant 384 : index
    %118 = vector.load %arg24[%c0_166, %c384_167] : memref<64x576xf32, #tpu.memory_space<vmem>>, vector<64x64xf32>
    tpu.vector_store %arg24[%c0_166, %c384_167], %117 {strides = array<i32>} : memref<64x576xf32, #tpu.memory_space<vmem>>, vector<64x64xf32>,
    %c2_168 = arith.constant 2 : index
    %c1_169 = arith.constant 1 : index
    %c0_170 = arith.constant 0 : index
    %119 = vector.load %arg22[%c2_168, %c1_169, %c0_170] : memref<10x10x64xf32, #tpu.memory_space<vmem>>, vector<8x8x64xf32>
    %120 = vector.shape_cast %119 : vector<8x8x64xf32> to vector<64x64xf32>
    %c0_171 = arith.constant 0 : index
    %c448_172 = arith.constant 448 : index
    %121 = vector.load %arg24[%c0_171, %c448_172] : memref<64x576xf32, #tpu.memory_space<vmem>>, vector<64x64xf32>
    tpu.vector_store %arg24[%c0_171, %c448_172], %120 {strides = array<i32>} : memref<64x576xf32, #tpu.memory_space<vmem>>, vector<64x64xf32>,
    %c2_173 = arith.constant 2 : index
    %c2_174 = arith.constant 2 : index
    %c0_175 = arith.constant 0 : index
    %122 = vector.load %arg22[%c2_173, %c2_174, %c0_175] : memref<10x10x64xf32, #tpu.memory_space<vmem>>, vector<8x8x64xf32>
    %123 = vector.shape_cast %122 : vector<8x8x64xf32> to vector<64x64xf32>
    %c0_176 = arith.constant 0 : index
    %c512_177 = arith.constant 512 : index
    %124 = vector.load %arg24[%c0_176, %c512_177] : memref<64x576xf32, #tpu.memory_space<vmem>>, vector<64x64xf32>
    tpu.vector_store %arg24[%c0_176, %c512_177], %123 {strides = array<i32>} : memref<64x576xf32, #tpu.memory_space<vmem>>, vector<64x64xf32>,
    %c0_178 = arith.constant 0 : index
    %c0_179 = arith.constant 0 : index
    %125 = vector.load %arg24[%c0_178, %c0_179] : memref<64x576xf32, #tpu.memory_space<vmem>>, vector<64x576xf32>
    %126 = arith.truncf %125 : vector<64x576xf32> to vector<64x576xbf16>
    %c0_180 = arith.constant 0 : index
    %c0_181 = arith.constant 0 : index
    %127 = vector.load %arg9[%c0_180, %c0_181] : memref<576x64xbf16, #tpu.memory_space<vmem>>, vector<576x64xbf16>
    %cst_182 = arith.constant dense<0.000000e+00> : vector<64x64xf32>
    %128 = tpu.matmul %126, %127, %cst_182 {dimension_numbers = #tpu.dot_dimension_numbers<[1], [0], [0], [1], [0, 0, 1, 1], [], []>} : vector<64x576xbf16>, vector<576x64xbf16>, vector<64x64xf32> -> vector<64x64xf32>
    %c0_183 = arith.constant 0 : index
    %c0_184 = arith.constant 0 : index
    %129 = vector.load %arg10[%c0_183, %c0_184] : memref<1x64xf32, #tpu.memory_space<vmem>>, vector<1x64xf32>
    %130 = vector.broadcast %129 : vector<1x64xf32> to vector<64x64xf32>
    %131 = arith.addf %128, %130 : vector<64x64xf32>
    %132 = arith.addf %57, %131 : vector<64x64xf32>
    %cst_185 = arith.constant 0.000000e+00 : f32
    %133 = vector.broadcast %cst_185 : f32 to vector<64x64xf32>
    %134 = arith.maximumf %132, %133 : vector<64x64xf32>
    %135 = vector.shape_cast %134 : vector<64x64xf32> to vector<8x8x64xf32>
    %c1_186 = arith.constant 1 : index
    %c1_187 = arith.constant 1 : index
    %c0_188 = arith.constant 0 : index
    %136 = vector.load %arg20[%c1_186, %c1_187, %c0_188] : memref<10x10x64xf32, #tpu.memory_space<vmem>>, vector<8x8x64xf32>
    tpu.vector_store %arg20[%c1_186, %c1_187, %c0_188], %135 {strides = array<i32>} : memref<10x10x64xf32, #tpu.memory_space<vmem>>, vector<8x8x64xf32>,
    %c0_189 = arith.constant 0 : index
    %c0_190 = arith.constant 0 : index
    %c0_191 = arith.constant 0 : index
    %137 = vector.load %arg20[%c0_189, %c0_190, %c0_191] : memref<10x10x64xf32, #tpu.memory_space<vmem>>, vector<8x8x64xf32>
    %138 = vector.shape_cast %137 : vector<8x8x64xf32> to vector<64x64xf32>
    %c0_192 = arith.constant 0 : index
    %c0_193 = arith.constant 0 : index
    %139 = vector.load %arg27[%c0_192, %c0_193] : memref<64x576xf32, #tpu.memory_space<vmem>>, vector<64x64xf32>
    tpu.vector_store %arg27[%c0_192, %c0_193], %138 {strides = array<i32>} : memref<64x576xf32, #tpu.memory_space<vmem>>, vector<64x64xf32>,
    %c0_194 = arith.constant 0 : index
    %c1_195 = arith.constant 1 : index
    %c0_196 = arith.constant 0 : index
    %140 = vector.load %arg20[%c0_194, %c1_195, %c0_196] : memref<10x10x64xf32, #tpu.memory_space<vmem>>, vector<8x8x64xf32>
    %141 = vector.shape_cast %140 : vector<8x8x64xf32> to vector<64x64xf32>
    %c0_197 = arith.constant 0 : index
    %c64_198 = arith.constant 64 : index
    %142 = vector.load %arg27[%c0_197, %c64_198] : memref<64x576xf32, #tpu.memory_space<vmem>>, vector<64x64xf32>
    tpu.vector_store %arg27[%c0_197, %c64_198], %141 {strides = array<i32>} : memref<64x576xf32, #tpu.memory_space<vmem>>, vector<64x64xf32>,
    %c0_199 = arith.constant 0 : index
    %c2_200 = arith.constant 2 : index
    %c0_201 = arith.constant 0 : index
    %143 = vector.load %arg20[%c0_199, %c2_200, %c0_201] : memref<10x10x64xf32, #tpu.memory_space<vmem>>, vector<8x8x64xf32>
    %144 = vector.shape_cast %143 : vector<8x8x64xf32> to vector<64x64xf32>
    %c0_202 = arith.constant 0 : index
    %c128_203 = arith.constant 128 : index
    %145 = vector.load %arg27[%c0_202, %c128_203] : memref<64x576xf32, #tpu.memory_space<vmem>>, vector<64x64xf32>
    tpu.vector_store %arg27[%c0_202, %c128_203], %144 {strides = array<i32>} : memref<64x576xf32, #tpu.memory_space<vmem>>, vector<64x64xf32>,
    %c1_204 = arith.constant 1 : index
    %c0_205 = arith.constant 0 : index
    %c0_206 = arith.constant 0 : index
    %146 = vector.load %arg20[%c1_204, %c0_205, %c0_206] : memref<10x10x64xf32, #tpu.memory_space<vmem>>, vector<8x8x64xf32>
    %147 = vector.shape_cast %146 : vector<8x8x64xf32> to vector<64x64xf32>
    %c0_207 = arith.constant 0 : index
    %c192_208 = arith.constant 192 : index
    %148 = vector.load %arg27[%c0_207, %c192_208] : memref<64x576xf32, #tpu.memory_space<vmem>>, vector<64x64xf32>
    tpu.vector_store %arg27[%c0_207, %c192_208], %147 {strides = array<i32>} : memref<64x576xf32, #tpu.memory_space<vmem>>, vector<64x64xf32>,
    %c1_209 = arith.constant 1 : index
    %c1_210 = arith.constant 1 : index
    %c0_211 = arith.constant 0 : index
    %149 = vector.load %arg20[%c1_209, %c1_210, %c0_211] : memref<10x10x64xf32, #tpu.memory_space<vmem>>, vector<8x8x64xf32>
    %150 = vector.shape_cast %149 : vector<8x8x64xf32> to vector<64x64xf32>
    %c0_212 = arith.constant 0 : index
    %c256_213 = arith.constant 256 : index
    %151 = vector.load %arg27[%c0_212, %c256_213] : memref<64x576xf32, #tpu.memory_space<vmem>>, vector<64x64xf32>
    tpu.vector_store %arg27[%c0_212, %c256_213], %150 {strides = array<i32>} : memref<64x576xf32, #tpu.memory_space<vmem>>, vector<64x64xf32>,
    %c1_214 = arith.constant 1 : index
    %c2_215 = arith.constant 2 : index
    %c0_216 = arith.constant 0 : index
    %152 = vector.load %arg20[%c1_214, %c2_215, %c0_216] : memref<10x10x64xf32, #tpu.memory_space<vmem>>, vector<8x8x64xf32>
    %153 = vector.shape_cast %152 : vector<8x8x64xf32> to vector<64x64xf32>
    %c0_217 = arith.constant 0 : index
    %c320_218 = arith.constant 320 : index
    %154 = vector.load %arg27[%c0_217, %c320_218] : memref<64x576xf32, #tpu.memory_space<vmem>>, vector<64x64xf32>
    tpu.vector_store %arg27[%c0_217, %c320_218], %153 {strides = array<i32>} : memref<64x576xf32, #tpu.memory_space<vmem>>, vector<64x64xf32>,
    %c2_219 = arith.constant 2 : index
    %c0_220 = arith.constant 0 : index
    %c0_221 = arith.constant 0 : index
    %155 = vector.load %arg20[%c2_219, %c0_220, %c0_221] : memref<10x10x64xf32, #tpu.memory_space<vmem>>, vector<8x8x64xf32>
    %156 = vector.shape_cast %155 : vector<8x8x64xf32> to vector<64x64xf32>
    %c0_222 = arith.constant 0 : index
    %c384_223 = arith.constant 384 : index
    %157 = vector.load %arg27[%c0_222, %c384_223] : memref<64x576xf32, #tpu.memory_space<vmem>>, vector<64x64xf32>
    tpu.vector_store %arg27[%c0_222, %c384_223], %156 {strides = array<i32>} : memref<64x576xf32, #tpu.memory_space<vmem>>, vector<64x64xf32>,
    %c2_224 = arith.constant 2 : index
    %c1_225 = arith.constant 1 : index
    %c0_226 = arith.constant 0 : index
    %158 = vector.load %arg20[%c2_224, %c1_225, %c0_226] : memref<10x10x64xf32, #tpu.memory_space<vmem>>, vector<8x8x64xf32>
    %159 = vector.shape_cast %158 : vector<8x8x64xf32> to vector<64x64xf32>
    %c0_227 = arith.constant 0 : index
    %c448_228 = arith.constant 448 : index
    %160 = vector.load %arg27[%c0_227, %c448_228] : memref<64x576xf32, #tpu.memory_space<vmem>>, vector<64x64xf32>
    tpu.vector_store %arg27[%c0_227, %c448_228], %159 {strides = array<i32>} : memref<64x576xf32, #tpu.memory_space<vmem>>, vector<64x64xf32>,
    %c2_229 = arith.constant 2 : index
    %c2_230 = arith.constant 2 : index
    %c0_231 = arith.constant 0 : index
    %161 = vector.load %arg20[%c2_229, %c2_230, %c0_231] : memref<10x10x64xf32, #tpu.memory_space<vmem>>, vector<8x8x64xf32>
    %162 = vector.shape_cast %161 : vector<8x8x64xf32> to vector<64x64xf32>
    %c0_232 = arith.constant 0 : index
    %c512_233 = arith.constant 512 : index
    %163 = vector.load %arg27[%c0_232, %c512_233] : memref<64x576xf32, #tpu.memory_space<vmem>>, vector<64x64xf32>
    tpu.vector_store %arg27[%c0_232, %c512_233], %162 {strides = array<i32>} : memref<64x576xf32, #tpu.memory_space<vmem>>, vector<64x64xf32>,
    %c0_234 = arith.constant 0 : index
    %c0_235 = arith.constant 0 : index
    %164 = vector.load %arg27[%c0_234, %c0_235] : memref<64x576xf32, #tpu.memory_space<vmem>>, vector<64x576xf32>
    %165 = arith.truncf %164 : vector<64x576xf32> to vector<64x576xbf16>
    %c0_236 = arith.constant 0 : index
    %c0_237 = arith.constant 0 : index
    %166 = vector.load %arg12[%c0_236, %c0_237] : memref<576x128xbf16, #tpu.memory_space<vmem>>, vector<576x128xbf16>
    %cst_238 = arith.constant dense<0.000000e+00> : vector<64x128xf32>
    %167 = tpu.matmul %165, %166, %cst_238 {dimension_numbers = #tpu.dot_dimension_numbers<[1], [0], [0], [1], [0, 0, 1, 1], [], []>} : vector<64x576xbf16>, vector<576x128xbf16>, vector<64x128xf32> -> vector<64x128xf32>
    %c0_239 = arith.constant 0 : index
    %c0_240 = arith.constant 0 : index
    %168 = vector.load %arg11[%c0_239, %c0_240] : memref<16x64xbf16, #tpu.memory_space<vmem>>, vector<16x64xbf16>
    %169 = arith.truncf %167 : vector<64x128xf32> to vector<64x128xbf16>
    %cst_241 = arith.constant dense<0.000000e+00> : vector<16x128xf32>
    %170 = tpu.matmul %168, %169, %cst_241 {dimension_numbers = #tpu.dot_dimension_numbers<[1], [0], [0], [1], [0, 0, 1, 1], [], []>} : vector<16x64xbf16>, vector<64x128xbf16>, vector<16x128xf32> -> vector<16x128xf32>
    %c0_242 = arith.constant 0 : index
    %c0_243 = arith.constant 0 : index
    %171 = vector.load %arg13[%c0_242, %c0_243] : memref<1x128xf32, #tpu.memory_space<vmem>>, vector<1x128xf32>
    %172 = vector.broadcast %171 : vector<1x128xf32> to vector<16x128xf32>
    %173 = arith.addf %170, %172 : vector<16x128xf32>
    %174 = vector.shape_cast %173 : vector<16x128xf32> to vector<4x4x128xf32>
    %c1_244 = arith.constant 1 : index
    %c1_245 = arith.constant 1 : index
    %c0_246 = arith.constant 0 : index
    %175 = vector.load %arg25[%c1_244, %c1_245, %c0_246] : memref<6x6x128xf32, #tpu.memory_space<vmem>>, vector<4x4x128xf32>
    tpu.vector_store %arg25[%c1_244, %c1_245, %c0_246], %174 {strides = array<i32>} : memref<6x6x128xf32, #tpu.memory_space<vmem>>, vector<4x4x128xf32>,
    %c0_247 = arith.constant 0 : index
    %c0_248 = arith.constant 0 : index
    %c0_249 = arith.constant 0 : index
    %176 = vector.load %arg25[%c0_247, %c0_248, %c0_249] : memref<6x6x128xf32, #tpu.memory_space<vmem>>, vector<4x4x128xf32>
    %177 = vector.shape_cast %176 : vector<4x4x128xf32> to vector<16x128xf32>
    %c0_250 = arith.constant 0 : index
    %c0_251 = arith.constant 0 : index
    %178 = vector.load %arg28[%c0_250, %c0_251] : memref<16x1152xf32, #tpu.memory_space<vmem>>, vector<16x128xf32>
    tpu.vector_store %arg28[%c0_250, %c0_251], %177 {strides = array<i32>} : memref<16x1152xf32, #tpu.memory_space<vmem>>, vector<16x128xf32>,
    %c0_252 = arith.constant 0 : index
    %c1_253 = arith.constant 1 : index
    %c0_254 = arith.constant 0 : index
    %179 = vector.load %arg25[%c0_252, %c1_253, %c0_254] : memref<6x6x128xf32, #tpu.memory_space<vmem>>, vector<4x4x128xf32>
    %180 = vector.shape_cast %179 : vector<4x4x128xf32> to vector<16x128xf32>
    %c0_255 = arith.constant 0 : index
    %c128_256 = arith.constant 128 : index
    %181 = vector.load %arg28[%c0_255, %c128_256] : memref<16x1152xf32, #tpu.memory_space<vmem>>, vector<16x128xf32>
    tpu.vector_store %arg28[%c0_255, %c128_256], %180 {strides = array<i32>} : memref<16x1152xf32, #tpu.memory_space<vmem>>, vector<16x128xf32>,
    %c0_257 = arith.constant 0 : index
    %c2_258 = arith.constant 2 : index
    %c0_259 = arith.constant 0 : index
    %182 = vector.load %arg25[%c0_257, %c2_258, %c0_259] : memref<6x6x128xf32, #tpu.memory_space<vmem>>, vector<4x4x128xf32>
    %183 = vector.shape_cast %182 : vector<4x4x128xf32> to vector<16x128xf32>
    %c0_260 = arith.constant 0 : index
    %c256_261 = arith.constant 256 : index
    %184 = vector.load %arg28[%c0_260, %c256_261] : memref<16x1152xf32, #tpu.memory_space<vmem>>, vector<16x128xf32>
    tpu.vector_store %arg28[%c0_260, %c256_261], %183 {strides = array<i32>} : memref<16x1152xf32, #tpu.memory_space<vmem>>, vector<16x128xf32>,
    %c1_262 = arith.constant 1 : index
    %c0_263 = arith.constant 0 : index
    %c0_264 = arith.constant 0 : index
    %185 = vector.load %arg25[%c1_262, %c0_263, %c0_264] : memref<6x6x128xf32, #tpu.memory_space<vmem>>, vector<4x4x128xf32>
    %186 = vector.shape_cast %185 : vector<4x4x128xf32> to vector<16x128xf32>
    %c0_265 = arith.constant 0 : index
    %c384_266 = arith.constant 384 : index
    %187 = vector.load %arg28[%c0_265, %c384_266] : memref<16x1152xf32, #tpu.memory_space<vmem>>, vector<16x128xf32>
    tpu.vector_store %arg28[%c0_265, %c384_266], %186 {strides = array<i32>} : memref<16x1152xf32, #tpu.memory_space<vmem>>, vector<16x128xf32>,
    %c1_267 = arith.constant 1 : index
    %c1_268 = arith.constant 1 : index
    %c0_269 = arith.constant 0 : index
    %188 = vector.load %arg25[%c1_267, %c1_268, %c0_269] : memref<6x6x128xf32, #tpu.memory_space<vmem>>, vector<4x4x128xf32>
    %189 = vector.shape_cast %188 : vector<4x4x128xf32> to vector<16x128xf32>
    %c0_270 = arith.constant 0 : index
    %c512_271 = arith.constant 512 : index
    %190 = vector.load %arg28[%c0_270, %c512_271] : memref<16x1152xf32, #tpu.memory_space<vmem>>, vector<16x128xf32>
    tpu.vector_store %arg28[%c0_270, %c512_271], %189 {strides = array<i32>} : memref<16x1152xf32, #tpu.memory_space<vmem>>, vector<16x128xf32>,
    %c1_272 = arith.constant 1 : index
    %c2_273 = arith.constant 2 : index
    %c0_274 = arith.constant 0 : index
    %191 = vector.load %arg25[%c1_272, %c2_273, %c0_274] : memref<6x6x128xf32, #tpu.memory_space<vmem>>, vector<4x4x128xf32>
    %192 = vector.shape_cast %191 : vector<4x4x128xf32> to vector<16x128xf32>
    %c0_275 = arith.constant 0 : index
    %c640 = arith.constant 640 : index
    %193 = vector.load %arg28[%c0_275, %c640] : memref<16x1152xf32, #tpu.memory_space<vmem>>, vector<16x128xf32>
    tpu.vector_store %arg28[%c0_275, %c640], %192 {strides = array<i32>} : memref<16x1152xf32, #tpu.memory_space<vmem>>, vector<16x128xf32>,
    %c2_276 = arith.constant 2 : index
    %c0_277 = arith.constant 0 : index
    %c0_278 = arith.constant 0 : index
    %194 = vector.load %arg25[%c2_276, %c0_277, %c0_278] : memref<6x6x128xf32, #tpu.memory_space<vmem>>, vector<4x4x128xf32>
    %195 = vector.shape_cast %194 : vector<4x4x128xf32> to vector<16x128xf32>
    %c0_279 = arith.constant 0 : index
    %c768 = arith.constant 768 : index
    %196 = vector.load %arg28[%c0_279, %c768] : memref<16x1152xf32, #tpu.memory_space<vmem>>, vector<16x128xf32>
    tpu.vector_store %arg28[%c0_279, %c768], %195 {strides = array<i32>} : memref<16x1152xf32, #tpu.memory_space<vmem>>, vector<16x128xf32>,
    %c2_280 = arith.constant 2 : index
    %c1_281 = arith.constant 1 : index
    %c0_282 = arith.constant 0 : index
    %197 = vector.load %arg25[%c2_280, %c1_281, %c0_282] : memref<6x6x128xf32, #tpu.memory_space<vmem>>, vector<4x4x128xf32>
    %198 = vector.shape_cast %197 : vector<4x4x128xf32> to vector<16x128xf32>
    %c0_283 = arith.constant 0 : index
    %c896 = arith.constant 896 : index
    %199 = vector.load %arg28[%c0_283, %c896] : memref<16x1152xf32, #tpu.memory_space<vmem>>, vector<16x128xf32>
    tpu.vector_store %arg28[%c0_283, %c896], %198 {strides = array<i32>} : memref<16x1152xf32, #tpu.memory_space<vmem>>, vector<16x128xf32>,
    %c2_284 = arith.constant 2 : index
    %c2_285 = arith.constant 2 : index
    %c0_286 = arith.constant 0 : index
    %200 = vector.load %arg25[%c2_284, %c2_285, %c0_286] : memref<6x6x128xf32, #tpu.memory_space<vmem>>, vector<4x4x128xf32>
    %201 = vector.shape_cast %200 : vector<4x4x128xf32> to vector<16x128xf32>
    %c0_287 = arith.constant 0 : index
    %c1024 = arith.constant 1024 : index
    %202 = vector.load %arg28[%c0_287, %c1024] : memref<16x1152xf32, #tpu.memory_space<vmem>>, vector<16x128xf32>
    tpu.vector_store %arg28[%c0_287, %c1024], %201 {strides = array<i32>} : memref<16x1152xf32, #tpu.memory_space<vmem>>, vector<16x128xf32>,
    %c0_288 = arith.constant 0 : index
    %c0_289 = arith.constant 0 : index
    %203 = vector.load %arg28[%c0_288, %c0_289] : memref<16x1152xf32, #tpu.memory_space<vmem>>, vector<16x1152xf32>
    %204 = arith.truncf %203 : vector<16x1152xf32> to vector<16x1152xbf16>
    %c0_290 = arith.constant 0 : index
    %c0_291 = arith.constant 0 : index
    %205 = vector.load %arg14[%c0_290, %c0_291] : memref<1152x128xbf16, #tpu.memory_space<vmem>>, vector<1152x128xbf16>
    %cst_292 = arith.constant dense<0.000000e+00> : vector<16x128xf32>
    %206 = tpu.matmul %204, %205, %cst_292 {dimension_numbers = #tpu.dot_dimension_numbers<[1], [0], [0], [1], [0, 0, 1, 1], [], []>} : vector<16x1152xbf16>, vector<1152x128xbf16>, vector<16x128xf32> -> vector<16x128xf32>
    %c0_293 = arith.constant 0 : index
    %c0_294 = arith.constant 0 : index
    %207 = vector.load %arg15[%c0_293, %c0_294] : memref<1x128xf32, #tpu.memory_space<vmem>>, vector<1x128xf32>
    %208 = vector.broadcast %207 : vector<1x128xf32> to vector<16x128xf32>
    %209 = arith.addf %206, %208 : vector<16x128xf32>
    %cst_295 = arith.constant 0.000000e+00 : f32
    %210 = vector.broadcast %cst_295 : f32 to vector<16x128xf32>
    %211 = arith.maximumf %209, %210 : vector<16x128xf32>
    %212 = vector.shape_cast %211 : vector<16x128xf32> to vector<4x4x128xf32>
    %c1_296 = arith.constant 1 : index
    %c1_297 = arith.constant 1 : index
    %c0_298 = arith.constant 0 : index
    %213 = vector.load %arg26[%c1_296, %c1_297, %c0_298] : memref<6x6x128xf32, #tpu.memory_space<vmem>>, vector<4x4x128xf32>
    tpu.vector_store %arg26[%c1_296, %c1_297, %c0_298], %212 {strides = array<i32>} : memref<6x6x128xf32, #tpu.memory_space<vmem>>, vector<4x4x128xf32>,
    %c0_299 = arith.constant 0 : index
    %c0_300 = arith.constant 0 : index
    %c0_301 = arith.constant 0 : index
    %214 = vector.load %arg26[%c0_299, %c0_300, %c0_301] : memref<6x6x128xf32, #tpu.memory_space<vmem>>, vector<4x4x128xf32>
    %215 = vector.shape_cast %214 : vector<4x4x128xf32> to vector<16x128xf32>
    %c0_302 = arith.constant 0 : index
    %c0_303 = arith.constant 0 : index
    %216 = vector.load %arg28[%c0_302, %c0_303] : memref<16x1152xf32, #tpu.memory_space<vmem>>, vector<16x128xf32>
    tpu.vector_store %arg28[%c0_302, %c0_303], %215 {strides = array<i32>} : memref<16x1152xf32, #tpu.memory_space<vmem>>, vector<16x128xf32>,
    %c0_304 = arith.constant 0 : index
    %c1_305 = arith.constant 1 : index
    %c0_306 = arith.constant 0 : index
    %217 = vector.load %arg26[%c0_304, %c1_305, %c0_306] : memref<6x6x128xf32, #tpu.memory_space<vmem>>, vector<4x4x128xf32>
    %218 = vector.shape_cast %217 : vector<4x4x128xf32> to vector<16x128xf32>
    %c0_307 = arith.constant 0 : index
    %c128_308 = arith.constant 128 : index
    %219 = vector.load %arg28[%c0_307, %c128_308] : memref<16x1152xf32, #tpu.memory_space<vmem>>, vector<16x128xf32>
    tpu.vector_store %arg28[%c0_307, %c128_308], %218 {strides = array<i32>} : memref<16x1152xf32, #tpu.memory_space<vmem>>, vector<16x128xf32>,
    %c0_309 = arith.constant 0 : index
    %c2_310 = arith.constant 2 : index
    %c0_311 = arith.constant 0 : index
    %220 = vector.load %arg26[%c0_309, %c2_310, %c0_311] : memref<6x6x128xf32, #tpu.memory_space<vmem>>, vector<4x4x128xf32>
    %221 = vector.shape_cast %220 : vector<4x4x128xf32> to vector<16x128xf32>
    %c0_312 = arith.constant 0 : index
    %c256_313 = arith.constant 256 : index
    %222 = vector.load %arg28[%c0_312, %c256_313] : memref<16x1152xf32, #tpu.memory_space<vmem>>, vector<16x128xf32>
    tpu.vector_store %arg28[%c0_312, %c256_313], %221 {strides = array<i32>} : memref<16x1152xf32, #tpu.memory_space<vmem>>, vector<16x128xf32>,
    %c1_314 = arith.constant 1 : index
    %c0_315 = arith.constant 0 : index
    %c0_316 = arith.constant 0 : index
    %223 = vector.load %arg26[%c1_314, %c0_315, %c0_316] : memref<6x6x128xf32, #tpu.memory_space<vmem>>, vector<4x4x128xf32>
    %224 = vector.shape_cast %223 : vector<4x4x128xf32> to vector<16x128xf32>
    %c0_317 = arith.constant 0 : index
    %c384_318 = arith.constant 384 : index
    %225 = vector.load %arg28[%c0_317, %c384_318] : memref<16x1152xf32, #tpu.memory_space<vmem>>, vector<16x128xf32>
    tpu.vector_store %arg28[%c0_317, %c384_318], %224 {strides = array<i32>} : memref<16x1152xf32, #tpu.memory_space<vmem>>, vector<16x128xf32>,
    %c1_319 = arith.constant 1 : index
    %c1_320 = arith.constant 1 : index
    %c0_321 = arith.constant 0 : index
    %226 = vector.load %arg26[%c1_319, %c1_320, %c0_321] : memref<6x6x128xf32, #tpu.memory_space<vmem>>, vector<4x4x128xf32>
    %227 = vector.shape_cast %226 : vector<4x4x128xf32> to vector<16x128xf32>
    %c0_322 = arith.constant 0 : index
    %c512_323 = arith.constant 512 : index
    %228 = vector.load %arg28[%c0_322, %c512_323] : memref<16x1152xf32, #tpu.memory_space<vmem>>, vector<16x128xf32>
    tpu.vector_store %arg28[%c0_322, %c512_323], %227 {strides = array<i32>} : memref<16x1152xf32, #tpu.memory_space<vmem>>, vector<16x128xf32>,
    %c1_324 = arith.constant 1 : index
    %c2_325 = arith.constant 2 : index
    %c0_326 = arith.constant 0 : index
    %229 = vector.load %arg26[%c1_324, %c2_325, %c0_326] : memref<6x6x128xf32, #tpu.memory_space<vmem>>, vector<4x4x128xf32>
    %230 = vector.shape_cast %229 : vector<4x4x128xf32> to vector<16x128xf32>
    %c0_327 = arith.constant 0 : index
    %c640_328 = arith.constant 640 : index
    %231 = vector.load %arg28[%c0_327, %c640_328] : memref<16x1152xf32, #tpu.memory_space<vmem>>, vector<16x128xf32>
    tpu.vector_store %arg28[%c0_327, %c640_328], %230 {strides = array<i32>} : memref<16x1152xf32, #tpu.memory_space<vmem>>, vector<16x128xf32>,
    %c2_329 = arith.constant 2 : index
    %c0_330 = arith.constant 0 : index
    %c0_331 = arith.constant 0 : index
    %232 = vector.load %arg26[%c2_329, %c0_330, %c0_331] : memref<6x6x128xf32, #tpu.memory_space<vmem>>, vector<4x4x128xf32>
    %233 = vector.shape_cast %232 : vector<4x4x128xf32> to vector<16x128xf32>
    %c0_332 = arith.constant 0 : index
    %c768_333 = arith.constant 768 : index
    %234 = vector.load %arg28[%c0_332, %c768_333] : memref<16x1152xf32, #tpu.memory_space<vmem>>, vector<16x128xf32>
    tpu.vector_store %arg28[%c0_332, %c768_333], %233 {strides = array<i32>} : memref<16x1152xf32, #tpu.memory_space<vmem>>, vector<16x128xf32>,
    %c2_334 = arith.constant 2 : index
    %c1_335 = arith.constant 1 : index
    %c0_336 = arith.constant 0 : index
    %235 = vector.load %arg26[%c2_334, %c1_335, %c0_336] : memref<6x6x128xf32, #tpu.memory_space<vmem>>, vector<4x4x128xf32>
    %236 = vector.shape_cast %235 : vector<4x4x128xf32> to vector<16x128xf32>
    %c0_337 = arith.constant 0 : index
    %c896_338 = arith.constant 896 : index
    %237 = vector.load %arg28[%c0_337, %c896_338] : memref<16x1152xf32, #tpu.memory_space<vmem>>, vector<16x128xf32>
    tpu.vector_store %arg28[%c0_337, %c896_338], %236 {strides = array<i32>} : memref<16x1152xf32, #tpu.memory_space<vmem>>, vector<16x128xf32>,
    %c2_339 = arith.constant 2 : index
    %c2_340 = arith.constant 2 : index
    %c0_341 = arith.constant 0 : index
    %238 = vector.load %arg26[%c2_339, %c2_340, %c0_341] : memref<6x6x128xf32, #tpu.memory_space<vmem>>, vector<4x4x128xf32>
    %239 = vector.shape_cast %238 : vector<4x4x128xf32> to vector<16x128xf32>
    %c0_342 = arith.constant 0 : index
    %c1024_343 = arith.constant 1024 : index
    %240 = vector.load %arg28[%c0_342, %c1024_343] : memref<16x1152xf32, #tpu.memory_space<vmem>>, vector<16x128xf32>
    tpu.vector_store %arg28[%c0_342, %c1024_343], %239 {strides = array<i32>} : memref<16x1152xf32, #tpu.memory_space<vmem>>, vector<16x128xf32>,
    %c0_344 = arith.constant 0 : index
    %c0_345 = arith.constant 0 : index
    %241 = vector.load %arg28[%c0_344, %c0_345] : memref<16x1152xf32, #tpu.memory_space<vmem>>, vector<16x1152xf32>
    %242 = arith.truncf %241 : vector<16x1152xf32> to vector<16x1152xbf16>
    %c0_346 = arith.constant 0 : index
    %c0_347 = arith.constant 0 : index
    %243 = vector.load %arg16[%c0_346, %c0_347] : memref<1152x128xbf16, #tpu.memory_space<vmem>>, vector<1152x128xbf16>
    %cst_348 = arith.constant dense<0.000000e+00> : vector<16x128xf32>
    %244 = tpu.matmul %242, %243, %cst_348 {dimension_numbers = #tpu.dot_dimension_numbers<[1], [0], [0], [1], [0, 0, 1, 1], [], []>} : vector<16x1152xbf16>, vector<1152x128xbf16>, vector<16x128xf32> -> vector<16x128xf32>
    %c0_349 = arith.constant 0 : index
    %c0_350 = arith.constant 0 : index
    %245 = vector.load %arg17[%c0_349, %c0_350] : memref<1x128xf32, #tpu.memory_space<vmem>>, vector<1x128xf32>
    %246 = vector.broadcast %245 : vector<1x128xf32> to vector<16x128xf32>
    %247 = arith.addf %244, %246 : vector<16x128xf32>
    %248 = arith.addf %173, %247 : vector<16x128xf32>
    %cst_351 = arith.constant 0.000000e+00 : f32
    %249 = vector.broadcast %cst_351 : f32 to vector<16x128xf32>
    %250 = arith.maximumf %248, %249 : vector<16x128xf32>
    %251 = vector.shape_cast %250 : vector<16x128xf32> to vector<4x4x128xf32>
    %c0_352 = arith.constant 0 : index
    %c0_353 = arith.constant 0 : index
    %c0_354 = arith.constant 0 : index
    %c0_355 = arith.constant 0 : index
    %252 = vector.load %arg18[%c0_352, %c0_353, %c0_354, %c0_355] : memref<1x4x4x128xf32, #tpu.memory_space<vmem>>, vector<1x4x4x128xf32>
    %253 = vector.shape_cast %252 : vector<1x4x4x128xf32> to vector<4x4x128xf32>
    %254 = vector.shape_cast %251 : vector<4x4x128xf32> to vector<1x4x4x128xf32>
    tpu.vector_store %arg18[%c0_352, %c0_353, %c0_354, %c0_355], %254 {strides = array<i32>} : memref<1x4x4x128xf32, #tpu.memory_space<vmem>>, vector<1x4x4x128xf32>,
    return
  }
  func.func @transform_0(%arg0: i32) -> (i32, i32, i32) {
    %c0_i32 = arith.constant 0 : i32
    %c0_i32_0 = arith.constant 0 : i32
    %c0_i32_1 = arith.constant 0 : i32
    return %arg0, %c0_i32, %c0_i32_0 : i32, i32, i32
  }
  func.func @transform_1(%arg0: i32) -> (i32, i32) {
    %c0_i32 = arith.constant 0 : i32
    %c0_i32_0 = arith.constant 0 : i32
    %c0_i32_1 = arith.constant 0 : i32
    return %c0_i32, %c0_i32_0 : i32, i32
  }
  func.func @transform_2(%arg0: i32) -> (i32, i32) {
    %c0_i32 = arith.constant 0 : i32
    %c0_i32_0 = arith.constant 0 : i32
    %c0_i32_1 = arith.constant 0 : i32
    return %c0_i32, %c0_i32_0 : i32, i32
  }
  func.func @transform_3(%arg0: i32) -> (i32, i32) {
    %c0_i32 = arith.constant 0 : i32
    %c0_i32_0 = arith.constant 0 : i32
    %c0_i32_1 = arith.constant 0 : i32
    return %c0_i32, %c0_i32_0 : i32, i32
  }
  func.func @transform_4(%arg0: i32) -> (i32, i32) {
    %c0_i32 = arith.constant 0 : i32
    %c0_i32_0 = arith.constant 0 : i32
    %c0_i32_1 = arith.constant 0 : i32
    return %c0_i32, %c0_i32_0 : i32, i32
  }
  func.func @transform_5(%arg0: i32) -> (i32, i32) {
    %c0_i32 = arith.constant 0 : i32
    %c0_i32_0 = arith.constant 0 : i32
    %c0_i32_1 = arith.constant 0 : i32
    return %c0_i32, %c0_i32_0 : i32, i32
  }
  func.func @transform_6(%arg0: i32) -> (i32, i32) {
    %c0_i32 = arith.constant 0 : i32
    %c0_i32_0 = arith.constant 0 : i32
    %c0_i32_1 = arith.constant 0 : i32
    return %c0_i32, %c0_i32_0 : i32, i32
  }
  func.func @transform_7(%arg0: i32) -> (i32, i32) {
    %c0_i32 = arith.constant 0 : i32
    %c0_i32_0 = arith.constant 0 : i32
    %c0_i32_1 = arith.constant 0 : i32
    return %c0_i32, %c0_i32_0 : i32, i32
  }
  func.func @transform_8(%arg0: i32) -> (i32, i32) {
    %c0_i32 = arith.constant 0 : i32
    %c0_i32_0 = arith.constant 0 : i32
    %c0_i32_1 = arith.constant 0 : i32
    return %c0_i32, %c0_i32_0 : i32, i32
  }
  func.func @transform_9(%arg0: i32) -> (i32, i32) {
    %c0_i32 = arith.constant 0 : i32
    %c0_i32_0 = arith.constant 0 : i32
    %c0_i32_1 = arith.constant 0 : i32
    return %c0_i32, %c0_i32_0 : i32, i32
  }
  func.func @transform_10(%arg0: i32) -> (i32, i32) {
    %c0_i32 = arith.constant 0 : i32
    %c0_i32_0 = arith.constant 0 : i32
    %c0_i32_1 = arith.constant 0 : i32
    return %c0_i32, %c0_i32_0 : i32, i32
  }
  func.func @transform_11(%arg0: i32) -> (i32, i32) {
    %c0_i32 = arith.constant 0 : i32
    %c0_i32_0 = arith.constant 0 : i32
    %c0_i32_1 = arith.constant 0 : i32
    return %c0_i32, %c0_i32_0 : i32, i32
  }
  func.func @transform_12(%arg0: i32) -> (i32, i32) {
    %c0_i32 = arith.constant 0 : i32
    %c0_i32_0 = arith.constant 0 : i32
    %c0_i32_1 = arith.constant 0 : i32
    return %c0_i32, %c0_i32_0 : i32, i32
  }
  func.func @transform_13(%arg0: i32) -> (i32, i32) {
    %c0_i32 = arith.constant 0 : i32
    %c0_i32_0 = arith.constant 0 : i32
    %c0_i32_1 = arith.constant 0 : i32
    return %c0_i32, %c0_i32_0 : i32, i32
  }
  func.func @transform_14(%arg0: i32) -> (i32, i32) {
    %c0_i32 = arith.constant 0 : i32
    %c0_i32_0 = arith.constant 0 : i32
    %c0_i32_1 = arith.constant 0 : i32
    return %c0_i32, %c0_i32_0 : i32, i32
  }
  func.func @transform_15(%arg0: i32) -> (i32, i32) {
    %c0_i32 = arith.constant 0 : i32
    %c0_i32_0 = arith.constant 0 : i32
    %c0_i32_1 = arith.constant 0 : i32
    return %c0_i32, %c0_i32_0 : i32, i32
  }
  func.func @transform_16(%arg0: i32) -> (i32, i32) {
    %c0_i32 = arith.constant 0 : i32
    %c0_i32_0 = arith.constant 0 : i32
    %c0_i32_1 = arith.constant 0 : i32
    return %c0_i32, %c0_i32_0 : i32, i32
  }
  func.func @transform_17(%arg0: i32) -> (i32, i32, i32, i32) {
    %c0_i32 = arith.constant 0 : i32
    %c0_i32_0 = arith.constant 0 : i32
    %c0_i32_1 = arith.constant 0 : i32
    %c0_i32_2 = arith.constant 0 : i32
    return %arg0, %c0_i32, %c0_i32_0, %c0_i32_1 : i32, i32, i32, i32
  }
}

</mosaic_0001>

<llo_original>
// kernel: _lambda_.1
$region0: #{_lambda_.1}
  #allocation0 [shape = 'u32[]', space=smem, size = 0x4, offset = 0x4, fixed_abs, tag = 'smem constant byte address 0x4 - core index']
  #allocation1 [shape = 'u32[144,128]{1,0:T(1,128)}', space=vmem, size = 0x12000, scoped, tag = 'internal scratch']
  #allocation2 [shape = 'f32[18,18,32]{2,1,0:T(8,128)}', space=vmem, size = 0x36000, scoped, tag = 'scratch operand']
  #allocation3 [shape = 'f32[10,10,64]{2,1,0:T(8,128)}', space=vmem, size = 0x14000, scoped, tag = 'scratch operand']
  #allocation4 [shape = 'f32[10,10,64]{2,1,0:T(8,128)}', space=vmem, size = 0x14000, scoped, tag = 'scratch operand']
  #allocation5 [shape = 'f32[10,10,64]{2,1,0:T(8,128)}', space=vmem, size = 0x14000, scoped, tag = 'scratch operand']
  #allocation6 [shape = 'f32[256,288]{1,0:T(8,128)}', space=vmem, size = 0x60000, scoped, tag = 'scratch operand']
  #allocation7 [shape = 'f32[64,576]{1,0:T(8,128)}', space=vmem, size = 0x28000, scoped, tag = 'scratch operand']
  #allocation8 [shape = 'f32[6,6,128]{2,1,0:T(8,128)}', space=vmem, size = 0x6000, scoped, tag = 'scratch operand']
  #allocation9 [shape = 'f32[6,6,128]{2,1,0:T(8,128)}', space=vmem, size = 0x6000, scoped, tag = 'scratch operand']
  #allocation10 [shape = 'f32[64,576]{1,0:T(8,128)}', space=vmem, size = 0x28000, scoped, tag = 'scratch operand']
  #allocation11 [shape = 'f32[16,1152]{1,0:T(8,128)}', space=vmem, size = 0x12000, scoped, tag = 'scratch operand']
  %s0 = inlined_call_operand.vmem [shape: bf16[2,256,36], index: 0, kind: input, shape index: {}]
  %s1 = inlined_call_operand.vmem [shape: bf16[36,32], index: 1, kind: input, shape index: {}]
  %s2 = inlined_call_operand.vmem [shape: f32[1,32], index: 2, kind: input, shape index: {}]
  %s3 = inlined_call_operand.vmem [shape: bf16[64,256], index: 3, kind: input, shape index: {}]
  %s4 = inlined_call_operand.vmem [shape: bf16[288,64], index: 4, kind: input, shape index: {}]
  %s5 = inlined_call_operand.vmem [shape: f32[1,64], index: 5, kind: input, shape index: {}]
  %s6 = inlined_call_operand.vmem [shape: bf16[576,64], index: 6, kind: input, shape index: {}]
  %s7 = inlined_call_operand.vmem [shape: f32[1,64], index: 7, kind: input, shape index: {}]
  %s8 = inlined_call_operand.vmem [shape: bf16[576,64], index: 8, kind: input, shape index: {}]
  %s9 = inlined_call_operand.vmem [shape: f32[1,64], index: 9, kind: input, shape index: {}]
  %s10 = inlined_call_operand.vmem [shape: bf16[16,64], index: 10, kind: input, shape index: {}]
  %s11 = inlined_call_operand.vmem [shape: bf16[576,128], index: 11, kind: input, shape index: {}]
  %s12 = inlined_call_operand.vmem [shape: f32[1,128], index: 12, kind: input, shape index: {}]
  %s13 = inlined_call_operand.vmem [shape: bf16[1152,128], index: 13, kind: input, shape index: {}]
  %s14 = inlined_call_operand.vmem [shape: f32[1,128], index: 14, kind: input, shape index: {}]
  %s15 = inlined_call_operand.vmem [shape: bf16[1152,128], index: 15, kind: input, shape index: {}]
  %s16 = inlined_call_operand.vmem [shape: f32[1,128], index: 16, kind: input, shape index: {}]
  %s17 = inlined_call_operand.hbm [shape: f32[2,4,4,128], index: 17, kind: output, shape index: {}]
  %s18 = sld [smem:[#allocation0]]
  $region101: #{_lambda_.1} parent=0
    _
  %s20 = ssub.s32 1, %s18
  %s21 = scalar_select 0, %s20, %s18
  $region1: #{_lambda_.1} parent=0
    #allocation12 [shape = 'u8[16384]{0}', space=vmem, size = 0x4000, scoped, tag = 'output window, operand 0']
    #allocation13 [shape = 's32[2]{0}', space=sflag, size = 0x8, scoped, tag = 'scoped memory for _lambda_.1']
    %22 = vsyncpa [#allocation13], 0
    %s23 = scalar_lea.sflag [#allocation13], 1
    %24 = vsyncpa %s23, 0
    loop: start=0, step=1, limit=4
    $region2: #{_lambda_.1} parent=1 // loop_pre_header
      _
    $region3: #{_lambda_.1} parent=1 // loop_header
      %s26 = sphi 0, %s30
      %p27 = scmp.ge.s32.totalorder %s26, 4
      %s36 = sphi 0, %s38
      %s39 = sphi 0, %s36
      %s40 = sphi 0, %s39
      %s56 = sphi 0, %s40
      %s60 = sphi 0, %s60
      %s62 = sphi 0, %s60
      %s63 = sphi 0, %s62
      %s77 = sphi 0, %s63
      %s81 = sphi 0, %s81
      %s83 = sphi 0, %s81
      %s84 = sphi 0, %s83
      %s98 = sphi 0, %s84
      %s102 = sphi 0, %s102
      %s104 = sphi 0, %s102
      %s105 = sphi 0, %s104
      %s119 = sphi 0, %s105
      %s123 = sphi 0, %s123
      %s125 = sphi 0, %s123
      %s126 = sphi 0, %s125
      %s140 = sphi 0, %s126
      %s144 = sphi 0, %s144
      %s146 = sphi 0, %s144
      %s147 = sphi 0, %s146
      %s161 = sphi 0, %s147
      %s165 = sphi 0, %s165
      %s167 = sphi 0, %s165
      %s168 = sphi 0, %s167
      %s182 = sphi 0, %s168
      %s186 = sphi 0, %s186
      %s188 = sphi 0, %s186
      %s189 = sphi 0, %s188
      %s203 = sphi 0, %s189
      %s207 = sphi 0, %s207
      %s209 = sphi 0, %s207
      %s210 = sphi 0, %s209
      %s224 = sphi 0, %s210
      %s228 = sphi 0, %s228
      %s230 = sphi 0, %s228
      %s231 = sphi 0, %s230
      %s245 = sphi 0, %s231
      %s249 = sphi 0, %s249
      %s251 = sphi 0, %s249
      %s252 = sphi 0, %s251
      %s266 = sphi 0, %s252
      %s270 = sphi 0, %s270
      %s272 = sphi 0, %s270
      %s273 = sphi 0, %s272
      %s287 = sphi 0, %s273
      %s291 = sphi 0, %s291
      %s293 = sphi 0, %s291
      %s294 = sphi 0, %s293
      %s308 = sphi 0, %s294
      %s312 = sphi 0, %s312
      %s314 = sphi 0, %s312
      %s315 = sphi 0, %s314
      %s329 = sphi 0, %s315
      %s333 = sphi 0, %s333
      %s335 = sphi 0, %s333
      %s336 = sphi 0, %s335
      %s350 = sphi 0, %s336
      %s354 = sphi 0, %s354
      %s356 = sphi 0, %s354
      %s357 = sphi 0, %s356
      %s371 = sphi 0, %s357
      %s375 = sphi 0, %s375
      %s377 = sphi 0, %s375
      %s378 = sphi 0, %s377
      %s392 = sphi 0, %s378
      %s398 = sphi 0, %s400
      %s401 = sphi 0, %s398
      %s402 = sphi 0, %s401
      %s418 = sphi 0, %s402
    $region4: #{_lambda_.1} parent=1 // loop_header_branch
      %29 = sbr.rel (%p27) target = $region8
    $region5: #{_lambda_.1} parent=1 // loop_body
      %s31 = ssub.s32 %s26, 1
      %s32 = ssub.s32 %s26, 2
      %s33 = sadd.s32 %s26, 1
      %s34 = ssub.s32 %s26, %s33
      %p35 = scmp.eq.s32.totalorder %s34, 0
      %s37 = sadd.s32 %s36, 1
      %s38 = scalar_select %p35, %s36, %s37
      %p41 = pneg %p35
      %p42 = scmp.eq.s32.totalorder %s26, 1
      %p43 = por %p41, %p42
      %p44 = scmp.ne.s32.totalorder %s36, %s39
      %p45 = scmp.eq.s32.totalorder %s26, 0
      %p46 = por %p44, %p45
      %p47 = scmp.ne.s32.totalorder %s36, %s39
      %p48 = scmp.eq.s32.totalorder %s31, 1
      %p49 = por %p47, %p48
      %p50 = scmp.ne.s32.totalorder %s39, %s40
      %p51 = scmp.eq.s32.totalorder %s31, 0
      %p52 = por %p50, %p51
      %p53 = scmp.ne.s32.totalorder %s39, %s40
      %p54 = scmp.eq.s32.totalorder %s32, 1
      %p55 = por %p53, %p54
      %p57 = scmp.ne.s32.totalorder %s40, %s56
      %p58 = scmp.eq.s32.totalorder %s32, 0
      %p59 = por %p57, %p58
      %s61 = sadd.s32 %s60, 1
      %p64 = scmp.eq.s32.totalorder %s26, 1
      %p65 = scmp.ne.s32.totalorder %s60, %s62
      %p66 = scmp.eq.s32.totalorder %s26, 0
      %p67 = por %p65, %p66
      %p68 = scmp.ne.s32.totalorder %s60, %s62
      %p69 = scmp.eq.s32.totalorder %s31, 1
      %p70 = por %p68, %p69
      %p71 = scmp.ne.s32.totalorder %s62, %s63
      %p72 = scmp.eq.s32.totalorder %s31, 0
      %p73 = por %p71, %p72
      %p74 = scmp.ne.s32.totalorder %s62, %s63
      %p75 = scmp.eq.s32.totalorder %s32, 1
      %p76 = por %p74, %p75
      %p78 = scmp.ne.s32.totalorder %s63, %s77
      %p79 = scmp.eq.s32.totalorder %s32, 0
      %p80 = por %p78, %p79
      %s82 = sadd.s32 %s81, 1
      %p85 = scmp.eq.s32.totalorder %s26, 1
      %p86 = scmp.ne.s32.totalorder %s81, %s83
      %p87 = scmp.eq.s32.totalorder %s26, 0
      %p88 = por %p86, %p87
      %p89 = scmp.ne.s32.totalorder %s81, %s83
      %p90 = scmp.eq.s32.totalorder %s31, 1
      %p91 = por %p89, %p90
      %p92 = scmp.ne.s32.totalorder %s83, %s84
      %p93 = scmp.eq.s32.totalorder %s31, 0
      %p94 = por %p92, %p93
      %p95 = scmp.ne.s32.totalorder %s83, %s84
      %p96 = scmp.eq.s32.totalorder %s32, 1
      %p97 = por %p95, %p96
      %p99 = scmp.ne.s32.totalorder %s84, %s98
      %p100 = scmp.eq.s32.totalorder %s32, 0
      %p101 = por %p99, %p100
      %s103 = sadd.s32 %s102, 1
      %p106 = scmp.eq.s32.totalorder %s26, 1
      %p107 = scmp.ne.s32.totalorder %s102, %s104
      %p108 = scmp.eq.s32.totalorder %s26, 0
      %p109 = por %p107, %p108
      %p110 = scmp.ne.s32.totalorder %s102, %s104
      %p111 = scmp.eq.s32.totalorder %s31, 1
      %p112 = por %p110, %p111
      %p113 = scmp.ne.s32.totalorder %s104, %s105
      %p114 = scmp.eq.s32.totalorder %s31, 0
      %p115 = por %p113, %p114
      %p116 = scmp.ne.s32.totalorder %s104, %s105
      %p117 = scmp.eq.s32.totalorder %s32, 1
      %p118 = por %p116, %p117
      %p120 = scmp.ne.s32.totalorder %s105, %s119
      %p121 = scmp.eq.s32.totalorder %s32, 0
      %p122 = por %p120, %p121
      %s124 = sadd.s32 %s123, 1
      %p127 = scmp.eq.s32.totalorder %s26, 1
      %p128 = scmp.ne.s32.totalorder %s123, %s125
      %p129 = scmp.eq.s32.totalorder %s26, 0
      %p130 = por %p128, %p129
      %p131 = scmp.ne.s32.totalorder %s123, %s125
      %p132 = scmp.eq.s32.totalorder %s31, 1
      %p133 = por %p131, %p132
      %p134 = scmp.ne.s32.totalorder %s125, %s126
      %p135 = scmp.eq.s32.totalorder %s31, 0
      %p136 = por %p134, %p135
      %p137 = scmp.ne.s32.totalorder %s125, %s126
      %p138 = scmp.eq.s32.totalorder %s32, 1
      %p139 = por %p137, %p138
      %p141 = scmp.ne.s32.totalorder %s126, %s140
      %p142 = scmp.eq.s32.totalorder %s32, 0
      %p143 = por %p141, %p142
      %s145 = sadd.s32 %s144, 1
      %p148 = scmp.eq.s32.totalorder %s26, 1
      %p149 = scmp.ne.s32.totalorder %s144, %s146
      %p150 = scmp.eq.s32.totalorder %s26, 0
      %p151 = por %p149, %p150
      %p152 = scmp.ne.s32.totalorder %s144, %s146
      %p153 = scmp.eq.s32.totalorder %s31, 1
      %p154 = por %p152, %p153
      %p155 = scmp.ne.s32.totalorder %s146, %s147
      %p156 = scmp.eq.s32.totalorder %s31, 0
      %p157 = por %p155, %p156
      %p158 = scmp.ne.s32.totalorder %s146, %s147
      %p159 = scmp.eq.s32.totalorder %s32, 1
      %p160 = por %p158, %p159
      %p162 = scmp.ne.s32.totalorder %s147, %s161
      %p163 = scmp.eq.s32.totalorder %s32, 0
      %p164 = por %p162, %p163
      %s166 = sadd.s32 %s165, 1
      %p169 = scmp.eq.s32.totalorder %s26, 1
      %p170 = scmp.ne.s32.totalorder %s165, %s167
      %p171 = scmp.eq.s32.totalorder %s26, 0
      %p172 = por %p170, %p171
      %p173 = scmp.ne.s32.totalorder %s165, %s167
      %p174 = scmp.eq.s32.totalorder %s31, 1
      %p175 = por %p173, %p174
      %p176 = scmp.ne.s32.totalorder %s167, %s168
      %p177 = scmp.eq.s32.totalorder %s31, 0
      %p178 = por %p176, %p177
      %p179 = scmp.ne.s32.totalorder %s167, %s168
      %p180 = scmp.eq.s32.totalorder %s32, 1
      %p181 = por %p179, %p180
      %p183 = scmp.ne.s32.totalorder %s168, %s182
      %p184 = scmp.eq.s32.totalorder %s32, 0
      %p185 = por %p183, %p184
      %s187 = sadd.s32 %s186, 1
      %p190 = scmp.eq.s32.totalorder %s26, 1
      %p191 = scmp.ne.s32.totalorder %s186, %s188
      %p192 = scmp.eq.s32.totalorder %s26, 0
      %p193 = por %p191, %p192
      %p194 = scmp.ne.s32.totalorder %s186, %s188
      %p195 = scmp.eq.s32.totalorder %s31, 1
      %p196 = por %p194, %p195
      %p197 = scmp.ne.s32.totalorder %s188, %s189
      %p198 = scmp.eq.s32.totalorder %s31, 0
      %p199 = por %p197, %p198
      %p200 = scmp.ne.s32.totalorder %s188, %s189
      %p201 = scmp.eq.s32.totalorder %s32, 1
      %p202 = por %p200, %p201
      %p204 = scmp.ne.s32.totalorder %s189, %s203
      %p205 = scmp.eq.s32.totalorder %s32, 0
      %p206 = por %p204, %p205
      %s208 = sadd.s32 %s207, 1
      %p211 = scmp.eq.s32.totalorder %s26, 1
      %p212 = scmp.ne.s32.totalorder %s207, %s209
      %p213 = scmp.eq.s32.totalorder %s26, 0
      %p214 = por %p212, %p213
      %p215 = scmp.ne.s32.totalorder %s207, %s209
      %p216 = scmp.eq.s32.totalorder %s31, 1
      %p217 = por %p215, %p216
      %p218 = scmp.ne.s32.totalorder %s209, %s210
      %p219 = scmp.eq.s32.totalorder %s31, 0
      %p220 = por %p218, %p219
      %p221 = scmp.ne.s32.totalorder %s209, %s210
      %p222 = scmp.eq.s32.totalorder %s32, 1
      %p223 = por %p221, %p222
      %p225 = scmp.ne.s32.totalorder %s210, %s224
      %p226 = scmp.eq.s32.totalorder %s32, 0
      %p227 = por %p225, %p226
      %s229 = sadd.s32 %s228, 1
      %p232 = scmp.eq.s32.totalorder %s26, 1
      %p233 = scmp.ne.s32.totalorder %s228, %s230
      %p234 = scmp.eq.s32.totalorder %s26, 0
      %p235 = por %p233, %p234
      %p236 = scmp.ne.s32.totalorder %s228, %s230
      %p237 = scmp.eq.s32.totalorder %s31, 1
      %p238 = por %p236, %p237
      %p239 = scmp.ne.s32.totalorder %s230, %s231
      %p240 = scmp.eq.s32.totalorder %s31, 0
      %p241 = por %p239, %p240
      %p242 = scmp.ne.s32.totalorder %s230, %s231
      %p243 = scmp.eq.s32.totalorder %s32, 1
      %p244 = por %p242, %p243
      %p246 = scmp.ne.s32.totalorder %s231, %s245
      %p247 = scmp.eq.s32.totalorder %s32, 0
      %p248 = por %p246, %p247
      %s250 = sadd.s32 %s249, 1
      %p253 = scmp.eq.s32.totalorder %s26, 1
      %p254 = scmp.ne.s32.totalorder %s249, %s251
      %p255 = scmp.eq.s32.totalorder %s26, 0
      %p256 = por %p254, %p255
      %p257 = scmp.ne.s32.totalorder %s249, %s251
      %p258 = scmp.eq.s32.totalorder %s31, 1
      %p259 = por %p257, %p258
      %p260 = scmp.ne.s32.totalorder %s251, %s252
      %p261 = scmp.eq.s32.totalorder %s31, 0
      %p262 = por %p260, %p261
      %p263 = scmp.ne.s32.totalorder %s251, %s252
      %p264 = scmp.eq.s32.totalorder %s32, 1
      %p265 = por %p263, %p264
      %p267 = scmp.ne.s32.totalorder %s252, %s266
      %p268 = scmp.eq.s32.totalorder %s32, 0
      %p269 = por %p267, %p268
      %s271 = sadd.s32 %s270, 1
      %p274 = scmp.eq.s32.totalorder %s26, 1
      %p275 = scmp.ne.s32.totalorder %s270, %s272
      %p276 = scmp.eq.s32.totalorder %s26, 0
      %p277 = por %p275, %p276
      %p278 = scmp.ne.s32.totalorder %s270, %s272
      %p279 = scmp.eq.s32.totalorder %s31, 1
      %p280 = por %p278, %p279
      %p281 = scmp.ne.s32.totalorder %s272, %s273
      %p282 = scmp.eq.s32.totalorder %s31, 0
      %p283 = por %p281, %p282
      %p284 = scmp.ne.s32.totalorder %s272, %s273
      %p285 = scmp.eq.s32.totalorder %s32, 1
      %p286 = por %p284, %p285
      %p288 = scmp.ne.s32.totalorder %s273, %s287
      %p289 = scmp.eq.s32.totalorder %s32, 0
      %p290 = por %p288, %p289
      %s292 = sadd.s32 %s291, 1
      %p295 = scmp.eq.s32.totalorder %s26, 1
      %p296 = scmp.ne.s32.totalorder %s291, %s293
      %p297 = scmp.eq.s32.totalorder %s26, 0
      %p298 = por %p296, %p297
      %p299 = scmp.ne.s32.totalorder %s291, %s293
      %p300 = scmp.eq.s32.totalorder %s31, 1
      %p301 = por %p299, %p300
      %p302 = scmp.ne.s32.totalorder %s293, %s294
      %p303 = scmp.eq.s32.totalorder %s31, 0
      %p304 = por %p302, %p303
      %p305 = scmp.ne.s32.totalorder %s293, %s294
      %p306 = scmp.eq.s32.totalorder %s32, 1
      %p307 = por %p305, %p306
      %p309 = scmp.ne.s32.totalorder %s294, %s308
      %p310 = scmp.eq.s32.totalorder %s32, 0
      %p311 = por %p309, %p310
      %s313 = sadd.s32 %s312, 1
      %p316 = scmp.eq.s32.totalorder %s26, 1
      %p317 = scmp.ne.s32.totalorder %s312, %s314
      %p318 = scmp.eq.s32.totalorder %s26, 0
      %p319 = por %p317, %p318
      %p320 = scmp.ne.s32.totalorder %s312, %s314
      %p321 = scmp.eq.s32.totalorder %s31, 1
      %p322 = por %p320, %p321
      %p323 = scmp.ne.s32.totalorder %s314, %s315
      %p324 = scmp.eq.s32.totalorder %s31, 0
      %p325 = por %p323, %p324
      %p326 = scmp.ne.s32.totalorder %s314, %s315
      %p327 = scmp.eq.s32.totalorder %s32, 1
      %p328 = por %p326, %p327
      %p330 = scmp.ne.s32.totalorder %s315, %s329
      %p331 = scmp.eq.s32.totalorder %s32, 0
      %p332 = por %p330, %p331
      %s334 = sadd.s32 %s333, 1
      %p337 = scmp.eq.s32.totalorder %s26, 1
      %p338 = scmp.ne.s32.totalorder %s333, %s335
      %p339 = scmp.eq.s32.totalorder %s26, 0
      %p340 = por %p338, %p339
      %p341 = scmp.ne.s32.totalorder %s333, %s335
      %p342 = scmp.eq.s32.totalorder %s31, 1
      %p343 = por %p341, %p342
      %p344 = scmp.ne.s32.totalorder %s335, %s336
      %p345 = scmp.eq.s32.totalorder %s31, 0
      %p346 = por %p344, %p345
      %p347 = scmp.ne.s32.totalorder %s335, %s336
      %p348 = scmp.eq.s32.totalorder %s32, 1
      %p349 = por %p347, %p348
      %p351 = scmp.ne.s32.totalorder %s336, %s350
      %p352 = scmp.eq.s32.totalorder %s32, 0
      %p353 = por %p351, %p352
      %s355 = sadd.s32 %s354, 1
      %p358 = scmp.eq.s32.totalorder %s26, 1
      %p359 = scmp.ne.s32.totalorder %s354, %s356
      %p360 = scmp.eq.s32.totalorder %s26, 0
      %p361 = por %p359, %p360
      %p362 = scmp.ne.s32.totalorder %s354, %s356
      %p363 = scmp.eq.s32.totalorder %s31, 1
      %p364 = por %p362, %p363
      %p365 = scmp.ne.s32.totalorder %s356, %s357
      %p366 = scmp.eq.s32.totalorder %s31, 0
      %p367 = por %p365, %p366
      %p368 = scmp.ne.s32.totalorder %s356, %s357
      %p369 = scmp.eq.s32.totalorder %s32, 1
      %p370 = por %p368, %p369
      %p372 = scmp.ne.s32.totalorder %s357, %s371
      %p373 = scmp.eq.s32.totalorder %s32, 0
      %p374 = por %p372, %p373
      %s376 = sadd.s32 %s375, 1
      %p379 = scmp.eq.s32.totalorder %s26, 1
      %p380 = scmp.ne.s32.totalorder %s375, %s377
      %p381 = scmp.eq.s32.totalorder %s26, 0
      %p382 = por %p380, %p381
      %p383 = scmp.ne.s32.totalorder %s375, %s377
      %p384 = scmp.eq.s32.totalorder %s31, 1
      %p385 = por %p383, %p384
      %p386 = scmp.ne.s32.totalorder %s377, %s378
      %p387 = scmp.eq.s32.totalorder %s31, 0
      %p388 = por %p386, %p387
      %p389 = scmp.ne.s32.totalorder %s377, %s378
      %p390 = scmp.eq.s32.totalorder %s32, 1
      %p391 = por %p389, %p390
      %p393 = scmp.ne.s32.totalorder %s378, %s392
      %p394 = scmp.eq.s32.totalorder %s32, 0
      %p395 = por %p393, %p394
      %s396 = ssub.s32 %s26, %s33
      %p397 = scmp.eq.s32.totalorder %s396, 0
      %s399 = sadd.s32 %s398, 1
      %s400 = scalar_select %p397, %s398, %s399
      %p403 = pneg %p397
      %p404 = scmp.eq.s32.totalorder %s26, 1
      %p405 = por %p403, %p404
      %p406 = scmp.ne.s32.totalorder %s398, %s401
      %p407 = scmp.eq.s32.totalorder %s26, 0
      %p408 = por %p406, %p407
      %p409 = scmp.ne.s32.totalorder %s398, %s401
      %p410 = scmp.eq.s32.totalorder %s31, 1
      %p411 = por %p409, %p410
      %p412 = scmp.ne.s32.totalorder %s401, %s402
      %p413 = scmp.eq.s32.totalorder %s31, 0
      %p414 = por %p412, %p413
      %p415 = scmp.ne.s32.totalorder %s401, %s402
      %p416 = scmp.eq.s32.totalorder %s32, 1
      %p417 = por %p415, %p416
      %p419 = scmp.ne.s32.totalorder %s402, %s418
      %p420 = scmp.eq.s32.totalorder %s32, 0
      %p421 = por %p419, %p420
      %p422 = scmp.le.s32.totalorder 1, %s26
      %p423 = scmp.lt.s32.totalorder %s26, 3
      %p424 = pnand %p422, %p423
      %p425 = pneg %p424
      // Predicated region
      $region9: #{_lambda_.1} parent=5 // pred_check
        _
      $region10: #{_lambda_.1} parent=5 // pred_check_branch
        %427 = sbr.rel (%p424) target = $region12
      $region11: #{_lambda_.1} parent=5 // pred_region
        %s428 = ssub.s32 %s26, 1
        // Predicated region
        $region13: #{_lambda_.1} parent=11 // pred_check
          %p429 = pneg %p73
        $region14: #{_lambda_.1} parent=11 // pred_check_branch
          %431 = sbr.rel (%p429) target = $region16
        $region15: #{_lambda_.1} parent=11 // pred_region
          _
        $region16: #{_lambda_.1} parent=11 // pred_fallthru
          _
        // Predicated region
        $region17: #{_lambda_.1} parent=11 // pred_check
          %p432 = pneg %p94
        $region18: #{_lambda_.1} parent=11 // pred_check_branch
          %434 = sbr.rel (%p432) target = $region20
        $region19: #{_lambda_.1} parent=11 // pred_region
          _
        $region20: #{_lambda_.1} parent=11 // pred_fallthru
          _
        // Predicated region
        $region21: #{_lambda_.1} parent=11 // pred_check
          %p435 = pneg %p115
        $region22: #{_lambda_.1} parent=11 // pred_check_branch
          %437 = sbr.rel (%p435) target = $region24
        $region23: #{_lambda_.1} parent=11 // pred_region
          _
        $region24: #{_lambda_.1} parent=11 // pred_fallthru
          _
        // Predicated region
        $region25: #{_lambda_.1} parent=11 // pred_check
          %p438 = pneg %p136
        $region26: #{_lambda_.1} parent=11 // pred_check_branch
          %440 = sbr.rel (%p438) target = $region28
        $region27: #{_lambda_.1} parent=11 // pred_region
          _
        $region28: #{_lambda_.1} parent=11 // pred_fallthru
          _
        // Predicated region
        $region29: #{_lambda_.1} parent=11 // pred_check
          %p441 = pneg %p157
        $region30: #{_lambda_.1} parent=11 // pred_check_branch
          %443 = sbr.rel (%p441) target = $region32
        $region31: #{_lambda_.1} parent=11 // pred_region
          _
        $region32: #{_lambda_.1} parent=11 // pred_fallthru
          _
        // Predicated region
        $region33: #{_lambda_.1} parent=11 // pred_check
          %p444 = pneg %p178
        $region34: #{_lambda_.1} parent=11 // pred_check_branch
          %446 = sbr.rel (%p444) target = $region36
        $region35: #{_lambda_.1} parent=11 // pred_region
          _
        $region36: #{_lambda_.1} parent=11 // pred_fallthru
          _
        // Predicated region
        $region37: #{_lambda_.1} parent=11 // pred_check
          %p447 = pneg %p199
        $region38: #{_lambda_.1} parent=11 // pred_check_branch
          %449 = sbr.rel (%p447) target = $region40
        $region39: #{_lambda_.1} parent=11 // pred_region
          _
        $region40: #{_lambda_.1} parent=11 // pred_fallthru
          _
        // Predicated region
        $region41: #{_lambda_.1} parent=11 // pred_check
          %p450 = pneg %p220
        $region42: #{_lambda_.1} parent=11 // pred_check_branch
          %452 = sbr.rel (%p450) target = $region44
        $region43: #{_lambda_.1} parent=11 // pred_region
          _
        $region44: #{_lambda_.1} parent=11 // pred_fallthru
          _
        // Predicated region
        $region45: #{_lambda_.1} parent=11 // pred_check
          %p453 = pneg %p241
        $region46: #{_lambda_.1} parent=11 // pred_check_branch
          %455 = sbr.rel (%p453) target = $region48
        $region47: #{_lambda_.1} parent=11 // pred_region
          _
        $region48: #{_lambda_.1} parent=11 // pred_fallthru
          _
        // Predicated region
        $region49: #{_lambda_.1} parent=11 // pred_check
          %p456 = pneg %p262
        $region50: #{_lambda_.1} parent=11 // pred_check_branch
          %458 = sbr.rel (%p456) target = $region52
        $region51: #{_lambda_.1} parent=11 // pred_region
          _
        $region52: #{_lambda_.1} parent=11 // pred_fallthru
          _
        // Predicated region
        $region53: #{_lambda_.1} parent=11 // pred_check
          %p459 = pneg %p283
        $region54: #{_lambda_.1} parent=11 // pred_check_branch
          %461 = sbr.rel (%p459) target = $region56
        $region55: #{_lambda_.1} parent=11 // pred_region
          _
        $region56: #{_lambda_.1} parent=11 // pred_fallthru
          _
        // Predicated region
        $region57: #{_lambda_.1} parent=11 // pred_check
          %p462 = pneg %p304
        $region58: #{_lambda_.1} parent=11 // pred_check_branch
          %464 = sbr.rel (%p462) target = $region60
        $region59: #{_lambda_.1} parent=11 // pred_region
          _
        $region60: #{_lambda_.1} parent=11 // pred_fallthru
          _
        // Predicated region
        $region61: #{_lambda_.1} parent=11 // pred_check
          %p465 = pneg %p325
        $region62: #{_lambda_.1} parent=11 // pred_check_branch
          %467 = sbr.rel (%p465) target = $region64
        $region63: #{_lambda_.1} parent=11 // pred_region
          _
        $region64: #{_lambda_.1} parent=11 // pred_fallthru
          _
        // Predicated region
        $region65: #{_lambda_.1} parent=11 // pred_check
          %p468 = pneg %p346
        $region66: #{_lambda_.1} parent=11 // pred_check_branch
          %470 = sbr.rel (%p468) target = $region68
        $region67: #{_lambda_.1} parent=11 // pred_region
          _
        $region68: #{_lambda_.1} parent=11 // pred_fallthru
          _
        // Predicated region
        $region69: #{_lambda_.1} parent=11 // pred_check
          %p471 = pneg %p367
        $region70: #{_lambda_.1} parent=11 // pred_check_branch
          %473 = sbr.rel (%p471) target = $region72
        $region71: #{_lambda_.1} parent=11 // pred_region
          _
        $region72: #{_lambda_.1} parent=11 // pred_fallthru
          _
        // Predicated region
        $region73: #{_lambda_.1} parent=11 // pred_check
          %p474 = pneg %p388
        $region74: #{_lambda_.1} parent=11 // pred_check_branch
          %476 = sbr.rel (%p474) target = $region76
        $region75: #{_lambda_.1} parent=11 // pred_region
          _
        $region76: #{_lambda_.1} parent=11 // pred_fallthru
          _
      $region12: #{_lambda_.1} parent=5 // pred_fallthru
        _
      %p477 = scmp.lt.s32.totalorder %s26, 2
      // Predicated region
      $region77: #{_lambda_.1} parent=5 // pred_check
        %p478 = pneg %p477
      $region78: #{_lambda_.1} parent=5 // pred_check_branch
        %480 = sbr.rel (%p478) target = $region80
      $region79: #{_lambda_.1} parent=5 // pred_region
        // Predicated region
        $region81: #{_lambda_.1} parent=79 // pred_check
          %p481 = pneg %p46
        $region82: #{_lambda_.1} parent=79 // pred_check_branch
          %483 = sbr.rel (%p481) target = $region84
        $region83: #{_lambda_.1} parent=79 // pred_region
          %p484 = scmp.lt.s32.totalorder %s26, 1
          %s485 = scalar_select %p484, %s26, 1
          %s486 = smul.addr %s485, 32
          %s487 = smul.addr %s486, 4
          %s488 = scalar_lea.vmem %s0, %s487
        $region84: #{_lambda_.1} parent=79 // pred_fallthru
          _
      $region80: #{_lambda_.1} parent=5 // pred_fallthru
        _
      %p489 = scmp.le.s32.totalorder 1, %s26
      %p490 = scmp.lt.s32.totalorder %s26, 3
      %p491 = pnand %p489, %p490
      %p492 = pneg %p491
      // Predicated region
      $region85: #{_lambda_.1} parent=5 // pred_check
        _
      $region86: #{_lambda_.1} parent=5 // pred_check_branch
        %494 = sbr.rel (%p491) target = $region88
      $region87: #{_lambda_.1} parent=5 // pred_region
        %s495 = ssub.s32 %s26, 1
        %p496 = scmp.lt.s32.totalorder %s31, 1
        %s497 = scalar_select %p496, %s31, 1
        %s498 = smul.addr %s497, 32
        %s499 = smul.addr %s498, 4
        %s500 = scalar_lea.vmem %s0, %s499
        %p501 = pneg %p52
        %p502 = pneg %p49
        %p503 = pneg %p73
        %p504 = pneg %p70
        %p505 = pneg %p94
        %p506 = pneg %p91
        %p507 = pneg %p115
        %p508 = pneg %p112
        %p509 = pneg %p136
        %p510 = pneg %p133
        %p511 = pneg %p157
        %p512 = pneg %p154
        %p513 = pneg %p178
        %p514 = pneg %p175
        %p515 = pneg %p199
        %p516 = pneg %p196
        %p517 = pneg %p220
        %p518 = pneg %p217
        %p519 = pneg %p241
        %p520 = pneg %p238
        %p521 = pneg %p262
        %p522 = pneg %p259
        %p523 = pneg %p283
        %p524 = pneg %p280
        %p525 = pneg %p304
        %p526 = pneg %p301
        %p527 = pneg %p325
        %p528 = pneg %p322
        %p529 = pneg %p346
        %p530 = pneg %p343
        %p531 = pneg %p367
        %p532 = pneg %p364
        %p533 = pneg %p388
        %p534 = pneg %p385
        %p535 = pneg %p414
        %p536 = pneg %p411
        %s537 = sand.u32 %s401, 1
        %s538 = scalar_lea.sflag [#allocation13], %s537
        %s539 = sand.u32 %s401, 1
        %s540 = smul.addr %s539, 16
        %s541 = scalar_lea.vmem [#allocation12], %s540
        %p542 = scmp.lt.s32.totalorder %s31, 1
        %s543 = scalar_select %p542, %s31, 1
        %s544 = smul.addr %s543, 32
        %s545 = smul.addr %s544, 4
        %s546 = scalar_lea.vmem %s0, %s545
        %vm548 = vcmask 261120
        %549 = vst.msk [vmem:[#allocation2] sm:$0xff] %vm548, 0.0
        %550 = vst.msk [vmem:[#allocation2 + $0x8] sm:$0xff] %vm548, 0.0
        %vm551 = vcmask 254976
        %552 = vst.msk [vmem:[#allocation2 + $0x10] sm:$0x3] %vm551, 0.0
        %553 = vst.msk [vmem:[#allocation2 + $0x18] sm:$0xff] %vm548, 0.0
        %554 = vst.msk [vmem:[#allocation2 + $0x20] sm:$0xff] %vm548, 0.0
        %555 = vst.msk [vmem:[#allocation2 + $0x28] sm:$0x3] %vm551, 0.0
        %556 = vst.msk [vmem:[#allocation2 + $0x30] sm:$0xff] %vm548, 0.0
        %557 = vst.msk [vmem:[#allocation2 + $0x38] sm:$0xff] %vm548, 0.0
        %558 = vst.msk [vmem:[#allocation2 + $0x40] sm:$0x3] %vm551, 0.0
        %559 = vst.msk [vmem:[#allocation2 + $0x48] sm:$0xff] %vm548, 0.0
        %560 = vst.msk [vmem:[#allocation2 + $0x50] sm:$0xff] %vm548, 0.0
        %561 = vst.msk [vmem:[#allocation2 + $0x58] sm:$0x3] %vm551, 0.0
        %562 = vst.msk [vmem:[#allocation2 + $0x60] sm:$0xff] %vm548, 0.0
        %563 = vst.msk [vmem:[#allocation2 + $0x68] sm:$0xff] %vm548, 0.0
        %564 = vst.msk [vmem:[#allocation2 + $0x70] sm:$0x3] %vm551, 0.0
        %565 = vst.msk [vmem:[#allocation2 + $0x78] sm:$0xff] %vm548, 0.0
        %566 = vst.msk [vmem:[#allocation2 + $0x80] sm:$0xff] %vm548, 0.0
        %567 = vst.msk [vmem:[#allocation2 + $0x88] sm:$0x3] %vm551, 0.0
        %568 = vst.msk [vmem:[#allocation2 + $0x90] sm:$0xff] %vm548, 0.0
        %569 = vst.msk [vmem:[#allocation2 + $0x98] sm:$0xff] %vm548, 0.0
        %570 = vst.msk [vmem:[#allocation2 + $0xa0] sm:$0x3] %vm551, 0.0
        %571 = vst.msk [vmem:[#allocation2 + $0xa8] sm:$0xff] %vm548, 0.0
        %572 = vst.msk [vmem:[#allocation2 + $0xb0] sm:$0xff] %vm548, 0.0
        %573 = vst.msk [vmem:[#allocation2 + $0xb8] sm:$0x3] %vm551, 0.0
        %574 = vst.msk [vmem:[#allocation2 + $0xc0] sm:$0xff] %vm548, 0.0
        %575 = vst.msk [vmem:[#allocation2 + $0xc8] sm:$0xff] %vm548, 0.0
        %576 = vst.msk [vmem:[#allocation2 + $0xd0] sm:$0x3] %vm551, 0.0
        %577 = vst.msk [vmem:[#allocation2 + $0xd8] sm:$0xff] %vm548, 0.0
        %578 = vst.msk [vmem:[#allocation2 + $0xe0] sm:$0xff] %vm548, 0.0
        %579 = vst.msk [vmem:[#allocation2 + $0xe8] sm:$0x3] %vm551, 0.0
        %580 = vst.msk [vmem:[#allocation2 + $0xf0] sm:$0xff] %vm548, 0.0
        %581 = vst.msk [vmem:[#allocation2 + $0xf8] sm:$0xff] %vm548, 0.0
        %582 = vst.msk [vmem:[#allocation2 + $0x100] sm:$0x3] %vm551, 0.0
        %583 = vst.msk [vmem:[#allocation2 + $0x108] sm:$0xff] %vm548, 0.0
        %584 = vst.msk [vmem:[#allocation2 + $0x110] sm:$0xff] %vm548, 0.0
        %585 = vst.msk [vmem:[#allocation2 + $0x118] sm:$0x3] %vm551, 0.0
        %586 = vst.msk [vmem:[#allocation2 + $0x120] sm:$0xff] %vm548, 0.0
        %587 = vst.msk [vmem:[#allocation2 + $0x128] sm:$0xff] %vm548, 0.0
        %588 = vst.msk [vmem:[#allocation2 + $0x130] sm:$0x3] %vm551, 0.0
        %589 = vst.msk [vmem:[#allocation2 + $0x138] sm:$0xff] %vm548, 0.0
        %590 = vst.msk [vmem:[#allocation2 + $0x140] sm:$0xff] %vm548, 0.0
        %591 = vst.msk [vmem:[#allocation2 + $0x148] sm:$0x3] %vm551, 0.0
        %592 = vst.msk [vmem:[#allocation2 + $0x150] sm:$0xff] %vm548, 0.0
        %593 = vst.msk [vmem:[#allocation2 + $0x158] sm:$0xff] %vm548, 0.0
        %594 = vst.msk [vmem:[#allocation2 + $0x160] sm:$0x3] %vm551, 0.0
        %595 = vst.msk [vmem:[#allocation2 + $0x168] sm:$0xff] %vm548, 0.0
        %596 = vst.msk [vmem:[#allocation2 + $0x170] sm:$0xff] %vm548, 0.0
        %597 = vst.msk [vmem:[#allocation2 + $0x178] sm:$0x3] %vm551, 0.0
        %598 = vst.msk [vmem:[#allocation2 + $0x180] sm:$0xff] %vm548, 0.0
        %599 = vst.msk [vmem:[#allocation2 + $0x188] sm:$0xff] %vm548, 0.0
        %600 = vst.msk [vmem:[#allocation2 + $0x190] sm:$0x3] %vm551, 0.0
        %601 = vst.msk [vmem:[#allocation2 + $0x198] sm:$0xff] %vm548, 0.0
        %602 = vst.msk [vmem:[#allocation2 + $0x1a0] sm:$0xff] %vm548, 0.0
        %603 = vst.msk [vmem:[#allocation2 + $0x1a8] sm:$0x3] %vm551, 0.0
        %vm604 = vcmask 523264
        %605 = vst.msk [vmem:[#allocation3] sm:$0xff] %vm604, 0.0
        %vm606 = vcmask 517120
        %607 = vst.msk [vmem:[#allocation3 + $0x8] sm:$0x3] %vm606, 0.0
        %608 = vst.msk [vmem:[#allocation3 + $0x10] sm:$0xff] %vm604, 0.0
        %609 = vst.msk [vmem:[#allocation3 + $0x18] sm:$0x3] %vm606, 0.0
        %610 = vst.msk [vmem:[#allocation3 + $0x20] sm:$0xff] %vm604, 0.0
        %611 = vst.msk [vmem:[#allocation3 + $0x28] sm:$0x3] %vm606, 0.0
        %612 = vst.msk [vmem:[#allocation3 + $0x30] sm:$0xff] %vm604, 0.0
        %613 = vst.msk [vmem:[#allocation3 + $0x38] sm:$0x3] %vm606, 0.0
        %614 = vst.msk [vmem:[#allocation3 + $0x40] sm:$0xff] %vm604, 0.0
        %615 = vst.msk [vmem:[#allocation3 + $0x48] sm:$0x3] %vm606, 0.0
        %616 = vst.msk [vmem:[#allocation3 + $0x50] sm:$0xff] %vm604, 0.0
        %617 = vst.msk [vmem:[#allocation3 + $0x58] sm:$0x3] %vm606, 0.0
        %618 = vst.msk [vmem:[#allocation3 + $0x60] sm:$0xff] %vm604, 0.0
        %619 = vst.msk [vmem:[#allocation3 + $0x68] sm:$0x3] %vm606, 0.0
        %620 = vst.msk [vmem:[#allocation3 + $0x70] sm:$0xff] %vm604, 0.0
        %621 = vst.msk [vmem:[#allocation3 + $0x78] sm:$0x3] %vm606, 0.0
        %622 = vst.msk [vmem:[#allocation3 + $0x80] sm:$0xff] %vm604, 0.0
        %623 = vst.msk [vmem:[#allocation3 + $0x88] sm:$0x3] %vm606, 0.0
        %624 = vst.msk [vmem:[#allocation3 + $0x90] sm:$0xff] %vm604, 0.0
        %625 = vst.msk [vmem:[#allocation3 + $0x98] sm:$0x3] %vm606, 0.0
        %626 = vst.msk [vmem:[#allocation4] sm:$0xff] %vm604, 0.0
        %627 = vst.msk [vmem:[#allocation4 + $0x8] sm:$0x3] %vm606, 0.0
        %628 = vst.msk [vmem:[#allocation4 + $0x10] sm:$0xff] %vm604, 0.0
        %629 = vst.msk [vmem:[#allocation4 + $0x18] sm:$0x3] %vm606, 0.0
        %630 = vst.msk [vmem:[#allocation4 + $0x20] sm:$0xff] %vm604, 0.0
        %631 = vst.msk [vmem:[#allocation4 + $0x28] sm:$0x3] %vm606, 0.0
        %632 = vst.msk [vmem:[#allocation4 + $0x30] sm:$0xff] %vm604, 0.0
        %633 = vst.msk [vmem:[#allocation4 + $0x38] sm:$0x3] %vm606, 0.0
        %634 = vst.msk [vmem:[#allocation4 + $0x40] sm:$0xff] %vm604, 0.0
        %635 = vst.msk [vmem:[#allocation4 + $0x48] sm:$0x3] %vm606, 0.0
        %636 = vst.msk [vmem:[#allocation4 + $0x50] sm:$0xff] %vm604, 0.0
        %637 = vst.msk [vmem:[#allocation4 + $0x58] sm:$0x3] %vm606, 0.0
        %638 = vst.msk [vmem:[#allocation4 + $0x60] sm:$0xff] %vm604, 0.0
        %639 = vst.msk [vmem:[#allocation4 + $0x68] sm:$0x3] %vm606, 0.0
        %640 = vst.msk [vmem:[#allocation4 + $0x70] sm:$0xff] %vm604, 0.0
        %641 = vst.msk [vmem:[#allocation4 + $0x78] sm:$0x3] %vm606, 0.0
        %642 = vst.msk [vmem:[#allocation4 + $0x80] sm:$0xff] %vm604, 0.0
        %643 = vst.msk [vmem:[#allocation4 + $0x88] sm:$0x3] %vm606, 0.0
        %644 = vst.msk [vmem:[#allocation4 + $0x90] sm:$0xff] %vm604, 0.0
        %645 = vst.msk [vmem:[#allocation4 + $0x98] sm:$0x3] %vm606, 0.0
        %646 = vst.msk [vmem:[#allocation5] sm:$0xff] %vm604, 0.0
        %647 = vst.msk [vmem:[#allocation5 + $0x8] sm:$0x3] %vm606, 0.0
        %648 = vst.msk [vmem:[#allocation5 + $0x10] sm:$0xff] %vm604, 0.0
        %649 = vst.msk [vmem:[#allocation5 + $0x18] sm:$0x3] %vm606, 0.0
        %650 = vst.msk [vmem:[#allocation5 + $0x20] sm:$0xff] %vm604, 0.0
        %651 = vst.msk [vmem:[#allocation5 + $0x28] sm:$0x3] %vm606, 0.0
        %652 = vst.msk [vmem:[#allocation5 + $0x30] sm:$0xff] %vm604, 0.0
        %653 = vst.msk [vmem:[#allocation5 + $0x38] sm:$0x3] %vm606, 0.0
        %654 = vst.msk [vmem:[#allocation5 + $0x40] sm:$0xff] %vm604, 0.0
        %655 = vst.msk [vmem:[#allocation5 + $0x48] sm:$0x3] %vm606, 0.0
        %656 = vst.msk [vmem:[#allocation5 + $0x50] sm:$0xff] %vm604, 0.0
        %657 = vst.msk [vmem:[#allocation5 + $0x58] sm:$0x3] %vm606, 0.0
        %658 = vst.msk [vmem:[#allocation5 + $0x60] sm:$0xff] %vm604, 0.0
        %659 = vst.msk [vmem:[#allocation5 + $0x68] sm:$0x3] %vm606, 0.0
        %660 = vst.msk [vmem:[#allocation5 + $0x70] sm:$0xff] %vm604, 0.0
        %661 = vst.msk [vmem:[#allocation5 + $0x78] sm:$0x3] %vm606, 0.0
        %662 = vst.msk [vmem:[#allocation5 + $0x80] sm:$0xff] %vm604, 0.0
        %663 = vst.msk [vmem:[#allocation5 + $0x88] sm:$0x3] %vm606, 0.0
        %664 = vst.msk [vmem:[#allocation5 + $0x90] sm:$0xff] %vm604, 0.0
        %665 = vst.msk [vmem:[#allocation5 + $0x98] sm:$0x3] %vm606, 0.0
        %666 = vst [vmem:[#allocation8] sm:$0x3f] 0.0
        %667 = vst [vmem:[#allocation8 + $0x8] sm:$0x3f] 0.0
        %668 = vst [vmem:[#allocation8 + $0x10] sm:$0x3f] 0.0
        %669 = vst [vmem:[#allocation8 + $0x18] sm:$0x3f] 0.0
        %670 = vst [vmem:[#allocation8 + $0x20] sm:$0x3f] 0.0
        %671 = vst [vmem:[#allocation8 + $0x28] sm:$0x3f] 0.0
        %672 = vst [vmem:[#allocation9] sm:$0x3f] 0.0
        %673 = vst [vmem:[#allocation9 + $0x8] sm:$0x3f] 0.0
        %674 = vst [vmem:[#allocation9 + $0x10] sm:$0x3f] 0.0
        %675 = vst [vmem:[#allocation9 + $0x18] sm:$0x3f] 0.0
        %676 = vst [vmem:[#allocation9 + $0x20] sm:$0x3f] 0.0
        %677 = vst [vmem:[#allocation9 + $0x28] sm:$0x3f] 0.0
        %v678 = vld [vmem:[%s546] sm:$0xf]
        %v679 = vld [vmem:[%s546 + $0x4] sm:$0xf]
        %v680 = vld [vmem:[%s546 + $0x8] sm:$0xf]
        %v681 = vld [vmem:[%s546 + $0xc] sm:$0xf]
        %v682 = vld [vmem:[%s546 + $0x10] sm:$0xf]
        %v683 = vld [vmem:[%s546 + $0x14] sm:$0xf]
        %v684 = vld [vmem:[%s546 + $0x18] sm:$0xf]
        %v685 = vld [vmem:[%s546 + $0x1c] sm:$0xf]
        %v686 = vld [vmem:[%s546 + $0x20] sm:$0xf]
        %v687 = vld [vmem:[%s546 + $0x24] sm:$0xf]
        %v688 = vld [vmem:[%s546 + $0x28] sm:$0xf]
        %v689 = vld [vmem:[%s546 + $0x2c] sm:$0xf]
        %v690 = vld [vmem:[%s546 + $0x30] sm:$0xf]
        %v691 = vld [vmem:[%s546 + $0x34] sm:$0xf]
        %v692 = vld [vmem:[%s546 + $0x38] sm:$0xf]
        %v693 = vld [vmem:[%s546 + $0x3c] sm:$0xf]
        %v694 = vld [vmem:[%s546 + $0x40] sm:$0xf]
        %v695 = vld [vmem:[%s546 + $0x44] sm:$0xf]
        %v696 = vld [vmem:[%s546 + $0x48] sm:$0xf]
        %v697 = vld [vmem:[%s546 + $0x4c] sm:$0xf]
        %v698 = vld [vmem:[%s546 + $0x50] sm:$0xf]
        %v699 = vld [vmem:[%s546 + $0x54] sm:$0xf]
        %v700 = vld [vmem:[%s546 + $0x58] sm:$0xf]
        %v701 = vld [vmem:[%s546 + $0x5c] sm:$0xf]
        %v702 = vld [vmem:[%s546 + $0x60] sm:$0xf]
        %v703 = vld [vmem:[%s546 + $0x64] sm:$0xf]
        %v704 = vld [vmem:[%s546 + $0x68] sm:$0xf]
        %v705 = vld [vmem:[%s546 + $0x6c] sm:$0xf]
        %v706 = vld [vmem:[%s546 + $0x70] sm:$0xf]
        %v707 = vld [vmem:[%s546 + $0x74] sm:$0xf]
        %v708 = vld [vmem:[%s546 + $0x78] sm:$0xf]
        %v709 = vld [vmem:[%s546 + $0x7c] sm:$0xf]
        %v710 = vld [vmem:[%s1] sm:$0xf]
        %v711 = vld [vmem:[%s1 + $0x4] sm:$0xf]
        %v712 = vld [vmem:[%s1 + $0x8] sm:$0xf]
        %v713 = vld [vmem:[%s1 + $0xc] sm:$0xf]
        %v714 = vld [vmem:[%s1 + $0x10] sm:$0x3]
        %v715 = vld [vmem:[%s2] sm:$0x1]
        %v717 = vlaneseq
        %v718 = vshrl.u32 %v717, 7
        %v719 = vsub.s32 0, %v718
        %v720 = vrot.slane %v715, %v719
        %v754 = vunpack.c.l.b16 %v678
        %v755 = vunpack.c.l.b16 %v679
        %v756 = vunpack.c.l.b16 %v680
        %v757 = vunpack.c.l.b16 %v681
        %v758 = vunpack.c.l.b16 %v682
        %v759 = vunpack.c.l.b16 %v683
        %v760 = vunpack.c.l.b16 %v684
        %v761 = vunpack.c.l.b16 %v685
        %v762 = vunpack.c.l.b16 %v686
        %v763 = vunpack.c.l.b16 %v687
        %v764 = vunpack.c.l.b16 %v688
        %v765 = vunpack.c.l.b16 %v689
        %v766 = vunpack.c.l.b16 %v690
        %v767 = vunpack.c.l.b16 %v691
        %v768 = vunpack.c.l.b16 %v692
        %v769 = vunpack.c.l.b16 %v693
        %v770 = vunpack.c.l.b16 %v694
        %v771 = vunpack.c.l.b16 %v695
        %v772 = vunpack.c.l.b16 %v696
        %v773 = vunpack.c.l.b16 %v697
        %v774 = vunpack.c.l.b16 %v698
        %v775 = vunpack.c.l.b16 %v699
        %v776 = vunpack.c.l.b16 %v700
        %v777 = vunpack.c.l.b16 %v701
        %v778 = vunpack.c.l.b16 %v702
        %v779 = vunpack.c.l.b16 %v703
        %v780 = vunpack.c.l.b16 %v704
        %v781 = vunpack.c.l.b16 %v705
        %v782 = vunpack.c.l.b16 %v706
        %v783 = vunpack.c.l.b16 %v707
        %v784 = vunpack.c.l.b16 %v708
        %v785 = vunpack.c.l.b16 %v709
        %v786 = vpack.c.b16 %v755, %v754
        %v787 = vpack.c.b16 %v757, %v756
        %v788 = vpack.c.b16 %v759, %v758
        %v789 = vpack.c.b16 %v761, %v760
        %v790 = vpack.c.b16 %v763, %v762
        %v791 = vpack.c.b16 %v765, %v764
        %v792 = vpack.c.b16 %v767, %v766
        %v793 = vpack.c.b16 %v769, %v768
        %v794 = vpack.c.b16 %v771, %v770
        %v795 = vpack.c.b16 %v773, %v772
        %v796 = vpack.c.b16 %v775, %v774
        %v797 = vpack.c.b16 %v777, %v776
        %v798 = vpack.c.b16 %v779, %v778
        %v799 = vpack.c.b16 %v781, %v780
        %v800 = vpack.c.b16 %v783, %v782
        %v801 = vpack.c.b16 %v785, %v784
        %v807 = vunpack.c.l.b16 %v710
        %v808 = vunpack.c.l.b16 %v711
        %v809 = vunpack.c.l.b16 %v712
        %v810 = vunpack.c.l.b16 %v713
        %v811 = vunpack.c.l.b16 %v714
        %v812 = vpack.c.b16 %v808, %v807
        %v813 = vpack.c.b16 %v810, %v809
        %v814 = vpack.c.b16 %v811, %v811
        %vm817 = vcmask 293888
        %v819 = vsel %vm817, %v786, 0
        %v822 = vsel %vm817, %v787, 0
        %v825 = vsel %vm817, %v788, 0
        %v828 = vsel %vm817, %v789, 0
        %v831 = vsel %vm817, %v790, 0
        %v834 = vsel %vm817, %v791, 0
        %v837 = vsel %vm817, %v792, 0
        %v840 = vsel %vm817, %v793, 0
        %v843 = vsel %vm817, %v794, 0
        %v846 = vsel %vm817, %v795, 0
        %v849 = vsel %vm817, %v796, 0
        %v852 = vsel %vm817, %v797, 0
        %v855 = vsel %vm817, %v798, 0
        %v858 = vsel %vm817, %v799, 0
        %v861 = vsel %vm817, %v800, 0
        %v864 = vsel %vm817, %v801, 0
        %vm866 = vcmask 1041408
        %v868 = vsel %vm866, %v814, 0
        %870 = vmatprep.subr.bf16.mxu0 0
        %871 = vmatpush1.bf16.msra.mxu0 0
        %872 = vmatprep.subr.bf16.mxu0 0
        %873 = vmatpush1.bf16.msra.mxu0 0
        %874 = vmatprep.subr.bf16.mxu0 0
        %875 = vmatpush1.bf16.msra.mxu0 0
        %876 = vmatprep.subr.bf16.mxu0 0
        %877 = vmatpush1.bf16.msra.mxu0 0
        %878 = vmatprep.subr.bf16.mxu0 0
        %879 = vmatpush1.bf16.msra.mxu0 0
        %880 = vmatprep.subr.bf16.mxu0 0
        %881 = vmatpush1.bf16.msra.mxu0 %v868
        %882 = vmatprep.subr.bf16.mxu0 0
        %883 = vmatpush1.bf16.msra.mxu0 %v813
        %884 = vmatprep.subr.bf16.mxu0 0
        %885 = vmatpush1.bf16.msra.mxu0 %v812
        %886 = vmatprep.subr.bf16.mxu0 0
        %887 = vmatpush2.bf16.msra.mxu0 0
        %888 = vmatprep.subr.bf16.mxu0 0
        %889 = vmatpush2.bf16.msra.mxu0 0
        %890 = vmatprep.subr.bf16.mxu0 0
        %891 = vmatpush2.bf16.msra.mxu0 0
        %892 = vmatprep.subr.bf16.mxu0 0
        %893 = vmatpush2.bf16.msra.mxu0 0
        %894 = vmatprep.subr.bf16.mxu0 0
        %895 = vmatpush2.bf16.msra.mxu0 0
        %896 = vmatprep.subr.bf16.mxu0 0
        %897 = vmatpush2.bf16.msra.mxu0 0
        %898 = vmatprep.subr.bf16.mxu0 0
        %899 = vmatpush2.bf16.msra.mxu0 0
        %900 = vmatprep.subr.bf16.mxu0 0
        %901 = vmatpush2.bf16.msra.mxu0 0
        %902 = vmatprep.mubr.bf16.mxu0 0
        %903 = vmatmul.mubr.bf16.gmra.mxu0 %v819
        %v904 = vpop.f32.mrf.mxu0
        %v905 = vadd.f32 %v720, %v904
        %v906 = vpop.f32.mrf.mxu0
        %v907 = vpop.f32.mrf.mxu0
        %v908 = vadd.f32 %v720, %v907
        %v909 = vpop.f32.mrf.mxu0
        %910 = vmatprep.mubr.bf16.mxu0 0
        %911 = vmatmul.mubr.bf16.gmra.mxu0 %v822
        %v912 = vpop.f32.mrf.mxu0
        %v913 = vadd.f32 %v720, %v912
        %v914 = vpop.f32.mrf.mxu0
        %v915 = vpop.f32.mrf.mxu0
        %v916 = vadd.f32 %v720, %v915
        %v917 = vpop.f32.mrf.mxu0
        %918 = vmatprep.mubr.bf16.mxu0 0
        %919 = vmatmul.mubr.bf16.gmra.mxu0 %v825
        %v920 = vpop.f32.mrf.mxu0
        %v921 = vadd.f32 %v720, %v920
        %v922 = vpop.f32.mrf.mxu0
        %v923 = vpop.f32.mrf.mxu0
        %v924 = vadd.f32 %v720, %v923
        %v925 = vpop.f32.mrf.mxu0
        %926 = vmatprep.mubr.bf16.mxu0 0
        %927 = vmatmul.mubr.bf16.gmra.mxu0 %v828
        %v928 = vpop.f32.mrf.mxu0
        %v929 = vadd.f32 %v720, %v928
        %v930 = vpop.f32.mrf.mxu0
        %v931 = vpop.f32.mrf.mxu0
        %v932 = vadd.f32 %v720, %v931
        %v933 = vpop.f32.mrf.mxu0
        %934 = vmatprep.mubr.bf16.mxu0 0
        %935 = vmatmul.mubr.bf16.gmra.mxu0 %v831
        %v936 = vpop.f32.mrf.mxu0
        %v937 = vadd.f32 %v720, %v936
        %v938 = vpop.f32.mrf.mxu0
        %v939 = vpop.f32.mrf.mxu0
        %v940 = vadd.f32 %v720, %v939
        %v941 = vpop.f32.mrf.mxu0
        %942 = vmatprep.mubr.bf16.mxu0 0
        %943 = vmatmul.mubr.bf16.gmra.mxu0 %v834
        %v944 = vpop.f32.mrf.mxu0
        %v945 = vadd.f32 %v720, %v944
        %v946 = vpop.f32.mrf.mxu0
        %v947 = vpop.f32.mrf.mxu0
        %v948 = vadd.f32 %v720, %v947
        %v949 = vpop.f32.mrf.mxu0
        %950 = vmatprep.mubr.bf16.mxu0 0
        %951 = vmatmul.mubr.bf16.gmra.mxu0 %v837
        %v952 = vpop.f32.mrf.mxu0
        %v953 = vadd.f32 %v720, %v952
        %v954 = vpop.f32.mrf.mxu0
        %v955 = vpop.f32.mrf.mxu0
        %v956 = vadd.f32 %v720, %v955
        %v957 = vpop.f32.mrf.mxu0
        %958 = vmatprep.mubr.bf16.mxu0 0
        %959 = vmatmul.mubr.bf16.gmra.mxu0 %v840
        %v960 = vpop.f32.mrf.mxu0
        %v961 = vadd.f32 %v720, %v960
        %v962 = vpop.f32.mrf.mxu0
        %v963 = vpop.f32.mrf.mxu0
        %v964 = vadd.f32 %v720, %v963
        %v965 = vpop.f32.mrf.mxu0
        %966 = vmatprep.mubr.bf16.mxu0 0
        %967 = vmatmul.mubr.bf16.gmra.mxu0 %v843
        %v968 = vpop.f32.mrf.mxu0
        %v969 = vadd.f32 %v720, %v968
        %v970 = vpop.f32.mrf.mxu0
        %v971 = vpop.f32.mrf.mxu0
        %v972 = vadd.f32 %v720, %v971
        %v973 = vpop.f32.mrf.mxu0
        %974 = vmatprep.mubr.bf16.mxu0 0
        %975 = vmatmul.mubr.bf16.gmra.mxu0 %v846
        %v976 = vpop.f32.mrf.mxu0
        %v977 = vadd.f32 %v720, %v976
        %v978 = vpop.f32.mrf.mxu0
        %v979 = vpop.f32.mrf.mxu0
        %v980 = vadd.f32 %v720, %v979
        %v981 = vpop.f32.mrf.mxu0
        %982 = vmatprep.mubr.bf16.mxu0 0
        %983 = vmatmul.mubr.bf16.gmra.mxu0 %v849
        %v984 = vpop.f32.mrf.mxu0
        %v985 = vadd.f32 %v720, %v984
        %v986 = vpop.f32.mrf.mxu0
        %v987 = vpop.f32.mrf.mxu0
        %v988 = vadd.f32 %v720, %v987
        %v989 = vpop.f32.mrf.mxu0
        %990 = vmatprep.mubr.bf16.mxu0 0
        %991 = vmatmul.mubr.bf16.gmra.mxu0 %v852
        %v992 = vpop.f32.mrf.mxu0
        %v993 = vadd.f32 %v720, %v992
        %v994 = vpop.f32.mrf.mxu0
        %v995 = vpop.f32.mrf.mxu0
        %v996 = vadd.f32 %v720, %v995
        %v997 = vpop.f32.mrf.mxu0
        %998 = vmatprep.mubr.bf16.mxu0 0
        %999 = vmatmul.mubr.bf16.gmra.mxu0 %v855
        %v1000 = vpop.f32.mrf.mxu0
        %v1001 = vadd.f32 %v720, %v1000
        %v1002 = vpop.f32.mrf.mxu0
        %v1003 = vpop.f32.mrf.mxu0
        %v1004 = vadd.f32 %v720, %v1003
        %v1005 = vpop.f32.mrf.mxu0
        %1006 = vmatprep.mubr.bf16.mxu0 0
        %1007 = vmatmul.mubr.bf16.gmra.mxu0 %v858
        %v1008 = vpop.f32.mrf.mxu0
        %v1009 = vadd.f32 %v720, %v1008
        %v1010 = vpop.f32.mrf.mxu0
        %v1011 = vpop.f32.mrf.mxu0
        %v1012 = vadd.f32 %v720, %v1011
        %v1013 = vpop.f32.mrf.mxu0
        %1014 = vmatprep.mubr.bf16.mxu0 0
        %1015 = vmatmul.mubr.bf16.gmra.mxu0 %v861
        %v1016 = vpop.f32.mrf.mxu0
        %v1017 = vadd.f32 %v720, %v1016
        %v1018 = vpop.f32.mrf.mxu0
        %v1019 = vpop.f32.mrf.mxu0
        %v1020 = vadd.f32 %v720, %v1019
        %v1021 = vpop.f32.mrf.mxu0
        %1022 = vmatprep.mubr.bf16.mxu0 0
        %1023 = vmatmul.mubr.bf16.gmra.mxu0 %v864
        %v1024 = vpop.f32.mrf.mxu0
        %v1025 = vadd.f32 %v720, %v1024
        %v1026 = vpop.f32.mrf.mxu0
        %v1027 = vpop.f32.mrf.mxu0
        %v1028 = vadd.f32 %v720, %v1027
        %v1029 = vpop.f32.mrf.mxu0
        %1030 = vdwg.mxu0
        %s1031 = scalar_lea.vmem [#allocation2], 24
        %1032 = vst.msk [vmem:[%s1031 + $0x1] sm:$0xff] %vm548, %v905
        %1033 = vst.msk [vmem:[%s1031 + $0x9] sm:$0xff] %vm548, %v908
        %1034 = vst.msk [vmem:[%s1031 + $0x19] sm:$0xff] %vm548, %v913
        %1035 = vst.msk [vmem:[%s1031 + $0x21] sm:$0xff] %vm548, %v916
        %1036 = vst.msk [vmem:[%s1031 + $0x31] sm:$0xff] %vm548, %v921
        %1037 = vst.msk [vmem:[%s1031 + $0x39] sm:$0xff] %vm548, %v924
        %1038 = vst.msk [vmem:[%s1031 + $0x49] sm:$0xff] %vm548, %v929
        %1039 = vst.msk [vmem:[%s1031 + $0x51] sm:$0xff] %vm548, %v932
        %1040 = vst.msk [vmem:[%s1031 + $0x61] sm:$0xff] %vm548, %v937
        %1041 = vst.msk [vmem:[%s1031 + $0x69] sm:$0xff] %vm548, %v940
        %1042 = vst.msk [vmem:[%s1031 + $0x79] sm:$0xff] %vm548, %v945
        %1043 = vst.msk [vmem:[%s1031 + $0x81] sm:$0xff] %vm548, %v948
        %1044 = vst.msk [vmem:[%s1031 + $0x91] sm:$0xff] %vm548, %v953
        %1045 = vst.msk [vmem:[%s1031 + $0x99] sm:$0xff] %vm548, %v956
        %1046 = vst.msk [vmem:[%s1031 + $0xa9] sm:$0xff] %vm548, %v961
        %1047 = vst.msk [vmem:[%s1031 + $0xb1] sm:$0xff] %vm548, %v964
        %1048 = vst.msk [vmem:[%s1031 + $0xc1] sm:$0xff] %vm548, %v969
        %1049 = vst.msk [vmem:[%s1031 + $0xc9] sm:$0xff] %vm548, %v972
        %1050 = vst.msk [vmem:[%s1031 + $0xd9] sm:$0xff] %vm548, %v977
        %1051 = vst.msk [vmem:[%s1031 + $0xe1] sm:$0xff] %vm548, %v980
        %1052 = vst.msk [vmem:[%s1031 + $0xf1] sm:$0xff] %vm548, %v985
        %1053 = vst.msk [vmem:[%s1031 + $0xf9] sm:$0xff] %vm548, %v988
        %1054 = vst.msk [vmem:[%s1031 + $0x109] sm:$0xff] %vm548, %v993
        %1055 = vst.msk [vmem:[%s1031 + $0x111] sm:$0xff] %vm548, %v996
        %1056 = vst.msk [vmem:[%s1031 + $0x121] sm:$0xff] %vm548, %v1001
        %1057 = vst.msk [vmem:[%s1031 + $0x129] sm:$0xff] %vm548, %v1004
        %1058 = vst.msk [vmem:[%s1031 + $0x139] sm:$0xff] %vm548, %v1009
        %1059 = vst.msk [vmem:[%s1031 + $0x141] sm:$0xff] %vm548, %v1012
        %1060 = vst.msk [vmem:[%s1031 + $0x151] sm:$0xff] %vm548, %v1017
        %1061 = vst.msk [vmem:[%s1031 + $0x159] sm:$0xff] %vm548, %v1020
        %1062 = vst.msk [vmem:[%s1031 + $0x169] sm:$0xff] %vm548, %v1025
        %1063 = vst.msk [vmem:[%s1031 + $0x171] sm:$0xff] %vm548, %v1028
        %v1064 = vld [vmem:[#allocation2] sm:$0xff]
        %v1065 = vld [vmem:[#allocation2 + $0x8] sm:$0xff]
        %v1066 = vld [vmem:[#allocation2 + $0x18] sm:$0xff]
        %v1067 = vld [vmem:[#allocation2 + $0x20] sm:$0xff]
        %v1068 = vld [vmem:[#allocation2 + $0x30] sm:$0xff]
        %v1069 = vld [vmem:[#allocation2 + $0x38] sm:$0xff]
        %v1070 = vld [vmem:[#allocation2 + $0x48] sm:$0xff]
        %v1071 = vld [vmem:[#allocation2 + $0x50] sm:$0xff]
        %v1072 = vld [vmem:[#allocation2 + $0x60] sm:$0xff]
        %v1073 = vld [vmem:[#allocation2 + $0x68] sm:$0xff]
        %v1074 = vld [vmem:[#allocation2 + $0x78] sm:$0xff]
        %v1075 = vld [vmem:[#allocation2 + $0x80] sm:$0xff]
        %v1076 = vld [vmem:[#allocation2 + $0x90] sm:$0xff]
        %v1077 = vld [vmem:[#allocation2 + $0x98] sm:$0xff]
        %v1078 = vld [vmem:[#allocation2 + $0xa8] sm:$0xff]
        %v1079 = vld [vmem:[#allocation2 + $0xb0] sm:$0xff]
        %v1080 = vld [vmem:[#allocation2 + $0xc0] sm:$0xff]
        %v1081 = vld [vmem:[#allocation2 + $0xc8] sm:$0xff]
        %v1082 = vld [vmem:[#allocation2 + $0xd8] sm:$0xff]
        %v1083 = vld [vmem:[#allocation2 + $0xe0] sm:$0xff]
        %v1084 = vld [vmem:[#allocation2 + $0xf0] sm:$0xff]
        %v1085 = vld [vmem:[#allocation2 + $0xf8] sm:$0xff]
        %v1086 = vld [vmem:[#allocation2 + $0x108] sm:$0xff]
        %v1087 = vld [vmem:[#allocation2 + $0x110] sm:$0xff]
        %v1088 = vld [vmem:[#allocation2 + $0x120] sm:$0xff]
        %v1089 = vld [vmem:[#allocation2 + $0x128] sm:$0xff]
        %v1090 = vld [vmem:[#allocation2 + $0x138] sm:$0xff]
        %v1091 = vld [vmem:[#allocation2 + $0x140] sm:$0xff]
        %v1092 = vld [vmem:[#allocation2 + $0x150] sm:$0xff]
        %v1093 = vld [vmem:[#allocation2 + $0x158] sm:$0xff]
        %v1094 = vld [vmem:[#allocation2 + $0x168] sm:$0xff]
        %v1095 = vld [vmem:[#allocation2 + $0x170] sm:$0xff]
        %1096 = vst.msk [vmem:[#allocation6] sm:$0xff] %vm548, %v1064
        %1097 = vst.msk [vmem:[#allocation6 + $0x18] sm:$0xff] %vm548, %v1065
        %1098 = vst.msk [vmem:[#allocation6 + $0x30] sm:$0xff] %vm548, %v1066
        %1099 = vst.msk [vmem:[#allocation6 + $0x48] sm:$0xff] %vm548, %v1067
        %1100 = vst.msk [vmem:[#allocation6 + $0x60] sm:$0xff] %vm548, %v1068
        %1101 = vst.msk [vmem:[#allocation6 + $0x78] sm:$0xff] %vm548, %v1069
        %1102 = vst.msk [vmem:[#allocation6 + $0x90] sm:$0xff] %vm548, %v1070
        %1103 = vst.msk [vmem:[#allocation6 + $0xa8] sm:$0xff] %vm548, %v1071
        %1104 = vst.msk [vmem:[#allocation6 + $0xc0] sm:$0xff] %vm548, %v1072
        %1105 = vst.msk [vmem:[#allocation6 + $0xd8] sm:$0xff] %vm548, %v1073
        %1106 = vst.msk [vmem:[#allocation6 + $0xf0] sm:$0xff] %vm548, %v1074
        %1107 = vst.msk [vmem:[#allocation6 + $0x108] sm:$0xff] %vm548, %v1075
        %1108 = vst.msk [vmem:[#allocation6 + $0x120] sm:$0xff] %vm548, %v1076
        %1109 = vst.msk [vmem:[#allocation6 + $0x138] sm:$0xff] %vm548, %v1077
        %1110 = vst.msk [vmem:[#allocation6 + $0x150] sm:$0xff] %vm548, %v1078
        %1111 = vst.msk [vmem:[#allocation6 + $0x168] sm:$0xff] %vm548, %v1079
        %1112 = vst.msk [vmem:[#allocation6 + $0x180] sm:$0xff] %vm548, %v1080
        %1113 = vst.msk [vmem:[#allocation6 + $0x198] sm:$0xff] %vm548, %v1081
        %1114 = vst.msk [vmem:[#allocation6 + $0x1b0] sm:$0xff] %vm548, %v1082
        %1115 = vst.msk [vmem:[#allocation6 + $0x1c8] sm:$0xff] %vm548, %v1083
        %1116 = vst.msk [vmem:[#allocation6 + $0x1e0] sm:$0xff] %vm548, %v1084
        %1117 = vst.msk [vmem:[#allocation6 + $0x1f8] sm:$0xff] %vm548, %v1085
        %1118 = vst.msk [vmem:[#allocation6 + $0x210] sm:$0xff] %vm548, %v1086
        %1119 = vst.msk [vmem:[#allocation6 + $0x228] sm:$0xff] %vm548, %v1087
        %1120 = vst.msk [vmem:[#allocation6 + $0x240] sm:$0xff] %vm548, %v1088
        %1121 = vst.msk [vmem:[#allocation6 + $0x258] sm:$0xff] %vm548, %v1089
        %1122 = vst.msk [vmem:[#allocation6 + $0x270] sm:$0xff] %vm548, %v1090
        %1123 = vst.msk [vmem:[#allocation6 + $0x288] sm:$0xff] %vm548, %v1091
        %1124 = vst.msk [vmem:[#allocation6 + $0x2a0] sm:$0xff] %vm548, %v1092
        %1125 = vst.msk [vmem:[#allocation6 + $0x2b8] sm:$0xff] %vm548, %v1093
        %1126 = vst.msk [vmem:[#allocation6 + $0x2d0] sm:$0xff] %vm548, %v1094
        %1127 = vst.msk [vmem:[#allocation6 + $0x2e8] sm:$0xff] %vm548, %v1095
        %v1128 = vld [vmem:[#allocation2 + $0x1] sm:$0xff]
        %v1129 = vld [vmem:[#allocation2 + $0x9] sm:$0xff]
        %v1130 = vld [vmem:[#allocation2 + $0x19] sm:$0xff]
        %v1131 = vld [vmem:[#allocation2 + $0x21] sm:$0xff]
        %v1132 = vld [vmem:[#allocation2 + $0x31] sm:$0xff]
        %v1133 = vld [vmem:[#allocation2 + $0x39] sm:$0xff]
        %v1134 = vld [vmem:[#allocation2 + $0x49] sm:$0xff]
        %v1135 = vld [vmem:[#allocation2 + $0x51] sm:$0xff]
        %v1136 = vld [vmem:[#allocation2 + $0x61] sm:$0xff]
        %v1137 = vld [vmem:[#allocation2 + $0x69] sm:$0xff]
        %v1138 = vld [vmem:[#allocation2 + $0x79] sm:$0xff]
        %v1139 = vld [vmem:[#allocation2 + $0x81] sm:$0xff]
        %v1140 = vld [vmem:[#allocation2 + $0x91] sm:$0xff]
        %v1141 = vld [vmem:[#allocation2 + $0x99] sm:$0xff]
        %v1142 = vld [vmem:[#allocation2 + $0xa9] sm:$0xff]
        %v1143 = vld [vmem:[#allocation2 + $0xb1] sm:$0xff]
        %v1144 = vld [vmem:[#allocation2 + $0xc1] sm:$0xff]
        %v1145 = vld [vmem:[#allocation2 + $0xc9] sm:$0xff]
        %v1146 = vld [vmem:[#allocation2 + $0xd9] sm:$0xff]
        %v1147 = vld [vmem:[#allocation2 + $0xe1] sm:$0xff]
        %v1148 = vld [vmem:[#allocation2 + $0xf1] sm:$0xff]
        %v1149 = vld [vmem:[#allocation2 + $0xf9] sm:$0xff]
        %v1150 = vld [vmem:[#allocation2 + $0x109] sm:$0xff]
        %v1151 = vld [vmem:[#allocation2 + $0x111] sm:$0xff]
        %v1152 = vld [vmem:[#allocation2 + $0x121] sm:$0xff]
        %v1153 = vld [vmem:[#allocation2 + $0x129] sm:$0xff]
        %v1154 = vld [vmem:[#allocation2 + $0x139] sm:$0xff]
        %v1155 = vld [vmem:[#allocation2 + $0x141] sm:$0xff]
        %v1156 = vld [vmem:[#allocation2 + $0x151] sm:$0xff]
        %v1157 = vld [vmem:[#allocation2 + $0x159] sm:$0xff]
        %v1158 = vld [vmem:[#allocation2 + $0x169] sm:$0xff]
        %v1159 = vld [vmem:[#allocation2 + $0x171] sm:$0xff]
        %1192 = vrot.lane.b32.xlu0 %v1128, 32
        %v1193 = vpop.permute.xlu0 %1192
        %1194 = vrot.lane.b32.xlu0 %v1129, 32
        %v1195 = vpop.permute.xlu0 %1194
        %1196 = vrot.lane.b32.xlu0 %v1130, 32
        %v1197 = vpop.permute.xlu0 %1196
        %1198 = vrot.lane.b32.xlu0 %v1131, 32
        %v1199 = vpop.permute.xlu0 %1198
        %1200 = vrot.lane.b32.xlu0 %v1132, 32
        %v1201 = vpop.permute.xlu0 %1200
        %1202 = vrot.lane.b32.xlu0 %v1133, 32
        %v1203 = vpop.permute.xlu0 %1202
        %1204 = vrot.lane.b32.xlu0 %v1134, 32
        %v1205 = vpop.permute.xlu0 %1204
        %1206 = vrot.lane.b32.xlu0 %v1135, 32
        %v1207 = vpop.permute.xlu0 %1206
        %1208 = vrot.lane.b32.xlu0 %v1136, 32
        %v1209 = vpop.permute.xlu0 %1208
        %1210 = vrot.lane.b32.xlu0 %v1137, 32
        %v1211 = vpop.permute.xlu0 %1210
        %1212 = vrot.lane.b32.xlu0 %v1138, 32
        %v1213 = vpop.permute.xlu0 %1212
        %1214 = vrot.lane.b32.xlu0 %v1139, 32
        %v1215 = vpop.permute.xlu0 %1214
        %1216 = vrot.lane.b32.xlu0 %v1140, 32
        %v1217 = vpop.permute.xlu0 %1216
        %1218 = vrot.lane.b32.xlu0 %v1141, 32
        %v1219 = vpop.permute.xlu0 %1218
        %1220 = vrot.lane.b32.xlu0 %v1142, 32
        %v1221 = vpop.permute.xlu0 %1220
        %1222 = vrot.lane.b32.xlu0 %v1143, 32
        %v1223 = vpop.permute.xlu0 %1222
        %1224 = vrot.lane.b32.xlu0 %v1144, 32
        %v1225 = vpop.permute.xlu0 %1224
        %1226 = vrot.lane.b32.xlu0 %v1145, 32
        %v1227 = vpop.permute.xlu0 %1226
        %1228 = vrot.lane.b32.xlu0 %v1146, 32
        %v1229 = vpop.permute.xlu0 %1228
        %1230 = vrot.lane.b32.xlu0 %v1147, 32
        %v1231 = vpop.permute.xlu0 %1230
        %1232 = vrot.lane.b32.xlu0 %v1148, 32
        %v1233 = vpop.permute.xlu0 %1232
        %1234 = vrot.lane.b32.xlu0 %v1149, 32
        %v1235 = vpop.permute.xlu0 %1234
        %1236 = vrot.lane.b32.xlu0 %v1150, 32
        %v1237 = vpop.permute.xlu0 %1236
        %1238 = vrot.lane.b32.xlu0 %v1151, 32
        %v1239 = vpop.permute.xlu0 %1238
        %1240 = vrot.lane.b32.xlu0 %v1152, 32
        %v1241 = vpop.permute.xlu0 %1240
        %1242 = vrot.lane.b32.xlu0 %v1153, 32
        %v1243 = vpop.permute.xlu0 %1242
        %1244 = vrot.lane.b32.xlu0 %v1154, 32
        %v1245 = vpop.permute.xlu0 %1244
        %1246 = vrot.lane.b32.xlu0 %v1155, 32
        %v1247 = vpop.permute.xlu0 %1246
        %1248 = vrot.lane.b32.xlu0 %v1156, 32
        %v1249 = vpop.permute.xlu0 %1248
        %1250 = vrot.lane.b32.xlu0 %v1157, 32
        %v1251 = vpop.permute.xlu0 %1250
        %1252 = vrot.lane.b32.xlu0 %v1158, 32
        %v1253 = vpop.permute.xlu0 %1252
        %1254 = vrot.lane.b32.xlu0 %v1159, 32
        %v1255 = vpop.permute.xlu0 %1254
        %vm1288 = vcmask 523520
        %1289 = vst.msk [vmem:[#allocation6] sm:$0xff] %vm1288, %v1193
        %1290 = vst.msk [vmem:[#allocation6 + $0x18] sm:$0xff] %vm1288, %v1195
        %1291 = vst.msk [vmem:[#allocation6 + $0x30] sm:$0xff] %vm1288, %v1197
        %1292 = vst.msk [vmem:[#allocation6 + $0x48] sm:$0xff] %vm1288, %v1199
        %1293 = vst.msk [vmem:[#allocation6 + $0x60] sm:$0xff] %vm1288, %v1201
        %1294 = vst.msk [vmem:[#allocation6 + $0x78] sm:$0xff] %vm1288, %v1203
        %1295 = vst.msk [vmem:[#allocation6 + $0x90] sm:$0xff] %vm1288, %v1205
        %1296 = vst.msk [vmem:[#allocation6 + $0xa8] sm:$0xff] %vm1288, %v1207
        %1297 = vst.msk [vmem:[#allocation6 + $0xc0] sm:$0xff] %vm1288, %v1209
        %1298 = vst.msk [vmem:[#allocation6 + $0xd8] sm:$0xff] %vm1288, %v1211
        %1299 = vst.msk [vmem:[#allocation6 + $0xf0] sm:$0xff] %vm1288, %v1213
        %1300 = vst.msk [vmem:[#allocation6 + $0x108] sm:$0xff] %vm1288, %v1215
        %1301 = vst.msk [vmem:[#allocation6 + $0x120] sm:$0xff] %vm1288, %v1217
        %1302 = vst.msk [vmem:[#allocation6 + $0x138] sm:$0xff] %vm1288, %v1219
        %1303 = vst.msk [vmem:[#allocation6 + $0x150] sm:$0xff] %vm1288, %v1221
        %1304 = vst.msk [vmem:[#allocation6 + $0x168] sm:$0xff] %vm1288, %v1223
        %1305 = vst.msk [vmem:[#allocation6 + $0x180] sm:$0xff] %vm1288, %v1225
        %1306 = vst.msk [vmem:[#allocation6 + $0x198] sm:$0xff] %vm1288, %v1227
        %1307 = vst.msk [vmem:[#allocation6 + $0x1b0] sm:$0xff] %vm1288, %v1229
        %1308 = vst.msk [vmem:[#allocation6 + $0x1c8] sm:$0xff] %vm1288, %v1231
        %1309 = vst.msk [vmem:[#allocation6 + $0x1e0] sm:$0xff] %vm1288, %v1233
        %1310 = vst.msk [vmem:[#allocation6 + $0x1f8] sm:$0xff] %vm1288, %v1235
        %1311 = vst.msk [vmem:[#allocation6 + $0x210] sm:$0xff] %vm1288, %v1237
        %1312 = vst.msk [vmem:[#allocation6 + $0x228] sm:$0xff] %vm1288, %v1239
        %1313 = vst.msk [vmem:[#allocation6 + $0x240] sm:$0xff] %vm1288, %v1241
        %1314 = vst.msk [vmem:[#allocation6 + $0x258] sm:$0xff] %vm1288, %v1243
        %1315 = vst.msk [vmem:[#allocation6 + $0x270] sm:$0xff] %vm1288, %v1245
        %1316 = vst.msk [vmem:[#allocation6 + $0x288] sm:$0xff] %vm1288, %v1247
        %1317 = vst.msk [vmem:[#allocation6 + $0x2a0] sm:$0xff] %vm1288, %v1249
        %1318 = vst.msk [vmem:[#allocation6 + $0x2b8] sm:$0xff] %vm1288, %v1251
        %1319 = vst.msk [vmem:[#allocation6 + $0x2d0] sm:$0xff] %vm1288, %v1253
        %1320 = vst.msk [vmem:[#allocation6 + $0x2e8] sm:$0xff] %vm1288, %v1255
        %v1321 = vld [vmem:[#allocation2 + $0x2] sm:$0xff]
        %v1322 = vld [vmem:[#allocation2 + $0xa] sm:$0xff]
        %v1323 = vld [vmem:[#allocation2 + $0x1a] sm:$0xff]
        %v1324 = vld [vmem:[#allocation2 + $0x22] sm:$0xff]
        %v1325 = vld [vmem:[#allocation2 + $0x32] sm:$0xff]
        %v1326 = vld [vmem:[#allocation2 + $0x3a] sm:$0xff]
        %v1327 = vld [vmem:[#allocation2 + $0x4a] sm:$0xff]
        %v1328 = vld [vmem:[#allocation2 + $0x52] sm:$0xff]
        %v1329 = vld [vmem:[#allocation2 + $0x62] sm:$0xff]
        %v1330 = vld [vmem:[#allocation2 + $0x6a] sm:$0xff]
        %v1331 = vld [vmem:[#allocation2 + $0x7a] sm:$0xff]
        %v1332 = vld [vmem:[#allocation2 + $0x82] sm:$0xff]
        %v1333 = vld [vmem:[#allocation2 + $0x92] sm:$0xff]
        %v1334 = vld [vmem:[#allocation2 + $0x9a] sm:$0xff]
        %v1335 = vld [vmem:[#allocation2 + $0xaa] sm:$0xff]
        %v1336 = vld [vmem:[#allocation2 + $0xb2] sm:$0xff]
        %v1337 = vld [vmem:[#allocation2 + $0xc2] sm:$0xff]
        %v1338 = vld [vmem:[#allocation2 + $0xca] sm:$0xff]
        %v1339 = vld [vmem:[#allocation2 + $0xda] sm:$0xff]
        %v1340 = vld [vmem:[#allocation2 + $0xe2] sm:$0xff]
        %v1341 = vld [vmem:[#allocation2 + $0xf2] sm:$0xff]
        %v1342 = vld [vmem:[#allocation2 + $0xfa] sm:$0xff]
        %v1343 = vld [vmem:[#allocation2 + $0x10a] sm:$0xff]
        %v1344 = vld [vmem:[#allocation2 + $0x112] sm:$0xff]
        %v1345 = vld [vmem:[#allocation2 + $0x122] sm:$0xff]
        %v1346 = vld [vmem:[#allocation2 + $0x12a] sm:$0xff]
        %v1347 = vld [vmem:[#allocation2 + $0x13a] sm:$0xff]
        %v1348 = vld [vmem:[#allocation2 + $0x142] sm:$0xff]
        %v1349 = vld [vmem:[#allocation2 + $0x152] sm:$0xff]
        %v1350 = vld [vmem:[#allocation2 + $0x15a] sm:$0xff]
        %v1351 = vld [vmem:[#allocation2 + $0x16a] sm:$0xff]
        %v1352 = vld [vmem:[#allocation2 + $0x172] sm:$0xff]
        %1385 = vrot.lane.b32.xlu0 %v1321, 64
        %v1386 = vpop.permute.xlu0 %1385
        %1387 = vrot.lane.b32.xlu0 %v1322, 64
        %v1388 = vpop.permute.xlu0 %1387
        %1389 = vrot.lane.b32.xlu0 %v1323, 64
        %v1390 = vpop.permute.xlu0 %1389
        %1391 = vrot.lane.b32.xlu0 %v1324, 64
        %v1392 = vpop.permute.xlu0 %1391
        %1393 = vrot.lane.b32.xlu0 %v1325, 64
        %v1394 = vpop.permute.xlu0 %1393
        %1395 = vrot.lane.b32.xlu0 %v1326, 64
        %v1396 = vpop.permute.xlu0 %1395
        %1397 = vrot.lane.b32.xlu0 %v1327, 64
        %v1398 = vpop.permute.xlu0 %1397
        %1399 = vrot.lane.b32.xlu0 %v1328, 64
        %v1400 = vpop.permute.xlu0 %1399
        %1401 = vrot.lane.b32.xlu0 %v1329, 64
        %v1402 = vpop.permute.xlu0 %1401
        %1403 = vrot.lane.b32.xlu0 %v1330, 64
        %v1404 = vpop.permute.xlu0 %1403
        %1405 = vrot.lane.b32.xlu0 %v1331, 64
        %v1406 = vpop.permute.xlu0 %1405
        %1407 = vrot.lane.b32.xlu0 %v1332, 64
        %v1408 = vpop.permute.xlu0 %1407
        %1409 = vrot.lane.b32.xlu0 %v1333, 64
        %v1410 = vpop.permute.xlu0 %1409
        %1411 = vrot.lane.b32.xlu0 %v1334, 64
        %v1412 = vpop.permute.xlu0 %1411
        %1413 = vrot.lane.b32.xlu0 %v1335, 64
        %v1414 = vpop.permute.xlu0 %1413
        %1415 = vrot.lane.b32.xlu0 %v1336, 64
        %v1416 = vpop.permute.xlu0 %1415
        %1417 = vrot.lane.b32.xlu0 %v1337, 64
        %v1418 = vpop.permute.xlu0 %1417
        %1419 = vrot.lane.b32.xlu0 %v1338, 64
        %v1420 = vpop.permute.xlu0 %1419
        %1421 = vrot.lane.b32.xlu0 %v1339, 64
        %v1422 = vpop.permute.xlu0 %1421
        %1423 = vrot.lane.b32.xlu0 %v1340, 64
        %v1424 = vpop.permute.xlu0 %1423
        %1425 = vrot.lane.b32.xlu0 %v1341, 64
        %v1426 = vpop.permute.xlu0 %1425
        %1427 = vrot.lane.b32.xlu0 %v1342, 64
        %v1428 = vpop.permute.xlu0 %1427
        %1429 = vrot.lane.b32.xlu0 %v1343, 64
        %v1430 = vpop.permute.xlu0 %1429
        %1431 = vrot.lane.b32.xlu0 %v1344, 64
        %v1432 = vpop.permute.xlu0 %1431
        %1433 = vrot.lane.b32.xlu0 %v1345, 64
        %v1434 = vpop.permute.xlu0 %1433
        %1435 = vrot.lane.b32.xlu0 %v1346, 64
        %v1436 = vpop.permute.xlu0 %1435
        %1437 = vrot.lane.b32.xlu0 %v1347, 64
        %v1438 = vpop.permute.xlu0 %1437
        %1439 = vrot.lane.b32.xlu0 %v1348, 64
        %v1440 = vpop.permute.xlu0 %1439
        %1441 = vrot.lane.b32.xlu0 %v1349, 64
        %v1442 = vpop.permute.xlu0 %1441
        %1443 = vrot.lane.b32.xlu0 %v1350, 64
        %v1444 = vpop.permute.xlu0 %1443
        %1445 = vrot.lane.b32.xlu0 %v1351, 64
        %v1446 = vpop.permute.xlu0 %1445
        %1447 = vrot.lane.b32.xlu0 %v1352, 64
        %v1448 = vpop.permute.xlu0 %1447
        %vm1481 = vcmask 785920
        %1482 = vst.msk [vmem:[#allocation6] sm:$0xff] %vm1481, %v1386
        %1483 = vst.msk [vmem:[#allocation6 + $0x18] sm:$0xff] %vm1481, %v1388
        %1484 = vst.msk [vmem:[#allocation6 + $0x30] sm:$0xff] %vm1481, %v1390
        %1485 = vst.msk [vmem:[#allocation6 + $0x48] sm:$0xff] %vm1481, %v1392
        %1486 = vst.msk [vmem:[#allocation6 + $0x60] sm:$0xff] %vm1481, %v1394
        %1487 = vst.msk [vmem:[#allocation6 + $0x78] sm:$0xff] %vm1481, %v1396
        %1488 = vst.msk [vmem:[#allocation6 + $0x90] sm:$0xff] %vm1481, %v1398
        %1489 = vst.msk [vmem:[#allocation6 + $0xa8] sm:$0xff] %vm1481, %v1400
        %1490 = vst.msk [vmem:[#allocation6 + $0xc0] sm:$0xff] %vm1481, %v1402
        %1491 = vst.msk [vmem:[#allocation6 + $0xd8] sm:$0xff] %vm1481, %v1404
        %1492 = vst.msk [vmem:[#allocation6 + $0xf0] sm:$0xff] %vm1481, %v1406
        %1493 = vst.msk [vmem:[#allocation6 + $0x108] sm:$0xff] %vm1481, %v1408
        %1494 = vst.msk [vmem:[#allocation6 + $0x120] sm:$0xff] %vm1481, %v1410
        %1495 = vst.msk [vmem:[#allocation6 + $0x138] sm:$0xff] %vm1481, %v1412
        %1496 = vst.msk [vmem:[#allocation6 + $0x150] sm:$0xff] %vm1481, %v1414
        %1497 = vst.msk [vmem:[#allocation6 + $0x168] sm:$0xff] %vm1481, %v1416
        %1498 = vst.msk [vmem:[#allocation6 + $0x180] sm:$0xff] %vm1481, %v1418
        %1499 = vst.msk [vmem:[#allocation6 + $0x198] sm:$0xff] %vm1481, %v1420
        %1500 = vst.msk [vmem:[#allocation6 + $0x1b0] sm:$0xff] %vm1481, %v1422
        %1501 = vst.msk [vmem:[#allocation6 + $0x1c8] sm:$0xff] %vm1481, %v1424
        %1502 = vst.msk [vmem:[#allocation6 + $0x1e0] sm:$0xff] %vm1481, %v1426
        %1503 = vst.msk [vmem:[#allocation6 + $0x1f8] sm:$0xff] %vm1481, %v1428
        %1504 = vst.msk [vmem:[#allocation6 + $0x210] sm:$0xff] %vm1481, %v1430
        %1505 = vst.msk [vmem:[#allocation6 + $0x228] sm:$0xff] %vm1481, %v1432
        %1506 = vst.msk [vmem:[#allocation6 + $0x240] sm:$0xff] %vm1481, %v1434
        %1507 = vst.msk [vmem:[#allocation6 + $0x258] sm:$0xff] %vm1481, %v1436
        %1508 = vst.msk [vmem:[#allocation6 + $0x270] sm:$0xff] %vm1481, %v1438
        %1509 = vst.msk [vmem:[#allocation6 + $0x288] sm:$0xff] %vm1481, %v1440
        %1510 = vst.msk [vmem:[#allocation6 + $0x2a0] sm:$0xff] %vm1481, %v1442
        %1511 = vst.msk [vmem:[#allocation6 + $0x2b8] sm:$0xff] %vm1481, %v1444
        %1512 = vst.msk [vmem:[#allocation6 + $0x2d0] sm:$0xff] %vm1481, %v1446
        %1513 = vst.msk [vmem:[#allocation6 + $0x2e8] sm:$0xff] %vm1481, %v1448
        %v1514 = vld [vmem:[%s1031] sm:$0xff]
        %v1515 = vld [vmem:[%s1031 + $0x8] sm:$0xff]
        %v1516 = vld [vmem:[%s1031 + $0x18] sm:$0xff]
        %v1517 = vld [vmem:[%s1031 + $0x20] sm:$0xff]
        %v1518 = vld [vmem:[%s1031 + $0x30] sm:$0xff]
        %v1519 = vld [vmem:[%s1031 + $0x38] sm:$0xff]
        %v1520 = vld [vmem:[%s1031 + $0x48] sm:$0xff]
        %v1521 = vld [vmem:[%s1031 + $0x50] sm:$0xff]
        %v1522 = vld [vmem:[%s1031 + $0x60] sm:$0xff]
        %v1523 = vld [vmem:[%s1031 + $0x68] sm:$0xff]
        %v1524 = vld [vmem:[%s1031 + $0x78] sm:$0xff]
        %v1525 = vld [vmem:[%s1031 + $0x80] sm:$0xff]
        %v1526 = vld [vmem:[%s1031 + $0x90] sm:$0xff]
        %v1527 = vld [vmem:[%s1031 + $0x98] sm:$0xff]
        %v1528 = vld [vmem:[%s1031 + $0xa8] sm:$0xff]
        %v1529 = vld [vmem:[%s1031 + $0xb0] sm:$0xff]
        %v1530 = vld [vmem:[%s1031 + $0xc0] sm:$0xff]
        %v1531 = vld [vmem:[%s1031 + $0xc8] sm:$0xff]
        %v1532 = vld [vmem:[%s1031 + $0xd8] sm:$0xff]
        %v1533 = vld [vmem:[%s1031 + $0xe0] sm:$0xff]
        %v1534 = vld [vmem:[%s1031 + $0xf0] sm:$0xff]
        %v1535 = vld [vmem:[%s1031 + $0xf8] sm:$0xff]
        %v1536 = vld [vmem:[%s1031 + $0x108] sm:$0xff]
        %v1537 = vld [vmem:[%s1031 + $0x110] sm:$0xff]
        %v1538 = vld [vmem:[%s1031 + $0x120] sm:$0xff]
        %v1539 = vld [vmem:[%s1031 + $0x128] sm:$0xff]
        %v1540 = vld [vmem:[%s1031 + $0x138] sm:$0xff]
        %v1541 = vld [vmem:[%s1031 + $0x140] sm:$0xff]
        %v1542 = vld [vmem:[%s1031 + $0x150] sm:$0xff]
        %v1543 = vld [vmem:[%s1031 + $0x158] sm:$0xff]
        %v1544 = vld [vmem:[%s1031 + $0x168] sm:$0xff]
        %v1545 = vld [vmem:[%s1031 + $0x170] sm:$0xff]
        %1578 = vrot.lane.b32.xlu0 %v1514, 96
        %v1579 = vpop.permute.xlu0 %1578
        %1580 = vrot.lane.b32.xlu0 %v1515, 96
        %v1581 = vpop.permute.xlu0 %1580
        %1582 = vrot.lane.b32.xlu0 %v1516, 96
        %v1583 = vpop.permute.xlu0 %1582
        %1584 = vrot.lane.b32.xlu0 %v1517, 96
        %v1585 = vpop.permute.xlu0 %1584
        %1586 = vrot.lane.b32.xlu0 %v1518, 96
        %v1587 = vpop.permute.xlu0 %1586
        %1588 = vrot.lane.b32.xlu0 %v1519, 96
        %v1589 = vpop.permute.xlu0 %1588
        %1590 = vrot.lane.b32.xlu0 %v1520, 96
        %v1591 = vpop.permute.xlu0 %1590
        %1592 = vrot.lane.b32.xlu0 %v1521, 96
        %v1593 = vpop.permute.xlu0 %1592
        %1594 = vrot.lane.b32.xlu0 %v1522, 96
        %v1595 = vpop.permute.xlu0 %1594
        %1596 = vrot.lane.b32.xlu0 %v1523, 96
        %v1597 = vpop.permute.xlu0 %1596
        %1598 = vrot.lane.b32.xlu0 %v1524, 96
        %v1599 = vpop.permute.xlu0 %1598
        %1600 = vrot.lane.b32.xlu0 %v1525, 96
        %v1601 = vpop.permute.xlu0 %1600
        %1602 = vrot.lane.b32.xlu0 %v1526, 96
        %v1603 = vpop.permute.xlu0 %1602
        %1604 = vrot.lane.b32.xlu0 %v1527, 96
        %v1605 = vpop.permute.xlu0 %1604
        %1606 = vrot.lane.b32.xlu0 %v1528, 96
        %v1607 = vpop.permute.xlu0 %1606
        %1608 = vrot.lane.b32.xlu0 %v1529, 96
        %v1609 = vpop.permute.xlu0 %1608
        %1610 = vrot.lane.b32.xlu0 %v1530, 96
        %v1611 = vpop.permute.xlu0 %1610
        %1612 = vrot.lane.b32.xlu0 %v1531, 96
        %v1613 = vpop.permute.xlu0 %1612
        %1614 = vrot.lane.b32.xlu0 %v1532, 96
        %v1615 = vpop.permute.xlu0 %1614
        %1616 = vrot.lane.b32.xlu0 %v1533, 96
        %v1617 = vpop.permute.xlu0 %1616
        %1618 = vrot.lane.b32.xlu0 %v1534, 96
        %v1619 = vpop.permute.xlu0 %1618
        %1620 = vrot.lane.b32.xlu0 %v1535, 96
        %v1621 = vpop.permute.xlu0 %1620
        %1622 = vrot.lane.b32.xlu0 %v1536, 96
        %v1623 = vpop.permute.xlu0 %1622
        %1624 = vrot.lane.b32.xlu0 %v1537, 96
        %v1625 = vpop.permute.xlu0 %1624
        %1626 = vrot.lane.b32.xlu0 %v1538, 96
        %v1627 = vpop.permute.xlu0 %1626
        %1628 = vrot.lane.b32.xlu0 %v1539, 96
        %v1629 = vpop.permute.xlu0 %1628
        %1630 = vrot.lane.b32.xlu0 %v1540, 96
        %v1631 = vpop.permute.xlu0 %1630
        %1632 = vrot.lane.b32.xlu0 %v1541, 96
        %v1633 = vpop.permute.xlu0 %1632
        %1634 = vrot.lane.b32.xlu0 %v1542, 96
        %v1635 = vpop.permute.xlu0 %1634
        %1636 = vrot.lane.b32.xlu0 %v1543, 96
        %v1637 = vpop.permute.xlu0 %1636
        %1638 = vrot.lane.b32.xlu0 %v1544, 96
        %v1639 = vpop.permute.xlu0 %1638
        %1640 = vrot.lane.b32.xlu0 %v1545, 96
        %v1641 = vpop.permute.xlu0 %1640
        %vm1674 = vcmask 1048320
        %1675 = vst.msk [vmem:[#allocation6] sm:$0xff] %vm1674, %v1579
        %1676 = vst.msk [vmem:[#allocation6 + $0x18] sm:$0xff] %vm1674, %v1581
        %1677 = vst.msk [vmem:[#allocation6 + $0x30] sm:$0xff] %vm1674, %v1583
        %1678 = vst.msk [vmem:[#allocation6 + $0x48] sm:$0xff] %vm1674, %v1585
        %1679 = vst.msk [vmem:[#allocation6 + $0x60] sm:$0xff] %vm1674, %v1587
        %1680 = vst.msk [vmem:[#allocation6 + $0x78] sm:$0xff] %vm1674, %v1589
        %1681 = vst.msk [vmem:[#allocation6 + $0x90] sm:$0xff] %vm1674, %v1591
        %1682 = vst.msk [vmem:[#allocation6 + $0xa8] sm:$0xff] %vm1674, %v1593
        %1683 = vst.msk [vmem:[#allocation6 + $0xc0] sm:$0xff] %vm1674, %v1595
        %1684 = vst.msk [vmem:[#allocation6 + $0xd8] sm:$0xff] %vm1674, %v1597
        %1685 = vst.msk [vmem:[#allocation6 + $0xf0] sm:$0xff] %vm1674, %v1599
        %1686 = vst.msk [vmem:[#allocation6 + $0x108] sm:$0xff] %vm1674, %v1601
        %1687 = vst.msk [vmem:[#allocation6 + $0x120] sm:$0xff] %vm1674, %v1603
        %1688 = vst.msk [vmem:[#allocation6 + $0x138] sm:$0xff] %vm1674, %v1605
        %1689 = vst.msk [vmem:[#allocation6 + $0x150] sm:$0xff] %vm1674, %v1607
        %1690 = vst.msk [vmem:[#allocation6 + $0x168] sm:$0xff] %vm1674, %v1609
        %1691 = vst.msk [vmem:[#allocation6 + $0x180] sm:$0xff] %vm1674, %v1611
        %1692 = vst.msk [vmem:[#allocation6 + $0x198] sm:$0xff] %vm1674, %v1613
        %1693 = vst.msk [vmem:[#allocation6 + $0x1b0] sm:$0xff] %vm1674, %v1615
        %1694 = vst.msk [vmem:[#allocation6 + $0x1c8] sm:$0xff] %vm1674, %v1617
        %1695 = vst.msk [vmem:[#allocation6 + $0x1e0] sm:$0xff] %vm1674, %v1619
        %1696 = vst.msk [vmem:[#allocation6 + $0x1f8] sm:$0xff] %vm1674, %v1621
        %1697 = vst.msk [vmem:[#allocation6 + $0x210] sm:$0xff] %vm1674, %v1623
        %1698 = vst.msk [vmem:[#allocation6 + $0x228] sm:$0xff] %vm1674, %v1625
        %1699 = vst.msk [vmem:[#allocation6 + $0x240] sm:$0xff] %vm1674, %v1627
        %1700 = vst.msk [vmem:[#allocation6 + $0x258] sm:$0xff] %vm1674, %v1629
        %1701 = vst.msk [vmem:[#allocation6 + $0x270] sm:$0xff] %vm1674, %v1631
        %1702 = vst.msk [vmem:[#allocation6 + $0x288] sm:$0xff] %vm1674, %v1633
        %1703 = vst.msk [vmem:[#allocation6 + $0x2a0] sm:$0xff] %vm1674, %v1635
        %1704 = vst.msk [vmem:[#allocation6 + $0x2b8] sm:$0xff] %vm1674, %v1637
        %1705 = vst.msk [vmem:[#allocation6 + $0x2d0] sm:$0xff] %vm1674, %v1639
        %1706 = vst.msk [vmem:[#allocation6 + $0x2e8] sm:$0xff] %vm1674, %v1641
        %v1707 = vld [vmem:[%s1031 + $0x1] sm:$0xff]
        %v1708 = vld [vmem:[%s1031 + $0x9] sm:$0xff]
        %v1709 = vld [vmem:[%s1031 + $0x19] sm:$0xff]
        %v1710 = vld [vmem:[%s1031 + $0x21] sm:$0xff]
        %v1711 = vld [vmem:[%s1031 + $0x31] sm:$0xff]
        %v1712 = vld [vmem:[%s1031 + $0x39] sm:$0xff]
        %v1713 = vld [vmem:[%s1031 + $0x49] sm:$0xff]
        %v1714 = vld [vmem:[%s1031 + $0x51] sm:$0xff]
        %v1715 = vld [vmem:[%s1031 + $0x61] sm:$0xff]
        %v1716 = vld [vmem:[%s1031 + $0x69] sm:$0xff]
        %v1717 = vld [vmem:[%s1031 + $0x79] sm:$0xff]
        %v1718 = vld [vmem:[%s1031 + $0x81] sm:$0xff]
        %v1719 = vld [vmem:[%s1031 + $0x91] sm:$0xff]
        %v1720 = vld [vmem:[%s1031 + $0x99] sm:$0xff]
        %v1721 = vld [vmem:[%s1031 + $0xa9] sm:$0xff]
        %v1722 = vld [vmem:[%s1031 + $0xb1] sm:$0xff]
        %v1723 = vld [vmem:[%s1031 + $0xc1] sm:$0xff]
        %v1724 = vld [vmem:[%s1031 + $0xc9] sm:$0xff]
        %v1725 = vld [vmem:[%s1031 + $0xd9] sm:$0xff]
        %v1726 = vld [vmem:[%s1031 + $0xe1] sm:$0xff]
        %v1727 = vld [vmem:[%s1031 + $0xf1] sm:$0xff]
        %v1728 = vld [vmem:[%s1031 + $0xf9] sm:$0xff]
        %v1729 = vld [vmem:[%s1031 + $0x109] sm:$0xff]
        %v1730 = vld [vmem:[%s1031 + $0x111] sm:$0xff]
        %v1731 = vld [vmem:[%s1031 + $0x121] sm:$0xff]
        %v1732 = vld [vmem:[%s1031 + $0x129] sm:$0xff]
        %v1733 = vld [vmem:[%s1031 + $0x139] sm:$0xff]
        %v1734 = vld [vmem:[%s1031 + $0x141] sm:$0xff]
        %v1735 = vld [vmem:[%s1031 + $0x151] sm:$0xff]
        %v1736 = vld [vmem:[%s1031 + $0x159] sm:$0xff]
        %v1737 = vld [vmem:[%s1031 + $0x169] sm:$0xff]
        %v1738 = vld [vmem:[%s1031 + $0x171] sm:$0xff]
        %1739 = vst.msk [vmem:[#allocation6 + $0x8] sm:$0xff] %vm548, %v1707
        %1740 = vst.msk [vmem:[#allocation6 + $0x20] sm:$0xff] %vm548, %v1708
        %1741 = vst.msk [vmem:[#allocation6 + $0x38] sm:$0xff] %vm548, %v1709
        %1742 = vst.msk [vmem:[#allocation6 + $0x50] sm:$0xff] %vm548, %v1710
        %1743 = vst.msk [vmem:[#allocation6 + $0x68] sm:$0xff] %vm548, %v1711
        %1744 = vst.msk [vmem:[#allocation6 + $0x80] sm:$0xff] %vm548, %v1712
        %1745 = vst.msk [vmem:[#allocation6 + $0x98] sm:$0xff] %vm548, %v1713
        %1746 = vst.msk [vmem:[#allocation6 + $0xb0] sm:$0xff] %vm548, %v1714
        %1747 = vst.msk [vmem:[#allocation6 + $0xc8] sm:$0xff] %vm548, %v1715
        %1748 = vst.msk [vmem:[#allocation6 + $0xe0] sm:$0xff] %vm548, %v1716
        %1749 = vst.msk [vmem:[#allocation6 + $0xf8] sm:$0xff] %vm548, %v1717
        %1750 = vst.msk [vmem:[#allocation6 + $0x110] sm:$0xff] %vm548, %v1718
        %1751 = vst.msk [vmem:[#allocation6 + $0x128] sm:$0xff] %vm548, %v1719
        %1752 = vst.msk [vmem:[#allocation6 + $0x140] sm:$0xff] %vm548, %v1720
        %1753 = vst.msk [vmem:[#allocation6 + $0x158] sm:$0xff] %vm548, %v1721
        %1754 = vst.msk [vmem:[#allocation6 + $0x170] sm:$0xff] %vm548, %v1722
        %1755 = vst.msk [vmem:[#allocation6 + $0x188] sm:$0xff] %vm548, %v1723
        %1756 = vst.msk [vmem:[#allocation6 + $0x1a0] sm:$0xff] %vm548, %v1724
        %1757 = vst.msk [vmem:[#allocation6 + $0x1b8] sm:$0xff] %vm548, %v1725
        %1758 = vst.msk [vmem:[#allocation6 + $0x1d0] sm:$0xff] %vm548, %v1726
        %1759 = vst.msk [vmem:[#allocation6 + $0x1e8] sm:$0xff] %vm548, %v1727
        %1760 = vst.msk [vmem:[#allocation6 + $0x200] sm:$0xff] %vm548, %v1728
        %1761 = vst.msk [vmem:[#allocation6 + $0x218] sm:$0xff] %vm548, %v1729
        %1762 = vst.msk [vmem:[#allocation6 + $0x230] sm:$0xff] %vm548, %v1730
        %1763 = vst.msk [vmem:[#allocation6 + $0x248] sm:$0xff] %vm548, %v1731
        %1764 = vst.msk [vmem:[#allocation6 + $0x260] sm:$0xff] %vm548, %v1732
        %1765 = vst.msk [vmem:[#allocation6 + $0x278] sm:$0xff] %vm548, %v1733
        %1766 = vst.msk [vmem:[#allocation6 + $0x290] sm:$0xff] %vm548, %v1734
        %1767 = vst.msk [vmem:[#allocation6 + $0x2a8] sm:$0xff] %vm548, %v1735
        %1768 = vst.msk [vmem:[#allocation6 + $0x2c0] sm:$0xff] %vm548, %v1736
        %1769 = vst.msk [vmem:[#allocation6 + $0x2d8] sm:$0xff] %vm548, %v1737
        %1770 = vst.msk [vmem:[#allocation6 + $0x2f0] sm:$0xff] %vm548, %v1738
        %v1771 = vld [vmem:[%s1031 + $0x2] sm:$0xff]
        %v1772 = vld [vmem:[%s1031 + $0xa] sm:$0xff]
        %v1773 = vld [vmem:[%s1031 + $0x1a] sm:$0xff]
        %v1774 = vld [vmem:[%s1031 + $0x22] sm:$0xff]
        %v1775 = vld [vmem:[%s1031 + $0x32] sm:$0xff]
        %v1776 = vld [vmem:[%s1031 + $0x3a] sm:$0xff]
        %v1777 = vld [vmem:[%s1031 + $0x4a] sm:$0xff]
        %v1778 = vld [vmem:[%s1031 + $0x52] sm:$0xff]
        %v1779 = vld [vmem:[%s1031 + $0x62] sm:$0xff]
        %v1780 = vld [vmem:[%s1031 + $0x6a] sm:$0xff]
        %v1781 = vld [vmem:[%s1031 + $0x7a] sm:$0xff]
        %v1782 = vld [vmem:[%s1031 + $0x82] sm:$0xff]
        %v1783 = vld [vmem:[%s1031 + $0x92] sm:$0xff]
        %v1784 = vld [vmem:[%s1031 + $0x9a] sm:$0xff]
        %v1785 = vld [vmem:[%s1031 + $0xaa] sm:$0xff]
        %v1786 = vld [vmem:[%s1031 + $0xb2] sm:$0xff]
        %v1787 = vld [vmem:[%s1031 + $0xc2] sm:$0xff]
        %v1788 = vld [vmem:[%s1031 + $0xca] sm:$0xff]
        %v1789 = vld [vmem:[%s1031 + $0xda] sm:$0xff]
        %v1790 = vld [vmem:[%s1031 + $0xe2] sm:$0xff]
        %v1791 = vld [vmem:[%s1031 + $0xf2] sm:$0xff]
        %v1792 = vld [vmem:[%s1031 + $0xfa] sm:$0xff]
        %v1793 = vld [vmem:[%s1031 + $0x10a] sm:$0xff]
        %v1794 = vld [vmem:[%s1031 + $0x112] sm:$0xff]
        %v1795 = vld [vmem:[%s1031 + $0x122] sm:$0xff]
        %v1796 = vld [vmem:[%s1031 + $0x12a] sm:$0xff]
        %v1797 = vld [vmem:[%s1031 + $0x13a] sm:$0xff]
        %v1798 = vld [vmem:[%s1031 + $0x142] sm:$0xff]
        %v1799 = vld [vmem:[%s1031 + $0x152] sm:$0xff]
        %v1800 = vld [vmem:[%s1031 + $0x15a] sm:$0xff]
        %v1801 = vld [vmem:[%s1031 + $0x16a] sm:$0xff]
        %v1802 = vld [vmem:[%s1031 + $0x172] sm:$0xff]
        %1835 = vrot.lane.b32.xlu0 %v1771, 32
        %v1836 = vpop.permute.xlu0 %1835
        %1837 = vrot.lane.b32.xlu0 %v1772, 32
        %v1838 = vpop.permute.xlu0 %1837
        %1839 = vrot.lane.b32.xlu0 %v1773, 32
        %v1840 = vpop.permute.xlu0 %1839
        %1841 = vrot.lane.b32.xlu0 %v1774, 32
        %v1842 = vpop.permute.xlu0 %1841
        %1843 = vrot.lane.b32.xlu0 %v1775, 32
        %v1844 = vpop.permute.xlu0 %1843
        %1845 = vrot.lane.b32.xlu0 %v1776, 32
        %v1846 = vpop.permute.xlu0 %1845
        %1847 = vrot.lane.b32.xlu0 %v1777, 32
        %v1848 = vpop.permute.xlu0 %1847
        %1849 = vrot.lane.b32.xlu0 %v1778, 32
        %v1850 = vpop.permute.xlu0 %1849
        %1851 = vrot.lane.b32.xlu0 %v1779, 32
        %v1852 = vpop.permute.xlu0 %1851
        %1853 = vrot.lane.b32.xlu0 %v1780, 32
        %v1854 = vpop.permute.xlu0 %1853
        %1855 = vrot.lane.b32.xlu0 %v1781, 32
        %v1856 = vpop.permute.xlu0 %1855
        %1857 = vrot.lane.b32.xlu0 %v1782, 32
        %v1858 = vpop.permute.xlu0 %1857
        %1859 = vrot.lane.b32.xlu0 %v1783, 32
        %v1860 = vpop.permute.xlu0 %1859
        %1861 = vrot.lane.b32.xlu0 %v1784, 32
        %v1862 = vpop.permute.xlu0 %1861
        %1863 = vrot.lane.b32.xlu0 %v1785, 32
        %v1864 = vpop.permute.xlu0 %1863
        %1865 = vrot.lane.b32.xlu0 %v1786, 32
        %v1866 = vpop.permute.xlu0 %1865
        %1867 = vrot.lane.b32.xlu0 %v1787, 32
        %v1868 = vpop.permute.xlu0 %1867
        %1869 = vrot.lane.b32.xlu0 %v1788, 32
        %v1870 = vpop.permute.xlu0 %1869
        %1871 = vrot.lane.b32.xlu0 %v1789, 32
        %v1872 = vpop.permute.xlu0 %1871
        %1873 = vrot.lane.b32.xlu0 %v1790, 32
        %v1874 = vpop.permute.xlu0 %1873
        %1875 = vrot.lane.b32.xlu0 %v1791, 32
        %v1876 = vpop.permute.xlu0 %1875
        %1877 = vrot.lane.b32.xlu0 %v1792, 32
        %v1878 = vpop.permute.xlu0 %1877
        %1879 = vrot.lane.b32.xlu0 %v1793, 32
        %v1880 = vpop.permute.xlu0 %1879
        %1881 = vrot.lane.b32.xlu0 %v1794, 32
        %v1882 = vpop.permute.xlu0 %1881
        %1883 = vrot.lane.b32.xlu0 %v1795, 32
        %v1884 = vpop.permute.xlu0 %1883
        %1885 = vrot.lane.b32.xlu0 %v1796, 32
        %v1886 = vpop.permute.xlu0 %1885
        %1887 = vrot.lane.b32.xlu0 %v1797, 32
        %v1888 = vpop.permute.xlu0 %1887
        %1889 = vrot.lane.b32.xlu0 %v1798, 32
        %v1890 = vpop.permute.xlu0 %1889
        %1891 = vrot.lane.b32.xlu0 %v1799, 32
        %v1892 = vpop.permute.xlu0 %1891
        %1893 = vrot.lane.b32.xlu0 %v1800, 32
        %v1894 = vpop.permute.xlu0 %1893
        %1895 = vrot.lane.b32.xlu0 %v1801, 32
        %v1896 = vpop.permute.xlu0 %1895
        %1897 = vrot.lane.b32.xlu0 %v1802, 32
        %v1898 = vpop.permute.xlu0 %1897
        %1931 = vst.msk [vmem:[#allocation6 + $0x8] sm:$0xff] %vm1288, %v1836
        %1932 = vst.msk [vmem:[#allocation6 + $0x20] sm:$0xff] %vm1288, %v1838
        %1933 = vst.msk [vmem:[#allocation6 + $0x38] sm:$0xff] %vm1288, %v1840
        %1934 = vst.msk [vmem:[#allocation6 + $0x50] sm:$0xff] %vm1288, %v1842
        %1935 = vst.msk [vmem:[#allocation6 + $0x68] sm:$0xff] %vm1288, %v1844
        %1936 = vst.msk [vmem:[#allocation6 + $0x80] sm:$0xff] %vm1288, %v1846
        %1937 = vst.msk [vmem:[#allocation6 + $0x98] sm:$0xff] %vm1288, %v1848
        %1938 = vst.msk [vmem:[#allocation6 + $0xb0] sm:$0xff] %vm1288, %v1850
        %1939 = vst.msk [vmem:[#allocation6 + $0xc8] sm:$0xff] %vm1288, %v1852
        %1940 = vst.msk [vmem:[#allocation6 + $0xe0] sm:$0xff] %vm1288, %v1854
        %1941 = vst.msk [vmem:[#allocation6 + $0xf8] sm:$0xff] %vm1288, %v1856
        %1942 = vst.msk [vmem:[#allocation6 + $0x110] sm:$0xff] %vm1288, %v1858
        %1943 = vst.msk [vmem:[#allocation6 + $0x128] sm:$0xff] %vm1288, %v1860
        %1944 = vst.msk [vmem:[#allocation6 + $0x140] sm:$0xff] %vm1288, %v1862
        %1945 = vst.msk [vmem:[#allocation6 + $0x158] sm:$0xff] %vm1288, %v1864
        %1946 = vst.msk [vmem:[#allocation6 + $0x170] sm:$0xff] %vm1288, %v1866
        %1947 = vst.msk [vmem:[#allocation6 + $0x188] sm:$0xff] %vm1288, %v1868
        %1948 = vst.msk [vmem:[#allocation6 + $0x1a0] sm:$0xff] %vm1288, %v1870
        %1949 = vst.msk [vmem:[#allocation6 + $0x1b8] sm:$0xff] %vm1288, %v1872
        %1950 = vst.msk [vmem:[#allocation6 + $0x1d0] sm:$0xff] %vm1288, %v1874
        %1951 = vst.msk [vmem:[#allocation6 + $0x1e8] sm:$0xff] %vm1288, %v1876
        %1952 = vst.msk [vmem:[#allocation6 + $0x200] sm:$0xff] %vm1288, %v1878
        %1953 = vst.msk [vmem:[#allocation6 + $0x218] sm:$0xff] %vm1288, %v1880
        %1954 = vst.msk [vmem:[#allocation6 + $0x230] sm:$0xff] %vm1288, %v1882
        %1955 = vst.msk [vmem:[#allocation6 + $0x248] sm:$0xff] %vm1288, %v1884
        %1956 = vst.msk [vmem:[#allocation6 + $0x260] sm:$0xff] %vm1288, %v1886
        %1957 = vst.msk [vmem:[#allocation6 + $0x278] sm:$0xff] %vm1288, %v1888
        %1958 = vst.msk [vmem:[#allocation6 + $0x290] sm:$0xff] %vm1288, %v1890
        %1959 = vst.msk [vmem:[#allocation6 + $0x2a8] sm:$0xff] %vm1288, %v1892
        %1960 = vst.msk [vmem:[#allocation6 + $0x2c0] sm:$0xff] %vm1288, %v1894
        %1961 = vst.msk [vmem:[#allocation6 + $0x2d8] sm:$0xff] %vm1288, %v1896
        %1962 = vst.msk [vmem:[#allocation6 + $0x2f0] sm:$0xff] %vm1288, %v1898
        %s1963 = scalar_lea.vmem [#allocation2], 48
        %v1964 = vld [vmem:[%s1963] sm:$0xff]
        %v1965 = vld [vmem:[%s1963 + $0x8] sm:$0xff]
        %v1966 = vld [vmem:[%s1963 + $0x18] sm:$0xff]
        %v1967 = vld [vmem:[%s1963 + $0x20] sm:$0xff]
        %v1968 = vld [vmem:[%s1963 + $0x30] sm:$0xff]
        %v1969 = vld [vmem:[%s1963 + $0x38] sm:$0xff]
        %v1970 = vld [vmem:[%s1963 + $0x48] sm:$0xff]
        %v1971 = vld [vmem:[%s1963 + $0x50] sm:$0xff]
        %v1972 = vld [vmem:[%s1963 + $0x60] sm:$0xff]
        %v1973 = vld [vmem:[%s1963 + $0x68] sm:$0xff]
        %v1974 = vld [vmem:[%s1963 + $0x78] sm:$0xff]
        %v1975 = vld [vmem:[%s1963 + $0x80] sm:$0xff]
        %v1976 = vld [vmem:[%s1963 + $0x90] sm:$0xff]
        %v1977 = vld [vmem:[%s1963 + $0x98] sm:$0xff]
        %v1978 = vld [vmem:[%s1963 + $0xa8] sm:$0xff]
        %v1979 = vld [vmem:[%s1963 + $0xb0] sm:$0xff]
        %v1980 = vld [vmem:[%s1963 + $0xc0] sm:$0xff]
        %v1981 = vld [vmem:[%s1963 + $0xc8] sm:$0xff]
        %v1982 = vld [vmem:[%s1963 + $0xd8] sm:$0xff]
        %v1983 = vld [vmem:[%s1963 + $0xe0] sm:$0xff]
        %v1984 = vld [vmem:[%s1963 + $0xf0] sm:$0xff]
        %v1985 = vld [vmem:[%s1963 + $0xf8] sm:$0xff]
        %v1986 = vld [vmem:[%s1963 + $0x108] sm:$0xff]
        %v1987 = vld [vmem:[%s1963 + $0x110] sm:$0xff]
        %v1988 = vld [vmem:[%s1963 + $0x120] sm:$0xff]
        %v1989 = vld [vmem:[%s1963 + $0x128] sm:$0xff]
        %v1990 = vld [vmem:[%s1963 + $0x138] sm:$0xff]
        %v1991 = vld [vmem:[%s1963 + $0x140] sm:$0xff]
        %v1992 = vld [vmem:[%s1963 + $0x150] sm:$0xff]
        %v1993 = vld [vmem:[%s1963 + $0x158] sm:$0xff]
        %v1994 = vld [vmem:[%s1963 + $0x168] sm:$0xff]
        %v1995 = vld [vmem:[%s1963 + $0x170] sm:$0xff]
        %2028 = vrot.lane.b32.xlu0 %v1964, 64
        %v2029 = vpop.permute.xlu0 %2028
        %2030 = vrot.lane.b32.xlu0 %v1965, 64
        %v2031 = vpop.permute.xlu0 %2030
        %2032 = vrot.lane.b32.xlu0 %v1966, 64
        %v2033 = vpop.permute.xlu0 %2032
        %2034 = vrot.lane.b32.xlu0 %v1967, 64
        %v2035 = vpop.permute.xlu0 %2034
        %2036 = vrot.lane.b32.xlu0 %v1968, 64
        %v2037 = vpop.permute.xlu0 %2036
        %2038 = vrot.lane.b32.xlu0 %v1969, 64
        %v2039 = vpop.permute.xlu0 %2038
        %2040 = vrot.lane.b32.xlu0 %v1970, 64
        %v2041 = vpop.permute.xlu0 %2040
        %2042 = vrot.lane.b32.xlu0 %v1971, 64
        %v2043 = vpop.permute.xlu0 %2042
        %2044 = vrot.lane.b32.xlu0 %v1972, 64
        %v2045 = vpop.permute.xlu0 %2044
        %2046 = vrot.lane.b32.xlu0 %v1973, 64
        %v2047 = vpop.permute.xlu0 %2046
        %2048 = vrot.lane.b32.xlu0 %v1974, 64
        %v2049 = vpop.permute.xlu0 %2048
        %2050 = vrot.lane.b32.xlu0 %v1975, 64
        %v2051 = vpop.permute.xlu0 %2050
        %2052 = vrot.lane.b32.xlu0 %v1976, 64
        %v2053 = vpop.permute.xlu0 %2052
        %2054 = vrot.lane.b32.xlu0 %v1977, 64
        %v2055 = vpop.permute.xlu0 %2054
        %2056 = vrot.lane.b32.xlu0 %v1978, 64
        %v2057 = vpop.permute.xlu0 %2056
        %2058 = vrot.lane.b32.xlu0 %v1979, 64
        %v2059 = vpop.permute.xlu0 %2058
        %2060 = vrot.lane.b32.xlu0 %v1980, 64
        %v2061 = vpop.permute.xlu0 %2060
        %2062 = vrot.lane.b32.xlu0 %v1981, 64
        %v2063 = vpop.permute.xlu0 %2062
        %2064 = vrot.lane.b32.xlu0 %v1982, 64
        %v2065 = vpop.permute.xlu0 %2064
        %2066 = vrot.lane.b32.xlu0 %v1983, 64
        %v2067 = vpop.permute.xlu0 %2066
        %2068 = vrot.lane.b32.xlu0 %v1984, 64
        %v2069 = vpop.permute.xlu0 %2068
        %2070 = vrot.lane.b32.xlu0 %v1985, 64
        %v2071 = vpop.permute.xlu0 %2070
        %2072 = vrot.lane.b32.xlu0 %v1986, 64
        %v2073 = vpop.permute.xlu0 %2072
        %2074 = vrot.lane.b32.xlu0 %v1987, 64
        %v2075 = vpop.permute.xlu0 %2074
        %2076 = vrot.lane.b32.xlu0 %v1988, 64
        %v2077 = vpop.permute.xlu0 %2076
        %2078 = vrot.lane.b32.xlu0 %v1989, 64
        %v2079 = vpop.permute.xlu0 %2078
        %2080 = vrot.lane.b32.xlu0 %v1990, 64
        %v2081 = vpop.permute.xlu0 %2080
        %2082 = vrot.lane.b32.xlu0 %v1991, 64
        %v2083 = vpop.permute.xlu0 %2082
        %2084 = vrot.lane.b32.xlu0 %v1992, 64
        %v2085 = vpop.permute.xlu0 %2084
        %2086 = vrot.lane.b32.xlu0 %v1993, 64
        %v2087 = vpop.permute.xlu0 %2086
        %2088 = vrot.lane.b32.xlu0 %v1994, 64
        %v2089 = vpop.permute.xlu0 %2088
        %2090 = vrot.lane.b32.xlu0 %v1995, 64
        %v2091 = vpop.permute.xlu0 %2090
        %2124 = vst.msk [vmem:[#allocation6 + $0x8] sm:$0xff] %vm1481, %v2029
        %2125 = vst.msk [vmem:[#allocation6 + $0x20] sm:$0xff] %vm1481, %v2031
        %2126 = vst.msk [vmem:[#allocation6 + $0x38] sm:$0xff] %vm1481, %v2033
        %2127 = vst.msk [vmem:[#allocation6 + $0x50] sm:$0xff] %vm1481, %v2035
        %2128 = vst.msk [vmem:[#allocation6 + $0x68] sm:$0xff] %vm1481, %v2037
        %2129 = vst.msk [vmem:[#allocation6 + $0x80] sm:$0xff] %vm1481, %v2039
        %2130 = vst.msk [vmem:[#allocation6 + $0x98] sm:$0xff] %vm1481, %v2041
        %2131 = vst.msk [vmem:[#allocation6 + $0xb0] sm:$0xff] %vm1481, %v2043
        %2132 = vst.msk [vmem:[#allocation6 + $0xc8] sm:$0xff] %vm1481, %v2045
        %2133 = vst.msk [vmem:[#allocation6 + $0xe0] sm:$0xff] %vm1481, %v2047
        %2134 = vst.msk [vmem:[#allocation6 + $0xf8] sm:$0xff] %vm1481, %v2049
        %2135 = vst.msk [vmem:[#allocation6 + $0x110] sm:$0xff] %vm1481, %v2051
        %2136 = vst.msk [vmem:[#allocation6 + $0x128] sm:$0xff] %vm1481, %v2053
        %2137 = vst.msk [vmem:[#allocation6 + $0x140] sm:$0xff] %vm1481, %v2055
        %2138 = vst.msk [vmem:[#allocation6 + $0x158] sm:$0xff] %vm1481, %v2057
        %2139 = vst.msk [vmem:[#allocation6 + $0x170] sm:$0xff] %vm1481, %v2059
        %2140 = vst.msk [vmem:[#allocation6 + $0x188] sm:$0xff] %vm1481, %v2061
        %2141 = vst.msk [vmem:[#allocation6 + $0x1a0] sm:$0xff] %vm1481, %v2063
        %2142 = vst.msk [vmem:[#allocation6 + $0x1b8] sm:$0xff] %vm1481, %v2065
        %2143 = vst.msk [vmem:[#allocation6 + $0x1d0] sm:$0xff] %vm1481, %v2067
        %2144 = vst.msk [vmem:[#allocation6 + $0x1e8] sm:$0xff] %vm1481, %v2069
        %2145 = vst.msk [vmem:[#allocation6 + $0x200] sm:$0xff] %vm1481, %v2071
        %2146 = vst.msk [vmem:[#allocation6 + $0x218] sm:$0xff] %vm1481, %v2073
        %2147 = vst.msk [vmem:[#allocation6 + $0x230] sm:$0xff] %vm1481, %v2075
        %2148 = vst.msk [vmem:[#allocation6 + $0x248] sm:$0xff] %vm1481, %v2077
        %2149 = vst.msk [vmem:[#allocation6 + $0x260] sm:$0xff] %vm1481, %v2079
        %2150 = vst.msk [vmem:[#allocation6 + $0x278] sm:$0xff] %vm1481, %v2081
        %2151 = vst.msk [vmem:[#allocation6 + $0x290] sm:$0xff] %vm1481, %v2083
        %2152 = vst.msk [vmem:[#allocation6 + $0x2a8] sm:$0xff] %vm1481, %v2085
        %2153 = vst.msk [vmem:[#allocation6 + $0x2c0] sm:$0xff] %vm1481, %v2087
        %2154 = vst.msk [vmem:[#allocation6 + $0x2d8] sm:$0xff] %vm1481, %v2089
        %2155 = vst.msk [vmem:[#allocation6 + $0x2f0] sm:$0xff] %vm1481, %v2091
        %v2156 = vld [vmem:[%s1963 + $0x1] sm:$0xff]
        %v2157 = vld [vmem:[%s1963 + $0x9] sm:$0xff]
        %v2158 = vld [vmem:[%s1963 + $0x19] sm:$0xff]
        %v2159 = vld [vmem:[%s1963 + $0x21] sm:$0xff]
        %v2160 = vld [vmem:[%s1963 + $0x31] sm:$0xff]
        %v2161 = vld [vmem:[%s1963 + $0x39] sm:$0xff]
        %v2162 = vld [vmem:[%s1963 + $0x49] sm:$0xff]
        %v2163 = vld [vmem:[%s1963 + $0x51] sm:$0xff]
        %v2164 = vld [vmem:[%s1963 + $0x61] sm:$0xff]
        %v2165 = vld [vmem:[%s1963 + $0x69] sm:$0xff]
        %v2166 = vld [vmem:[%s1963 + $0x79] sm:$0xff]
        %v2167 = vld [vmem:[%s1963 + $0x81] sm:$0xff]
        %v2168 = vld [vmem:[%s1963 + $0x91] sm:$0xff]
        %v2169 = vld [vmem:[%s1963 + $0x99] sm:$0xff]
        %v2170 = vld [vmem:[%s1963 + $0xa9] sm:$0xff]
        %v2171 = vld [vmem:[%s1963 + $0xb1] sm:$0xff]
        %v2172 = vld [vmem:[%s1963 + $0xc1] sm:$0xff]
        %v2173 = vld [vmem:[%s1963 + $0xc9] sm:$0xff]
        %v2174 = vld [vmem:[%s1963 + $0xd9] sm:$0xff]
        %v2175 = vld [vmem:[%s1963 + $0xe1] sm:$0xff]
        %v2176 = vld [vmem:[%s1963 + $0xf1] sm:$0xff]
        %v2177 = vld [vmem:[%s1963 + $0xf9] sm:$0xff]
        %v2178 = vld [vmem:[%s1963 + $0x109] sm:$0xff]
        %v2179 = vld [vmem:[%s1963 + $0x111] sm:$0xff]
        %v2180 = vld [vmem:[%s1963 + $0x121] sm:$0xff]
        %v2181 = vld [vmem:[%s1963 + $0x129] sm:$0xff]
        %v2182 = vld [vmem:[%s1963 + $0x139] sm:$0xff]
        %v2183 = vld [vmem:[%s1963 + $0x141] sm:$0xff]
        %v2184 = vld [vmem:[%s1963 + $0x151] sm:$0xff]
        %v2185 = vld [vmem:[%s1963 + $0x159] sm:$0xff]
        %v2186 = vld [vmem:[%s1963 + $0x169] sm:$0xff]
        %v2187 = vld [vmem:[%s1963 + $0x171] sm:$0xff]
        %2220 = vrot.lane.b32.xlu0 %v2156, 96
        %v2221 = vpop.permute.xlu0 %2220
        %2222 = vrot.lane.b32.xlu0 %v2157, 96
        %v2223 = vpop.permute.xlu0 %2222
        %2224 = vrot.lane.b32.xlu0 %v2158, 96
        %v2225 = vpop.permute.xlu0 %2224
        %2226 = vrot.lane.b32.xlu0 %v2159, 96
        %v2227 = vpop.permute.xlu0 %2226
        %2228 = vrot.lane.b32.xlu0 %v2160, 96
        %v2229 = vpop.permute.xlu0 %2228
        %2230 = vrot.lane.b32.xlu0 %v2161, 96
        %v2231 = vpop.permute.xlu0 %2230
        %2232 = vrot.lane.b32.xlu0 %v2162, 96
        %v2233 = vpop.permute.xlu0 %2232
        %2234 = vrot.lane.b32.xlu0 %v2163, 96
        %v2235 = vpop.permute.xlu0 %2234
        %2236 = vrot.lane.b32.xlu0 %v2164, 96
        %v2237 = vpop.permute.xlu0 %2236
        %2238 = vrot.lane.b32.xlu0 %v2165, 96
        %v2239 = vpop.permute.xlu0 %2238
        %2240 = vrot.lane.b32.xlu0 %v2166, 96
        %v2241 = vpop.permute.xlu0 %2240
        %2242 = vrot.lane.b32.xlu0 %v2167, 96
        %v2243 = vpop.permute.xlu0 %2242
        %2244 = vrot.lane.b32.xlu0 %v2168, 96
        %v2245 = vpop.permute.xlu0 %2244
        %2246 = vrot.lane.b32.xlu0 %v2169, 96
        %v2247 = vpop.permute.xlu0 %2246
        %2248 = vrot.lane.b32.xlu0 %v2170, 96
        %v2249 = vpop.permute.xlu0 %2248
        %2250 = vrot.lane.b32.xlu0 %v2171, 96
        %v2251 = vpop.permute.xlu0 %2250
        %2252 = vrot.lane.b32.xlu0 %v2172, 96
        %v2253 = vpop.permute.xlu0 %2252
        %2254 = vrot.lane.b32.xlu0 %v2173, 96
        %v2255 = vpop.permute.xlu0 %2254
        %2256 = vrot.lane.b32.xlu0 %v2174, 96
        %v2257 = vpop.permute.xlu0 %2256
        %2258 = vrot.lane.b32.xlu0 %v2175, 96
        %v2259 = vpop.permute.xlu0 %2258
        %2260 = vrot.lane.b32.xlu0 %v2176, 96
        %v2261 = vpop.permute.xlu0 %2260
        %2262 = vrot.lane.b32.xlu0 %v2177, 96
        %v2263 = vpop.permute.xlu0 %2262
        %2264 = vrot.lane.b32.xlu0 %v2178, 96
        %v2265 = vpop.permute.xlu0 %2264
        %2266 = vrot.lane.b32.xlu0 %v2179, 96
        %v2267 = vpop.permute.xlu0 %2266
        %2268 = vrot.lane.b32.xlu0 %v2180, 96
        %v2269 = vpop.permute.xlu0 %2268
        %2270 = vrot.lane.b32.xlu0 %v2181, 96
        %v2271 = vpop.permute.xlu0 %2270
        %2272 = vrot.lane.b32.xlu0 %v2182, 96
        %v2273 = vpop.permute.xlu0 %2272
        %2274 = vrot.lane.b32.xlu0 %v2183, 96
        %v2275 = vpop.permute.xlu0 %2274
        %2276 = vrot.lane.b32.xlu0 %v2184, 96
        %v2277 = vpop.permute.xlu0 %2276
        %2278 = vrot.lane.b32.xlu0 %v2185, 96
        %v2279 = vpop.permute.xlu0 %2278
        %2280 = vrot.lane.b32.xlu0 %v2186, 96
        %v2281 = vpop.permute.xlu0 %2280
        %2282 = vrot.lane.b32.xlu0 %v2187, 96
        %v2283 = vpop.permute.xlu0 %2282
        %2316 = vst.msk [vmem:[#allocation6 + $0x8] sm:$0xff] %vm1674, %v2221
        %2317 = vst.msk [vmem:[#allocation6 + $0x20] sm:$0xff] %vm1674, %v2223
        %2318 = vst.msk [vmem:[#allocation6 + $0x38] sm:$0xff] %vm1674, %v2225
        %2319 = vst.msk [vmem:[#allocation6 + $0x50] sm:$0xff] %vm1674, %v2227
        %2320 = vst.msk [vmem:[#allocation6 + $0x68] sm:$0xff] %vm1674, %v2229
        %2321 = vst.msk [vmem:[#allocation6 + $0x80] sm:$0xff] %vm1674, %v2231
        %2322 = vst.msk [vmem:[#allocation6 + $0x98] sm:$0xff] %vm1674, %v2233
        %2323 = vst.msk [vmem:[#allocation6 + $0xb0] sm:$0xff] %vm1674, %v2235
        %2324 = vst.msk [vmem:[#allocation6 + $0xc8] sm:$0xff] %vm1674, %v2237
        %2325 = vst.msk [vmem:[#allocation6 + $0xe0] sm:$0xff] %vm1674, %v2239
        %2326 = vst.msk [vmem:[#allocation6 + $0xf8] sm:$0xff] %vm1674, %v2241
        %2327 = vst.msk [vmem:[#allocation6 + $0x110] sm:$0xff] %vm1674, %v2243
        %2328 = vst.msk [vmem:[#allocation6 + $0x128] sm:$0xff] %vm1674, %v2245
        %2329 = vst.msk [vmem:[#allocation6 + $0x140] sm:$0xff] %vm1674, %v2247
        %2330 = vst.msk [vmem:[#allocation6 + $0x158] sm:$0xff] %vm1674, %v2249
        %2331 = vst.msk [vmem:[#allocation6 + $0x170] sm:$0xff] %vm1674, %v2251
        %2332 = vst.msk [vmem:[#allocation6 + $0x188] sm:$0xff] %vm1674, %v2253
        %2333 = vst.msk [vmem:[#allocation6 + $0x1a0] sm:$0xff] %vm1674, %v2255
        %2334 = vst.msk [vmem:[#allocation6 + $0x1b8] sm:$0xff] %vm1674, %v2257
        %2335 = vst.msk [vmem:[#allocation6 + $0x1d0] sm:$0xff] %vm1674, %v2259
        %2336 = vst.msk [vmem:[#allocation6 + $0x1e8] sm:$0xff] %vm1674, %v2261
        %2337 = vst.msk [vmem:[#allocation6 + $0x200] sm:$0xff] %vm1674, %v2263
        %2338 = vst.msk [vmem:[#allocation6 + $0x218] sm:$0xff] %vm1674, %v2265
        %2339 = vst.msk [vmem:[#allocation6 + $0x230] sm:$0xff] %vm1674, %v2267
        %2340 = vst.msk [vmem:[#allocation6 + $0x248] sm:$0xff] %vm1674, %v2269
        %2341 = vst.msk [vmem:[#allocation6 + $0x260] sm:$0xff] %vm1674, %v2271
        %2342 = vst.msk [vmem:[#allocation6 + $0x278] sm:$0xff] %vm1674, %v2273
        %2343 = vst.msk [vmem:[#allocation6 + $0x290] sm:$0xff] %vm1674, %v2275
        %2344 = vst.msk [vmem:[#allocation6 + $0x2a8] sm:$0xff] %vm1674, %v2277
        %2345 = vst.msk [vmem:[#allocation6 + $0x2c0] sm:$0xff] %vm1674, %v2279
        %2346 = vst.msk [vmem:[#allocation6 + $0x2d8] sm:$0xff] %vm1674, %v2281
        %2347 = vst.msk [vmem:[#allocation6 + $0x2f0] sm:$0xff] %vm1674, %v2283
        %v2348 = vld [vmem:[%s1963 + $0x2] sm:$0xff]
        %v2349 = vld [vmem:[%s1963 + $0xa] sm:$0xff]
        %v2350 = vld [vmem:[%s1963 + $0x1a] sm:$0xff]
        %v2351 = vld [vmem:[%s1963 + $0x22] sm:$0xff]
        %v2352 = vld [vmem:[%s1963 + $0x32] sm:$0xff]
        %v2353 = vld [vmem:[%s1963 + $0x3a] sm:$0xff]
        %v2354 = vld [vmem:[%s1963 + $0x4a] sm:$0xff]
        %v2355 = vld [vmem:[%s1963 + $0x52] sm:$0xff]
        %v2356 = vld [vmem:[%s1963 + $0x62] sm:$0xff]
        %v2357 = vld [vmem:[%s1963 + $0x6a] sm:$0xff]
        %v2358 = vld [vmem:[%s1963 + $0x7a] sm:$0xff]
        %v2359 = vld [vmem:[%s1963 + $0x82] sm:$0xff]
        %v2360 = vld [vmem:[%s1963 + $0x92] sm:$0xff]
        %v2361 = vld [vmem:[%s1963 + $0x9a] sm:$0xff]
        %v2362 = vld [vmem:[%s1963 + $0xaa] sm:$0xff]
        %v2363 = vld [vmem:[%s1963 + $0xb2] sm:$0xff]
        %v2364 = vld [vmem:[%s1963 + $0xc2] sm:$0xff]
        %v2365 = vld [vmem:[%s1963 + $0xca] sm:$0xff]
        %v2366 = vld [vmem:[%s1963 + $0xda] sm:$0xff]
        %v2367 = vld [vmem:[%s1963 + $0xe2] sm:$0xff]
        %v2368 = vld [vmem:[%s1963 + $0xf2] sm:$0xff]
        %v2369 = vld [vmem:[%s1963 + $0xfa] sm:$0xff]
        %v2370 = vld [vmem:[%s1963 + $0x10a] sm:$0xff]
        %v2371 = vld [vmem:[%s1963 + $0x112] sm:$0xff]
        %v2372 = vld [vmem:[%s1963 + $0x122] sm:$0xff]
        %v2373 = vld [vmem:[%s1963 + $0x12a] sm:$0xff]
        %v2374 = vld [vmem:[%s1963 + $0x13a] sm:$0xff]
        %v2375 = vld [vmem:[%s1963 + $0x142] sm:$0xff]
        %v2376 = vld [vmem:[%s1963 + $0x152] sm:$0xff]
        %v2377 = vld [vmem:[%s1963 + $0x15a] sm:$0xff]
        %v2378 = vld [vmem:[%s1963 + $0x16a] sm:$0xff]
        %v2379 = vld [vmem:[%s1963 + $0x172] sm:$0xff]
        %2380 = vst.msk [vmem:[#allocation6 + $0x10] sm:$0xff] %vm548, %v2348
        %2381 = vst.msk [vmem:[#allocation6 + $0x28] sm:$0xff] %vm548, %v2349
        %2382 = vst.msk [vmem:[#allocation6 + $0x40] sm:$0xff] %vm548, %v2350
        %2383 = vst.msk [vmem:[#allocation6 + $0x58] sm:$0xff] %vm548, %v2351
        %2384 = vst.msk [vmem:[#allocation6 + $0x70] sm:$0xff] %vm548, %v2352
        %2385 = vst.msk [vmem:[#allocation6 + $0x88] sm:$0xff] %vm548, %v2353
        %2386 = vst.msk [vmem:[#allocation6 + $0xa0] sm:$0xff] %vm548, %v2354
        %2387 = vst.msk [vmem:[#allocation6 + $0xb8] sm:$0xff] %vm548, %v2355
        %2388 = vst.msk [vmem:[#allocation6 + $0xd0] sm:$0xff] %vm548, %v2356
        %2389 = vst.msk [vmem:[#allocation6 + $0xe8] sm:$0xff] %vm548, %v2357
        %2390 = vst.msk [vmem:[#allocation6 + $0x100] sm:$0xff] %vm548, %v2358
        %2391 = vst.msk [vmem:[#allocation6 + $0x118] sm:$0xff] %vm548, %v2359
        %2392 = vst.msk [vmem:[#allocation6 + $0x130] sm:$0xff] %vm548, %v2360
        %2393 = vst.msk [vmem:[#allocation6 + $0x148] sm:$0xff] %vm548, %v2361
        %2394 = vst.msk [vmem:[#allocation6 + $0x160] sm:$0xff] %vm548, %v2362
        %2395 = vst.msk [vmem:[#allocation6 + $0x178] sm:$0xff] %vm548, %v2363
        %2396 = vst.msk [vmem:[#allocation6 + $0x190] sm:$0xff] %vm548, %v2364
        %2397 = vst.msk [vmem:[#allocation6 + $0x1a8] sm:$0xff] %vm548, %v2365
        %2398 = vst.msk [vmem:[#allocation6 + $0x1c0] sm:$0xff] %vm548, %v2366
        %2399 = vst.msk [vmem:[#allocation6 + $0x1d8] sm:$0xff] %vm548, %v2367
        %2400 = vst.msk [vmem:[#allocation6 + $0x1f0] sm:$0xff] %vm548, %v2368
        %2401 = vst.msk [vmem:[#allocation6 + $0x208] sm:$0xff] %vm548, %v2369
        %2402 = vst.msk [vmem:[#allocation6 + $0x220] sm:$0xff] %vm548, %v2370
        %2403 = vst.msk [vmem:[#allocation6 + $0x238] sm:$0xff] %vm548, %v2371
        %2404 = vst.msk [vmem:[#allocation6 + $0x250] sm:$0xff] %vm548, %v2372
        %2405 = vst.msk [vmem:[#allocation6 + $0x268] sm:$0xff] %vm548, %v2373
        %2406 = vst.msk [vmem:[#allocation6 + $0x280] sm:$0xff] %vm548, %v2374
        %2407 = vst.msk [vmem:[#allocation6 + $0x298] sm:$0xff] %vm548, %v2375
        %2408 = vst.msk [vmem:[#allocation6 + $0x2b0] sm:$0xff] %vm548, %v2376
        %2409 = vst.msk [vmem:[#allocation6 + $0x2c8] sm:$0xff] %vm548, %v2377
        %2410 = vst.msk [vmem:[#allocation6 + $0x2e0] sm:$0xff] %vm548, %v2378
        %2411 = vst.msk [vmem:[#allocation6 + $0x2f8] sm:$0xff] %vm548, %v2379
        %v2412 = vld [vmem:[#allocation6] sm:$0xff]
        %v2413 = vld [vmem:[#allocation6 + $0x8] sm:$0xff]
        %v2414 = vld [vmem:[#allocation6 + $0x10] sm:$0xff]
        %v2415 = vld [vmem:[#allocation6 + $0x18] sm:$0xff]
        %v2416 = vld [vmem:[#allocation6 + $0x20] sm:$0xff]
        %v2417 = vld [vmem:[#allocation6 + $0x28] sm:$0xff]
        %v2418 = vld [vmem:[#allocation6 + $0x30] sm:$0xff]
        %v2419 = vld [vmem:[#allocation6 + $0x38] sm:$0xff]
        %v2420 = vld [vmem:[#allocation6 + $0x40] sm:$0xff]
        %v2421 = vld [vmem:[#allocation6 + $0x48] sm:$0xff]
        %v2422 = vld [vmem:[#allocation6 + $0x50] sm:$0xff]
        %v2423 = vld [vmem:[#allocation6 + $0x58] sm:$0xff]
        %v2424 = vld [vmem:[#allocation6 + $0x60] sm:$0xff]
        %v2425 = vld [vmem:[#allocation6 + $0x68] sm:$0xff]
        %v2426 = vld [vmem:[#allocation6 + $0x70] sm:$0xff]
        %v2427 = vld [vmem:[#allocation6 + $0x78] sm:$0xff]
        %v2428 = vld [vmem:[#allocation6 + $0x80] sm:$0xff]
        %v2429 = vld [vmem:[#allocation6 + $0x88] sm:$0xff]
        %v2430 = vld [vmem:[#allocation6 + $0x90] sm:$0xff]
        %v2431 = vld [vmem:[#allocation6 + $0x98] sm:$0xff]
        %v2432 = vld [vmem:[#allocation6 + $0xa0] sm:$0xff]
        %v2433 = vld [vmem:[#allocation6 + $0xa8] sm:$0xff]
        %v2434 = vld [vmem:[#allocation6 + $0xb0] sm:$0xff]
        %v2435 = vld [vmem:[#allocation6 + $0xb8] sm:$0xff]
        %v2436 = vld [vmem:[#allocation6 + $0xc0] sm:$0xff]
        %v2437 = vld [vmem:[#allocation6 + $0xc8] sm:$0xff]
        %v2438 = vld [vmem:[#allocation6 + $0xd0] sm:$0xff]
        %v2439 = vld [vmem:[#allocation6 + $0xd8] sm:$0xff]
        %v2440 = vld [vmem:[#allocation6 + $0xe0] sm:$0xff]
        %v2441 = vld [vmem:[#allocation6 + $0xe8] sm:$0xff]
        %v2442 = vld [vmem:[#allocation6 + $0xf0] sm:$0xff]
        %v2443 = vld [vmem:[#allocation6 + $0xf8] sm:$0xff]
        %v2444 = vld [vmem:[#allocation6 + $0x100] sm:$0xff]
        %v2445 = vld [vmem:[#allocation6 + $0x108] sm:$0xff]
        %v2446 = vld [vmem:[#allocation6 + $0x110] sm:$0xff]
        %v2447 = vld [vmem:[#allocation6 + $0x118] sm:$0xff]
        %v2448 = vld [vmem:[#allocation6 + $0x120] sm:$0xff]
        %v2449 = vld [vmem:[#allocation6 + $0x128] sm:$0xff]
        %v2450 = vld [vmem:[#allocation6 + $0x130] sm:$0xff]
        %v2451 = vld [vmem:[#allocation6 + $0x138] sm:$0xff]
        %v2452 = vld [vmem:[#allocation6 + $0x140] sm:$0xff]
        %v2453 = vld [vmem:[#allocation6 + $0x148] sm:$0xff]
        %v2454 = vld [vmem:[#allocation6 + $0x150] sm:$0xff]
        %v2455 = vld [vmem:[#allocation6 + $0x158] sm:$0xff]
        %v2456 = vld [vmem:[#allocation6 + $0x160] sm:$0xff]
        %v2457 = vld [vmem:[#allocation6 + $0x168] sm:$0xff]
        %v2458 = vld [vmem:[#allocation6 + $0x170] sm:$0xff]
        %v2459 = vld [vmem:[#allocation6 + $0x178] sm:$0xff]
        %v2460 = vld [vmem:[#allocation6 + $0x180] sm:$0xff]
        %v2461 = vld [vmem:[#allocation6 + $0x188] sm:$0xff]
        %v2462 = vld [vmem:[#allocation6 + $0x190] sm:$0xff]
        %v2463 = vld [vmem:[#allocation6 + $0x198] sm:$0xff]
        %v2464 = vld [vmem:[#allocation6 + $0x1a0] sm:$0xff]
        %v2465 = vld [vmem:[#allocation6 + $0x1a8] sm:$0xff]
        %v2466 = vld [vmem:[#allocation6 + $0x1b0] sm:$0xff]
        %v2467 = vld [vmem:[#allocation6 + $0x1b8] sm:$0xff]
        %v2468 = vld [vmem:[#allocation6 + $0x1c0] sm:$0xff]
        %v2469 = vld [vmem:[#allocation6 + $0x1c8] sm:$0xff]
        %v2470 = vld [vmem:[#allocation6 + $0x1d0] sm:$0xff]
        %v2471 = vld [vmem:[#allocation6 + $0x1d8] sm:$0xff]
        %v2472 = vld [vmem:[#allocation6 + $0x1e0] sm:$0xff]
        %v2473 = vld [vmem:[#allocation6 + $0x1e8] sm:$0xff]
        %v2474 = vld [vmem:[#allocation6 + $0x1f0] sm:$0xff]
        %v2475 = vld [vmem:[#allocation6 + $0x1f8] sm:$0xff]
        %v2476 = vld [vmem:[#allocation6 + $0x200] sm:$0xff]
        %v2477 = vld [vmem:[#allocation6 + $0x208] sm:$0xff]
        %v2478 = vld [vmem:[#allocation6 + $0x210] sm:$0xff]
        %v2479 = vld [vmem:[#allocation6 + $0x218] sm:$0xff]
        %v2480 = vld [vmem:[#allocation6 + $0x220] sm:$0xff]
        %v2481 = vld [vmem:[#allocation6 + $0x228] sm:$0xff]
        %v2482 = vld [vmem:[#allocation6 + $0x230] sm:$0xff]
        %v2483 = vld [vmem:[#allocation6 + $0x238] sm:$0xff]
        %v2484 = vld [vmem:[#allocation6 + $0x240] sm:$0xff]
        %v2485 = vld [vmem:[#allocation6 + $0x248] sm:$0xff]
        %v2486 = vld [vmem:[#allocation6 + $0x250] sm:$0xff]
        %v2487 = vld [vmem:[#allocation6 + $0x258] sm:$0xff]
        %v2488 = vld [vmem:[#allocation6 + $0x260] sm:$0xff]
        %v2489 = vld [vmem:[#allocation6 + $0x268] sm:$0xff]
        %v2490 = vld [vmem:[#allocation6 + $0x270] sm:$0xff]
        %v2491 = vld [vmem:[#allocation6 + $0x278] sm:$0xff]
        %v2492 = vld [vmem:[#allocation6 + $0x280] sm:$0xff]
        %v2493 = vld [vmem:[#allocation6 + $0x288] sm:$0xff]
        %v2494 = vld [vmem:[#allocation6 + $0x290] sm:$0xff]
        %v2495 = vld [vmem:[#allocation6 + $0x298] sm:$0xff]
        %v2496 = vld [vmem:[#allocation6 + $0x2a0] sm:$0xff]
        %v2497 = vld [vmem:[#allocation6 + $0x2a8] sm:$0xff]
        %v2498 = vld [vmem:[#allocation6 + $0x2b0] sm:$0xff]
        %v2499 = vld [vmem:[#allocation6 + $0x2b8] sm:$0xff]
        %v2500 = vld [vmem:[#allocation6 + $0x2c0] sm:$0xff]
        %v2501 = vld [vmem:[#allocation6 + $0x2c8] sm:$0xff]
        %v2502 = vld [vmem:[#allocation6 + $0x2d0] sm:$0xff]
        %v2503 = vld [vmem:[#allocation6 + $0x2d8] sm:$0xff]
        %v2504 = vld [vmem:[#allocation6 + $0x2e0] sm:$0xff]
        %v2505 = vld [vmem:[#allocation6 + $0x2e8] sm:$0xff]
        %v2506 = vld [vmem:[#allocation6 + $0x2f0] sm:$0xff]
        %v2507 = vld [vmem:[#allocation6 + $0x2f8] sm:$0xff]
        %v2508 = vpack.c.bf16 %v2415, %v2412
        %v2509 = vpack.c.bf16 %v2416, %v2413
        %v2510 = vpack.c.bf16 %v2417, %v2414
        %v2511 = vpack.c.bf16 %v2421, %v2418
        %v2512 = vpack.c.bf16 %v2422, %v2419
        %v2513 = vpack.c.bf16 %v2423, %v2420
        %v2514 = vpack.c.bf16 %v2427, %v2424
        %v2515 = vpack.c.bf16 %v2428, %v2425
        %v2516 = vpack.c.bf16 %v2429, %v2426
        %v2517 = vpack.c.bf16 %v2433, %v2430
        %v2518 = vpack.c.bf16 %v2434, %v2431
        %v2519 = vpack.c.bf16 %v2435, %v2432
        %v2520 = vpack.c.bf16 %v2439, %v2436
        %v2521 = vpack.c.bf16 %v2440, %v2437
        %v2522 = vpack.c.bf16 %v2441, %v2438
        %v2523 = vpack.c.bf16 %v2445, %v2442
        %v2524 = vpack.c.bf16 %v2446, %v2443
        %v2525 = vpack.c.bf16 %v2447, %v2444
        %v2526 = vpack.c.bf16 %v2451, %v2448
        %v2527 = vpack.c.bf16 %v2452, %v2449
        %v2528 = vpack.c.bf16 %v2453, %v2450
        %v2529 = vpack.c.bf16 %v2457, %v2454
        %v2530 = vpack.c.bf16 %v2458, %v2455
        %v2531 = vpack.c.bf16 %v2459, %v2456
        %v2532 = vpack.c.bf16 %v2463, %v2460
        %v2533 = vpack.c.bf16 %v2464, %v2461
        %v2534 = vpack.c.bf16 %v2465, %v2462
        %v2535 = vpack.c.bf16 %v2469, %v2466
        %v2536 = vpack.c.bf16 %v2470, %v2467
        %v2537 = vpack.c.bf16 %v2471, %v2468
        %v2538 = vpack.c.bf16 %v2475, %v2472
        %v2539 = vpack.c.bf16 %v2476, %v2473
        %v2540 = vpack.c.bf16 %v2477, %v2474
        %v2541 = vpack.c.bf16 %v2481, %v2478
        %v2542 = vpack.c.bf16 %v2482, %v2479
        %v2543 = vpack.c.bf16 %v2483, %v2480
        %v2544 = vpack.c.bf16 %v2487, %v2484
        %v2545 = vpack.c.bf16 %v2488, %v2485
        %v2546 = vpack.c.bf16 %v2489, %v2486
        %v2547 = vpack.c.bf16 %v2493, %v2490
        %v2548 = vpack.c.bf16 %v2494, %v2491
        %v2549 = vpack.c.bf16 %v2495, %v2492
        %v2550 = vpack.c.bf16 %v2499, %v2496
        %v2551 = vpack.c.bf16 %v2500, %v2497
        %v2552 = vpack.c.bf16 %v2501, %v2498
        %v2553 = vpack.c.bf16 %v2505, %v2502
        %v2554 = vpack.c.bf16 %v2506, %v2503
        %v2555 = vpack.c.bf16 %v2507, %v2504
        %v2556 = vld [vmem:[%s4] sm:$0xf]
        %v2557 = vld [vmem:[%s4 + $0x4] sm:$0xf]
        %v2558 = vld [vmem:[%s4 + $0x8] sm:$0xf]
        %v2559 = vld [vmem:[%s4 + $0xc] sm:$0xf]
        %v2560 = vld [vmem:[%s4 + $0x10] sm:$0xf]
        %v2561 = vld [vmem:[%s4 + $0x14] sm:$0xf]
        %v2562 = vld [vmem:[%s4 + $0x18] sm:$0xf]
        %v2563 = vld [vmem:[%s4 + $0x1c] sm:$0xf]
        %v2564 = vld [vmem:[%s4 + $0x20] sm:$0xf]
        %v2565 = vld [vmem:[%s4 + $0x24] sm:$0xf]
        %v2566 = vld [vmem:[%s4 + $0x28] sm:$0xf]
        %v2567 = vld [vmem:[%s4 + $0x2c] sm:$0xf]
        %v2568 = vld [vmem:[%s4 + $0x30] sm:$0xf]
        %v2569 = vld [vmem:[%s4 + $0x34] sm:$0xf]
        %v2570 = vld [vmem:[%s4 + $0x38] sm:$0xf]
        %v2571 = vld [vmem:[%s4 + $0x3c] sm:$0xf]
        %v2572 = vld [vmem:[%s4 + $0x40] sm:$0xf]
        %v2573 = vld [vmem:[%s4 + $0x44] sm:$0xf]
        %v2574 = vld [vmem:[%s4 + $0x48] sm:$0xf]
        %v2575 = vld [vmem:[%s4 + $0x4c] sm:$0xf]
        %v2576 = vld [vmem:[%s4 + $0x50] sm:$0xf]
        %v2577 = vld [vmem:[%s4 + $0x54] sm:$0xf]
        %v2578 = vld [vmem:[%s4 + $0x58] sm:$0xf]
        %v2579 = vld [vmem:[%s4 + $0x5c] sm:$0xf]
        %v2580 = vld [vmem:[%s4 + $0x60] sm:$0xf]
        %v2581 = vld [vmem:[%s4 + $0x64] sm:$0xf]
        %v2582 = vld [vmem:[%s4 + $0x68] sm:$0xf]
        %v2583 = vld [vmem:[%s4 + $0x6c] sm:$0xf]
        %v2584 = vld [vmem:[%s4 + $0x70] sm:$0xf]
        %v2585 = vld [vmem:[%s4 + $0x74] sm:$0xf]
        %v2586 = vld [vmem:[%s4 + $0x78] sm:$0xf]
        %v2587 = vld [vmem:[%s4 + $0x7c] sm:$0xf]
        %v2588 = vld [vmem:[%s4 + $0x80] sm:$0xf]
        %v2589 = vld [vmem:[%s4 + $0x84] sm:$0xf]
        %v2590 = vld [vmem:[%s4 + $0x88] sm:$0xf]
        %v2591 = vld [vmem:[%s4 + $0x8c] sm:$0xf]
        %v2628 = vunpack.c.l.b16 %v2556
        %v2629 = vunpack.c.l.b16 %v2557
        %v2630 = vunpack.c.l.b16 %v2558
        %v2631 = vunpack.c.l.b16 %v2559
        %v2632 = vunpack.c.l.b16 %v2560
        %v2633 = vunpack.c.l.b16 %v2561
        %v2634 = vunpack.c.l.b16 %v2562
        %v2635 = vunpack.c.l.b16 %v2563
        %v2636 = vunpack.c.l.b16 %v2564
        %v2637 = vunpack.c.l.b16 %v2565
        %v2638 = vunpack.c.l.b16 %v2566
        %v2639 = vunpack.c.l.b16 %v2567
        %v2640 = vunpack.c.l.b16 %v2568
        %v2641 = vunpack.c.l.b16 %v2569
        %v2642 = vunpack.c.l.b16 %v2570
        %v2643 = vunpack.c.l.b16 %v2571
        %v2644 = vunpack.c.l.b16 %v2572
        %v2645 = vunpack.c.l.b16 %v2573
        %v2646 = vunpack.c.l.b16 %v2574
        %v2647 = vunpack.c.l.b16 %v2575
        %v2648 = vunpack.c.l.b16 %v2576
        %v2649 = vunpack.c.l.b16 %v2577
        %v2650 = vunpack.c.l.b16 %v2578
        %v2651 = vunpack.c.l.b16 %v2579
        %v2652 = vunpack.c.l.b16 %v2580
        %v2653 = vunpack.c.l.b16 %v2581
        %v2654 = vunpack.c.l.b16 %v2582
        %v2655 = vunpack.c.l.b16 %v2583
        %v2656 = vunpack.c.l.b16 %v2584
        %v2657 = vunpack.c.l.b16 %v2585
        %v2658 = vunpack.c.l.b16 %v2586
        %v2659 = vunpack.c.l.b16 %v2587
        %v2660 = vunpack.c.l.b16 %v2588
        %v2661 = vunpack.c.l.b16 %v2589
        %v2662 = vunpack.c.l.b16 %v2590
        %v2663 = vunpack.c.l.b16 %v2591
        %v2664 = vpack.c.b16 %v2629, %v2628
        %v2665 = vpack.c.b16 %v2631, %v2630
        %v2666 = vpack.c.b16 %v2633, %v2632
        %v2667 = vpack.c.b16 %v2635, %v2634
        %v2668 = vpack.c.b16 %v2637, %v2636
        %v2669 = vpack.c.b16 %v2639, %v2638
        %v2670 = vpack.c.b16 %v2641, %v2640
        %v2671 = vpack.c.b16 %v2643, %v2642
        %v2672 = vpack.c.b16 %v2645, %v2644
        %v2673 = vpack.c.b16 %v2647, %v2646
        %v2674 = vpack.c.b16 %v2649, %v2648
        %v2675 = vpack.c.b16 %v2651, %v2650
        %v2676 = vpack.c.b16 %v2653, %v2652
        %v2677 = vpack.c.b16 %v2655, %v2654
        %v2678 = vpack.c.b16 %v2657, %v2656
        %v2679 = vpack.c.b16 %v2659, %v2658
        %v2680 = vpack.c.b16 %v2661, %v2660
        %v2681 = vpack.c.b16 %v2663, %v2662
        %v2701 = vsel %vm548, %v2510, 0
        %v2704 = vsel %vm548, %v2513, 0
        %v2707 = vsel %vm548, %v2516, 0
        %v2710 = vsel %vm548, %v2519, 0
        %v2713 = vsel %vm548, %v2522, 0
        %v2716 = vsel %vm548, %v2525, 0
        %v2719 = vsel %vm548, %v2528, 0
        %v2722 = vsel %vm548, %v2531, 0
        %v2725 = vsel %vm548, %v2534, 0
        %v2728 = vsel %vm548, %v2537, 0
        %v2731 = vsel %vm548, %v2540, 0
        %v2734 = vsel %vm548, %v2543, 0
        %v2737 = vsel %vm548, %v2546, 0
        %v2740 = vsel %vm548, %v2549, 0
        %v2743 = vsel %vm548, %v2552, 0
        %v2746 = vsel %vm548, %v2555, 0
        %2748 = vmatprep.subr.bf16.mxu0 0
        %2749 = vmatpush1.bf16.msra.mxu0 %v2671
        %2750 = vmatprep.subr.bf16.mxu0 0
        %2751 = vmatpush1.bf16.msra.mxu0 %v2670
        %2752 = vmatprep.subr.bf16.mxu0 0
        %2753 = vmatpush1.bf16.msra.mxu0 %v2669
        %2754 = vmatprep.subr.bf16.mxu0 0
        %2755 = vmatpush1.bf16.msra.mxu0 %v2668
        %2756 = vmatprep.subr.bf16.mxu0 0
        %2757 = vmatpush1.bf16.msra.mxu0 %v2667
        %2758 = vmatprep.subr.bf16.mxu0 0
        %2759 = vmatpush1.bf16.msra.mxu0 %v2666
        %2760 = vmatprep.subr.bf16.mxu0 0
        %2761 = vmatpush1.bf16.msra.mxu0 %v2665
        %2762 = vmatprep.subr.bf16.mxu0 0
        %2763 = vmatpush1.bf16.msra.mxu0 %v2664
        %2764 = vmatprep.subr.bf16.mxu0 0
        %2765 = vmatpush2.bf16.msra.mxu0 %v2679
        %2766 = vmatprep.subr.bf16.mxu0 0
        %2767 = vmatpush2.bf16.msra.mxu0 %v2678
        %2768 = vmatprep.subr.bf16.mxu0 0
        %2769 = vmatpush2.bf16.msra.mxu0 %v2677
        %2770 = vmatprep.subr.bf16.mxu0 0
        %2771 = vmatpush2.bf16.msra.mxu0 %v2676
        %2772 = vmatprep.subr.bf16.mxu0 0
        %2773 = vmatpush2.bf16.msra.mxu0 %v2675
        %2774 = vmatprep.subr.bf16.mxu0 0
        %2775 = vmatpush2.bf16.msra.mxu0 %v2674
        %2776 = vmatprep.subr.bf16.mxu0 0
        %2777 = vmatpush2.bf16.msra.mxu0 %v2673
        %2778 = vmatprep.subr.bf16.mxu0 0
        %2779 = vmatpush2.bf16.msra.mxu0 %v2672
        %2780 = vmatprep.mubr.bf16.mxu0 %v2509
        %2781 = vmatmul.mubr.bf16.gmra.mxu0 %v2508
        %v2782 = vpop.f32.mrf.mxu0
        %v2783 = vadd.f32 0.0, %v2782
        %v2784 = vpop.f32.mrf.mxu0
        %v2785 = vpop.f32.mrf.mxu0
        %v2786 = vadd.f32 0.0, %v2785
        %v2787 = vpop.f32.mrf.mxu0
        %2788 = vmatprep.mubr.bf16.mxu0 %v2512
        %2789 = vmatmul.mubr.bf16.gmra.mxu0 %v2511
        %v2790 = vpop.f32.mrf.mxu0
        %v2791 = vadd.f32 0.0, %v2790
        %v2792 = vpop.f32.mrf.mxu0
        %v2793 = vpop.f32.mrf.mxu0
        %v2794 = vadd.f32 0.0, %v2793
        %v2795 = vpop.f32.mrf.mxu0
        %2796 = vmatprep.mubr.bf16.mxu0 %v2515
        %2797 = vmatmul.mubr.bf16.gmra.mxu0 %v2514
        %v2798 = vpop.f32.mrf.mxu0
        %v2799 = vadd.f32 0.0, %v2798
        %v2800 = vpop.f32.mrf.mxu0
        %v2801 = vpop.f32.mrf.mxu0
        %v2802 = vadd.f32 0.0, %v2801
        %v2803 = vpop.f32.mrf.mxu0
        %2804 = vmatprep.mubr.bf16.mxu0 %v2518
        %2805 = vmatmul.mubr.bf16.gmra.mxu0 %v2517
        %v2806 = vpop.f32.mrf.mxu0
        %v2807 = vadd.f32 0.0, %v2806
        %v2808 = vpop.f32.mrf.mxu0
        %v2809 = vpop.f32.mrf.mxu0
        %v2810 = vadd.f32 0.0, %v2809
        %v2811 = vpop.f32.mrf.mxu0
        %2812 = vmatprep.mubr.bf16.mxu0 %v2521
        %2813 = vmatmul.mubr.bf16.gmra.mxu0 %v2520
        %v2814 = vpop.f32.mrf.mxu0
        %v2815 = vadd.f32 0.0, %v2814
        %v2816 = vpop.f32.mrf.mxu0
        %v2817 = vpop.f32.mrf.mxu0
        %v2818 = vadd.f32 0.0, %v2817
        %v2819 = vpop.f32.mrf.mxu0
        %2820 = vmatprep.mubr.bf16.mxu0 %v2524
        %2821 = vmatmul.mubr.bf16.gmra.mxu0 %v2523
        %v2822 = vpop.f32.mrf.mxu0
        %v2823 = vadd.f32 0.0, %v2822
        %v2824 = vpop.f32.mrf.mxu0
        %v2825 = vpop.f32.mrf.mxu0
        %v2826 = vadd.f32 0.0, %v2825
        %v2827 = vpop.f32.mrf.mxu0
        %2828 = vmatprep.mubr.bf16.mxu0 %v2527
        %2829 = vmatmul.mubr.bf16.gmra.mxu0 %v2526
        %v2830 = vpop.f32.mrf.mxu0
        %v2831 = vadd.f32 0.0, %v2830
        %v2832 = vpop.f32.mrf.mxu0
        %v2833 = vpop.f32.mrf.mxu0
        %v2834 = vadd.f32 0.0, %v2833
        %v2835 = vpop.f32.mrf.mxu0
        %2836 = vmatprep.mubr.bf16.mxu0 %v2530
        %2837 = vmatmul.mubr.bf16.gmra.mxu0 %v2529
        %v2838 = vpop.f32.mrf.mxu0
        %v2839 = vadd.f32 0.0, %v2838
        %v2840 = vpop.f32.mrf.mxu0
        %v2841 = vpop.f32.mrf.mxu0
        %v2842 = vadd.f32 0.0, %v2841
        %v2843 = vpop.f32.mrf.mxu0
        %2844 = vmatprep.mubr.bf16.mxu0 %v2533
        %2845 = vmatmul.mubr.bf16.gmra.mxu0 %v2532
        %v2846 = vpop.f32.mrf.mxu0
        %v2847 = vadd.f32 0.0, %v2846
        %v2848 = vpop.f32.mrf.mxu0
        %v2849 = vpop.f32.mrf.mxu0
        %v2850 = vadd.f32 0.0, %v2849
        %v2851 = vpop.f32.mrf.mxu0
        %2852 = vmatprep.mubr.bf16.mxu0 %v2536
        %2853 = vmatmul.mubr.bf16.gmra.mxu0 %v2535
        %v2854 = vpop.f32.mrf.mxu0
        %v2855 = vadd.f32 0.0, %v2854
        %v2856 = vpop.f32.mrf.mxu0
        %v2857 = vpop.f32.mrf.mxu0
        %v2858 = vadd.f32 0.0, %v2857
        %v2859 = vpop.f32.mrf.mxu0
        %2860 = vmatprep.mubr.bf16.mxu0 %v2539
        %2861 = vmatmul.mubr.bf16.gmra.mxu0 %v2538
        %v2862 = vpop.f32.mrf.mxu0
        %v2863 = vadd.f32 0.0, %v2862
        %v2864 = vpop.f32.mrf.mxu0
        %v2865 = vpop.f32.mrf.mxu0
        %v2866 = vadd.f32 0.0, %v2865
        %v2867 = vpop.f32.mrf.mxu0
        %2868 = vmatprep.mubr.bf16.mxu0 %v2542
        %2869 = vmatmul.mubr.bf16.gmra.mxu0 %v2541
        %v2870 = vpop.f32.mrf.mxu0
        %v2871 = vadd.f32 0.0, %v2870
        %v2872 = vpop.f32.mrf.mxu0
        %v2873 = vpop.f32.mrf.mxu0
        %v2874 = vadd.f32 0.0, %v2873
        %v2875 = vpop.f32.mrf.mxu0
        %2876 = vmatprep.mubr.bf16.mxu0 %v2545
        %2877 = vmatmul.mubr.bf16.gmra.mxu0 %v2544
        %v2878 = vpop.f32.mrf.mxu0
        %v2879 = vadd.f32 0.0, %v2878
        %v2880 = vpop.f32.mrf.mxu0
        %v2881 = vpop.f32.mrf.mxu0
        %v2882 = vadd.f32 0.0, %v2881
        %v2883 = vpop.f32.mrf.mxu0
        %2884 = vmatprep.mubr.bf16.mxu0 %v2548
        %2885 = vmatmul.mubr.bf16.gmra.mxu0 %v2547
        %v2886 = vpop.f32.mrf.mxu0
        %v2887 = vadd.f32 0.0, %v2886
        %v2888 = vpop.f32.mrf.mxu0
        %v2889 = vpop.f32.mrf.mxu0
        %v2890 = vadd.f32 0.0, %v2889
        %v2891 = vpop.f32.mrf.mxu0
        %2892 = vmatprep.mubr.bf16.mxu0 %v2551
        %2893 = vmatmul.mubr.bf16.gmra.mxu0 %v2550
        %v2894 = vpop.f32.mrf.mxu0
        %v2895 = vadd.f32 0.0, %v2894
        %v2896 = vpop.f32.mrf.mxu0
        %v2897 = vpop.f32.mrf.mxu0
        %v2898 = vadd.f32 0.0, %v2897
        %v2899 = vpop.f32.mrf.mxu0
        %2900 = vmatprep.mubr.bf16.mxu0 %v2554
        %2901 = vmatmul.mubr.bf16.gmra.mxu0 %v2553
        %v2902 = vpop.f32.mrf.mxu0
        %v2903 = vadd.f32 0.0, %v2902
        %v2904 = vpop.f32.mrf.mxu0
        %v2905 = vpop.f32.mrf.mxu0
        %v2906 = vadd.f32 0.0, %v2905
        %v2907 = vpop.f32.mrf.mxu0
        %2908 = vdwg.mxu0
        %2909 = vmatprep.subr.bf16.mxu0 0
        %2910 = vmatpush1.bf16.msra.mxu0 0
        %2911 = vmatprep.subr.bf16.mxu0 0
        %2912 = vmatpush1.bf16.msra.mxu0 0
        %2913 = vmatprep.subr.bf16.mxu0 0
        %2914 = vmatpush1.bf16.msra.mxu0 0
        %2915 = vmatprep.subr.bf16.mxu0 0
        %2916 = vmatpush1.bf16.msra.mxu0 0
        %2917 = vmatprep.subr.bf16.mxu0 0
        %2918 = vmatpush1.bf16.msra.mxu0 0
        %2919 = vmatprep.subr.bf16.mxu0 0
        %2920 = vmatpush1.bf16.msra.mxu0 0
        %2921 = vmatprep.subr.bf16.mxu0 0
        %2922 = vmatpush1.bf16.msra.mxu0 %v2681
        %2923 = vmatprep.subr.bf16.mxu0 0
        %2924 = vmatpush1.bf16.msra.mxu0 %v2680
        %2925 = vmatprep.subr.bf16.mxu0 0
        %2926 = vmatpush2.bf16.msra.mxu0 0
        %2927 = vmatprep.subr.bf16.mxu0 0
        %2928 = vmatpush2.bf16.msra.mxu0 0
        %2929 = vmatprep.subr.bf16.mxu0 0
        %2930 = vmatpush2.bf16.msra.mxu0 0
        %2931 = vmatprep.subr.bf16.mxu0 0
        %2932 = vmatpush2.bf16.msra.mxu0 0
        %2933 = vmatprep.subr.bf16.mxu0 0
        %2934 = vmatpush2.bf16.msra.mxu0 0
        %2935 = vmatprep.subr.bf16.mxu0 0
        %2936 = vmatpush2.bf16.msra.mxu0 0
        %2937 = vmatprep.subr.bf16.mxu0 0
        %2938 = vmatpush2.bf16.msra.mxu0 0
        %2939 = vmatprep.subr.bf16.mxu0 0
        %2940 = vmatpush2.bf16.msra.mxu0 0
        %2941 = vmatprep.mubr.bf16.mxu0 0
        %2942 = vmatmul.mubr.bf16.gmra.mxu0 %v2701
        %v2943 = vpop.f32.mrf.mxu0
        %v2944 = vadd.f32 %v2783, %v2943
        %v2945 = vpop.f32.mrf.mxu0
        %v2946 = vpop.f32.mrf.mxu0
        %v2947 = vadd.f32 %v2786, %v2946
        %v2948 = vpop.f32.mrf.mxu0
        %2949 = vmatprep.mubr.bf16.mxu0 0
        %2950 = vmatmul.mubr.bf16.gmra.mxu0 %v2704
        %v2951 = vpop.f32.mrf.mxu0
        %v2952 = vadd.f32 %v2791, %v2951
        %v2953 = vpop.f32.mrf.mxu0
        %v2954 = vpop.f32.mrf.mxu0
        %v2955 = vadd.f32 %v2794, %v2954
        %v2956 = vpop.f32.mrf.mxu0
        %2957 = vmatprep.mubr.bf16.mxu0 0
        %2958 = vmatmul.mubr.bf16.gmra.mxu0 %v2707
        %v2959 = vpop.f32.mrf.mxu0
        %v2960 = vadd.f32 %v2799, %v2959
        %v2961 = vpop.f32.mrf.mxu0
        %v2962 = vpop.f32.mrf.mxu0
        %v2963 = vadd.f32 %v2802, %v2962
        %v2964 = vpop.f32.mrf.mxu0
        %2965 = vmatprep.mubr.bf16.mxu0 0
        %2966 = vmatmul.mubr.bf16.gmra.mxu0 %v2710
        %v2967 = vpop.f32.mrf.mxu0
        %v2968 = vadd.f32 %v2807, %v2967
        %v2969 = vpop.f32.mrf.mxu0
        %v2970 = vpop.f32.mrf.mxu0
        %v2971 = vadd.f32 %v2810, %v2970
        %v2972 = vpop.f32.mrf.mxu0
        %2973 = vmatprep.mubr.bf16.mxu0 0
        %2974 = vmatmul.mubr.bf16.gmra.mxu0 %v2713
        %v2975 = vpop.f32.mrf.mxu0
        %v2976 = vadd.f32 %v2815, %v2975
        %v2977 = vpop.f32.mrf.mxu0
        %v2978 = vpop.f32.mrf.mxu0
        %v2979 = vadd.f32 %v2818, %v2978
        %v2980 = vpop.f32.mrf.mxu0
        %2981 = vmatprep.mubr.bf16.mxu0 0
        %2982 = vmatmul.mubr.bf16.gmra.mxu0 %v2716
        %v2983 = vpop.f32.mrf.mxu0
        %v2984 = vadd.f32 %v2823, %v2983
        %v2985 = vpop.f32.mrf.mxu0
        %v2986 = vpop.f32.mrf.mxu0
        %v2987 = vadd.f32 %v2826, %v2986
        %v2988 = vpop.f32.mrf.mxu0
        %2989 = vmatprep.mubr.bf16.mxu0 0
        %2990 = vmatmul.mubr.bf16.gmra.mxu0 %v2719
        %v2991 = vpop.f32.mrf.mxu0
        %v2992 = vadd.f32 %v2831, %v2991
        %v2993 = vpop.f32.mrf.mxu0
        %v2994 = vpop.f32.mrf.mxu0
        %v2995 = vadd.f32 %v2834, %v2994
        %v2996 = vpop.f32.mrf.mxu0
        %2997 = vmatprep.mubr.bf16.mxu0 0
        %2998 = vmatmul.mubr.bf16.gmra.mxu0 %v2722
        %v2999 = vpop.f32.mrf.mxu0
        %v3000 = vadd.f32 %v2839, %v2999
        %v3001 = vpop.f32.mrf.mxu0
        %v3002 = vpop.f32.mrf.mxu0
        %v3003 = vadd.f32 %v2842, %v3002
        %v3004 = vpop.f32.mrf.mxu0
        %3005 = vmatprep.mubr.bf16.mxu0 0
        %3006 = vmatmul.mubr.bf16.gmra.mxu0 %v2725
        %v3007 = vpop.f32.mrf.mxu0
        %v3008 = vadd.f32 %v2847, %v3007
        %v3009 = vpop.f32.mrf.mxu0
        %v3010 = vpop.f32.mrf.mxu0
        %v3011 = vadd.f32 %v2850, %v3010
        %v3012 = vpop.f32.mrf.mxu0
        %3013 = vmatprep.mubr.bf16.mxu0 0
        %3014 = vmatmul.mubr.bf16.gmra.mxu0 %v2728
        %v3015 = vpop.f32.mrf.mxu0
        %v3016 = vadd.f32 %v2855, %v3015
        %v3017 = vpop.f32.mrf.mxu0
        %v3018 = vpop.f32.mrf.mxu0
        %v3019 = vadd.f32 %v2858, %v3018
        %v3020 = vpop.f32.mrf.mxu0
        %3021 = vmatprep.mubr.bf16.mxu0 0
        %3022 = vmatmul.mubr.bf16.gmra.mxu0 %v2731
        %v3023 = vpop.f32.mrf.mxu0
        %v3024 = vadd.f32 %v2863, %v3023
        %v3025 = vpop.f32.mrf.mxu0
        %v3026 = vpop.f32.mrf.mxu0
        %v3027 = vadd.f32 %v2866, %v3026
        %v3028 = vpop.f32.mrf.mxu0
        %3029 = vmatprep.mubr.bf16.mxu0 0
        %3030 = vmatmul.mubr.bf16.gmra.mxu0 %v2734
        %v3031 = vpop.f32.mrf.mxu0
        %v3032 = vadd.f32 %v2871, %v3031
        %v3033 = vpop.f32.mrf.mxu0
        %v3034 = vpop.f32.mrf.mxu0
        %v3035 = vadd.f32 %v2874, %v3034
        %v3036 = vpop.f32.mrf.mxu0
        %3037 = vmatprep.mubr.bf16.mxu0 0
        %3038 = vmatmul.mubr.bf16.gmra.mxu0 %v2737
        %v3039 = vpop.f32.mrf.mxu0
        %v3040 = vadd.f32 %v2879, %v3039
        %v3041 = vpop.f32.mrf.mxu0
        %v3042 = vpop.f32.mrf.mxu0
        %v3043 = vadd.f32 %v2882, %v3042
        %v3044 = vpop.f32.mrf.mxu0
        %3045 = vmatprep.mubr.bf16.mxu0 0
        %3046 = vmatmul.mubr.bf16.gmra.mxu0 %v2740
        %v3047 = vpop.f32.mrf.mxu0
        %v3048 = vadd.f32 %v2887, %v3047
        %v3049 = vpop.f32.mrf.mxu0
        %v3050 = vpop.f32.mrf.mxu0
        %v3051 = vadd.f32 %v2890, %v3050
        %v3052 = vpop.f32.mrf.mxu0
        %3053 = vmatprep.mubr.bf16.mxu0 0
        %3054 = vmatmul.mubr.bf16.gmra.mxu0 %v2743
        %v3055 = vpop.f32.mrf.mxu0
        %v3056 = vadd.f32 %v2895, %v3055
        %v3057 = vpop.f32.mrf.mxu0
        %v3058 = vpop.f32.mrf.mxu0
        %v3059 = vadd.f32 %v2898, %v3058
        %v3060 = vpop.f32.mrf.mxu0
        %3061 = vmatprep.mubr.bf16.mxu0 0
        %3062 = vmatmul.mubr.bf16.gmra.mxu0 %v2746
        %v3063 = vpop.f32.mrf.mxu0
        %v3064 = vadd.f32 %v2903, %v3063
        %v3065 = vpop.f32.mrf.mxu0
        %v3066 = vpop.f32.mrf.mxu0
        %v3067 = vadd.f32 %v2906, %v3066
        %v3068 = vpop.f32.mrf.mxu0
        %3069 = vdwg.mxu0
        %v3070 = vld [vmem:[%s3] sm:$0xff]
        %v3071 = vld [vmem:[%s3 + $0x8] sm:$0xff]
        %v3072 = vld [vmem:[%s3 + $0x10] sm:$0xff]
        %v3073 = vld [vmem:[%s3 + $0x18] sm:$0xff]
        %v3074 = vld [vmem:[%s3 + $0x20] sm:$0xff]
        %v3075 = vld [vmem:[%s3 + $0x28] sm:$0xff]
        %v3076 = vld [vmem:[%s3 + $0x30] sm:$0xff]
        %v3077 = vld [vmem:[%s3 + $0x38] sm:$0xff]
        %v3078 = vpack.c.bf16 %v2947, %v2944
        %v3079 = vpack.c.bf16 %v2955, %v2952
        %v3080 = vpack.c.bf16 %v2963, %v2960
        %v3081 = vpack.c.bf16 %v2971, %v2968
        %v3082 = vpack.c.bf16 %v2979, %v2976
        %v3083 = vpack.c.bf16 %v2987, %v2984
        %v3084 = vpack.c.bf16 %v2995, %v2992
        %v3085 = vpack.c.bf16 %v3003, %v3000
        %v3086 = vpack.c.bf16 %v3011, %v3008
        %v3087 = vpack.c.bf16 %v3019, %v3016
        %v3088 = vpack.c.bf16 %v3027, %v3024
        %v3089 = vpack.c.bf16 %v3035, %v3032
        %v3090 = vpack.c.bf16 %v3043, %v3040
        %v3091 = vpack.c.bf16 %v3051, %v3048
        %v3092 = vpack.c.bf16 %v3059, %v3056
        %v3093 = vpack.c.bf16 %v3067, %v3064
        %v3094 = vld [vmem:[%s5] sm:$0x1]
        %v3096 = vlaneseq
        %v3097 = vshrl.u32 %v3096, 7
        %v3098 = vsub.s32 0, %v3097
        %v3099 = vrot.slane %v3094, %v3098
        %v3109 = vunpack.c.l.b16 %v3070
        %v3110 = vunpack.c.h.b16 %v3070
        %v3111 = vunpack.c.l.b16 %v3071
        %v3112 = vunpack.c.h.b16 %v3071
        %v3113 = vunpack.c.l.b16 %v3072
        %v3114 = vunpack.c.h.b16 %v3072
        %v3115 = vunpack.c.l.b16 %v3073
        %v3116 = vunpack.c.h.b16 %v3073
        %v3117 = vunpack.c.l.b16 %v3074
        %v3118 = vunpack.c.h.b16 %v3074
        %v3119 = vunpack.c.l.b16 %v3075
        %v3120 = vunpack.c.h.b16 %v3075
        %v3121 = vunpack.c.l.b16 %v3076
        %v3122 = vunpack.c.h.b16 %v3076
        %v3123 = vunpack.c.l.b16 %v3077
        %v3124 = vunpack.c.h.b16 %v3077
        %v3125 = vpack.c.b16 %v3111, %v3109
        %v3126 = vpack.c.b16 %v3112, %v3110
        %v3127 = vpack.c.b16 %v3115, %v3113
        %v3128 = vpack.c.b16 %v3116, %v3114
        %v3129 = vpack.c.b16 %v3119, %v3117
        %v3130 = vpack.c.b16 %v3120, %v3118
        %v3131 = vpack.c.b16 %v3123, %v3121
        %v3132 = vpack.c.b16 %v3124, %v3122
        %3141 = vmatprep.subr.bf16.mxu0 0
        %3142 = vmatpush1.bf16.msra.mxu0 %v3085
        %3143 = vmatprep.subr.bf16.mxu0 0
        %3144 = vmatpush1.bf16.msra.mxu0 %v3084
        %3145 = vmatprep.subr.bf16.mxu0 0
        %3146 = vmatpush1.bf16.msra.mxu0 %v3083
        %3147 = vmatprep.subr.bf16.mxu0 0
        %3148 = vmatpush1.bf16.msra.mxu0 %v3082
        %3149 = vmatprep.subr.bf16.mxu0 0
        %3150 = vmatpush1.bf16.msra.mxu0 %v3081
        %3151 = vmatprep.subr.bf16.mxu0 0
        %3152 = vmatpush1.bf16.msra.mxu0 %v3080
        %3153 = vmatprep.subr.bf16.mxu0 0
        %3154 = vmatpush1.bf16.msra.mxu0 %v3079
        %3155 = vmatprep.subr.bf16.mxu0 0
        %3156 = vmatpush1.bf16.msra.mxu0 %v3078
        %3157 = vmatprep.subr.bf16.mxu0 0
        %3158 = vmatpush2.bf16.msra.mxu0 %v3093
        %3159 = vmatprep.subr.bf16.mxu0 0
        %3160 = vmatpush2.bf16.msra.mxu0 %v3092
        %3161 = vmatprep.subr.bf16.mxu0 0
        %3162 = vmatpush2.bf16.msra.mxu0 %v3091
        %3163 = vmatprep.subr.bf16.mxu0 0
        %3164 = vmatpush2.bf16.msra.mxu0 %v3090
        %3165 = vmatprep.subr.bf16.mxu0 0
        %3166 = vmatpush2.bf16.msra.mxu0 %v3089
        %3167 = vmatprep.subr.bf16.mxu0 0
        %3168 = vmatpush2.bf16.msra.mxu0 %v3088
        %3169 = vmatprep.subr.bf16.mxu0 0
        %3170 = vmatpush2.bf16.msra.mxu0 %v3087
        %3171 = vmatprep.subr.bf16.mxu0 0
        %3172 = vmatpush2.bf16.msra.mxu0 %v3086
        %3173 = vmatprep.mubr.bf16.mxu0 %v3126
        %3174 = vmatmul.mubr.bf16.gmra.mxu0 %v3125
        %v3175 = vpop.f32.mrf.mxu0
        %v3176 = vadd.f32 %v3099, %v3175
        %v3177 = vpop.f32.mrf.mxu0
        %v3178 = vpop.f32.mrf.mxu0
        %v3179 = vadd.f32 %v3099, %v3178
        %v3180 = vpop.f32.mrf.mxu0
        %3181 = vmatprep.mubr.bf16.mxu0 %v3128
        %3182 = vmatmul.mubr.bf16.gmra.mxu0 %v3127
        %v3183 = vpop.f32.mrf.mxu0
        %v3184 = vadd.f32 %v3099, %v3183
        %v3185 = vpop.f32.mrf.mxu0
        %v3186 = vpop.f32.mrf.mxu0
        %v3187 = vadd.f32 %v3099, %v3186
        %v3188 = vpop.f32.mrf.mxu0
        %3189 = vmatprep.mubr.bf16.mxu0 %v3130
        %3190 = vmatmul.mubr.bf16.gmra.mxu0 %v3129
        %v3191 = vpop.f32.mrf.mxu0
        %v3192 = vadd.f32 %v3099, %v3191
        %v3193 = vpop.f32.mrf.mxu0
        %v3194 = vpop.f32.mrf.mxu0
        %v3195 = vadd.f32 %v3099, %v3194
        %v3196 = vpop.f32.mrf.mxu0
        %3197 = vmatprep.mubr.bf16.mxu0 %v3132
        %3198 = vmatmul.mubr.bf16.gmra.mxu0 %v3131
        %v3199 = vpop.f32.mrf.mxu0
        %v3200 = vadd.f32 %v3099, %v3199
        %v3201 = vpop.f32.mrf.mxu0
        %v3202 = vpop.f32.mrf.mxu0
        %v3203 = vadd.f32 %v3099, %v3202
        %v3204 = vpop.f32.mrf.mxu0
        %3205 = vdwg.mxu0
        %s3206 = scalar_lea.vmem [#allocation4], 16
        %3207 = vst.msk [vmem:[%s3206 + $0x1] sm:$0xff] %vm604, %v3176
        %3208 = vst.msk [vmem:[%s3206 + $0x11] sm:$0xff] %vm604, %v3179
        %3209 = vst.msk [vmem:[%s3206 + $0x21] sm:$0xff] %vm604, %v3184
        %3210 = vst.msk [vmem:[%s3206 + $0x31] sm:$0xff] %vm604, %v3187
        %3211 = vst.msk [vmem:[%s3206 + $0x41] sm:$0xff] %vm604, %v3192
        %3212 = vst.msk [vmem:[%s3206 + $0x51] sm:$0xff] %vm604, %v3195
        %3213 = vst.msk [vmem:[%s3206 + $0x61] sm:$0xff] %vm604, %v3200
        %3214 = vst.msk [vmem:[%s3206 + $0x71] sm:$0xff] %vm604, %v3203
        %v3215 = vld [vmem:[#allocation4] sm:$0xff]
        %v3216 = vld [vmem:[#allocation4 + $0x10] sm:$0xff]
        %v3217 = vld [vmem:[#allocation4 + $0x20] sm:$0xff]
        %v3218 = vld [vmem:[#allocation4 + $0x30] sm:$0xff]
        %v3219 = vld [vmem:[#allocation4 + $0x40] sm:$0xff]
        %v3220 = vld [vmem:[#allocation4 + $0x50] sm:$0xff]
        %v3221 = vld [vmem:[#allocation4 + $0x60] sm:$0xff]
        %v3222 = vld [vmem:[#allocation4 + $0x70] sm:$0xff]
        %3223 = vst.msk [vmem:[#allocation7] sm:$0xff] %vm604, %v3215
        %3224 = vst.msk [vmem:[#allocation7 + $0x28] sm:$0xff] %vm604, %v3216
        %3225 = vst.msk [vmem:[#allocation7 + $0x50] sm:$0xff] %vm604, %v3217
        %3226 = vst.msk [vmem:[#allocation7 + $0x78] sm:$0xff] %vm604, %v3218
        %3227 = vst.msk [vmem:[#allocation7 + $0xa0] sm:$0xff] %vm604, %v3219
        %3228 = vst.msk [vmem:[#allocation7 + $0xc8] sm:$0xff] %vm604, %v3220
        %3229 = vst.msk [vmem:[#allocation7 + $0xf0] sm:$0xff] %vm604, %v3221
        %3230 = vst.msk [vmem:[#allocation7 + $0x118] sm:$0xff] %vm604, %v3222
        %v3231 = vld [vmem:[#allocation4 + $0x1] sm:$0xff]
        %v3232 = vld [vmem:[#allocation4 + $0x11] sm:$0xff]
        %v3233 = vld [vmem:[#allocation4 + $0x21] sm:$0xff]
        %v3234 = vld [vmem:[#allocation4 + $0x31] sm:$0xff]
        %v3235 = vld [vmem:[#allocation4 + $0x41] sm:$0xff]
        %v3236 = vld [vmem:[#allocation4 + $0x51] sm:$0xff]
        %v3237 = vld [vmem:[#allocation4 + $0x61] sm:$0xff]
        %v3238 = vld [vmem:[#allocation4 + $0x71] sm:$0xff]
        %3247 = vrot.lane.b32.xlu0 %v3231, 64
        %v3248 = vpop.permute.xlu0 %3247
        %3249 = vrot.lane.b32.xlu0 %v3232, 64
        %v3250 = vpop.permute.xlu0 %3249
        %3251 = vrot.lane.b32.xlu0 %v3233, 64
        %v3252 = vpop.permute.xlu0 %3251
        %3253 = vrot.lane.b32.xlu0 %v3234, 64
        %v3254 = vpop.permute.xlu0 %3253
        %3255 = vrot.lane.b32.xlu0 %v3235, 64
        %v3256 = vpop.permute.xlu0 %3255
        %3257 = vrot.lane.b32.xlu0 %v3236, 64
        %v3258 = vpop.permute.xlu0 %3257
        %3259 = vrot.lane.b32.xlu0 %v3237, 64
        %v3260 = vpop.permute.xlu0 %3259
        %3261 = vrot.lane.b32.xlu0 %v3238, 64
        %v3262 = vpop.permute.xlu0 %3261
        %vm3271 = vcmask 1048064
        %3272 = vst.msk [vmem:[#allocation7] sm:$0xff] %vm3271, %v3248
        %3273 = vst.msk [vmem:[#allocation7 + $0x28] sm:$0xff] %vm3271, %v3250
        %3274 = vst.msk [vmem:[#allocation7 + $0x50] sm:$0xff] %vm3271, %v3252
        %3275 = vst.msk [vmem:[#allocation7 + $0x78] sm:$0xff] %vm3271, %v3254
        %3276 = vst.msk [vmem:[#allocation7 + $0xa0] sm:$0xff] %vm3271, %v3256
        %3277 = vst.msk [vmem:[#allocation7 + $0xc8] sm:$0xff] %vm3271, %v3258
        %3278 = vst.msk [vmem:[#allocation7 + $0xf0] sm:$0xff] %vm3271, %v3260
        %3279 = vst.msk [vmem:[#allocation7 + $0x118] sm:$0xff] %vm3271, %v3262
        %v3280 = vld [vmem:[#allocation4 + $0x2] sm:$0xff]
        %v3281 = vld [vmem:[#allocation4 + $0x12] sm:$0xff]
        %v3282 = vld [vmem:[#allocation4 + $0x22] sm:$0xff]
        %v3283 = vld [vmem:[#allocation4 + $0x32] sm:$0xff]
        %v3284 = vld [vmem:[#allocation4 + $0x42] sm:$0xff]
        %v3285 = vld [vmem:[#allocation4 + $0x52] sm:$0xff]
        %v3286 = vld [vmem:[#allocation4 + $0x62] sm:$0xff]
        %v3287 = vld [vmem:[#allocation4 + $0x72] sm:$0xff]
        %3288 = vst.msk [vmem:[#allocation7 + $0x8] sm:$0xff] %vm604, %v3280
        %3289 = vst.msk [vmem:[#allocation7 + $0x30] sm:$0xff] %vm604, %v3281
        %3290 = vst.msk [vmem:[#allocation7 + $0x58] sm:$0xff] %vm604, %v3282
        %3291 = vst.msk [vmem:[#allocation7 + $0x80] sm:$0xff] %vm604, %v3283
        %3292 = vst.msk [vmem:[#allocation7 + $0xa8] sm:$0xff] %vm604, %v3284
        %3293 = vst.msk [vmem:[#allocation7 + $0xd0] sm:$0xff] %vm604, %v3285
        %3294 = vst.msk [vmem:[#allocation7 + $0xf8] sm:$0xff] %vm604, %v3286
        %3295 = vst.msk [vmem:[#allocation7 + $0x120] sm:$0xff] %vm604, %v3287
        %v3296 = vld [vmem:[%s3206] sm:$0xff]
        %v3297 = vld [vmem:[%s3206 + $0x10] sm:$0xff]
        %v3298 = vld [vmem:[%s3206 + $0x20] sm:$0xff]
        %v3299 = vld [vmem:[%s3206 + $0x30] sm:$0xff]
        %v3300 = vld [vmem:[%s3206 + $0x40] sm:$0xff]
        %v3301 = vld [vmem:[%s3206 + $0x50] sm:$0xff]
        %v3302 = vld [vmem:[%s3206 + $0x60] sm:$0xff]
        %v3303 = vld [vmem:[%s3206 + $0x70] sm:$0xff]
        %3312 = vrot.lane.b32.xlu0 %v3296, 64
        %v3313 = vpop.permute.xlu0 %3312
        %3314 = vrot.lane.b32.xlu0 %v3297, 64
        %v3315 = vpop.permute.xlu0 %3314
        %3316 = vrot.lane.b32.xlu0 %v3298, 64
        %v3317 = vpop.permute.xlu0 %3316
        %3318 = vrot.lane.b32.xlu0 %v3299, 64
        %v3319 = vpop.permute.xlu0 %3318
        %3320 = vrot.lane.b32.xlu0 %v3300, 64
        %v3321 = vpop.permute.xlu0 %3320
        %3322 = vrot.lane.b32.xlu0 %v3301, 64
        %v3323 = vpop.permute.xlu0 %3322
        %3324 = vrot.lane.b32.xlu0 %v3302, 64
        %v3325 = vpop.permute.xlu0 %3324
        %3326 = vrot.lane.b32.xlu0 %v3303, 64
        %v3327 = vpop.permute.xlu0 %3326
        %3336 = vst.msk [vmem:[#allocation7 + $0x8] sm:$0xff] %vm3271, %v3313
        %3337 = vst.msk [vmem:[#allocation7 + $0x30] sm:$0xff] %vm3271, %v3315
        %3338 = vst.msk [vmem:[#allocation7 + $0x58] sm:$0xff] %vm3271, %v3317
        %3339 = vst.msk [vmem:[#allocation7 + $0x80] sm:$0xff] %vm3271, %v3319
        %3340 = vst.msk [vmem:[#allocation7 + $0xa8] sm:$0xff] %vm3271, %v3321
        %3341 = vst.msk [vmem:[#allocation7 + $0xd0] sm:$0xff] %vm3271, %v3323
        %3342 = vst.msk [vmem:[#allocation7 + $0xf8] sm:$0xff] %vm3271, %v3325
        %3343 = vst.msk [vmem:[#allocation7 + $0x120] sm:$0xff] %vm3271, %v3327
        %v3344 = vld [vmem:[%s3206 + $0x1] sm:$0xff]
        %v3345 = vld [vmem:[%s3206 + $0x11] sm:$0xff]
        %v3346 = vld [vmem:[%s3206 + $0x21] sm:$0xff]
        %v3347 = vld [vmem:[%s3206 + $0x31] sm:$0xff]
        %v3348 = vld [vmem:[%s3206 + $0x41] sm:$0xff]
        %v3349 = vld [vmem:[%s3206 + $0x51] sm:$0xff]
        %v3350 = vld [vmem:[%s3206 + $0x61] sm:$0xff]
        %v3351 = vld [vmem:[%s3206 + $0x71] sm:$0xff]
        %3352 = vst.msk [vmem:[#allocation7 + $0x10] sm:$0xff] %vm604, %v3344
        %3353 = vst.msk [vmem:[#allocation7 + $0x38] sm:$0xff] %vm604, %v3345
        %3354 = vst.msk [vmem:[#allocation7 + $0x60] sm:$0xff] %vm604, %v3346
        %3355 = vst.msk [vmem:[#allocation7 + $0x88] sm:$0xff] %vm604, %v3347
        %3356 = vst.msk [vmem:[#allocation7 + $0xb0] sm:$0xff] %vm604, %v3348
        %3357 = vst.msk [vmem:[#allocation7 + $0xd8] sm:$0xff] %vm604, %v3349
        %3358 = vst.msk [vmem:[#allocation7 + $0x100] sm:$0xff] %vm604, %v3350
        %3359 = vst.msk [vmem:[#allocation7 + $0x128] sm:$0xff] %vm604, %v3351
        %v3360 = vld [vmem:[%s3206 + $0x2] sm:$0xff]
        %v3361 = vld [vmem:[%s3206 + $0x12] sm:$0xff]
        %v3362 = vld [vmem:[%s3206 + $0x22] sm:$0xff]
        %v3363 = vld [vmem:[%s3206 + $0x32] sm:$0xff]
        %v3364 = vld [vmem:[%s3206 + $0x42] sm:$0xff]
        %v3365 = vld [vmem:[%s3206 + $0x52] sm:$0xff]
        %v3366 = vld [vmem:[%s3206 + $0x62] sm:$0xff]
        %v3367 = vld [vmem:[%s3206 + $0x72] sm:$0xff]
        %3376 = vrot.lane.b32.xlu0 %v3360, 64
        %v3377 = vpop.permute.xlu0 %3376
        %3378 = vrot.lane.b32.xlu0 %v3361, 64
        %v3379 = vpop.permute.xlu0 %3378
        %3380 = vrot.lane.b32.xlu0 %v3362, 64
        %v3381 = vpop.permute.xlu0 %3380
        %3382 = vrot.lane.b32.xlu0 %v3363, 64
        %v3383 = vpop.permute.xlu0 %3382
        %3384 = vrot.lane.b32.xlu0 %v3364, 64
        %v3385 = vpop.permute.xlu0 %3384
        %3386 = vrot.lane.b32.xlu0 %v3365, 64
        %v3387 = vpop.permute.xlu0 %3386
        %3388 = vrot.lane.b32.xlu0 %v3366, 64
        %v3389 = vpop.permute.xlu0 %3388
        %3390 = vrot.lane.b32.xlu0 %v3367, 64
        %v3391 = vpop.permute.xlu0 %3390
        %3400 = vst.msk [vmem:[#allocation7 + $0x10] sm:$0xff] %vm3271, %v3377
        %3401 = vst.msk [vmem:[#allocation7 + $0x38] sm:$0xff] %vm3271, %v3379
        %3402 = vst.msk [vmem:[#allocation7 + $0x60] sm:$0xff] %vm3271, %v3381
        %3403 = vst.msk [vmem:[#allocation7 + $0x88] sm:$0xff] %vm3271, %v3383
        %3404 = vst.msk [vmem:[#allocation7 + $0xb0] sm:$0xff] %vm3271, %v3385
        %3405 = vst.msk [vmem:[#allocation7 + $0xd8] sm:$0xff] %vm3271, %v3387
        %3406 = vst.msk [vmem:[#allocation7 + $0x100] sm:$0xff] %vm3271, %v3389
        %3407 = vst.msk [vmem:[#allocation7 + $0x128] sm:$0xff] %vm3271, %v3391
        %s3408 = scalar_lea.vmem [#allocation4], 32
        %v3409 = vld [vmem:[%s3408] sm:$0xff]
        %v3410 = vld [vmem:[%s3408 + $0x10] sm:$0xff]
        %v3411 = vld [vmem:[%s3408 + $0x20] sm:$0xff]
        %v3412 = vld [vmem:[%s3408 + $0x30] sm:$0xff]
        %v3413 = vld [vmem:[%s3408 + $0x40] sm:$0xff]
        %v3414 = vld [vmem:[%s3408 + $0x50] sm:$0xff]
        %v3415 = vld [vmem:[%s3408 + $0x60] sm:$0xff]
        %v3416 = vld [vmem:[%s3408 + $0x70] sm:$0xff]
        %3417 = vst.msk [vmem:[#allocation7 + $0x18] sm:$0xff] %vm604, %v3409
        %3418 = vst.msk [vmem:[#allocation7 + $0x40] sm:$0xff] %vm604, %v3410
        %3419 = vst.msk [vmem:[#allocation7 + $0x68] sm:$0xff] %vm604, %v3411
        %3420 = vst.msk [vmem:[#allocation7 + $0x90] sm:$0xff] %vm604, %v3412
        %3421 = vst.msk [vmem:[#allocation7 + $0xb8] sm:$0xff] %vm604, %v3413
        %3422 = vst.msk [vmem:[#allocation7 + $0xe0] sm:$0xff] %vm604, %v3414
        %3423 = vst.msk [vmem:[#allocation7 + $0x108] sm:$0xff] %vm604, %v3415
        %3424 = vst.msk [vmem:[#allocation7 + $0x130] sm:$0xff] %vm604, %v3416
        %v3425 = vld [vmem:[%s3408 + $0x1] sm:$0xff]
        %v3426 = vld [vmem:[%s3408 + $0x11] sm:$0xff]
        %v3427 = vld [vmem:[%s3408 + $0x21] sm:$0xff]
        %v3428 = vld [vmem:[%s3408 + $0x31] sm:$0xff]
        %v3429 = vld [vmem:[%s3408 + $0x41] sm:$0xff]
        %v3430 = vld [vmem:[%s3408 + $0x51] sm:$0xff]
        %v3431 = vld [vmem:[%s3408 + $0x61] sm:$0xff]
        %v3432 = vld [vmem:[%s3408 + $0x71] sm:$0xff]
        %3441 = vrot.lane.b32.xlu0 %v3425, 64
        %v3442 = vpop.permute.xlu0 %3441
        %3443 = vrot.lane.b32.xlu0 %v3426, 64
        %v3444 = vpop.permute.xlu0 %3443
        %3445 = vrot.lane.b32.xlu0 %v3427, 64
        %v3446 = vpop.permute.xlu0 %3445
        %3447 = vrot.lane.b32.xlu0 %v3428, 64
        %v3448 = vpop.permute.xlu0 %3447
        %3449 = vrot.lane.b32.xlu0 %v3429, 64
        %v3450 = vpop.permute.xlu0 %3449
        %3451 = vrot.lane.b32.xlu0 %v3430, 64
        %v3452 = vpop.permute.xlu0 %3451
        %3453 = vrot.lane.b32.xlu0 %v3431, 64
        %v3454 = vpop.permute.xlu0 %3453
        %3455 = vrot.lane.b32.xlu0 %v3432, 64
        %v3456 = vpop.permute.xlu0 %3455
        %3465 = vst.msk [vmem:[#allocation7 + $0x18] sm:$0xff] %vm3271, %v3442
        %3466 = vst.msk [vmem:[#allocation7 + $0x40] sm:$0xff] %vm3271, %v3444
        %3467 = vst.msk [vmem:[#allocation7 + $0x68] sm:$0xff] %vm3271, %v3446
        %3468 = vst.msk [vmem:[#allocation7 + $0x90] sm:$0xff] %vm3271, %v3448
        %3469 = vst.msk [vmem:[#allocation7 + $0xb8] sm:$0xff] %vm3271, %v3450
        %3470 = vst.msk [vmem:[#allocation7 + $0xe0] sm:$0xff] %vm3271, %v3452
        %3471 = vst.msk [vmem:[#allocation7 + $0x108] sm:$0xff] %vm3271, %v3454
        %3472 = vst.msk [vmem:[#allocation7 + $0x130] sm:$0xff] %vm3271, %v3456
        %v3473 = vld [vmem:[%s3408 + $0x2] sm:$0xff]
        %v3474 = vld [vmem:[%s3408 + $0x12] sm:$0xff]
        %v3475 = vld [vmem:[%s3408 + $0x22] sm:$0xff]
        %v3476 = vld [vmem:[%s3408 + $0x32] sm:$0xff]
        %v3477 = vld [vmem:[%s3408 + $0x42] sm:$0xff]
        %v3478 = vld [vmem:[%s3408 + $0x52] sm:$0xff]
        %v3479 = vld [vmem:[%s3408 + $0x62] sm:$0xff]
        %v3480 = vld [vmem:[%s3408 + $0x72] sm:$0xff]
        %3481 = vst.msk [vmem:[#allocation7 + $0x20] sm:$0xff] %vm604, %v3473
        %3482 = vst.msk [vmem:[#allocation7 + $0x48] sm:$0xff] %vm604, %v3474
        %3483 = vst.msk [vmem:[#allocation7 + $0x70] sm:$0xff] %vm604, %v3475
        %3484 = vst.msk [vmem:[#allocation7 + $0x98] sm:$0xff] %vm604, %v3476
        %3485 = vst.msk [vmem:[#allocation7 + $0xc0] sm:$0xff] %vm604, %v3477
        %3486 = vst.msk [vmem:[#allocation7 + $0xe8] sm:$0xff] %vm604, %v3478
        %3487 = vst.msk [vmem:[#allocation7 + $0x110] sm:$0xff] %vm604, %v3479
        %3488 = vst.msk [vmem:[#allocation7 + $0x138] sm:$0xff] %vm604, %v3480
        %v3489 = vld [vmem:[#allocation7] sm:$0xff]
        %v3490 = vld [vmem:[#allocation7 + $0x8] sm:$0xff]
        %v3491 = vld [vmem:[#allocation7 + $0x10] sm:$0xff]
        %v3492 = vld [vmem:[#allocation7 + $0x18] sm:$0xff]
        %v3493 = vld [vmem:[#allocation7 + $0x20] sm:$0xff]
        %v3494 = vld [vmem:[#allocation7 + $0x28] sm:$0xff]
        %v3495 = vld [vmem:[#allocation7 + $0x30] sm:$0xff]
        %v3496 = vld [vmem:[#allocation7 + $0x38] sm:$0xff]
        %v3497 = vld [vmem:[#allocation7 + $0x40] sm:$0xff]
        %v3498 = vld [vmem:[#allocation7 + $0x48] sm:$0xff]
        %v3499 = vld [vmem:[#allocation7 + $0x50] sm:$0xff]
        %v3500 = vld [vmem:[#allocation7 + $0x58] sm:$0xff]
        %v3501 = vld [vmem:[#allocation7 + $0x60] sm:$0xff]
        %v3502 = vld [vmem:[#allocation7 + $0x68] sm:$0xff]
        %v3503 = vld [vmem:[#allocation7 + $0x70] sm:$0xff]
        %v3504 = vld [vmem:[#allocation7 + $0x78] sm:$0xff]
        %v3505 = vld [vmem:[#allocation7 + $0x80] sm:$0xff]
        %v3506 = vld [vmem:[#allocation7 + $0x88] sm:$0xff]
        %v3507 = vld [vmem:[#allocation7 + $0x90] sm:$0xff]
        %v3508 = vld [vmem:[#allocation7 + $0x98] sm:$0xff]
        %v3509 = vld [vmem:[#allocation7 + $0xa0] sm:$0xff]
        %v3510 = vld [vmem:[#allocation7 + $0xa8] sm:$0xff]
        %v3511 = vld [vmem:[#allocation7 + $0xb0] sm:$0xff]
        %v3512 = vld [vmem:[#allocation7 + $0xb8] sm:$0xff]
        %v3513 = vld [vmem:[#allocation7 + $0xc0] sm:$0xff]
        %v3514 = vld [vmem:[#allocation7 + $0xc8] sm:$0xff]
        %v3515 = vld [vmem:[#allocation7 + $0xd0] sm:$0xff]
        %v3516 = vld [vmem:[#allocation7 + $0xd8] sm:$0xff]
        %v3517 = vld [vmem:[#allocation7 + $0xe0] sm:$0xff]
        %v3518 = vld [vmem:[#allocation7 + $0xe8] sm:$0xff]
        %v3519 = vld [vmem:[#allocation7 + $0xf0] sm:$0xff]
        %v3520 = vld [vmem:[#allocation7 + $0xf8] sm:$0xff]
        %v3521 = vld [vmem:[#allocation7 + $0x100] sm:$0xff]
        %v3522 = vld [vmem:[#allocation7 + $0x108] sm:$0xff]
        %v3523 = vld [vmem:[#allocation7 + $0x110] sm:$0xff]
        %v3524 = vld [vmem:[#allocation7 + $0x118] sm:$0xff]
        %v3525 = vld [vmem:[#allocation7 + $0x120] sm:$0xff]
        %v3526 = vld [vmem:[#allocation7 + $0x128] sm:$0xff]
        %v3527 = vld [vmem:[#allocation7 + $0x130] sm:$0xff]
        %v3528 = vld [vmem:[#allocation7 + $0x138] sm:$0xff]
        %v3529 = vpack.c.bf16 %v3494, %v3489
        %v3530 = vpack.c.bf16 %v3495, %v3490
        %v3531 = vpack.c.bf16 %v3496, %v3491
        %v3532 = vpack.c.bf16 %v3497, %v3492
        %v3533 = vpack.c.bf16 %v3498, %v3493
        %v3534 = vpack.c.bf16 %v3504, %v3499
        %v3535 = vpack.c.bf16 %v3505, %v3500
        %v3536 = vpack.c.bf16 %v3506, %v3501
        %v3537 = vpack.c.bf16 %v3507, %v3502
        %v3538 = vpack.c.bf16 %v3508, %v3503
        %v3539 = vpack.c.bf16 %v3514, %v3509
        %v3540 = vpack.c.bf16 %v3515, %v3510
        %v3541 = vpack.c.bf16 %v3516, %v3511
        %v3542 = vpack.c.bf16 %v3517, %v3512
        %v3543 = vpack.c.bf16 %v3518, %v3513
        %v3544 = vpack.c.bf16 %v3524, %v3519
        %v3545 = vpack.c.bf16 %v3525, %v3520
        %v3546 = vpack.c.bf16 %v3526, %v3521
        %v3547 = vpack.c.bf16 %v3527, %v3522
        %v3548 = vpack.c.bf16 %v3528, %v3523
        %v3549 = vld [vmem:[%s6] sm:$0xf]
        %v3550 = vld [vmem:[%s6 + $0x4] sm:$0xf]
        %v3551 = vld [vmem:[%s6 + $0x8] sm:$0xf]
        %v3552 = vld [vmem:[%s6 + $0xc] sm:$0xf]
        %v3553 = vld [vmem:[%s6 + $0x10] sm:$0xf]
        %v3554 = vld [vmem:[%s6 + $0x14] sm:$0xf]
        %v3555 = vld [vmem:[%s6 + $0x18] sm:$0xf]
        %v3556 = vld [vmem:[%s6 + $0x1c] sm:$0xf]
        %v3557 = vld [vmem:[%s6 + $0x20] sm:$0xf]
        %v3558 = vld [vmem:[%s6 + $0x24] sm:$0xf]
        %v3559 = vld [vmem:[%s6 + $0x28] sm:$0xf]
        %v3560 = vld [vmem:[%s6 + $0x2c] sm:$0xf]
        %v3561 = vld [vmem:[%s6 + $0x30] sm:$0xf]
        %v3562 = vld [vmem:[%s6 + $0x34] sm:$0xf]
        %v3563 = vld [vmem:[%s6 + $0x38] sm:$0xf]
        %v3564 = vld [vmem:[%s6 + $0x3c] sm:$0xf]
        %v3565 = vld [vmem:[%s6 + $0x40] sm:$0xf]
        %v3566 = vld [vmem:[%s6 + $0x44] sm:$0xf]
        %v3567 = vld [vmem:[%s6 + $0x48] sm:$0xf]
        %v3568 = vld [vmem:[%s6 + $0x4c] sm:$0xf]
        %v3569 = vld [vmem:[%s6 + $0x50] sm:$0xf]
        %v3570 = vld [vmem:[%s6 + $0x54] sm:$0xf]
        %v3571 = vld [vmem:[%s6 + $0x58] sm:$0xf]
        %v3572 = vld [vmem:[%s6 + $0x5c] sm:$0xf]
        %v3573 = vld [vmem:[%s6 + $0x60] sm:$0xf]
        %v3574 = vld [vmem:[%s6 + $0x64] sm:$0xf]
        %v3575 = vld [vmem:[%s6 + $0x68] sm:$0xf]
        %v3576 = vld [vmem:[%s6 + $0x6c] sm:$0xf]
        %v3577 = vld [vmem:[%s6 + $0x70] sm:$0xf]
        %v3578 = vld [vmem:[%s6 + $0x74] sm:$0xf]
        %v3579 = vld [vmem:[%s6 + $0x78] sm:$0xf]
        %v3580 = vld [vmem:[%s6 + $0x7c] sm:$0xf]
        %v3581 = vld [vmem:[%s6 + $0x80] sm:$0xf]
        %v3582 = vld [vmem:[%s6 + $0x84] sm:$0xf]
        %v3583 = vld [vmem:[%s6 + $0x88] sm:$0xf]
        %v3584 = vld [vmem:[%s6 + $0x8c] sm:$0xf]
        %v3585 = vld [vmem:[%s6 + $0x90] sm:$0xf]
        %v3586 = vld [vmem:[%s6 + $0x94] sm:$0xf]
        %v3587 = vld [vmem:[%s6 + $0x98] sm:$0xf]
        %v3588 = vld [vmem:[%s6 + $0x9c] sm:$0xf]
        %v3589 = vld [vmem:[%s6 + $0xa0] sm:$0xf]
        %v3590 = vld [vmem:[%s6 + $0xa4] sm:$0xf]
        %v3591 = vld [vmem:[%s6 + $0xa8] sm:$0xf]
        %v3592 = vld [vmem:[%s6 + $0xac] sm:$0xf]
        %v3593 = vld [vmem:[%s6 + $0xb0] sm:$0xf]
        %v3594 = vld [vmem:[%s6 + $0xb4] sm:$0xf]
        %v3595 = vld [vmem:[%s6 + $0xb8] sm:$0xf]
        %v3596 = vld [vmem:[%s6 + $0xbc] sm:$0xf]
        %v3597 = vld [vmem:[%s6 + $0xc0] sm:$0xf]
        %v3598 = vld [vmem:[%s6 + $0xc4] sm:$0xf]
        %v3599 = vld [vmem:[%s6 + $0xc8] sm:$0xf]
        %v3600 = vld [vmem:[%s6 + $0xcc] sm:$0xf]
        %v3601 = vld [vmem:[%s6 + $0xd0] sm:$0xf]
        %v3602 = vld [vmem:[%s6 + $0xd4] sm:$0xf]
        %v3603 = vld [vmem:[%s6 + $0xd8] sm:$0xf]
        %v3604 = vld [vmem:[%s6 + $0xdc] sm:$0xf]
        %v3605 = vld [vmem:[%s6 + $0xe0] sm:$0xf]
        %v3606 = vld [vmem:[%s6 + $0xe4] sm:$0xf]
        %v3607 = vld [vmem:[%s6 + $0xe8] sm:$0xf]
        %v3608 = vld [vmem:[%s6 + $0xec] sm:$0xf]
        %v3609 = vld [vmem:[%s6 + $0xf0] sm:$0xf]
        %v3610 = vld [vmem:[%s6 + $0xf4] sm:$0xf]
        %v3611 = vld [vmem:[%s6 + $0xf8] sm:$0xf]
        %v3612 = vld [vmem:[%s6 + $0xfc] sm:$0xf]
        %v3613 = vld [vmem:[%s6 + $0x100] sm:$0xf]
        %v3614 = vld [vmem:[%s6 + $0x104] sm:$0xf]
        %v3615 = vld [vmem:[%s6 + $0x108] sm:$0xf]
        %v3616 = vld [vmem:[%s6 + $0x10c] sm:$0xf]
        %v3617 = vld [vmem:[%s6 + $0x110] sm:$0xf]
        %v3618 = vld [vmem:[%s6 + $0x114] sm:$0xf]
        %v3619 = vld [vmem:[%s6 + $0x118] sm:$0xf]
        %v3620 = vld [vmem:[%s6 + $0x11c] sm:$0xf]
        %v3621 = vld [vmem:[%s7] sm:$0x1]
        %v3623 = vlaneseq
        %v3624 = vshrl.u32 %v3623, 7
        %v3625 = vsub.s32 0, %v3624
        %v3626 = vrot.slane %v3621, %v3625
        %v3700 = vunpack.c.l.b16 %v3549
        %v3701 = vunpack.c.l.b16 %v3550
        %v3702 = vunpack.c.l.b16 %v3551
        %v3703 = vunpack.c.l.b16 %v3552
        %v3704 = vunpack.c.l.b16 %v3553
        %v3705 = vunpack.c.l.b16 %v3554
        %v3706 = vunpack.c.l.b16 %v3555
        %v3707 = vunpack.c.l.b16 %v3556
        %v3708 = vunpack.c.l.b16 %v3557
        %v3709 = vunpack.c.l.b16 %v3558
        %v3710 = vunpack.c.l.b16 %v3559
        %v3711 = vunpack.c.l.b16 %v3560
        %v3712 = vunpack.c.l.b16 %v3561
        %v3713 = vunpack.c.l.b16 %v3562
        %v3714 = vunpack.c.l.b16 %v3563
        %v3715 = vunpack.c.l.b16 %v3564
        %v3716 = vunpack.c.l.b16 %v3565
        %v3717 = vunpack.c.l.b16 %v3566
        %v3718 = vunpack.c.l.b16 %v3567
        %v3719 = vunpack.c.l.b16 %v3568
        %v3720 = vunpack.c.l.b16 %v3569
        %v3721 = vunpack.c.l.b16 %v3570
        %v3722 = vunpack.c.l.b16 %v3571
        %v3723 = vunpack.c.l.b16 %v3572
        %v3724 = vunpack.c.l.b16 %v3573
        %v3725 = vunpack.c.l.b16 %v3574
        %v3726 = vunpack.c.l.b16 %v3575
        %v3727 = vunpack.c.l.b16 %v3576
        %v3728 = vunpack.c.l.b16 %v3577
        %v3729 = vunpack.c.l.b16 %v3578
        %v3730 = vunpack.c.l.b16 %v3579
        %v3731 = vunpack.c.l.b16 %v3580
        %v3732 = vunpack.c.l.b16 %v3581
        %v3733 = vunpack.c.l.b16 %v3582
        %v3734 = vunpack.c.l.b16 %v3583
        %v3735 = vunpack.c.l.b16 %v3584
        %v3736 = vunpack.c.l.b16 %v3585
        %v3737 = vunpack.c.l.b16 %v3586
        %v3738 = vunpack.c.l.b16 %v3587
        %v3739 = vunpack.c.l.b16 %v3588
        %v3740 = vunpack.c.l.b16 %v3589
        %v3741 = vunpack.c.l.b16 %v3590
        %v3742 = vunpack.c.l.b16 %v3591
        %v3743 = vunpack.c.l.b16 %v3592
        %v3744 = vunpack.c.l.b16 %v3593
        %v3745 = vunpack.c.l.b16 %v3594
        %v3746 = vunpack.c.l.b16 %v3595
        %v3747 = vunpack.c.l.b16 %v3596
        %v3748 = vunpack.c.l.b16 %v3597
        %v3749 = vunpack.c.l.b16 %v3598
        %v3750 = vunpack.c.l.b16 %v3599
        %v3751 = vunpack.c.l.b16 %v3600
        %v3752 = vunpack.c.l.b16 %v3601
        %v3753 = vunpack.c.l.b16 %v3602
        %v3754 = vunpack.c.l.b16 %v3603
        %v3755 = vunpack.c.l.b16 %v3604
        %v3756 = vunpack.c.l.b16 %v3605
        %v3757 = vunpack.c.l.b16 %v3606
        %v3758 = vunpack.c.l.b16 %v3607
        %v3759 = vunpack.c.l.b16 %v3608
        %v3760 = vunpack.c.l.b16 %v3609
        %v3761 = vunpack.c.l.b16 %v3610
        %v3762 = vunpack.c.l.b16 %v3611
        %v3763 = vunpack.c.l.b16 %v3612
        %v3764 = vunpack.c.l.b16 %v3613
        %v3765 = vunpack.c.l.b16 %v3614
        %v3766 = vunpack.c.l.b16 %v3615
        %v3767 = vunpack.c.l.b16 %v3616
        %v3768 = vunpack.c.l.b16 %v3617
        %v3769 = vunpack.c.l.b16 %v3618
        %v3770 = vunpack.c.l.b16 %v3619
        %v3771 = vunpack.c.l.b16 %v3620
        %v3772 = vpack.c.b16 %v3701, %v3700
        %v3773 = vpack.c.b16 %v3703, %v3702
        %v3774 = vpack.c.b16 %v3705, %v3704
        %v3775 = vpack.c.b16 %v3707, %v3706
        %v3776 = vpack.c.b16 %v3709, %v3708
        %v3777 = vpack.c.b16 %v3711, %v3710
        %v3778 = vpack.c.b16 %v3713, %v3712
        %v3779 = vpack.c.b16 %v3715, %v3714
        %v3780 = vpack.c.b16 %v3717, %v3716
        %v3781 = vpack.c.b16 %v3719, %v3718
        %v3782 = vpack.c.b16 %v3721, %v3720
        %v3783 = vpack.c.b16 %v3723, %v3722
        %v3784 = vpack.c.b16 %v3725, %v3724
        %v3785 = vpack.c.b16 %v3727, %v3726
        %v3786 = vpack.c.b16 %v3729, %v3728
        %v3787 = vpack.c.b16 %v3731, %v3730
        %v3788 = vpack.c.b16 %v3733, %v3732
        %v3789 = vpack.c.b16 %v3735, %v3734
        %v3790 = vpack.c.b16 %v3737, %v3736
        %v3791 = vpack.c.b16 %v3739, %v3738
        %v3792 = vpack.c.b16 %v3741, %v3740
        %v3793 = vpack.c.b16 %v3743, %v3742
        %v3794 = vpack.c.b16 %v3745, %v3744
        %v3795 = vpack.c.b16 %v3747, %v3746
        %v3796 = vpack.c.b16 %v3749, %v3748
        %v3797 = vpack.c.b16 %v3751, %v3750
        %v3798 = vpack.c.b16 %v3753, %v3752
        %v3799 = vpack.c.b16 %v3755, %v3754
        %v3800 = vpack.c.b16 %v3757, %v3756
        %v3801 = vpack.c.b16 %v3759, %v3758
        %v3802 = vpack.c.b16 %v3761, %v3760
        %v3803 = vpack.c.b16 %v3763, %v3762
        %v3804 = vpack.c.b16 %v3765, %v3764
        %v3805 = vpack.c.b16 %v3767, %v3766
        %v3806 = vpack.c.b16 %v3769, %v3768
        %v3807 = vpack.c.b16 %v3771, %v3770
        %v3845 = vsel %vm604, %v3533, 0
        %v3848 = vsel %vm604, %v3538, 0
        %v3851 = vsel %vm604, %v3543, 0
        %v3854 = vsel %vm604, %v3548, 0
        %3856 = vmatprep.subr.bf16.mxu0 0
        %3857 = vmatpush1.bf16.msra.mxu0 %v3779
        %3858 = vmatprep.subr.bf16.mxu0 0
        %3859 = vmatpush1.bf16.msra.mxu0 %v3778
        %3860 = vmatprep.subr.bf16.mxu0 0
        %3861 = vmatpush1.bf16.msra.mxu0 %v3777
        %3862 = vmatprep.subr.bf16.mxu0 0
        %3863 = vmatpush1.bf16.msra.mxu0 %v3776
        %3864 = vmatprep.subr.bf16.mxu0 0
        %3865 = vmatpush1.bf16.msra.mxu0 %v3775
        %3866 = vmatprep.subr.bf16.mxu0 0
        %3867 = vmatpush1.bf16.msra.mxu0 %v3774
        %3868 = vmatprep.subr.bf16.mxu0 0
        %3869 = vmatpush1.bf16.msra.mxu0 %v3773
        %3870 = vmatprep.subr.bf16.mxu0 0
        %3871 = vmatpush1.bf16.msra.mxu0 %v3772
        %3872 = vmatprep.subr.bf16.mxu0 0
        %3873 = vmatpush2.bf16.msra.mxu0 %v3787
        %3874 = vmatprep.subr.bf16.mxu0 0
        %3875 = vmatpush2.bf16.msra.mxu0 %v3786
        %3876 = vmatprep.subr.bf16.mxu0 0
        %3877 = vmatpush2.bf16.msra.mxu0 %v3785
        %3878 = vmatprep.subr.bf16.mxu0 0
        %3879 = vmatpush2.bf16.msra.mxu0 %v3784
        %3880 = vmatprep.subr.bf16.mxu0 0
        %3881 = vmatpush2.bf16.msra.mxu0 %v3783
        %3882 = vmatprep.subr.bf16.mxu0 0
        %3883 = vmatpush2.bf16.msra.mxu0 %v3782
        %3884 = vmatprep.subr.bf16.mxu0 0
        %3885 = vmatpush2.bf16.msra.mxu0 %v3781
        %3886 = vmatprep.subr.bf16.mxu0 0
        %3887 = vmatpush2.bf16.msra.mxu0 %v3780
        %3888 = vmatprep.mubr.bf16.mxu0 %v3530
        %3889 = vmatmul.mubr.bf16.gmra.mxu0 %v3529
        %v3890 = vpop.f32.mrf.mxu0
        %v3891 = vadd.f32 %v3626, %v3890
        %v3892 = vpop.f32.mrf.mxu0
        %v3893 = vpop.f32.mrf.mxu0
        %v3894 = vadd.f32 %v3626, %v3893
        %v3895 = vpop.f32.mrf.mxu0
        %3896 = vmatprep.mubr.bf16.mxu0 %v3535
        %3897 = vmatmul.mubr.bf16.gmra.mxu0 %v3534
        %v3898 = vpop.f32.mrf.mxu0
        %v3899 = vadd.f32 %v3626, %v3898
        %v3900 = vpop.f32.mrf.mxu0
        %v3901 = vpop.f32.mrf.mxu0
        %v3902 = vadd.f32 %v3626, %v3901
        %v3903 = vpop.f32.mrf.mxu0
        %3904 = vmatprep.mubr.bf16.mxu0 %v3540
        %3905 = vmatmul.mubr.bf16.gmra.mxu0 %v3539
        %v3906 = vpop.f32.mrf.mxu0
        %v3907 = vadd.f32 %v3626, %v3906
        %v3908 = vpop.f32.mrf.mxu0
        %v3909 = vpop.f32.mrf.mxu0
        %v3910 = vadd.f32 %v3626, %v3909
        %v3911 = vpop.f32.mrf.mxu0
        %3912 = vmatprep.mubr.bf16.mxu0 %v3545
        %3913 = vmatmul.mubr.bf16.gmra.mxu0 %v3544
        %v3914 = vpop.f32.mrf.mxu0
        %v3915 = vadd.f32 %v3626, %v3914
        %v3916 = vpop.f32.mrf.mxu0
        %v3917 = vpop.f32.mrf.mxu0
        %v3918 = vadd.f32 %v3626, %v3917
        %v3919 = vpop.f32.mrf.mxu0
        %3920 = vdwg.mxu0
        %3921 = vmatprep.subr.bf16.mxu0 0
        %3922 = vmatpush1.bf16.msra.mxu0 %v3795
        %3923 = vmatprep.subr.bf16.mxu0 0
        %3924 = vmatpush1.bf16.msra.mxu0 %v3794
        %3925 = vmatprep.subr.bf16.mxu0 0
        %3926 = vmatpush1.bf16.msra.mxu0 %v3793
        %3927 = vmatprep.subr.bf16.mxu0 0
        %3928 = vmatpush1.bf16.msra.mxu0 %v3792
        %3929 = vmatprep.subr.bf16.mxu0 0
        %3930 = vmatpush1.bf16.msra.mxu0 %v3791
        %3931 = vmatprep.subr.bf16.mxu0 0
        %3932 = vmatpush1.bf16.msra.mxu0 %v3790
        %3933 = vmatprep.subr.bf16.mxu0 0
        %3934 = vmatpush1.bf16.msra.mxu0 %v3789
        %3935 = vmatprep.subr.bf16.mxu0 0
        %3936 = vmatpush1.bf16.msra.mxu0 %v3788
        %3937 = vmatprep.subr.bf16.mxu0 0
        %3938 = vmatpush2.bf16.msra.mxu0 %v3803
        %3939 = vmatprep.subr.bf16.mxu0 0
        %3940 = vmatpush2.bf16.msra.mxu0 %v3802
        %3941 = vmatprep.subr.bf16.mxu0 0
        %3942 = vmatpush2.bf16.msra.mxu0 %v3801
        %3943 = vmatprep.subr.bf16.mxu0 0
        %3944 = vmatpush2.bf16.msra.mxu0 %v3800
        %3945 = vmatprep.subr.bf16.mxu0 0
        %3946 = vmatpush2.bf16.msra.mxu0 %v3799
        %3947 = vmatprep.subr.bf16.mxu0 0
        %3948 = vmatpush2.bf16.msra.mxu0 %v3798
        %3949 = vmatprep.subr.bf16.mxu0 0
        %3950 = vmatpush2.bf16.msra.mxu0 %v3797
        %3951 = vmatprep.subr.bf16.mxu0 0
        %3952 = vmatpush2.bf16.msra.mxu0 %v3796
        %3953 = vmatprep.mubr.bf16.mxu0 %v3532
        %3954 = vmatmul.mubr.bf16.gmra.mxu0 %v3531
        %v3955 = vpop.f32.mrf.mxu0
        %v3956 = vadd.f32 %v3891, %v3955
        %v3957 = vpop.f32.mrf.mxu0
        %v3958 = vpop.f32.mrf.mxu0
        %v3959 = vadd.f32 %v3894, %v3958
        %v3960 = vpop.f32.mrf.mxu0
        %3961 = vmatprep.mubr.bf16.mxu0 %v3537
        %3962 = vmatmul.mubr.bf16.gmra.mxu0 %v3536
        %v3963 = vpop.f32.mrf.mxu0
        %v3964 = vadd.f32 %v3899, %v3963
        %v3965 = vpop.f32.mrf.mxu0
        %v3966 = vpop.f32.mrf.mxu0
        %v3967 = vadd.f32 %v3902, %v3966
        %v3968 = vpop.f32.mrf.mxu0
        %3969 = vmatprep.mubr.bf16.mxu0 %v3542
        %3970 = vmatmul.mubr.bf16.gmra.mxu0 %v3541
        %v3971 = vpop.f32.mrf.mxu0
        %v3972 = vadd.f32 %v3907, %v3971
        %v3973 = vpop.f32.mrf.mxu0
        %v3974 = vpop.f32.mrf.mxu0
        %v3975 = vadd.f32 %v3910, %v3974
        %v3976 = vpop.f32.mrf.mxu0
        %3977 = vmatprep.mubr.bf16.mxu0 %v3547
        %3978 = vmatmul.mubr.bf16.gmra.mxu0 %v3546
        %v3979 = vpop.f32.mrf.mxu0
        %v3980 = vadd.f32 %v3915, %v3979
        %v3981 = vpop.f32.mrf.mxu0
        %v3982 = vpop.f32.mrf.mxu0
        %v3983 = vadd.f32 %v3918, %v3982
        %v3984 = vpop.f32.mrf.mxu0
        %3985 = vdwg.mxu0
        %3986 = vmatprep.subr.bf16.mxu0 0
        %3987 = vmatpush1.bf16.msra.mxu0 0
        %3988 = vmatprep.subr.bf16.mxu0 0
        %3989 = vmatpush1.bf16.msra.mxu0 0
        %3990 = vmatprep.subr.bf16.mxu0 0
        %3991 = vmatpush1.bf16.msra.mxu0 0
        %3992 = vmatprep.subr.bf16.mxu0 0
        %3993 = vmatpush1.bf16.msra.mxu0 0
        %3994 = vmatprep.subr.bf16.mxu0 0
        %3995 = vmatpush1.bf16.msra.mxu0 %v3807
        %3996 = vmatprep.subr.bf16.mxu0 0
        %3997 = vmatpush1.bf16.msra.mxu0 %v3806
        %3998 = vmatprep.subr.bf16.mxu0 0
        %3999 = vmatpush1.bf16.msra.mxu0 %v3805
        %4000 = vmatprep.subr.bf16.mxu0 0
        %4001 = vmatpush1.bf16.msra.mxu0 %v3804
        %4002 = vmatprep.subr.bf16.mxu0 0
        %4003 = vmatpush2.bf16.msra.mxu0 0
        %4004 = vmatprep.subr.bf16.mxu0 0
        %4005 = vmatpush2.bf16.msra.mxu0 0
        %4006 = vmatprep.subr.bf16.mxu0 0
        %4007 = vmatpush2.bf16.msra.mxu0 0
        %4008 = vmatprep.subr.bf16.mxu0 0
        %4009 = vmatpush2.bf16.msra.mxu0 0
        %4010 = vmatprep.subr.bf16.mxu0 0
        %4011 = vmatpush2.bf16.msra.mxu0 0
        %4012 = vmatprep.subr.bf16.mxu0 0
        %4013 = vmatpush2.bf16.msra.mxu0 0
        %4014 = vmatprep.subr.bf16.mxu0 0
        %4015 = vmatpush2.bf16.msra.mxu0 0
        %4016 = vmatprep.subr.bf16.mxu0 0
        %4017 = vmatpush2.bf16.msra.mxu0 0
        %4018 = vmatprep.mubr.bf16.mxu0 0
        %4019 = vmatmul.mubr.bf16.gmra.mxu0 %v3845
        %v4020 = vpop.f32.mrf.mxu0
        %v4021 = vadd.f32 %v3956, %v4020
        %v4022 = vpop.f32.mrf.mxu0
        %v4023 = vpop.f32.mrf.mxu0
        %v4024 = vadd.f32 %v3959, %v4023
        %v4025 = vpop.f32.mrf.mxu0
        %4026 = vmatprep.mubr.bf16.mxu0 0
        %4027 = vmatmul.mubr.bf16.gmra.mxu0 %v3848
        %v4028 = vpop.f32.mrf.mxu0
        %v4029 = vadd.f32 %v3964, %v4028
        %v4030 = vpop.f32.mrf.mxu0
        %v4031 = vpop.f32.mrf.mxu0
        %v4032 = vadd.f32 %v3967, %v4031
        %v4033 = vpop.f32.mrf.mxu0
        %4034 = vmatprep.mubr.bf16.mxu0 0
        %4035 = vmatmul.mubr.bf16.gmra.mxu0 %v3851
        %v4036 = vpop.f32.mrf.mxu0
        %v4037 = vadd.f32 %v3972, %v4036
        %v4038 = vpop.f32.mrf.mxu0
        %v4039 = vpop.f32.mrf.mxu0
        %v4040 = vadd.f32 %v3975, %v4039
        %v4041 = vpop.f32.mrf.mxu0
        %4042 = vmatprep.mubr.bf16.mxu0 0
        %4043 = vmatmul.mubr.bf16.gmra.mxu0 %v3854
        %v4044 = vpop.f32.mrf.mxu0
        %v4045 = vadd.f32 %v3980, %v4044
        %v4046 = vpop.f32.mrf.mxu0
        %v4047 = vpop.f32.mrf.mxu0
        %v4048 = vadd.f32 %v3983, %v4047
        %v4049 = vpop.f32.mrf.mxu0
        %4050 = vdwg.mxu0
        %v4051 = vmax.f32 %v4021, 0.0
        %v4052 = vmax.f32 %v4024, 0.0
        %v4053 = vmax.f32 %v4029, 0.0
        %v4054 = vmax.f32 %v4032, 0.0
        %v4055 = vmax.f32 %v4037, 0.0
        %v4056 = vmax.f32 %v4040, 0.0
        %v4057 = vmax.f32 %v4045, 0.0
        %v4058 = vmax.f32 %v4048, 0.0
        %s4059 = scalar_lea.vmem [#allocation5], 16
        %4060 = vst.msk [vmem:[%s4059 + $0x1] sm:$0xff] %vm604, %v4051
        %4061 = vst.msk [vmem:[%s4059 + $0x11] sm:$0xff] %vm604, %v4052
        %4062 = vst.msk [vmem:[%s4059 + $0x21] sm:$0xff] %vm604, %v4053
        %4063 = vst.msk [vmem:[%s4059 + $0x31] sm:$0xff] %vm604, %v4054
        %4064 = vst.msk [vmem:[%s4059 + $0x41] sm:$0xff] %vm604, %v4055
        %4065 = vst.msk [vmem:[%s4059 + $0x51] sm:$0xff] %vm604, %v4056
        %4066 = vst.msk [vmem:[%s4059 + $0x61] sm:$0xff] %vm604, %v4057
        %4067 = vst.msk [vmem:[%s4059 + $0x71] sm:$0xff] %vm604, %v4058
        %v4068 = vld [vmem:[#allocation5] sm:$0xff]
        %v4069 = vld [vmem:[#allocation5 + $0x10] sm:$0xff]
        %v4070 = vld [vmem:[#allocation5 + $0x20] sm:$0xff]
        %v4071 = vld [vmem:[#allocation5 + $0x30] sm:$0xff]
        %v4072 = vld [vmem:[#allocation5 + $0x40] sm:$0xff]
        %v4073 = vld [vmem:[#allocation5 + $0x50] sm:$0xff]
        %v4074 = vld [vmem:[#allocation5 + $0x60] sm:$0xff]
        %v4075 = vld [vmem:[#allocation5 + $0x70] sm:$0xff]
        %4076 = vst.msk [vmem:[#allocation7] sm:$0xff] %vm604, %v4068
        %4077 = vst.msk [vmem:[#allocation7 + $0x28] sm:$0xff] %vm604, %v4069
        %4078 = vst.msk [vmem:[#allocation7 + $0x50] sm:$0xff] %vm604, %v4070
        %4079 = vst.msk [vmem:[#allocation7 + $0x78] sm:$0xff] %vm604, %v4071
        %4080 = vst.msk [vmem:[#allocation7 + $0xa0] sm:$0xff] %vm604, %v4072
        %4081 = vst.msk [vmem:[#allocation7 + $0xc8] sm:$0xff] %vm604, %v4073
        %4082 = vst.msk [vmem:[#allocation7 + $0xf0] sm:$0xff] %vm604, %v4074
        %4083 = vst.msk [vmem:[#allocation7 + $0x118] sm:$0xff] %vm604, %v4075
        %v4084 = vld [vmem:[#allocation5 + $0x1] sm:$0xff]
        %v4085 = vld [vmem:[#allocation5 + $0x11] sm:$0xff]
        %v4086 = vld [vmem:[#allocation5 + $0x21] sm:$0xff]
        %v4087 = vld [vmem:[#allocation5 + $0x31] sm:$0xff]
        %v4088 = vld [vmem:[#allocation5 + $0x41] sm:$0xff]
        %v4089 = vld [vmem:[#allocation5 + $0x51] sm:$0xff]
        %v4090 = vld [vmem:[#allocation5 + $0x61] sm:$0xff]
        %v4091 = vld [vmem:[#allocation5 + $0x71] sm:$0xff]
        %4100 = vrot.lane.b32.xlu0 %v4084, 64
        %v4101 = vpop.permute.xlu0 %4100
        %4102 = vrot.lane.b32.xlu0 %v4085, 64
        %v4103 = vpop.permute.xlu0 %4102
        %4104 = vrot.lane.b32.xlu0 %v4086, 64
        %v4105 = vpop.permute.xlu0 %4104
        %4106 = vrot.lane.b32.xlu0 %v4087, 64
        %v4107 = vpop.permute.xlu0 %4106
        %4108 = vrot.lane.b32.xlu0 %v4088, 64
        %v4109 = vpop.permute.xlu0 %4108
        %4110 = vrot.lane.b32.xlu0 %v4089, 64
        %v4111 = vpop.permute.xlu0 %4110
        %4112 = vrot.lane.b32.xlu0 %v4090, 64
        %v4113 = vpop.permute.xlu0 %4112
        %4114 = vrot.lane.b32.xlu0 %v4091, 64
        %v4115 = vpop.permute.xlu0 %4114
        %4124 = vst.msk [vmem:[#allocation7] sm:$0xff] %vm3271, %v4101
        %4125 = vst.msk [vmem:[#allocation7 + $0x28] sm:$0xff] %vm3271, %v4103
        %4126 = vst.msk [vmem:[#allocation7 + $0x50] sm:$0xff] %vm3271, %v4105
        %4127 = vst.msk [vmem:[#allocation7 + $0x78] sm:$0xff] %vm3271, %v4107
        %4128 = vst.msk [vmem:[#allocation7 + $0xa0] sm:$0xff] %vm3271, %v4109
        %4129 = vst.msk [vmem:[#allocation7 + $0xc8] sm:$0xff] %vm3271, %v4111
        %4130 = vst.msk [vmem:[#allocation7 + $0xf0] sm:$0xff] %vm3271, %v4113
        %4131 = vst.msk [vmem:[#allocation7 + $0x118] sm:$0xff] %vm3271, %v4115
        %v4132 = vld [vmem:[#allocation5 + $0x2] sm:$0xff]
        %v4133 = vld [vmem:[#allocation5 + $0x12] sm:$0xff]
        %v4134 = vld [vmem:[#allocation5 + $0x22] sm:$0xff]
        %v4135 = vld [vmem:[#allocation5 + $0x32] sm:$0xff]
        %v4136 = vld [vmem:[#allocation5 + $0x42] sm:$0xff]
        %v4137 = vld [vmem:[#allocation5 + $0x52] sm:$0xff]
        %v4138 = vld [vmem:[#allocation5 + $0x62] sm:$0xff]
        %v4139 = vld [vmem:[#allocation5 + $0x72] sm:$0xff]
        %4140 = vst.msk [vmem:[#allocation7 + $0x8] sm:$0xff] %vm604, %v4132
        %4141 = vst.msk [vmem:[#allocation7 + $0x30] sm:$0xff] %vm604, %v4133
        %4142 = vst.msk [vmem:[#allocation7 + $0x58] sm:$0xff] %vm604, %v4134
        %4143 = vst.msk [vmem:[#allocation7 + $0x80] sm:$0xff] %vm604, %v4135
        %4144 = vst.msk [vmem:[#allocation7 + $0xa8] sm:$0xff] %vm604, %v4136
        %4145 = vst.msk [vmem:[#allocation7 + $0xd0] sm:$0xff] %vm604, %v4137
        %4146 = vst.msk [vmem:[#allocation7 + $0xf8] sm:$0xff] %vm604, %v4138
        %4147 = vst.msk [vmem:[#allocation7 + $0x120] sm:$0xff] %vm604, %v4139
        %v4148 = vld [vmem:[%s4059] sm:$0xff]
        %v4149 = vld [vmem:[%s4059 + $0x10] sm:$0xff]
        %v4150 = vld [vmem:[%s4059 + $0x20] sm:$0xff]
        %v4151 = vld [vmem:[%s4059 + $0x30] sm:$0xff]
        %v4152 = vld [vmem:[%s4059 + $0x40] sm:$0xff]
        %v4153 = vld [vmem:[%s4059 + $0x50] sm:$0xff]
        %v4154 = vld [vmem:[%s4059 + $0x60] sm:$0xff]
        %v4155 = vld [vmem:[%s4059 + $0x70] sm:$0xff]
        %4164 = vrot.lane.b32.xlu0 %v4148, 64
        %v4165 = vpop.permute.xlu0 %4164
        %4166 = vrot.lane.b32.xlu0 %v4149, 64
        %v4167 = vpop.permute.xlu0 %4166
        %4168 = vrot.lane.b32.xlu0 %v4150, 64
        %v4169 = vpop.permute.xlu0 %4168
        %4170 = vrot.lane.b32.xlu0 %v4151, 64
        %v4171 = vpop.permute.xlu0 %4170
        %4172 = vrot.lane.b32.xlu0 %v4152, 64
        %v4173 = vpop.permute.xlu0 %4172
        %4174 = vrot.lane.b32.xlu0 %v4153, 64
        %v4175 = vpop.permute.xlu0 %4174
        %4176 = vrot.lane.b32.xlu0 %v4154, 64
        %v4177 = vpop.permute.xlu0 %4176
        %4178 = vrot.lane.b32.xlu0 %v4155, 64
        %v4179 = vpop.permute.xlu0 %4178
        %4188 = vst.msk [vmem:[#allocation7 + $0x8] sm:$0xff] %vm3271, %v4165
        %4189 = vst.msk [vmem:[#allocation7 + $0x30] sm:$0xff] %vm3271, %v4167
        %4190 = vst.msk [vmem:[#allocation7 + $0x58] sm:$0xff] %vm3271, %v4169
        %4191 = vst.msk [vmem:[#allocation7 + $0x80] sm:$0xff] %vm3271, %v4171
        %4192 = vst.msk [vmem:[#allocation7 + $0xa8] sm:$0xff] %vm3271, %v4173
        %4193 = vst.msk [vmem:[#allocation7 + $0xd0] sm:$0xff] %vm3271, %v4175
        %4194 = vst.msk [vmem:[#allocation7 + $0xf8] sm:$0xff] %vm3271, %v4177
        %4195 = vst.msk [vmem:[#allocation7 + $0x120] sm:$0xff] %vm3271, %v4179
        %v4196 = vld [vmem:[%s4059 + $0x1] sm:$0xff]
        %v4197 = vld [vmem:[%s4059 + $0x11] sm:$0xff]
        %v4198 = vld [vmem:[%s4059 + $0x21] sm:$0xff]
        %v4199 = vld [vmem:[%s4059 + $0x31] sm:$0xff]
        %v4200 = vld [vmem:[%s4059 + $0x41] sm:$0xff]
        %v4201 = vld [vmem:[%s4059 + $0x51] sm:$0xff]
        %v4202 = vld [vmem:[%s4059 + $0x61] sm:$0xff]
        %v4203 = vld [vmem:[%s4059 + $0x71] sm:$0xff]
        %4204 = vst.msk [vmem:[#allocation7 + $0x10] sm:$0xff] %vm604, %v4196
        %4205 = vst.msk [vmem:[#allocation7 + $0x38] sm:$0xff] %vm604, %v4197
        %4206 = vst.msk [vmem:[#allocation7 + $0x60] sm:$0xff] %vm604, %v4198
        %4207 = vst.msk [vmem:[#allocation7 + $0x88] sm:$0xff] %vm604, %v4199
        %4208 = vst.msk [vmem:[#allocation7 + $0xb0] sm:$0xff] %vm604, %v4200
        %4209 = vst.msk [vmem:[#allocation7 + $0xd8] sm:$0xff] %vm604, %v4201
        %4210 = vst.msk [vmem:[#allocation7 + $0x100] sm:$0xff] %vm604, %v4202
        %4211 = vst.msk [vmem:[#allocation7 + $0x128] sm:$0xff] %vm604, %v4203
        %v4212 = vld [vmem:[%s4059 + $0x2] sm:$0xff]
        %v4213 = vld [vmem:[%s4059 + $0x12] sm:$0xff]
        %v4214 = vld [vmem:[%s4059 + $0x22] sm:$0xff]
        %v4215 = vld [vmem:[%s4059 + $0x32] sm:$0xff]
        %v4216 = vld [vmem:[%s4059 + $0x42] sm:$0xff]
        %v4217 = vld [vmem:[%s4059 + $0x52] sm:$0xff]
        %v4218 = vld [vmem:[%s4059 + $0x62] sm:$0xff]
        %v4219 = vld [vmem:[%s4059 + $0x72] sm:$0xff]
        %4228 = vrot.lane.b32.xlu0 %v4212, 64
        %v4229 = vpop.permute.xlu0 %4228
        %4230 = vrot.lane.b32.xlu0 %v4213, 64
        %v4231 = vpop.permute.xlu0 %4230
        %4232 = vrot.lane.b32.xlu0 %v4214, 64
        %v4233 = vpop.permute.xlu0 %4232
        %4234 = vrot.lane.b32.xlu0 %v4215, 64
        %v4235 = vpop.permute.xlu0 %4234
        %4236 = vrot.lane.b32.xlu0 %v4216, 64
        %v4237 = vpop.permute.xlu0 %4236
        %4238 = vrot.lane.b32.xlu0 %v4217, 64
        %v4239 = vpop.permute.xlu0 %4238
        %4240 = vrot.lane.b32.xlu0 %v4218, 64
        %v4241 = vpop.permute.xlu0 %4240
        %4242 = vrot.lane.b32.xlu0 %v4219, 64
        %v4243 = vpop.permute.xlu0 %4242
        %4252 = vst.msk [vmem:[#allocation7 + $0x10] sm:$0xff] %vm3271, %v4229
        %4253 = vst.msk [vmem:[#allocation7 + $0x38] sm:$0xff] %vm3271, %v4231
        %4254 = vst.msk [vmem:[#allocation7 + $0x60] sm:$0xff] %vm3271, %v4233
        %4255 = vst.msk [vmem:[#allocation7 + $0x88] sm:$0xff] %vm3271, %v4235
        %4256 = vst.msk [vmem:[#allocation7 + $0xb0] sm:$0xff] %vm3271, %v4237
        %4257 = vst.msk [vmem:[#allocation7 + $0xd8] sm:$0xff] %vm3271, %v4239
        %4258 = vst.msk [vmem:[#allocation7 + $0x100] sm:$0xff] %vm3271, %v4241
        %4259 = vst.msk [vmem:[#allocation7 + $0x128] sm:$0xff] %vm3271, %v4243
        %s4260 = scalar_lea.vmem [#allocation5], 32
        %v4261 = vld [vmem:[%s4260] sm:$0xff]
        %v4262 = vld [vmem:[%s4260 + $0x10] sm:$0xff]
        %v4263 = vld [vmem:[%s4260 + $0x20] sm:$0xff]
        %v4264 = vld [vmem:[%s4260 + $0x30] sm:$0xff]
        %v4265 = vld [vmem:[%s4260 + $0x40] sm:$0xff]
        %v4266 = vld [vmem:[%s4260 + $0x50] sm:$0xff]
        %v4267 = vld [vmem:[%s4260 + $0x60] sm:$0xff]
        %v4268 = vld [vmem:[%s4260 + $0x70] sm:$0xff]
        %4269 = vst.msk [vmem:[#allocation7 + $0x18] sm:$0xff] %vm604, %v4261
        %4270 = vst.msk [vmem:[#allocation7 + $0x40] sm:$0xff] %vm604, %v4262
        %4271 = vst.msk [vmem:[#allocation7 + $0x68] sm:$0xff] %vm604, %v4263
        %4272 = vst.msk [vmem:[#allocation7 + $0x90] sm:$0xff] %vm604, %v4264
        %4273 = vst.msk [vmem:[#allocation7 + $0xb8] sm:$0xff] %vm604, %v4265
        %4274 = vst.msk [vmem:[#allocation7 + $0xe0] sm:$0xff] %vm604, %v4266
        %4275 = vst.msk [vmem:[#allocation7 + $0x108] sm:$0xff] %vm604, %v4267
        %4276 = vst.msk [vmem:[#allocation7 + $0x130] sm:$0xff] %vm604, %v4268
        %v4277 = vld [vmem:[%s4260 + $0x1] sm:$0xff]
        %v4278 = vld [vmem:[%s4260 + $0x11] sm:$0xff]
        %v4279 = vld [vmem:[%s4260 + $0x21] sm:$0xff]
        %v4280 = vld [vmem:[%s4260 + $0x31] sm:$0xff]
        %v4281 = vld [vmem:[%s4260 + $0x41] sm:$0xff]
        %v4282 = vld [vmem:[%s4260 + $0x51] sm:$0xff]
        %v4283 = vld [vmem:[%s4260 + $0x61] sm:$0xff]
        %v4284 = vld [vmem:[%s4260 + $0x71] sm:$0xff]
        %4293 = vrot.lane.b32.xlu0 %v4277, 64
        %v4294 = vpop.permute.xlu0 %4293
        %4295 = vrot.lane.b32.xlu0 %v4278, 64
        %v4296 = vpop.permute.xlu0 %4295
        %4297 = vrot.lane.b32.xlu0 %v4279, 64
        %v4298 = vpop.permute.xlu0 %4297
        %4299 = vrot.lane.b32.xlu0 %v4280, 64
        %v4300 = vpop.permute.xlu0 %4299
        %4301 = vrot.lane.b32.xlu0 %v4281, 64
        %v4302 = vpop.permute.xlu0 %4301
        %4303 = vrot.lane.b32.xlu0 %v4282, 64
        %v4304 = vpop.permute.xlu0 %4303
        %4305 = vrot.lane.b32.xlu0 %v4283, 64
        %v4306 = vpop.permute.xlu0 %4305
        %4307 = vrot.lane.b32.xlu0 %v4284, 64
        %v4308 = vpop.permute.xlu0 %4307
        %4317 = vst.msk [vmem:[#allocation7 + $0x18] sm:$0xff] %vm3271, %v4294
        %4318 = vst.msk [vmem:[#allocation7 + $0x40] sm:$0xff] %vm3271, %v4296
        %4319 = vst.msk [vmem:[#allocation7 + $0x68] sm:$0xff] %vm3271, %v4298
        %4320 = vst.msk [vmem:[#allocation7 + $0x90] sm:$0xff] %vm3271, %v4300
        %4321 = vst.msk [vmem:[#allocation7 + $0xb8] sm:$0xff] %vm3271, %v4302
        %4322 = vst.msk [vmem:[#allocation7 + $0xe0] sm:$0xff] %vm3271, %v4304
        %4323 = vst.msk [vmem:[#allocation7 + $0x108] sm:$0xff] %vm3271, %v4306
        %4324 = vst.msk [vmem:[#allocation7 + $0x130] sm:$0xff] %vm3271, %v4308
        %v4325 = vld [vmem:[%s4260 + $0x2] sm:$0xff]
        %v4326 = vld [vmem:[%s4260 + $0x12] sm:$0xff]
        %v4327 = vld [vmem:[%s4260 + $0x22] sm:$0xff]
        %v4328 = vld [vmem:[%s4260 + $0x32] sm:$0xff]
        %v4329 = vld [vmem:[%s4260 + $0x42] sm:$0xff]
        %v4330 = vld [vmem:[%s4260 + $0x52] sm:$0xff]
        %v4331 = vld [vmem:[%s4260 + $0x62] sm:$0xff]
        %v4332 = vld [vmem:[%s4260 + $0x72] sm:$0xff]
        %4333 = vst.msk [vmem:[#allocation7 + $0x20] sm:$0xff] %vm604, %v4325
        %4334 = vst.msk [vmem:[#allocation7 + $0x48] sm:$0xff] %vm604, %v4326
        %4335 = vst.msk [vmem:[#allocation7 + $0x70] sm:$0xff] %vm604, %v4327
        %4336 = vst.msk [vmem:[#allocation7 + $0x98] sm:$0xff] %vm604, %v4328
        %4337 = vst.msk [vmem:[#allocation7 + $0xc0] sm:$0xff] %vm604, %v4329
        %4338 = vst.msk [vmem:[#allocation7 + $0xe8] sm:$0xff] %vm604, %v4330
        %4339 = vst.msk [vmem:[#allocation7 + $0x110] sm:$0xff] %vm604, %v4331
        %4340 = vst.msk [vmem:[#allocation7 + $0x138] sm:$0xff] %vm604, %v4332
        %v4341 = vld [vmem:[#allocation7] sm:$0xff]
        %v4342 = vld [vmem:[#allocation7 + $0x8] sm:$0xff]
        %v4343 = vld [vmem:[#allocation7 + $0x10] sm:$0xff]
        %v4344 = vld [vmem:[#allocation7 + $0x18] sm:$0xff]
        %v4345 = vld [vmem:[#allocation7 + $0x20] sm:$0xff]
        %v4346 = vld [vmem:[#allocation7 + $0x28] sm:$0xff]
        %v4347 = vld [vmem:[#allocation7 + $0x30] sm:$0xff]
        %v4348 = vld [vmem:[#allocation7 + $0x38] sm:$0xff]
        %v4349 = vld [vmem:[#allocation7 + $0x40] sm:$0xff]
        %v4350 = vld [vmem:[#allocation7 + $0x48] sm:$0xff]
        %v4351 = vld [vmem:[#allocation7 + $0x50] sm:$0xff]
        %v4352 = vld [vmem:[#allocation7 + $0x58] sm:$0xff]
        %v4353 = vld [vmem:[#allocation7 + $0x60] sm:$0xff]
        %v4354 = vld [vmem:[#allocation7 + $0x68] sm:$0xff]
        %v4355 = vld [vmem:[#allocation7 + $0x70] sm:$0xff]
        %v4356 = vld [vmem:[#allocation7 + $0x78] sm:$0xff]
        %v4357 = vld [vmem:[#allocation7 + $0x80] sm:$0xff]
        %v4358 = vld [vmem:[#allocation7 + $0x88] sm:$0xff]
        %v4359 = vld [vmem:[#allocation7 + $0x90] sm:$0xff]
        %v4360 = vld [vmem:[#allocation7 + $0x98] sm:$0xff]
        %v4361 = vld [vmem:[#allocation7 + $0xa0] sm:$0xff]
        %v4362 = vld [vmem:[#allocation7 + $0xa8] sm:$0xff]
        %v4363 = vld [vmem:[#allocation7 + $0xb0] sm:$0xff]
        %v4364 = vld [vmem:[#allocation7 + $0xb8] sm:$0xff]
        %v4365 = vld [vmem:[#allocation7 + $0xc0] sm:$0xff]
        %v4366 = vld [vmem:[#allocation7 + $0xc8] sm:$0xff]
        %v4367 = vld [vmem:[#allocation7 + $0xd0] sm:$0xff]
        %v4368 = vld [vmem:[#allocation7 + $0xd8] sm:$0xff]
        %v4369 = vld [vmem:[#allocation7 + $0xe0] sm:$0xff]
        %v4370 = vld [vmem:[#allocation7 + $0xe8] sm:$0xff]
        %v4371 = vld [vmem:[#allocation7 + $0xf0] sm:$0xff]
        %v4372 = vld [vmem:[#allocation7 + $0xf8] sm:$0xff]
        %v4373 = vld [vmem:[#allocation7 + $0x100] sm:$0xff]
        %v4374 = vld [vmem:[#allocation7 + $0x108] sm:$0xff]
        %v4375 = vld [vmem:[#allocation7 + $0x110] sm:$0xff]
        %v4376 = vld [vmem:[#allocation7 + $0x118] sm:$0xff]
        %v4377 = vld [vmem:[#allocation7 + $0x120] sm:$0xff]
        %v4378 = vld [vmem:[#allocation7 + $0x128] sm:$0xff]
        %v4379 = vld [vmem:[#allocation7 + $0x130] sm:$0xff]
        %v4380 = vld [vmem:[#allocation7 + $0x138] sm:$0xff]
        %v4381 = vpack.c.bf16 %v4346, %v4341
        %v4382 = vpack.c.bf16 %v4347, %v4342
        %v4383 = vpack.c.bf16 %v4348, %v4343
        %v4384 = vpack.c.bf16 %v4349, %v4344
        %v4385 = vpack.c.bf16 %v4350, %v4345
        %v4386 = vpack.c.bf16 %v4356, %v4351
        %v4387 = vpack.c.bf16 %v4357, %v4352
        %v4388 = vpack.c.bf16 %v4358, %v4353
        %v4389 = vpack.c.bf16 %v4359, %v4354
        %v4390 = vpack.c.bf16 %v4360, %v4355
        %v4391 = vpack.c.bf16 %v4366, %v4361
        %v4392 = vpack.c.bf16 %v4367, %v4362
        %v4393 = vpack.c.bf16 %v4368, %v4363
        %v4394 = vpack.c.bf16 %v4369, %v4364
        %v4395 = vpack.c.bf16 %v4370, %v4365
        %v4396 = vpack.c.bf16 %v4376, %v4371
        %v4397 = vpack.c.bf16 %v4377, %v4372
        %v4398 = vpack.c.bf16 %v4378, %v4373
        %v4399 = vpack.c.bf16 %v4379, %v4374
        %v4400 = vpack.c.bf16 %v4380, %v4375
        %v4401 = vld [vmem:[%s8] sm:$0xf]
        %v4402 = vld [vmem:[%s8 + $0x4] sm:$0xf]
        %v4403 = vld [vmem:[%s8 + $0x8] sm:$0xf]
        %v4404 = vld [vmem:[%s8 + $0xc] sm:$0xf]
        %v4405 = vld [vmem:[%s8 + $0x10] sm:$0xf]
        %v4406 = vld [vmem:[%s8 + $0x14] sm:$0xf]
        %v4407 = vld [vmem:[%s8 + $0x18] sm:$0xf]
        %v4408 = vld [vmem:[%s8 + $0x1c] sm:$0xf]
        %v4409 = vld [vmem:[%s8 + $0x20] sm:$0xf]
        %v4410 = vld [vmem:[%s8 + $0x24] sm:$0xf]
        %v4411 = vld [vmem:[%s8 + $0x28] sm:$0xf]
        %v4412 = vld [vmem:[%s8 + $0x2c] sm:$0xf]
        %v4413 = vld [vmem:[%s8 + $0x30] sm:$0xf]
        %v4414 = vld [vmem:[%s8 + $0x34] sm:$0xf]
        %v4415 = vld [vmem:[%s8 + $0x38] sm:$0xf]
        %v4416 = vld [vmem:[%s8 + $0x3c] sm:$0xf]
        %v4417 = vld [vmem:[%s8 + $0x40] sm:$0xf]
        %v4418 = vld [vmem:[%s8 + $0x44] sm:$0xf]
        %v4419 = vld [vmem:[%s8 + $0x48] sm:$0xf]
        %v4420 = vld [vmem:[%s8 + $0x4c] sm:$0xf]
        %v4421 = vld [vmem:[%s8 + $0x50] sm:$0xf]
        %v4422 = vld [vmem:[%s8 + $0x54] sm:$0xf]
        %v4423 = vld [vmem:[%s8 + $0x58] sm:$0xf]
        %v4424 = vld [vmem:[%s8 + $0x5c] sm:$0xf]
        %v4425 = vld [vmem:[%s8 + $0x60] sm:$0xf]
        %v4426 = vld [vmem:[%s8 + $0x64] sm:$0xf]
        %v4427 = vld [vmem:[%s8 + $0x68] sm:$0xf]
        %v4428 = vld [vmem:[%s8 + $0x6c] sm:$0xf]
        %v4429 = vld [vmem:[%s8 + $0x70] sm:$0xf]
        %v4430 = vld [vmem:[%s8 + $0x74] sm:$0xf]
        %v4431 = vld [vmem:[%s8 + $0x78] sm:$0xf]
        %v4432 = vld [vmem:[%s8 + $0x7c] sm:$0xf]
        %v4433 = vld [vmem:[%s8 + $0x80] sm:$0xf]
        %v4434 = vld [vmem:[%s8 + $0x84] sm:$0xf]
        %v4435 = vld [vmem:[%s8 + $0x88] sm:$0xf]
        %v4436 = vld [vmem:[%s8 + $0x8c] sm:$0xf]
        %v4437 = vld [vmem:[%s8 + $0x90] sm:$0xf]
        %v4438 = vld [vmem:[%s8 + $0x94] sm:$0xf]
        %v4439 = vld [vmem:[%s8 + $0x98] sm:$0xf]
        %v4440 = vld [vmem:[%s8 + $0x9c] sm:$0xf]
        %v4441 = vld [vmem:[%s8 + $0xa0] sm:$0xf]
        %v4442 = vld [vmem:[%s8 + $0xa4] sm:$0xf]
        %v4443 = vld [vmem:[%s8 + $0xa8] sm:$0xf]
        %v4444 = vld [vmem:[%s8 + $0xac] sm:$0xf]
        %v4445 = vld [vmem:[%s8 + $0xb0] sm:$0xf]
        %v4446 = vld [vmem:[%s8 + $0xb4] sm:$0xf]
        %v4447 = vld [vmem:[%s8 + $0xb8] sm:$0xf]
        %v4448 = vld [vmem:[%s8 + $0xbc] sm:$0xf]
        %v4449 = vld [vmem:[%s8 + $0xc0] sm:$0xf]
        %v4450 = vld [vmem:[%s8 + $0xc4] sm:$0xf]
        %v4451 = vld [vmem:[%s8 + $0xc8] sm:$0xf]
        %v4452 = vld [vmem:[%s8 + $0xcc] sm:$0xf]
        %v4453 = vld [vmem:[%s8 + $0xd0] sm:$0xf]
        %v4454 = vld [vmem:[%s8 + $0xd4] sm:$0xf]
        %v4455 = vld [vmem:[%s8 + $0xd8] sm:$0xf]
        %v4456 = vld [vmem:[%s8 + $0xdc] sm:$0xf]
        %v4457 = vld [vmem:[%s8 + $0xe0] sm:$0xf]
        %v4458 = vld [vmem:[%s8 + $0xe4] sm:$0xf]
        %v4459 = vld [vmem:[%s8 + $0xe8] sm:$0xf]
        %v4460 = vld [vmem:[%s8 + $0xec] sm:$0xf]
        %v4461 = vld [vmem:[%s8 + $0xf0] sm:$0xf]
        %v4462 = vld [vmem:[%s8 + $0xf4] sm:$0xf]
        %v4463 = vld [vmem:[%s8 + $0xf8] sm:$0xf]
        %v4464 = vld [vmem:[%s8 + $0xfc] sm:$0xf]
        %v4465 = vld [vmem:[%s8 + $0x100] sm:$0xf]
        %v4466 = vld [vmem:[%s8 + $0x104] sm:$0xf]
        %v4467 = vld [vmem:[%s8 + $0x108] sm:$0xf]
        %v4468 = vld [vmem:[%s8 + $0x10c] sm:$0xf]
        %v4469 = vld [vmem:[%s8 + $0x110] sm:$0xf]
        %v4470 = vld [vmem:[%s8 + $0x114] sm:$0xf]
        %v4471 = vld [vmem:[%s8 + $0x118] sm:$0xf]
        %v4472 = vld [vmem:[%s8 + $0x11c] sm:$0xf]
        %v4473 = vld [vmem:[%s9] sm:$0x1]
        %v4475 = vlaneseq
        %v4476 = vshrl.u32 %v4475, 7
        %v4477 = vsub.s32 0, %v4476
        %v4478 = vrot.slane %v4473, %v4477
        %v4552 = vunpack.c.l.b16 %v4401
        %v4553 = vunpack.c.l.b16 %v4402
        %v4554 = vunpack.c.l.b16 %v4403
        %v4555 = vunpack.c.l.b16 %v4404
        %v4556 = vunpack.c.l.b16 %v4405
        %v4557 = vunpack.c.l.b16 %v4406
        %v4558 = vunpack.c.l.b16 %v4407
        %v4559 = vunpack.c.l.b16 %v4408
        %v4560 = vunpack.c.l.b16 %v4409
        %v4561 = vunpack.c.l.b16 %v4410
        %v4562 = vunpack.c.l.b16 %v4411
        %v4563 = vunpack.c.l.b16 %v4412
        %v4564 = vunpack.c.l.b16 %v4413
        %v4565 = vunpack.c.l.b16 %v4414
        %v4566 = vunpack.c.l.b16 %v4415
        %v4567 = vunpack.c.l.b16 %v4416
        %v4568 = vunpack.c.l.b16 %v4417
        %v4569 = vunpack.c.l.b16 %v4418
        %v4570 = vunpack.c.l.b16 %v4419
        %v4571 = vunpack.c.l.b16 %v4420
        %v4572 = vunpack.c.l.b16 %v4421
        %v4573 = vunpack.c.l.b16 %v4422
        %v4574 = vunpack.c.l.b16 %v4423
        %v4575 = vunpack.c.l.b16 %v4424
        %v4576 = vunpack.c.l.b16 %v4425
        %v4577 = vunpack.c.l.b16 %v4426
        %v4578 = vunpack.c.l.b16 %v4427
        %v4579 = vunpack.c.l.b16 %v4428
        %v4580 = vunpack.c.l.b16 %v4429
        %v4581 = vunpack.c.l.b16 %v4430
        %v4582 = vunpack.c.l.b16 %v4431
        %v4583 = vunpack.c.l.b16 %v4432
        %v4584 = vunpack.c.l.b16 %v4433
        %v4585 = vunpack.c.l.b16 %v4434
        %v4586 = vunpack.c.l.b16 %v4435
        %v4587 = vunpack.c.l.b16 %v4436
        %v4588 = vunpack.c.l.b16 %v4437
        %v4589 = vunpack.c.l.b16 %v4438
        %v4590 = vunpack.c.l.b16 %v4439
        %v4591 = vunpack.c.l.b16 %v4440
        %v4592 = vunpack.c.l.b16 %v4441
        %v4593 = vunpack.c.l.b16 %v4442
        %v4594 = vunpack.c.l.b16 %v4443
        %v4595 = vunpack.c.l.b16 %v4444
        %v4596 = vunpack.c.l.b16 %v4445
        %v4597 = vunpack.c.l.b16 %v4446
        %v4598 = vunpack.c.l.b16 %v4447
        %v4599 = vunpack.c.l.b16 %v4448
        %v4600 = vunpack.c.l.b16 %v4449
        %v4601 = vunpack.c.l.b16 %v4450
        %v4602 = vunpack.c.l.b16 %v4451
        %v4603 = vunpack.c.l.b16 %v4452
        %v4604 = vunpack.c.l.b16 %v4453
        %v4605 = vunpack.c.l.b16 %v4454
        %v4606 = vunpack.c.l.b16 %v4455
        %v4607 = vunpack.c.l.b16 %v4456
        %v4608 = vunpack.c.l.b16 %v4457
        %v4609 = vunpack.c.l.b16 %v4458
        %v4610 = vunpack.c.l.b16 %v4459
        %v4611 = vunpack.c.l.b16 %v4460
        %v4612 = vunpack.c.l.b16 %v4461
        %v4613 = vunpack.c.l.b16 %v4462
        %v4614 = vunpack.c.l.b16 %v4463
        %v4615 = vunpack.c.l.b16 %v4464
        %v4616 = vunpack.c.l.b16 %v4465
        %v4617 = vunpack.c.l.b16 %v4466
        %v4618 = vunpack.c.l.b16 %v4467
        %v4619 = vunpack.c.l.b16 %v4468
        %v4620 = vunpack.c.l.b16 %v4469
        %v4621 = vunpack.c.l.b16 %v4470
        %v4622 = vunpack.c.l.b16 %v4471
        %v4623 = vunpack.c.l.b16 %v4472
        %v4624 = vpack.c.b16 %v4553, %v4552
        %v4625 = vpack.c.b16 %v4555, %v4554
        %v4626 = vpack.c.b16 %v4557, %v4556
        %v4627 = vpack.c.b16 %v4559, %v4558
        %v4628 = vpack.c.b16 %v4561, %v4560
        %v4629 = vpack.c.b16 %v4563, %v4562
        %v4630 = vpack.c.b16 %v4565, %v4564
        %v4631 = vpack.c.b16 %v4567, %v4566
        %v4632 = vpack.c.b16 %v4569, %v4568
        %v4633 = vpack.c.b16 %v4571, %v4570
        %v4634 = vpack.c.b16 %v4573, %v4572
        %v4635 = vpack.c.b16 %v4575, %v4574
        %v4636 = vpack.c.b16 %v4577, %v4576
        %v4637 = vpack.c.b16 %v4579, %v4578
        %v4638 = vpack.c.b16 %v4581, %v4580
        %v4639 = vpack.c.b16 %v4583, %v4582
        %v4640 = vpack.c.b16 %v4585, %v4584
        %v4641 = vpack.c.b16 %v4587, %v4586
        %v4642 = vpack.c.b16 %v4589, %v4588
        %v4643 = vpack.c.b16 %v4591, %v4590
        %v4644 = vpack.c.b16 %v4593, %v4592
        %v4645 = vpack.c.b16 %v4595, %v4594
        %v4646 = vpack.c.b16 %v4597, %v4596
        %v4647 = vpack.c.b16 %v4599, %v4598
        %v4648 = vpack.c.b16 %v4601, %v4600
        %v4649 = vpack.c.b16 %v4603, %v4602
        %v4650 = vpack.c.b16 %v4605, %v4604
        %v4651 = vpack.c.b16 %v4607, %v4606
        %v4652 = vpack.c.b16 %v4609, %v4608
        %v4653 = vpack.c.b16 %v4611, %v4610
        %v4654 = vpack.c.b16 %v4613, %v4612
        %v4655 = vpack.c.b16 %v4615, %v4614
        %v4656 = vpack.c.b16 %v4617, %v4616
        %v4657 = vpack.c.b16 %v4619, %v4618
        %v4658 = vpack.c.b16 %v4621, %v4620
        %v4659 = vpack.c.b16 %v4623, %v4622
        %v4697 = vsel %vm604, %v4385, 0
        %v4700 = vsel %vm604, %v4390, 0
        %v4703 = vsel %vm604, %v4395, 0
        %v4706 = vsel %vm604, %v4400, 0
        %4708 = vmatprep.subr.bf16.mxu0 0
        %4709 = vmatpush1.bf16.msra.mxu0 %v4631
        %4710 = vmatprep.subr.bf16.mxu0 0
        %4711 = vmatpush1.bf16.msra.mxu0 %v4630
        %4712 = vmatprep.subr.bf16.mxu0 0
        %4713 = vmatpush1.bf16.msra.mxu0 %v4629
        %4714 = vmatprep.subr.bf16.mxu0 0
        %4715 = vmatpush1.bf16.msra.mxu0 %v4628
        %4716 = vmatprep.subr.bf16.mxu0 0
        %4717 = vmatpush1.bf16.msra.mxu0 %v4627
        %4718 = vmatprep.subr.bf16.mxu0 0
        %4719 = vmatpush1.bf16.msra.mxu0 %v4626
        %4720 = vmatprep.subr.bf16.mxu0 0
        %4721 = vmatpush1.bf16.msra.mxu0 %v4625
        %4722 = vmatprep.subr.bf16.mxu0 0
        %4723 = vmatpush1.bf16.msra.mxu0 %v4624
        %4724 = vmatprep.subr.bf16.mxu0 0
        %4725 = vmatpush2.bf16.msra.mxu0 %v4639
        %4726 = vmatprep.subr.bf16.mxu0 0
        %4727 = vmatpush2.bf16.msra.mxu0 %v4638
        %4728 = vmatprep.subr.bf16.mxu0 0
        %4729 = vmatpush2.bf16.msra.mxu0 %v4637
        %4730 = vmatprep.subr.bf16.mxu0 0
        %4731 = vmatpush2.bf16.msra.mxu0 %v4636
        %4732 = vmatprep.subr.bf16.mxu0 0
        %4733 = vmatpush2.bf16.msra.mxu0 %v4635
        %4734 = vmatprep.subr.bf16.mxu0 0
        %4735 = vmatpush2.bf16.msra.mxu0 %v4634
        %4736 = vmatprep.subr.bf16.mxu0 0
        %4737 = vmatpush2.bf16.msra.mxu0 %v4633
        %4738 = vmatprep.subr.bf16.mxu0 0
        %4739 = vmatpush2.bf16.msra.mxu0 %v4632
        %4740 = vmatprep.mubr.bf16.mxu0 %v4382
        %4741 = vmatmul.mubr.bf16.gmra.mxu0 %v4381
        %v4742 = vpop.f32.mrf.mxu0
        %v4743 = vadd.f32 %v4478, %v4742
        %v4744 = vpop.f32.mrf.mxu0
        %v4745 = vpop.f32.mrf.mxu0
        %v4746 = vadd.f32 %v4478, %v4745
        %v4747 = vpop.f32.mrf.mxu0
        %4748 = vmatprep.mubr.bf16.mxu0 %v4387
        %4749 = vmatmul.mubr.bf16.gmra.mxu0 %v4386
        %v4750 = vpop.f32.mrf.mxu0
        %v4751 = vadd.f32 %v4478, %v4750
        %v4752 = vpop.f32.mrf.mxu0
        %v4753 = vpop.f32.mrf.mxu0
        %v4754 = vadd.f32 %v4478, %v4753
        %v4755 = vpop.f32.mrf.mxu0
        %4756 = vmatprep.mubr.bf16.mxu0 %v4392
        %4757 = vmatmul.mubr.bf16.gmra.mxu0 %v4391
        %v4758 = vpop.f32.mrf.mxu0
        %v4759 = vadd.f32 %v4478, %v4758
        %v4760 = vpop.f32.mrf.mxu0
        %v4761 = vpop.f32.mrf.mxu0
        %v4762 = vadd.f32 %v4478, %v4761
        %v4763 = vpop.f32.mrf.mxu0
        %4764 = vmatprep.mubr.bf16.mxu0 %v4397
        %4765 = vmatmul.mubr.bf16.gmra.mxu0 %v4396
        %v4766 = vpop.f32.mrf.mxu0
        %v4767 = vadd.f32 %v4478, %v4766
        %v4768 = vpop.f32.mrf.mxu0
        %v4769 = vpop.f32.mrf.mxu0
        %v4770 = vadd.f32 %v4478, %v4769
        %v4771 = vpop.f32.mrf.mxu0
        %4772 = vdwg.mxu0
        %4773 = vmatprep.subr.bf16.mxu0 0
        %4774 = vmatpush1.bf16.msra.mxu0 %v4647
        %4775 = vmatprep.subr.bf16.mxu0 0
        %4776 = vmatpush1.bf16.msra.mxu0 %v4646
        %4777 = vmatprep.subr.bf16.mxu0 0
        %4778 = vmatpush1.bf16.msra.mxu0 %v4645
        %4779 = vmatprep.subr.bf16.mxu0 0
        %4780 = vmatpush1.bf16.msra.mxu0 %v4644
        %4781 = vmatprep.subr.bf16.mxu0 0
        %4782 = vmatpush1.bf16.msra.mxu0 %v4643
        %4783 = vmatprep.subr.bf16.mxu0 0
        %4784 = vmatpush1.bf16.msra.mxu0 %v4642
        %4785 = vmatprep.subr.bf16.mxu0 0
        %4786 = vmatpush1.bf16.msra.mxu0 %v4641
        %4787 = vmatprep.subr.bf16.mxu0 0
        %4788 = vmatpush1.bf16.msra.mxu0 %v4640
        %4789 = vmatprep.subr.bf16.mxu0 0
        %4790 = vmatpush2.bf16.msra.mxu0 %v4655
        %4791 = vmatprep.subr.bf16.mxu0 0
        %4792 = vmatpush2.bf16.msra.mxu0 %v4654
        %4793 = vmatprep.subr.bf16.mxu0 0
        %4794 = vmatpush2.bf16.msra.mxu0 %v4653
        %4795 = vmatprep.subr.bf16.mxu0 0
        %4796 = vmatpush2.bf16.msra.mxu0 %v4652
        %4797 = vmatprep.subr.bf16.mxu0 0
        %4798 = vmatpush2.bf16.msra.mxu0 %v4651
        %4799 = vmatprep.subr.bf16.mxu0 0
        %4800 = vmatpush2.bf16.msra.mxu0 %v4650
        %4801 = vmatprep.subr.bf16.mxu0 0
        %4802 = vmatpush2.bf16.msra.mxu0 %v4649
        %4803 = vmatprep.subr.bf16.mxu0 0
        %4804 = vmatpush2.bf16.msra.mxu0 %v4648
        %4805 = vmatprep.mubr.bf16.mxu0 %v4384
        %4806 = vmatmul.mubr.bf16.gmra.mxu0 %v4383
        %v4807 = vpop.f32.mrf.mxu0
        %v4808 = vadd.f32 %v4743, %v4807
        %v4809 = vpop.f32.mrf.mxu0
        %v4810 = vpop.f32.mrf.mxu0
        %v4811 = vadd.f32 %v4746, %v4810
        %v4812 = vpop.f32.mrf.mxu0
        %4813 = vmatprep.mubr.bf16.mxu0 %v4389
        %4814 = vmatmul.mubr.bf16.gmra.mxu0 %v4388
        %v4815 = vpop.f32.mrf.mxu0
        %v4816 = vadd.f32 %v4751, %v4815
        %v4817 = vpop.f32.mrf.mxu0
        %v4818 = vpop.f32.mrf.mxu0
        %v4819 = vadd.f32 %v4754, %v4818
        %v4820 = vpop.f32.mrf.mxu0
        %4821 = vmatprep.mubr.bf16.mxu0 %v4394
        %4822 = vmatmul.mubr.bf16.gmra.mxu0 %v4393
        %v4823 = vpop.f32.mrf.mxu0
        %v4824 = vadd.f32 %v4759, %v4823
        %v4825 = vpop.f32.mrf.mxu0
        %v4826 = vpop.f32.mrf.mxu0
        %v4827 = vadd.f32 %v4762, %v4826
        %v4828 = vpop.f32.mrf.mxu0
        %4829 = vmatprep.mubr.bf16.mxu0 %v4399
        %4830 = vmatmul.mubr.bf16.gmra.mxu0 %v4398
        %v4831 = vpop.f32.mrf.mxu0
        %v4832 = vadd.f32 %v4767, %v4831
        %v4833 = vpop.f32.mrf.mxu0
        %v4834 = vpop.f32.mrf.mxu0
        %v4835 = vadd.f32 %v4770, %v4834
        %v4836 = vpop.f32.mrf.mxu0
        %4837 = vdwg.mxu0
        %4838 = vmatprep.subr.bf16.mxu0 0
        %4839 = vmatpush1.bf16.msra.mxu0 0
        %4840 = vmatprep.subr.bf16.mxu0 0
        %4841 = vmatpush1.bf16.msra.mxu0 0
        %4842 = vmatprep.subr.bf16.mxu0 0
        %4843 = vmatpush1.bf16.msra.mxu0 0
        %4844 = vmatprep.subr.bf16.mxu0 0
        %4845 = vmatpush1.bf16.msra.mxu0 0
        %4846 = vmatprep.subr.bf16.mxu0 0
        %4847 = vmatpush1.bf16.msra.mxu0 %v4659
        %4848 = vmatprep.subr.bf16.mxu0 0
        %4849 = vmatpush1.bf16.msra.mxu0 %v4658
        %4850 = vmatprep.subr.bf16.mxu0 0
        %4851 = vmatpush1.bf16.msra.mxu0 %v4657
        %4852 = vmatprep.subr.bf16.mxu0 0
        %4853 = vmatpush1.bf16.msra.mxu0 %v4656
        %4854 = vmatprep.subr.bf16.mxu0 0
        %4855 = vmatpush2.bf16.msra.mxu0 0
        %4856 = vmatprep.subr.bf16.mxu0 0
        %4857 = vmatpush2.bf16.msra.mxu0 0
        %4858 = vmatprep.subr.bf16.mxu0 0
        %4859 = vmatpush2.bf16.msra.mxu0 0
        %4860 = vmatprep.subr.bf16.mxu0 0
        %4861 = vmatpush2.bf16.msra.mxu0 0
        %4862 = vmatprep.subr.bf16.mxu0 0
        %4863 = vmatpush2.bf16.msra.mxu0 0
        %4864 = vmatprep.subr.bf16.mxu0 0
        %4865 = vmatpush2.bf16.msra.mxu0 0
        %4866 = vmatprep.subr.bf16.mxu0 0
        %4867 = vmatpush2.bf16.msra.mxu0 0
        %4868 = vmatprep.subr.bf16.mxu0 0
        %4869 = vmatpush2.bf16.msra.mxu0 0
        %4870 = vmatprep.mubr.bf16.mxu0 0
        %4871 = vmatmul.mubr.bf16.gmra.mxu0 %v4697
        %v4872 = vpop.f32.mrf.mxu0
        %v4873 = vadd.f32 %v4808, %v4872
        %v4874 = vpop.f32.mrf.mxu0
        %v4875 = vpop.f32.mrf.mxu0
        %v4876 = vadd.f32 %v4811, %v4875
        %v4877 = vpop.f32.mrf.mxu0
        %4878 = vmatprep.mubr.bf16.mxu0 0
        %4879 = vmatmul.mubr.bf16.gmra.mxu0 %v4700
        %v4880 = vpop.f32.mrf.mxu0
        %v4881 = vadd.f32 %v4816, %v4880
        %v4882 = vpop.f32.mrf.mxu0
        %v4883 = vpop.f32.mrf.mxu0
        %v4884 = vadd.f32 %v4819, %v4883
        %v4885 = vpop.f32.mrf.mxu0
        %4886 = vmatprep.mubr.bf16.mxu0 0
        %4887 = vmatmul.mubr.bf16.gmra.mxu0 %v4703
        %v4888 = vpop.f32.mrf.mxu0
        %v4889 = vadd.f32 %v4824, %v4888
        %v4890 = vpop.f32.mrf.mxu0
        %v4891 = vpop.f32.mrf.mxu0
        %v4892 = vadd.f32 %v4827, %v4891
        %v4893 = vpop.f32.mrf.mxu0
        %4894 = vmatprep.mubr.bf16.mxu0 0
        %4895 = vmatmul.mubr.bf16.gmra.mxu0 %v4706
        %v4896 = vpop.f32.mrf.mxu0
        %v4897 = vadd.f32 %v4832, %v4896
        %v4898 = vpop.f32.mrf.mxu0
        %v4899 = vpop.f32.mrf.mxu0
        %v4900 = vadd.f32 %v4835, %v4899
        %v4901 = vpop.f32.mrf.mxu0
        %4902 = vdwg.mxu0
        %v4903 = vadd.f32 %v3176, %v4873
        %v4904 = vadd.f32 %v3179, %v4876
        %v4905 = vadd.f32 %v3184, %v4881
        %v4906 = vadd.f32 %v3187, %v4884
        %v4907 = vadd.f32 %v3192, %v4889
        %v4908 = vadd.f32 %v3195, %v4892
        %v4909 = vadd.f32 %v3200, %v4897
        %v4910 = vadd.f32 %v3203, %v4900
        %v4911 = vmax.f32 %v4903, 0.0
        %v4912 = vmax.f32 %v4904, 0.0
        %v4913 = vmax.f32 %v4905, 0.0
        %v4914 = vmax.f32 %v4906, 0.0
        %v4915 = vmax.f32 %v4907, 0.0
        %v4916 = vmax.f32 %v4908, 0.0
        %v4917 = vmax.f32 %v4909, 0.0
        %v4918 = vmax.f32 %v4910, 0.0
        %s4919 = scalar_lea.vmem [#allocation3], 16
        %4920 = vst.msk [vmem:[%s4919 + $0x1] sm:$0xff] %vm604, %v4911
        %4921 = vst.msk [vmem:[%s4919 + $0x11] sm:$0xff] %vm604, %v4912
        %4922 = vst.msk [vmem:[%s4919 + $0x21] sm:$0xff] %vm604, %v4913
        %4923 = vst.msk [vmem:[%s4919 + $0x31] sm:$0xff] %vm604, %v4914
        %4924 = vst.msk [vmem:[%s4919 + $0x41] sm:$0xff] %vm604, %v4915
        %4925 = vst.msk [vmem:[%s4919 + $0x51] sm:$0xff] %vm604, %v4916
        %4926 = vst.msk [vmem:[%s4919 + $0x61] sm:$0xff] %vm604, %v4917
        %4927 = vst.msk [vmem:[%s4919 + $0x71] sm:$0xff] %vm604, %v4918
        %v4928 = vld [vmem:[#allocation3] sm:$0xff]
        %v4929 = vld [vmem:[#allocation3 + $0x10] sm:$0xff]
        %v4930 = vld [vmem:[#allocation3 + $0x20] sm:$0xff]
        %v4931 = vld [vmem:[#allocation3 + $0x30] sm:$0xff]
        %v4932 = vld [vmem:[#allocation3 + $0x40] sm:$0xff]
        %v4933 = vld [vmem:[#allocation3 + $0x50] sm:$0xff]
        %v4934 = vld [vmem:[#allocation3 + $0x60] sm:$0xff]
        %v4935 = vld [vmem:[#allocation3 + $0x70] sm:$0xff]
        %4936 = vst.msk [vmem:[#allocation10] sm:$0xff] %vm604, %v4928
        %4937 = vst.msk [vmem:[#allocation10 + $0x28] sm:$0xff] %vm604, %v4929
        %4938 = vst.msk [vmem:[#allocation10 + $0x50] sm:$0xff] %vm604, %v4930
        %4939 = vst.msk [vmem:[#allocation10 + $0x78] sm:$0xff] %vm604, %v4931
        %4940 = vst.msk [vmem:[#allocation10 + $0xa0] sm:$0xff] %vm604, %v4932
        %4941 = vst.msk [vmem:[#allocation10 + $0xc8] sm:$0xff] %vm604, %v4933
        %4942 = vst.msk [vmem:[#allocation10 + $0xf0] sm:$0xff] %vm604, %v4934
        %4943 = vst.msk [vmem:[#allocation10 + $0x118] sm:$0xff] %vm604, %v4935
        %v4944 = vld [vmem:[#allocation3 + $0x1] sm:$0xff]
        %v4945 = vld [vmem:[#allocation3 + $0x11] sm:$0xff]
        %v4946 = vld [vmem:[#allocation3 + $0x21] sm:$0xff]
        %v4947 = vld [vmem:[#allocation3 + $0x31] sm:$0xff]
        %v4948 = vld [vmem:[#allocation3 + $0x41] sm:$0xff]
        %v4949 = vld [vmem:[#allocation3 + $0x51] sm:$0xff]
        %v4950 = vld [vmem:[#allocation3 + $0x61] sm:$0xff]
        %v4951 = vld [vmem:[#allocation3 + $0x71] sm:$0xff]
        %4960 = vrot.lane.b32.xlu0 %v4944, 64
        %v4961 = vpop.permute.xlu0 %4960
        %4962 = vrot.lane.b32.xlu0 %v4945, 64
        %v4963 = vpop.permute.xlu0 %4962
        %4964 = vrot.lane.b32.xlu0 %v4946, 64
        %v4965 = vpop.permute.xlu0 %4964
        %4966 = vrot.lane.b32.xlu0 %v4947, 64
        %v4967 = vpop.permute.xlu0 %4966
        %4968 = vrot.lane.b32.xlu0 %v4948, 64
        %v4969 = vpop.permute.xlu0 %4968
        %4970 = vrot.lane.b32.xlu0 %v4949, 64
        %v4971 = vpop.permute.xlu0 %4970
        %4972 = vrot.lane.b32.xlu0 %v4950, 64
        %v4973 = vpop.permute.xlu0 %4972
        %4974 = vrot.lane.b32.xlu0 %v4951, 64
        %v4975 = vpop.permute.xlu0 %4974
        %4984 = vst.msk [vmem:[#allocation10] sm:$0xff] %vm3271, %v4961
        %4985 = vst.msk [vmem:[#allocation10 + $0x28] sm:$0xff] %vm3271, %v4963
        %4986 = vst.msk [vmem:[#allocation10 + $0x50] sm:$0xff] %vm3271, %v4965
        %4987 = vst.msk [vmem:[#allocation10 + $0x78] sm:$0xff] %vm3271, %v4967
        %4988 = vst.msk [vmem:[#allocation10 + $0xa0] sm:$0xff] %vm3271, %v4969
        %4989 = vst.msk [vmem:[#allocation10 + $0xc8] sm:$0xff] %vm3271, %v4971
        %4990 = vst.msk [vmem:[#allocation10 + $0xf0] sm:$0xff] %vm3271, %v4973
        %4991 = vst.msk [vmem:[#allocation10 + $0x118] sm:$0xff] %vm3271, %v4975
        %v4992 = vld [vmem:[#allocation3 + $0x2] sm:$0xff]
        %v4993 = vld [vmem:[#allocation3 + $0x12] sm:$0xff]
        %v4994 = vld [vmem:[#allocation3 + $0x22] sm:$0xff]
        %v4995 = vld [vmem:[#allocation3 + $0x32] sm:$0xff]
        %v4996 = vld [vmem:[#allocation3 + $0x42] sm:$0xff]
        %v4997 = vld [vmem:[#allocation3 + $0x52] sm:$0xff]
        %v4998 = vld [vmem:[#allocation3 + $0x62] sm:$0xff]
        %v4999 = vld [vmem:[#allocation3 + $0x72] sm:$0xff]
        %5000 = vst.msk [vmem:[#allocation10 + $0x8] sm:$0xff] %vm604, %v4992
        %5001 = vst.msk [vmem:[#allocation10 + $0x30] sm:$0xff] %vm604, %v4993
        %5002 = vst.msk [vmem:[#allocation10 + $0x58] sm:$0xff] %vm604, %v4994
        %5003 = vst.msk [vmem:[#allocation10 + $0x80] sm:$0xff] %vm604, %v4995
        %5004 = vst.msk [vmem:[#allocation10 + $0xa8] sm:$0xff] %vm604, %v4996
        %5005 = vst.msk [vmem:[#allocation10 + $0xd0] sm:$0xff] %vm604, %v4997
        %5006 = vst.msk [vmem:[#allocation10 + $0xf8] sm:$0xff] %vm604, %v4998
        %5007 = vst.msk [vmem:[#allocation10 + $0x120] sm:$0xff] %vm604, %v4999
        %v5008 = vld [vmem:[%s4919] sm:$0xff]
        %v5009 = vld [vmem:[%s4919 + $0x10] sm:$0xff]
        %v5010 = vld [vmem:[%s4919 + $0x20] sm:$0xff]
        %v5011 = vld [vmem:[%s4919 + $0x30] sm:$0xff]
        %v5012 = vld [vmem:[%s4919 + $0x40] sm:$0xff]
        %v5013 = vld [vmem:[%s4919 + $0x50] sm:$0xff]
        %v5014 = vld [vmem:[%s4919 + $0x60] sm:$0xff]
        %v5015 = vld [vmem:[%s4919 + $0x70] sm:$0xff]
        %5024 = vrot.lane.b32.xlu0 %v5008, 64
        %v5025 = vpop.permute.xlu0 %5024
        %5026 = vrot.lane.b32.xlu0 %v5009, 64
        %v5027 = vpop.permute.xlu0 %5026
        %5028 = vrot.lane.b32.xlu0 %v5010, 64
        %v5029 = vpop.permute.xlu0 %5028
        %5030 = vrot.lane.b32.xlu0 %v5011, 64
        %v5031 = vpop.permute.xlu0 %5030
        %5032 = vrot.lane.b32.xlu0 %v5012, 64
        %v5033 = vpop.permute.xlu0 %5032
        %5034 = vrot.lane.b32.xlu0 %v5013, 64
        %v5035 = vpop.permute.xlu0 %5034
        %5036 = vrot.lane.b32.xlu0 %v5014, 64
        %v5037 = vpop.permute.xlu0 %5036
        %5038 = vrot.lane.b32.xlu0 %v5015, 64
        %v5039 = vpop.permute.xlu0 %5038
        %5048 = vst.msk [vmem:[#allocation10 + $0x8] sm:$0xff] %vm3271, %v5025
        %5049 = vst.msk [vmem:[#allocation10 + $0x30] sm:$0xff] %vm3271, %v5027
        %5050 = vst.msk [vmem:[#allocation10 + $0x58] sm:$0xff] %vm3271, %v5029
        %5051 = vst.msk [vmem:[#allocation10 + $0x80] sm:$0xff] %vm3271, %v5031
        %5052 = vst.msk [vmem:[#allocation10 + $0xa8] sm:$0xff] %vm3271, %v5033
        %5053 = vst.msk [vmem:[#allocation10 + $0xd0] sm:$0xff] %vm3271, %v5035
        %5054 = vst.msk [vmem:[#allocation10 + $0xf8] sm:$0xff] %vm3271, %v5037
        %5055 = vst.msk [vmem:[#allocation10 + $0x120] sm:$0xff] %vm3271, %v5039
        %v5056 = vld [vmem:[%s4919 + $0x1] sm:$0xff]
        %v5057 = vld [vmem:[%s4919 + $0x11] sm:$0xff]
        %v5058 = vld [vmem:[%s4919 + $0x21] sm:$0xff]
        %v5059 = vld [vmem:[%s4919 + $0x31] sm:$0xff]
        %v5060 = vld [vmem:[%s4919 + $0x41] sm:$0xff]
        %v5061 = vld [vmem:[%s4919 + $0x51] sm:$0xff]
        %v5062 = vld [vmem:[%s4919 + $0x61] sm:$0xff]
        %v5063 = vld [vmem:[%s4919 + $0x71] sm:$0xff]
        %5064 = vst.msk [vmem:[#allocation10 + $0x10] sm:$0xff] %vm604, %v5056
        %5065 = vst.msk [vmem:[#allocation10 + $0x38] sm:$0xff] %vm604, %v5057
        %5066 = vst.msk [vmem:[#allocation10 + $0x60] sm:$0xff] %vm604, %v5058
        %5067 = vst.msk [vmem:[#allocation10 + $0x88] sm:$0xff] %vm604, %v5059
        %5068 = vst.msk [vmem:[#allocation10 + $0xb0] sm:$0xff] %vm604, %v5060
        %5069 = vst.msk [vmem:[#allocation10 + $0xd8] sm:$0xff] %vm604, %v5061
        %5070 = vst.msk [vmem:[#allocation10 + $0x100] sm:$0xff] %vm604, %v5062
        %5071 = vst.msk [vmem:[#allocation10 + $0x128] sm:$0xff] %vm604, %v5063
        %v5072 = vld [vmem:[%s4919 + $0x2] sm:$0xff]
        %v5073 = vld [vmem:[%s4919 + $0x12] sm:$0xff]
        %v5074 = vld [vmem:[%s4919 + $0x22] sm:$0xff]
        %v5075 = vld [vmem:[%s4919 + $0x32] sm:$0xff]
        %v5076 = vld [vmem:[%s4919 + $0x42] sm:$0xff]
        %v5077 = vld [vmem:[%s4919 + $0x52] sm:$0xff]
        %v5078 = vld [vmem:[%s4919 + $0x62] sm:$0xff]
        %v5079 = vld [vmem:[%s4919 + $0x72] sm:$0xff]
        %5088 = vrot.lane.b32.xlu0 %v5072, 64
        %v5089 = vpop.permute.xlu0 %5088
        %5090 = vrot.lane.b32.xlu0 %v5073, 64
        %v5091 = vpop.permute.xlu0 %5090
        %5092 = vrot.lane.b32.xlu0 %v5074, 64
        %v5093 = vpop.permute.xlu0 %5092
        %5094 = vrot.lane.b32.xlu0 %v5075, 64
        %v5095 = vpop.permute.xlu0 %5094
        %5096 = vrot.lane.b32.xlu0 %v5076, 64
        %v5097 = vpop.permute.xlu0 %5096
        %5098 = vrot.lane.b32.xlu0 %v5077, 64
        %v5099 = vpop.permute.xlu0 %5098
        %5100 = vrot.lane.b32.xlu0 %v5078, 64
        %v5101 = vpop.permute.xlu0 %5100
        %5102 = vrot.lane.b32.xlu0 %v5079, 64
        %v5103 = vpop.permute.xlu0 %5102
        %5112 = vst.msk [vmem:[#allocation10 + $0x10] sm:$0xff] %vm3271, %v5089
        %5113 = vst.msk [vmem:[#allocation10 + $0x38] sm:$0xff] %vm3271, %v5091
        %5114 = vst.msk [vmem:[#allocation10 + $0x60] sm:$0xff] %vm3271, %v5093
        %5115 = vst.msk [vmem:[#allocation10 + $0x88] sm:$0xff] %vm3271, %v5095
        %5116 = vst.msk [vmem:[#allocation10 + $0xb0] sm:$0xff] %vm3271, %v5097
        %5117 = vst.msk [vmem:[#allocation10 + $0xd8] sm:$0xff] %vm3271, %v5099
        %5118 = vst.msk [vmem:[#allocation10 + $0x100] sm:$0xff] %vm3271, %v5101
        %5119 = vst.msk [vmem:[#allocation10 + $0x128] sm:$0xff] %vm3271, %v5103
        %s5120 = scalar_lea.vmem [#allocation3], 32
        %v5121 = vld [vmem:[%s5120] sm:$0xff]
        %v5122 = vld [vmem:[%s5120 + $0x10] sm:$0xff]
        %v5123 = vld [vmem:[%s5120 + $0x20] sm:$0xff]
        %v5124 = vld [vmem:[%s5120 + $0x30] sm:$0xff]
        %v5125 = vld [vmem:[%s5120 + $0x40] sm:$0xff]
        %v5126 = vld [vmem:[%s5120 + $0x50] sm:$0xff]
        %v5127 = vld [vmem:[%s5120 + $0x60] sm:$0xff]
        %v5128 = vld [vmem:[%s5120 + $0x70] sm:$0xff]
        %5129 = vst.msk [vmem:[#allocation10 + $0x18] sm:$0xff] %vm604, %v5121
        %5130 = vst.msk [vmem:[#allocation10 + $0x40] sm:$0xff] %vm604, %v5122
        %5131 = vst.msk [vmem:[#allocation10 + $0x68] sm:$0xff] %vm604, %v5123
        %5132 = vst.msk [vmem:[#allocation10 + $0x90] sm:$0xff] %vm604, %v5124
        %5133 = vst.msk [vmem:[#allocation10 + $0xb8] sm:$0xff] %vm604, %v5125
        %5134 = vst.msk [vmem:[#allocation10 + $0xe0] sm:$0xff] %vm604, %v5126
        %5135 = vst.msk [vmem:[#allocation10 + $0x108] sm:$0xff] %vm604, %v5127
        %5136 = vst.msk [vmem:[#allocation10 + $0x130] sm:$0xff] %vm604, %v5128
        %v5137 = vld [vmem:[%s5120 + $0x1] sm:$0xff]
        %v5138 = vld [vmem:[%s5120 + $0x11] sm:$0xff]
        %v5139 = vld [vmem:[%s5120 + $0x21] sm:$0xff]
        %v5140 = vld [vmem:[%s5120 + $0x31] sm:$0xff]
        %v5141 = vld [vmem:[%s5120 + $0x41] sm:$0xff]
        %v5142 = vld [vmem:[%s5120 + $0x51] sm:$0xff]
        %v5143 = vld [vmem:[%s5120 + $0x61] sm:$0xff]
        %v5144 = vld [vmem:[%s5120 + $0x71] sm:$0xff]
        %5153 = vrot.lane.b32.xlu0 %v5137, 64
        %v5154 = vpop.permute.xlu0 %5153
        %5155 = vrot.lane.b32.xlu0 %v5138, 64
        %v5156 = vpop.permute.xlu0 %5155
        %5157 = vrot.lane.b32.xlu0 %v5139, 64
        %v5158 = vpop.permute.xlu0 %5157
        %5159 = vrot.lane.b32.xlu0 %v5140, 64
        %v5160 = vpop.permute.xlu0 %5159
        %5161 = vrot.lane.b32.xlu0 %v5141, 64
        %v5162 = vpop.permute.xlu0 %5161
        %5163 = vrot.lane.b32.xlu0 %v5142, 64
        %v5164 = vpop.permute.xlu0 %5163
        %5165 = vrot.lane.b32.xlu0 %v5143, 64
        %v5166 = vpop.permute.xlu0 %5165
        %5167 = vrot.lane.b32.xlu0 %v5144, 64
        %v5168 = vpop.permute.xlu0 %5167
        %5177 = vst.msk [vmem:[#allocation10 + $0x18] sm:$0xff] %vm3271, %v5154
        %5178 = vst.msk [vmem:[#allocation10 + $0x40] sm:$0xff] %vm3271, %v5156
        %5179 = vst.msk [vmem:[#allocation10 + $0x68] sm:$0xff] %vm3271, %v5158
        %5180 = vst.msk [vmem:[#allocation10 + $0x90] sm:$0xff] %vm3271, %v5160
        %5181 = vst.msk [vmem:[#allocation10 + $0xb8] sm:$0xff] %vm3271, %v5162
        %5182 = vst.msk [vmem:[#allocation10 + $0xe0] sm:$0xff] %vm3271, %v5164
        %5183 = vst.msk [vmem:[#allocation10 + $0x108] sm:$0xff] %vm3271, %v5166
        %5184 = vst.msk [vmem:[#allocation10 + $0x130] sm:$0xff] %vm3271, %v5168
        %v5185 = vld [vmem:[%s5120 + $0x2] sm:$0xff]
        %v5186 = vld [vmem:[%s5120 + $0x12] sm:$0xff]
        %v5187 = vld [vmem:[%s5120 + $0x22] sm:$0xff]
        %v5188 = vld [vmem:[%s5120 + $0x32] sm:$0xff]
        %v5189 = vld [vmem:[%s5120 + $0x42] sm:$0xff]
        %v5190 = vld [vmem:[%s5120 + $0x52] sm:$0xff]
        %v5191 = vld [vmem:[%s5120 + $0x62] sm:$0xff]
        %v5192 = vld [vmem:[%s5120 + $0x72] sm:$0xff]
        %5193 = vst.msk [vmem:[#allocation10 + $0x20] sm:$0xff] %vm604, %v5185
        %5194 = vst.msk [vmem:[#allocation10 + $0x48] sm:$0xff] %vm604, %v5186
        %5195 = vst.msk [vmem:[#allocation10 + $0x70] sm:$0xff] %vm604, %v5187
        %5196 = vst.msk [vmem:[#allocation10 + $0x98] sm:$0xff] %vm604, %v5188
        %5197 = vst.msk [vmem:[#allocation10 + $0xc0] sm:$0xff] %vm604, %v5189
        %5198 = vst.msk [vmem:[#allocation10 + $0xe8] sm:$0xff] %vm604, %v5190
        %5199 = vst.msk [vmem:[#allocation10 + $0x110] sm:$0xff] %vm604, %v5191
        %5200 = vst.msk [vmem:[#allocation10 + $0x138] sm:$0xff] %vm604, %v5192
        %v5201 = vld [vmem:[#allocation10] sm:$0xff]
        %v5202 = vld [vmem:[#allocation10 + $0x8] sm:$0xff]
        %v5203 = vld [vmem:[#allocation10 + $0x10] sm:$0xff]
        %v5204 = vld [vmem:[#allocation10 + $0x18] sm:$0xff]
        %v5205 = vld [vmem:[#allocation10 + $0x20] sm:$0xff]
        %v5206 = vld [vmem:[#allocation10 + $0x28] sm:$0xff]
        %v5207 = vld [vmem:[#allocation10 + $0x30] sm:$0xff]
        %v5208 = vld [vmem:[#allocation10 + $0x38] sm:$0xff]
        %v5209 = vld [vmem:[#allocation10 + $0x40] sm:$0xff]
        %v5210 = vld [vmem:[#allocation10 + $0x48] sm:$0xff]
        %v5211 = vld [vmem:[#allocation10 + $0x50] sm:$0xff]
        %v5212 = vld [vmem:[#allocation10 + $0x58] sm:$0xff]
        %v5213 = vld [vmem:[#allocation10 + $0x60] sm:$0xff]
        %v5214 = vld [vmem:[#allocation10 + $0x68] sm:$0xff]
        %v5215 = vld [vmem:[#allocation10 + $0x70] sm:$0xff]
        %v5216 = vld [vmem:[#allocation10 + $0x78] sm:$0xff]
        %v5217 = vld [vmem:[#allocation10 + $0x80] sm:$0xff]
        %v5218 = vld [vmem:[#allocation10 + $0x88] sm:$0xff]
        %v5219 = vld [vmem:[#allocation10 + $0x90] sm:$0xff]
        %v5220 = vld [vmem:[#allocation10 + $0x98] sm:$0xff]
        %v5221 = vld [vmem:[#allocation10 + $0xa0] sm:$0xff]
        %v5222 = vld [vmem:[#allocation10 + $0xa8] sm:$0xff]
        %v5223 = vld [vmem:[#allocation10 + $0xb0] sm:$0xff]
        %v5224 = vld [vmem:[#allocation10 + $0xb8] sm:$0xff]
        %v5225 = vld [vmem:[#allocation10 + $0xc0] sm:$0xff]
        %v5226 = vld [vmem:[#allocation10 + $0xc8] sm:$0xff]
        %v5227 = vld [vmem:[#allocation10 + $0xd0] sm:$0xff]
        %v5228 = vld [vmem:[#allocation10 + $0xd8] sm:$0xff]
        %v5229 = vld [vmem:[#allocation10 + $0xe0] sm:$0xff]
        %v5230 = vld [vmem:[#allocation10 + $0xe8] sm:$0xff]
        %v5231 = vld [vmem:[#allocation10 + $0xf0] sm:$0xff]
        %v5232 = vld [vmem:[#allocation10 + $0xf8] sm:$0xff]
        %v5233 = vld [vmem:[#allocation10 + $0x100] sm:$0xff]
        %v5234 = vld [vmem:[#allocation10 + $0x108] sm:$0xff]
        %v5235 = vld [vmem:[#allocation10 + $0x110] sm:$0xff]
        %v5236 = vld [vmem:[#allocation10 + $0x118] sm:$0xff]
        %v5237 = vld [vmem:[#allocation10 + $0x120] sm:$0xff]
        %v5238 = vld [vmem:[#allocation10 + $0x128] sm:$0xff]
        %v5239 = vld [vmem:[#allocation10 + $0x130] sm:$0xff]
        %v5240 = vld [vmem:[#allocation10 + $0x138] sm:$0xff]
        %v5241 = vpack.c.bf16 %v5206, %v5201
        %v5242 = vpack.c.bf16 %v5207, %v5202
        %v5243 = vpack.c.bf16 %v5208, %v5203
        %v5244 = vpack.c.bf16 %v5209, %v5204
        %v5245 = vpack.c.bf16 %v5210, %v5205
        %v5246 = vpack.c.bf16 %v5216, %v5211
        %v5247 = vpack.c.bf16 %v5217, %v5212
        %v5248 = vpack.c.bf16 %v5218, %v5213
        %v5249 = vpack.c.bf16 %v5219, %v5214
        %v5250 = vpack.c.bf16 %v5220, %v5215
        %v5251 = vpack.c.bf16 %v5226, %v5221
        %v5252 = vpack.c.bf16 %v5227, %v5222
        %v5253 = vpack.c.bf16 %v5228, %v5223
        %v5254 = vpack.c.bf16 %v5229, %v5224
        %v5255 = vpack.c.bf16 %v5230, %v5225
        %v5256 = vpack.c.bf16 %v5236, %v5231
        %v5257 = vpack.c.bf16 %v5237, %v5232
        %v5258 = vpack.c.bf16 %v5238, %v5233
        %v5259 = vpack.c.bf16 %v5239, %v5234
        %v5260 = vpack.c.bf16 %v5240, %v5235
        %v5261 = vld [vmem:[%s11] sm:$0xf]
        %v5262 = vld [vmem:[%s11 + $0x4] sm:$0xf]
        %v5263 = vld [vmem:[%s11 + $0x8] sm:$0xf]
        %v5264 = vld [vmem:[%s11 + $0xc] sm:$0xf]
        %v5265 = vld [vmem:[%s11 + $0x10] sm:$0xf]
        %v5266 = vld [vmem:[%s11 + $0x14] sm:$0xf]
        %v5267 = vld [vmem:[%s11 + $0x18] sm:$0xf]
        %v5268 = vld [vmem:[%s11 + $0x1c] sm:$0xf]
        %v5269 = vld [vmem:[%s11 + $0x20] sm:$0xf]
        %v5270 = vld [vmem:[%s11 + $0x24] sm:$0xf]
        %v5271 = vld [vmem:[%s11 + $0x28] sm:$0xf]
        %v5272 = vld [vmem:[%s11 + $0x2c] sm:$0xf]
        %v5273 = vld [vmem:[%s11 + $0x30] sm:$0xf]
        %v5274 = vld [vmem:[%s11 + $0x34] sm:$0xf]
        %v5275 = vld [vmem:[%s11 + $0x38] sm:$0xf]
        %v5276 = vld [vmem:[%s11 + $0x3c] sm:$0xf]
        %v5277 = vld [vmem:[%s11 + $0x40] sm:$0xf]
        %v5278 = vld [vmem:[%s11 + $0x44] sm:$0xf]
        %v5279 = vld [vmem:[%s11 + $0x48] sm:$0xf]
        %v5280 = vld [vmem:[%s11 + $0x4c] sm:$0xf]
        %v5281 = vld [vmem:[%s11 + $0x50] sm:$0xf]
        %v5282 = vld [vmem:[%s11 + $0x54] sm:$0xf]
        %v5283 = vld [vmem:[%s11 + $0x58] sm:$0xf]
        %v5284 = vld [vmem:[%s11 + $0x5c] sm:$0xf]
        %v5285 = vld [vmem:[%s11 + $0x60] sm:$0xf]
        %v5286 = vld [vmem:[%s11 + $0x64] sm:$0xf]
        %v5287 = vld [vmem:[%s11 + $0x68] sm:$0xf]
        %v5288 = vld [vmem:[%s11 + $0x6c] sm:$0xf]
        %v5289 = vld [vmem:[%s11 + $0x70] sm:$0xf]
        %v5290 = vld [vmem:[%s11 + $0x74] sm:$0xf]
        %v5291 = vld [vmem:[%s11 + $0x78] sm:$0xf]
        %v5292 = vld [vmem:[%s11 + $0x7c] sm:$0xf]
        %v5293 = vld [vmem:[%s11 + $0x80] sm:$0xf]
        %v5294 = vld [vmem:[%s11 + $0x84] sm:$0xf]
        %v5295 = vld [vmem:[%s11 + $0x88] sm:$0xf]
        %v5296 = vld [vmem:[%s11 + $0x8c] sm:$0xf]
        %v5297 = vld [vmem:[%s11 + $0x90] sm:$0xf]
        %v5298 = vld [vmem:[%s11 + $0x94] sm:$0xf]
        %v5299 = vld [vmem:[%s11 + $0x98] sm:$0xf]
        %v5300 = vld [vmem:[%s11 + $0x9c] sm:$0xf]
        %v5301 = vld [vmem:[%s11 + $0xa0] sm:$0xf]
        %v5302 = vld [vmem:[%s11 + $0xa4] sm:$0xf]
        %v5303 = vld [vmem:[%s11 + $0xa8] sm:$0xf]
        %v5304 = vld [vmem:[%s11 + $0xac] sm:$0xf]
        %v5305 = vld [vmem:[%s11 + $0xb0] sm:$0xf]
        %v5306 = vld [vmem:[%s11 + $0xb4] sm:$0xf]
        %v5307 = vld [vmem:[%s11 + $0xb8] sm:$0xf]
        %v5308 = vld [vmem:[%s11 + $0xbc] sm:$0xf]
        %v5309 = vld [vmem:[%s11 + $0xc0] sm:$0xf]
        %v5310 = vld [vmem:[%s11 + $0xc4] sm:$0xf]
        %v5311 = vld [vmem:[%s11 + $0xc8] sm:$0xf]
        %v5312 = vld [vmem:[%s11 + $0xcc] sm:$0xf]
        %v5313 = vld [vmem:[%s11 + $0xd0] sm:$0xf]
        %v5314 = vld [vmem:[%s11 + $0xd4] sm:$0xf]
        %v5315 = vld [vmem:[%s11 + $0xd8] sm:$0xf]
        %v5316 = vld [vmem:[%s11 + $0xdc] sm:$0xf]
        %v5317 = vld [vmem:[%s11 + $0xe0] sm:$0xf]
        %v5318 = vld [vmem:[%s11 + $0xe4] sm:$0xf]
        %v5319 = vld [vmem:[%s11 + $0xe8] sm:$0xf]
        %v5320 = vld [vmem:[%s11 + $0xec] sm:$0xf]
        %v5321 = vld [vmem:[%s11 + $0xf0] sm:$0xf]
        %v5322 = vld [vmem:[%s11 + $0xf4] sm:$0xf]
        %v5323 = vld [vmem:[%s11 + $0xf8] sm:$0xf]
        %v5324 = vld [vmem:[%s11 + $0xfc] sm:$0xf]
        %v5325 = vld [vmem:[%s11 + $0x100] sm:$0xf]
        %v5326 = vld [vmem:[%s11 + $0x104] sm:$0xf]
        %v5327 = vld [vmem:[%s11 + $0x108] sm:$0xf]
        %v5328 = vld [vmem:[%s11 + $0x10c] sm:$0xf]
        %v5329 = vld [vmem:[%s11 + $0x110] sm:$0xf]
        %v5330 = vld [vmem:[%s11 + $0x114] sm:$0xf]
        %v5331 = vld [vmem:[%s11 + $0x118] sm:$0xf]
        %v5332 = vld [vmem:[%s11 + $0x11c] sm:$0xf]
        %v5405 = vunpack.c.l.b16 %v5261
        %v5406 = vunpack.c.l.b16 %v5262
        %v5407 = vunpack.c.l.b16 %v5263
        %v5408 = vunpack.c.l.b16 %v5264
        %v5409 = vunpack.c.l.b16 %v5265
        %v5410 = vunpack.c.l.b16 %v5266
        %v5411 = vunpack.c.l.b16 %v5267
        %v5412 = vunpack.c.l.b16 %v5268
        %v5413 = vunpack.c.l.b16 %v5269
        %v5414 = vunpack.c.l.b16 %v5270
        %v5415 = vunpack.c.l.b16 %v5271
        %v5416 = vunpack.c.l.b16 %v5272
        %v5417 = vunpack.c.l.b16 %v5273
        %v5418 = vunpack.c.l.b16 %v5274
        %v5419 = vunpack.c.l.b16 %v5275
        %v5420 = vunpack.c.l.b16 %v5276
        %v5421 = vunpack.c.l.b16 %v5277
        %v5422 = vunpack.c.l.b16 %v5278
        %v5423 = vunpack.c.l.b16 %v5279
        %v5424 = vunpack.c.l.b16 %v5280
        %v5425 = vunpack.c.l.b16 %v5281
        %v5426 = vunpack.c.l.b16 %v5282
        %v5427 = vunpack.c.l.b16 %v5283
        %v5428 = vunpack.c.l.b16 %v5284
        %v5429 = vunpack.c.l.b16 %v5285
        %v5430 = vunpack.c.l.b16 %v5286
        %v5431 = vunpack.c.l.b16 %v5287
        %v5432 = vunpack.c.l.b16 %v5288
        %v5433 = vunpack.c.l.b16 %v5289
        %v5434 = vunpack.c.l.b16 %v5290
        %v5435 = vunpack.c.l.b16 %v5291
        %v5436 = vunpack.c.l.b16 %v5292
        %v5437 = vunpack.c.l.b16 %v5293
        %v5438 = vunpack.c.l.b16 %v5294
        %v5439 = vunpack.c.l.b16 %v5295
        %v5440 = vunpack.c.l.b16 %v5296
        %v5441 = vunpack.c.l.b16 %v5297
        %v5442 = vunpack.c.l.b16 %v5298
        %v5443 = vunpack.c.l.b16 %v5299
        %v5444 = vunpack.c.l.b16 %v5300
        %v5445 = vunpack.c.l.b16 %v5301
        %v5446 = vunpack.c.l.b16 %v5302
        %v5447 = vunpack.c.l.b16 %v5303
        %v5448 = vunpack.c.l.b16 %v5304
        %v5449 = vunpack.c.l.b16 %v5305
        %v5450 = vunpack.c.l.b16 %v5306
        %v5451 = vunpack.c.l.b16 %v5307
        %v5452 = vunpack.c.l.b16 %v5308
        %v5453 = vunpack.c.l.b16 %v5309
        %v5454 = vunpack.c.l.b16 %v5310
        %v5455 = vunpack.c.l.b16 %v5311
        %v5456 = vunpack.c.l.b16 %v5312
        %v5457 = vunpack.c.l.b16 %v5313
        %v5458 = vunpack.c.l.b16 %v5314
        %v5459 = vunpack.c.l.b16 %v5315
        %v5460 = vunpack.c.l.b16 %v5316
        %v5461 = vunpack.c.l.b16 %v5317
        %v5462 = vunpack.c.l.b16 %v5318
        %v5463 = vunpack.c.l.b16 %v5319
        %v5464 = vunpack.c.l.b16 %v5320
        %v5465 = vunpack.c.l.b16 %v5321
        %v5466 = vunpack.c.l.b16 %v5322
        %v5467 = vunpack.c.l.b16 %v5323
        %v5468 = vunpack.c.l.b16 %v5324
        %v5469 = vunpack.c.l.b16 %v5325
        %v5470 = vunpack.c.l.b16 %v5326
        %v5471 = vunpack.c.l.b16 %v5327
        %v5472 = vunpack.c.l.b16 %v5328
        %v5473 = vunpack.c.l.b16 %v5329
        %v5474 = vunpack.c.l.b16 %v5330
        %v5475 = vunpack.c.l.b16 %v5331
        %v5476 = vunpack.c.l.b16 %v5332
        %v5477 = vpack.c.b16 %v5406, %v5405
        %v5478 = vpack.c.b16 %v5408, %v5407
        %v5479 = vpack.c.b16 %v5410, %v5409
        %v5480 = vpack.c.b16 %v5412, %v5411
        %v5481 = vpack.c.b16 %v5414, %v5413
        %v5482 = vpack.c.b16 %v5416, %v5415
        %v5483 = vpack.c.b16 %v5418, %v5417
        %v5484 = vpack.c.b16 %v5420, %v5419
        %v5485 = vpack.c.b16 %v5422, %v5421
        %v5486 = vpack.c.b16 %v5424, %v5423
        %v5487 = vpack.c.b16 %v5426, %v5425
        %v5488 = vpack.c.b16 %v5428, %v5427
        %v5489 = vpack.c.b16 %v5430, %v5429
        %v5490 = vpack.c.b16 %v5432, %v5431
        %v5491 = vpack.c.b16 %v5434, %v5433
        %v5492 = vpack.c.b16 %v5436, %v5435
        %v5493 = vpack.c.b16 %v5438, %v5437
        %v5494 = vpack.c.b16 %v5440, %v5439
        %v5495 = vpack.c.b16 %v5442, %v5441
        %v5496 = vpack.c.b16 %v5444, %v5443
        %v5497 = vpack.c.b16 %v5446, %v5445
        %v5498 = vpack.c.b16 %v5448, %v5447
        %v5499 = vpack.c.b16 %v5450, %v5449
        %v5500 = vpack.c.b16 %v5452, %v5451
        %v5501 = vpack.c.b16 %v5454, %v5453
        %v5502 = vpack.c.b16 %v5456, %v5455
        %v5503 = vpack.c.b16 %v5458, %v5457
        %v5504 = vpack.c.b16 %v5460, %v5459
        %v5505 = vpack.c.b16 %v5462, %v5461
        %v5506 = vpack.c.b16 %v5464, %v5463
        %v5507 = vpack.c.b16 %v5466, %v5465
        %v5508 = vpack.c.b16 %v5468, %v5467
        %v5509 = vpack.c.b16 %v5470, %v5469
        %v5510 = vpack.c.b16 %v5472, %v5471
        %v5511 = vpack.c.b16 %v5474, %v5473
        %v5512 = vpack.c.b16 %v5476, %v5475
        %v5550 = vsel %vm604, %v5245, 0
        %v5553 = vsel %vm604, %v5250, 0
        %v5556 = vsel %vm604, %v5255, 0
        %v5559 = vsel %vm604, %v5260, 0
        %5561 = vmatprep.subr.bf16.mxu0 0
        %5562 = vmatpush1.bf16.msra.mxu0 %v5484
        %5563 = vmatprep.subr.bf16.mxu0 0
        %5564 = vmatpush1.bf16.msra.mxu0 %v5483
        %5565 = vmatprep.subr.bf16.mxu0 0
        %5566 = vmatpush1.bf16.msra.mxu0 %v5482
        %5567 = vmatprep.subr.bf16.mxu0 0
        %5568 = vmatpush1.bf16.msra.mxu0 %v5481
        %5569 = vmatprep.subr.bf16.mxu0 0
        %5570 = vmatpush1.bf16.msra.mxu0 %v5480
        %5571 = vmatprep.subr.bf16.mxu0 0
        %5572 = vmatpush1.bf16.msra.mxu0 %v5479
        %5573 = vmatprep.subr.bf16.mxu0 0
        %5574 = vmatpush1.bf16.msra.mxu0 %v5478
        %5575 = vmatprep.subr.bf16.mxu0 0
        %5576 = vmatpush1.bf16.msra.mxu0 %v5477
        %5577 = vmatprep.subr.bf16.mxu0 0
        %5578 = vmatpush2.bf16.msra.mxu0 %v5492
        %5579 = vmatprep.subr.bf16.mxu0 0
        %5580 = vmatpush2.bf16.msra.mxu0 %v5491
        %5581 = vmatprep.subr.bf16.mxu0 0
        %5582 = vmatpush2.bf16.msra.mxu0 %v5490
        %5583 = vmatprep.subr.bf16.mxu0 0
        %5584 = vmatpush2.bf16.msra.mxu0 %v5489
        %5585 = vmatprep.subr.bf16.mxu0 0
        %5586 = vmatpush2.bf16.msra.mxu0 %v5488
        %5587 = vmatprep.subr.bf16.mxu0 0
        %5588 = vmatpush2.bf16.msra.mxu0 %v5487
        %5589 = vmatprep.subr.bf16.mxu0 0
        %5590 = vmatpush2.bf16.msra.mxu0 %v5486
        %5591 = vmatprep.subr.bf16.mxu0 0
        %5592 = vmatpush2.bf16.msra.mxu0 %v5485
        %5593 = vmatprep.mubr.bf16.mxu0 %v5242
        %5594 = vmatmul.mubr.bf16.gmra.mxu0 %v5241
        %v5595 = vpop.f32.mrf.mxu0
        %v5596 = vadd.f32 0.0, %v5595
        %v5597 = vpop.f32.mrf.mxu0
        %v5598 = vpop.f32.mrf.mxu0
        %v5599 = vadd.f32 0.0, %v5598
        %v5600 = vpop.f32.mrf.mxu0
        %5601 = vmatprep.mubr.bf16.mxu0 %v5247
        %5602 = vmatmul.mubr.bf16.gmra.mxu0 %v5246
        %v5603 = vpop.f32.mrf.mxu0
        %v5604 = vadd.f32 0.0, %v5603
        %v5605 = vpop.f32.mrf.mxu0
        %v5606 = vpop.f32.mrf.mxu0
        %v5607 = vadd.f32 0.0, %v5606
        %v5608 = vpop.f32.mrf.mxu0
        %5609 = vmatprep.mubr.bf16.mxu0 %v5252
        %5610 = vmatmul.mubr.bf16.gmra.mxu0 %v5251
        %v5611 = vpop.f32.mrf.mxu0
        %v5612 = vadd.f32 0.0, %v5611
        %v5613 = vpop.f32.mrf.mxu0
        %v5614 = vpop.f32.mrf.mxu0
        %v5615 = vadd.f32 0.0, %v5614
        %v5616 = vpop.f32.mrf.mxu0
        %5617 = vmatprep.mubr.bf16.mxu0 %v5257
        %5618 = vmatmul.mubr.bf16.gmra.mxu0 %v5256
        %v5619 = vpop.f32.mrf.mxu0
        %v5620 = vadd.f32 0.0, %v5619
        %v5621 = vpop.f32.mrf.mxu0
        %v5622 = vpop.f32.mrf.mxu0
        %v5623 = vadd.f32 0.0, %v5622
        %v5624 = vpop.f32.mrf.mxu0
        %5625 = vdwg.mxu0
        %5626 = vmatprep.subr.bf16.mxu0 0
        %5627 = vmatpush1.bf16.msra.mxu0 %v5500
        %5628 = vmatprep.subr.bf16.mxu0 0
        %5629 = vmatpush1.bf16.msra.mxu0 %v5499
        %5630 = vmatprep.subr.bf16.mxu0 0
        %5631 = vmatpush1.bf16.msra.mxu0 %v5498
        %5632 = vmatprep.subr.bf16.mxu0 0
        %5633 = vmatpush1.bf16.msra.mxu0 %v5497
        %5634 = vmatprep.subr.bf16.mxu0 0
        %5635 = vmatpush1.bf16.msra.mxu0 %v5496
        %5636 = vmatprep.subr.bf16.mxu0 0
        %5637 = vmatpush1.bf16.msra.mxu0 %v5495
        %5638 = vmatprep.subr.bf16.mxu0 0
        %5639 = vmatpush1.bf16.msra.mxu0 %v5494
        %5640 = vmatprep.subr.bf16.mxu0 0
        %5641 = vmatpush1.bf16.msra.mxu0 %v5493
        %5642 = vmatprep.subr.bf16.mxu0 0
        %5643 = vmatpush2.bf16.msra.mxu0 %v5508
        %5644 = vmatprep.subr.bf16.mxu0 0
        %5645 = vmatpush2.bf16.msra.mxu0 %v5507
        %5646 = vmatprep.subr.bf16.mxu0 0
        %5647 = vmatpush2.bf16.msra.mxu0 %v5506
        %5648 = vmatprep.subr.bf16.mxu0 0
        %5649 = vmatpush2.bf16.msra.mxu0 %v5505
        %5650 = vmatprep.subr.bf16.mxu0 0
        %5651 = vmatpush2.bf16.msra.mxu0 %v5504
        %5652 = vmatprep.subr.bf16.mxu0 0
        %5653 = vmatpush2.bf16.msra.mxu0 %v5503
        %5654 = vmatprep.subr.bf16.mxu0 0
        %5655 = vmatpush2.bf16.msra.mxu0 %v5502
        %5656 = vmatprep.subr.bf16.mxu0 0
        %5657 = vmatpush2.bf16.msra.mxu0 %v5501
        %5658 = vmatprep.mubr.bf16.mxu0 %v5244
        %5659 = vmatmul.mubr.bf16.gmra.mxu0 %v5243
        %v5660 = vpop.f32.mrf.mxu0
        %v5661 = vadd.f32 %v5596, %v5660
        %v5662 = vpop.f32.mrf.mxu0
        %v5663 = vpop.f32.mrf.mxu0
        %v5664 = vadd.f32 %v5599, %v5663
        %v5665 = vpop.f32.mrf.mxu0
        %5666 = vmatprep.mubr.bf16.mxu0 %v5249
        %5667 = vmatmul.mubr.bf16.gmra.mxu0 %v5248
        %v5668 = vpop.f32.mrf.mxu0
        %v5669 = vadd.f32 %v5604, %v5668
        %v5670 = vpop.f32.mrf.mxu0
        %v5671 = vpop.f32.mrf.mxu0
        %v5672 = vadd.f32 %v5607, %v5671
        %v5673 = vpop.f32.mrf.mxu0
        %5674 = vmatprep.mubr.bf16.mxu0 %v5254
        %5675 = vmatmul.mubr.bf16.gmra.mxu0 %v5253
        %v5676 = vpop.f32.mrf.mxu0
        %v5677 = vadd.f32 %v5612, %v5676
        %v5678 = vpop.f32.mrf.mxu0
        %v5679 = vpop.f32.mrf.mxu0
        %v5680 = vadd.f32 %v5615, %v5679
        %v5681 = vpop.f32.mrf.mxu0
        %5682 = vmatprep.mubr.bf16.mxu0 %v5259
        %5683 = vmatmul.mubr.bf16.gmra.mxu0 %v5258
        %v5684 = vpop.f32.mrf.mxu0
        %v5685 = vadd.f32 %v5620, %v5684
        %v5686 = vpop.f32.mrf.mxu0
        %v5687 = vpop.f32.mrf.mxu0
        %v5688 = vadd.f32 %v5623, %v5687
        %v5689 = vpop.f32.mrf.mxu0
        %5690 = vdwg.mxu0
        %5691 = vmatprep.subr.bf16.mxu0 0
        %5692 = vmatpush1.bf16.msra.mxu0 0
        %5693 = vmatprep.subr.bf16.mxu0 0
        %5694 = vmatpush1.bf16.msra.mxu0 0
        %5695 = vmatprep.subr.bf16.mxu0 0
        %5696 = vmatpush1.bf16.msra.mxu0 0
        %5697 = vmatprep.subr.bf16.mxu0 0
        %5698 = vmatpush1.bf16.msra.mxu0 0
        %5699 = vmatprep.subr.bf16.mxu0 0
        %5700 = vmatpush1.bf16.msra.mxu0 %v5512
        %5701 = vmatprep.subr.bf16.mxu0 0
        %5702 = vmatpush1.bf16.msra.mxu0 %v5511
        %5703 = vmatprep.subr.bf16.mxu0 0
        %5704 = vmatpush1.bf16.msra.mxu0 %v5510
        %5705 = vmatprep.subr.bf16.mxu0 0
        %5706 = vmatpush1.bf16.msra.mxu0 %v5509
        %5707 = vmatprep.subr.bf16.mxu0 0
        %5708 = vmatpush2.bf16.msra.mxu0 0
        %5709 = vmatprep.subr.bf16.mxu0 0
        %5710 = vmatpush2.bf16.msra.mxu0 0
        %5711 = vmatprep.subr.bf16.mxu0 0
        %5712 = vmatpush2.bf16.msra.mxu0 0
        %5713 = vmatprep.subr.bf16.mxu0 0
        %5714 = vmatpush2.bf16.msra.mxu0 0
        %5715 = vmatprep.subr.bf16.mxu0 0
        %5716 = vmatpush2.bf16.msra.mxu0 0
        %5717 = vmatprep.subr.bf16.mxu0 0
        %5718 = vmatpush2.bf16.msra.mxu0 0
        %5719 = vmatprep.subr.bf16.mxu0 0
        %5720 = vmatpush2.bf16.msra.mxu0 0
        %5721 = vmatprep.subr.bf16.mxu0 0
        %5722 = vmatpush2.bf16.msra.mxu0 0
        %5723 = vmatprep.mubr.bf16.mxu0 0
        %5724 = vmatmul.mubr.bf16.gmra.mxu0 %v5550
        %v5725 = vpop.f32.mrf.mxu0
        %v5726 = vadd.f32 %v5661, %v5725
        %v5727 = vpop.f32.mrf.mxu0
        %v5728 = vpop.f32.mrf.mxu0
        %v5729 = vadd.f32 %v5664, %v5728
        %v5730 = vpop.f32.mrf.mxu0
        %5731 = vmatprep.mubr.bf16.mxu0 0
        %5732 = vmatmul.mubr.bf16.gmra.mxu0 %v5553
        %v5733 = vpop.f32.mrf.mxu0
        %v5734 = vadd.f32 %v5669, %v5733
        %v5735 = vpop.f32.mrf.mxu0
        %v5736 = vpop.f32.mrf.mxu0
        %v5737 = vadd.f32 %v5672, %v5736
        %v5738 = vpop.f32.mrf.mxu0
        %5739 = vmatprep.mubr.bf16.mxu0 0
        %5740 = vmatmul.mubr.bf16.gmra.mxu0 %v5556
        %v5741 = vpop.f32.mrf.mxu0
        %v5742 = vadd.f32 %v5677, %v5741
        %v5743 = vpop.f32.mrf.mxu0
        %v5744 = vpop.f32.mrf.mxu0
        %v5745 = vadd.f32 %v5680, %v5744
        %v5746 = vpop.f32.mrf.mxu0
        %5747 = vmatprep.mubr.bf16.mxu0 0
        %5748 = vmatmul.mubr.bf16.gmra.mxu0 %v5559
        %v5749 = vpop.f32.mrf.mxu0
        %v5750 = vadd.f32 %v5685, %v5749
        %v5751 = vpop.f32.mrf.mxu0
        %v5752 = vpop.f32.mrf.mxu0
        %v5753 = vadd.f32 %v5688, %v5752
        %v5754 = vpop.f32.mrf.mxu0
        %5755 = vdwg.mxu0
        %v5756 = vld [vmem:[%s10] sm:$0xf]
        %v5757 = vld [vmem:[%s10 + $0x4] sm:$0xf]
        %v5758 = vpack.c.bf16 %v5729, %v5726
        %v5759 = vpack.c.bf16 %v5737, %v5734
        %v5760 = vpack.c.bf16 %v5745, %v5742
        %v5761 = vpack.c.bf16 %v5753, %v5750
        %v5762 = vld [vmem:[%s12] sm:$0x1]
        %v5764 = vlaneseq
        %v5765 = vshrl.u32 %v5764, 7
        %v5766 = vsub.s32 0, %v5765
        %v5767 = vrot.slane %v5762, %v5766
        %v5771 = vunpack.c.l.b16 %v5756
        %v5772 = vunpack.c.l.b16 %v5757
        %v5773 = vpack.c.b16 %v5772, %v5771
        %v5775 = vsel %vm604, %v5773, 0
        %5777 = vmatprep.subr.bf16.mxu0 0
        %5778 = vmatpush1.bf16.msra.mxu0 0
        %5779 = vmatprep.subr.bf16.mxu0 0
        %5780 = vmatpush1.bf16.msra.mxu0 0
        %5781 = vmatprep.subr.bf16.mxu0 0
        %5782 = vmatpush1.bf16.msra.mxu0 0
        %5783 = vmatprep.subr.bf16.mxu0 0
        %5784 = vmatpush1.bf16.msra.mxu0 0
        %5785 = vmatprep.subr.bf16.mxu0 0
        %5786 = vmatpush1.bf16.msra.mxu0 %v5761
        %5787 = vmatprep.subr.bf16.mxu0 0
        %5788 = vmatpush1.bf16.msra.mxu0 %v5760
        %5789 = vmatprep.subr.bf16.mxu0 0
        %5790 = vmatpush1.bf16.msra.mxu0 %v5759
        %5791 = vmatprep.subr.bf16.mxu0 0
        %5792 = vmatpush1.bf16.msra.mxu0 %v5758
        %5793 = vmatprep.subr.bf16.mxu0 0
        %5794 = vmatpush2.bf16.msra.mxu0 0
        %5795 = vmatprep.subr.bf16.mxu0 0
        %5796 = vmatpush2.bf16.msra.mxu0 0
        %5797 = vmatprep.subr.bf16.mxu0 0
        %5798 = vmatpush2.bf16.msra.mxu0 0
        %5799 = vmatprep.subr.bf16.mxu0 0
        %5800 = vmatpush2.bf16.msra.mxu0 0
        %5801 = vmatprep.subr.bf16.mxu0 0
        %5802 = vmatpush2.bf16.msra.mxu0 0
        %5803 = vmatprep.subr.bf16.mxu0 0
        %5804 = vmatpush2.bf16.msra.mxu0 0
        %5805 = vmatprep.subr.bf16.mxu0 0
        %5806 = vmatpush2.bf16.msra.mxu0 0
        %5807 = vmatprep.subr.bf16.mxu0 0
        %5808 = vmatpush2.bf16.msra.mxu0 0
        %5809 = vmatprep.mubr.bf16.mxu0 0
        %5810 = vmatmul.mubr.bf16.gmra.mxu0 %v5775
        %v5811 = vpop.f32.mrf.mxu0
        %v5812 = vadd.f32 %v5767, %v5811
        %v5813 = vpop.f32.mrf.mxu0
        %v5814 = vpop.f32.mrf.mxu0
        %v5815 = vadd.f32 %v5767, %v5814
        %v5816 = vpop.f32.mrf.mxu0
        %5817 = vdwg.mxu0
        %v5820 = vcombine.high %v5812, %v5812
        %v5821 = vcombine.high %v5815, %v5815
        %s5824 = scalar_lea.vmem [#allocation8], 8
        %5825 = vst [vmem:[%s5824 + $0x1] sm:$0xf] %v5812
        %5826 = vst [vmem:[%s5824 + $0x9] sm:$0xf] %v5820
        %5827 = vst [vmem:[%s5824 + $0x11] sm:$0xf] %v5815
        %5828 = vst [vmem:[%s5824 + $0x19] sm:$0xf] %v5821
        %v5829 = vld [vmem:[#allocation8] sm:$0xf]
        %v5830 = vld [vmem:[#allocation8 + $0x8] sm:$0xf]
        %v5831 = vld [vmem:[#allocation8 + $0x10] sm:$0xf]
        %v5832 = vld [vmem:[#allocation8 + $0x18] sm:$0xf]
        %v5837 = vcombine.low %v5829, %v5830
        %v5838 = vcombine.low %v5831, %v5832
        %5841 = vst [vmem:[#allocation11] sm:$0xff] %v5837
        %5842 = vst [vmem:[#allocation11 + $0x48] sm:$0xff] %v5838
        %v5843 = vld [vmem:[#allocation8 + $0x1] sm:$0xf]
        %v5844 = vld [vmem:[#allocation8 + $0x9] sm:$0xf]
        %v5845 = vld [vmem:[#allocation8 + $0x11] sm:$0xf]
        %v5846 = vld [vmem:[#allocation8 + $0x19] sm:$0xf]
        %v5851 = vcombine.low %v5843, %v5844
        %v5852 = vcombine.low %v5845, %v5846
        %5855 = vst [vmem:[#allocation11 + $0x8] sm:$0xff] %v5851
        %5856 = vst [vmem:[#allocation11 + $0x50] sm:$0xff] %v5852
        %v5857 = vld [vmem:[#allocation8 + $0x2] sm:$0xf]
        %v5858 = vld [vmem:[#allocation8 + $0xa] sm:$0xf]
        %v5859 = vld [vmem:[#allocation8 + $0x12] sm:$0xf]
        %v5860 = vld [vmem:[#allocation8 + $0x1a] sm:$0xf]
        %v5865 = vcombine.low %v5857, %v5858
        %v5866 = vcombine.low %v5859, %v5860
        %5869 = vst [vmem:[#allocation11 + $0x10] sm:$0xff] %v5865
        %5870 = vst [vmem:[#allocation11 + $0x58] sm:$0xff] %v5866
        %v5871 = vld [vmem:[%s5824] sm:$0xf]
        %v5872 = vld [vmem:[%s5824 + $0x8] sm:$0xf]
        %v5873 = vld [vmem:[%s5824 + $0x10] sm:$0xf]
        %v5874 = vld [vmem:[%s5824 + $0x18] sm:$0xf]
        %v5879 = vcombine.low %v5871, %v5872
        %v5880 = vcombine.low %v5873, %v5874
        %5883 = vst [vmem:[#allocation11 + $0x18] sm:$0xff] %v5879
        %5884 = vst [vmem:[#allocation11 + $0x60] sm:$0xff] %v5880
        %v5885 = vld [vmem:[%s5824 + $0x1] sm:$0xf]
        %v5886 = vld [vmem:[%s5824 + $0x9] sm:$0xf]
        %v5887 = vld [vmem:[%s5824 + $0x11] sm:$0xf]
        %v5888 = vld [vmem:[%s5824 + $0x19] sm:$0xf]
        %v5893 = vcombine.low %v5885, %v5886
        %v5894 = vcombine.low %v5887, %v5888
        %5897 = vst [vmem:[#allocation11 + $0x20] sm:$0xff] %v5893
        %5898 = vst [vmem:[#allocation11 + $0x68] sm:$0xff] %v5894
        %v5899 = vld [vmem:[%s5824 + $0x2] sm:$0xf]
        %v5900 = vld [vmem:[%s5824 + $0xa] sm:$0xf]
        %v5901 = vld [vmem:[%s5824 + $0x12] sm:$0xf]
        %v5902 = vld [vmem:[%s5824 + $0x1a] sm:$0xf]
        %v5907 = vcombine.low %v5899, %v5900
        %v5908 = vcombine.low %v5901, %v5902
        %5911 = vst [vmem:[#allocation11 + $0x28] sm:$0xff] %v5907
        %5912 = vst [vmem:[#allocation11 + $0x70] sm:$0xff] %v5908
        %s5913 = scalar_lea.vmem [#allocation8], 16
        %v5914 = vld [vmem:[%s5913] sm:$0xf]
        %v5915 = vld [vmem:[%s5913 + $0x8] sm:$0xf]
        %v5916 = vld [vmem:[%s5913 + $0x10] sm:$0xf]
        %v5917 = vld [vmem:[%s5913 + $0x18] sm:$0xf]
        %v5922 = vcombine.low %v5914, %v5915
        %v5923 = vcombine.low %v5916, %v5917
        %5926 = vst [vmem:[#allocation11 + $0x30] sm:$0xff] %v5922
        %5927 = vst [vmem:[#allocation11 + $0x78] sm:$0xff] %v5923
        %v5928 = vld [vmem:[%s5913 + $0x1] sm:$0xf]
        %v5929 = vld [vmem:[%s5913 + $0x9] sm:$0xf]
        %v5930 = vld [vmem:[%s5913 + $0x11] sm:$0xf]
        %v5931 = vld [vmem:[%s5913 + $0x19] sm:$0xf]
        %v5936 = vcombine.low %v5928, %v5929
        %v5937 = vcombine.low %v5930, %v5931
        %5940 = vst [vmem:[#allocation11 + $0x38] sm:$0xff] %v5936
        %5941 = vst [vmem:[#allocation11 + $0x80] sm:$0xff] %v5937
        %v5942 = vld [vmem:[%s5913 + $0x2] sm:$0xf]
        %v5943 = vld [vmem:[%s5913 + $0xa] sm:$0xf]
        %v5944 = vld [vmem:[%s5913 + $0x12] sm:$0xf]
        %v5945 = vld [vmem:[%s5913 + $0x1a] sm:$0xf]
        %v5950 = vcombine.low %v5942, %v5943
        %v5951 = vcombine.low %v5944, %v5945
        %5954 = vst [vmem:[#allocation11 + $0x40] sm:$0xff] %v5950
        %5955 = vst [vmem:[#allocation11 + $0x88] sm:$0xff] %v5951
        %v5956 = vld [vmem:[#allocation11] sm:$0xff]
        %v5957 = vld [vmem:[#allocation11 + $0x8] sm:$0xff]
        %v5958 = vld [vmem:[#allocation11 + $0x10] sm:$0xff]
        %v5959 = vld [vmem:[#allocation11 + $0x18] sm:$0xff]
        %v5960 = vld [vmem:[#allocation11 + $0x20] sm:$0xff]
        %v5961 = vld [vmem:[#allocation11 + $0x28] sm:$0xff]
        %v5962 = vld [vmem:[#allocation11 + $0x30] sm:$0xff]
        %v5963 = vld [vmem:[#allocation11 + $0x38] sm:$0xff]
        %v5964 = vld [vmem:[#allocation11 + $0x40] sm:$0xff]
        %v5965 = vld [vmem:[#allocation11 + $0x48] sm:$0xff]
        %v5966 = vld [vmem:[#allocation11 + $0x50] sm:$0xff]
        %v5967 = vld [vmem:[#allocation11 + $0x58] sm:$0xff]
        %v5968 = vld [vmem:[#allocation11 + $0x60] sm:$0xff]
        %v5969 = vld [vmem:[#allocation11 + $0x68] sm:$0xff]
        %v5970 = vld [vmem:[#allocation11 + $0x70] sm:$0xff]
        %v5971 = vld [vmem:[#allocation11 + $0x78] sm:$0xff]
        %v5972 = vld [vmem:[#allocation11 + $0x80] sm:$0xff]
        %v5973 = vld [vmem:[#allocation11 + $0x88] sm:$0xff]
        %v5974 = vpack.c.bf16 %v5965, %v5956
        %v5975 = vpack.c.bf16 %v5966, %v5957
        %v5976 = vpack.c.bf16 %v5967, %v5958
        %v5977 = vpack.c.bf16 %v5968, %v5959
        %v5978 = vpack.c.bf16 %v5969, %v5960
        %v5979 = vpack.c.bf16 %v5970, %v5961
        %v5980 = vpack.c.bf16 %v5971, %v5962
        %v5981 = vpack.c.bf16 %v5972, %v5963
        %v5982 = vpack.c.bf16 %v5973, %v5964
        %v5983 = vld [vmem:[%s13] sm:$0xf]
        %v5984 = vld [vmem:[%s13 + $0x4] sm:$0xf]
        %v5985 = vld [vmem:[%s13 + $0x8] sm:$0xf]
        %v5986 = vld [vmem:[%s13 + $0xc] sm:$0xf]
        %v5987 = vld [vmem:[%s13 + $0x10] sm:$0xf]
        %v5988 = vld [vmem:[%s13 + $0x14] sm:$0xf]
        %v5989 = vld [vmem:[%s13 + $0x18] sm:$0xf]
        %v5990 = vld [vmem:[%s13 + $0x1c] sm:$0xf]
        %v5991 = vld [vmem:[%s13 + $0x20] sm:$0xf]
        %v5992 = vld [vmem:[%s13 + $0x24] sm:$0xf]
        %v5993 = vld [vmem:[%s13 + $0x28] sm:$0xf]
        %v5994 = vld [vmem:[%s13 + $0x2c] sm:$0xf]
        %v5995 = vld [vmem:[%s13 + $0x30] sm:$0xf]
        %v5996 = vld [vmem:[%s13 + $0x34] sm:$0xf]
        %v5997 = vld [vmem:[%s13 + $0x38] sm:$0xf]
        %v5998 = vld [vmem:[%s13 + $0x3c] sm:$0xf]
        %v5999 = vld [vmem:[%s13 + $0x40] sm:$0xf]
        %v6000 = vld [vmem:[%s13 + $0x44] sm:$0xf]
        %v6001 = vld [vmem:[%s13 + $0x48] sm:$0xf]
        %v6002 = vld [vmem:[%s13 + $0x4c] sm:$0xf]
        %v6003 = vld [vmem:[%s13 + $0x50] sm:$0xf]
        %v6004 = vld [vmem:[%s13 + $0x54] sm:$0xf]
        %v6005 = vld [vmem:[%s13 + $0x58] sm:$0xf]
        %v6006 = vld [vmem:[%s13 + $0x5c] sm:$0xf]
        %v6007 = vld [vmem:[%s13 + $0x60] sm:$0xf]
        %v6008 = vld [vmem:[%s13 + $0x64] sm:$0xf]
        %v6009 = vld [vmem:[%s13 + $0x68] sm:$0xf]
        %v6010 = vld [vmem:[%s13 + $0x6c] sm:$0xf]
        %v6011 = vld [vmem:[%s13 + $0x70] sm:$0xf]
        %v6012 = vld [vmem:[%s13 + $0x74] sm:$0xf]
        %v6013 = vld [vmem:[%s13 + $0x78] sm:$0xf]
        %v6014 = vld [vmem:[%s13 + $0x7c] sm:$0xf]
        %v6015 = vld [vmem:[%s13 + $0x80] sm:$0xf]
        %v6016 = vld [vmem:[%s13 + $0x84] sm:$0xf]
        %v6017 = vld [vmem:[%s13 + $0x88] sm:$0xf]
        %v6018 = vld [vmem:[%s13 + $0x8c] sm:$0xf]
        %v6019 = vld [vmem:[%s13 + $0x90] sm:$0xf]
        %v6020 = vld [vmem:[%s13 + $0x94] sm:$0xf]
        %v6021 = vld [vmem:[%s13 + $0x98] sm:$0xf]
        %v6022 = vld [vmem:[%s13 + $0x9c] sm:$0xf]
        %v6023 = vld [vmem:[%s13 + $0xa0] sm:$0xf]
        %v6024 = vld [vmem:[%s13 + $0xa4] sm:$0xf]
        %v6025 = vld [vmem:[%s13 + $0xa8] sm:$0xf]
        %v6026 = vld [vmem:[%s13 + $0xac] sm:$0xf]
        %v6027 = vld [vmem:[%s13 + $0xb0] sm:$0xf]
        %v6028 = vld [vmem:[%s13 + $0xb4] sm:$0xf]
        %v6029 = vld [vmem:[%s13 + $0xb8] sm:$0xf]
        %v6030 = vld [vmem:[%s13 + $0xbc] sm:$0xf]
        %v6031 = vld [vmem:[%s13 + $0xc0] sm:$0xf]
        %v6032 = vld [vmem:[%s13 + $0xc4] sm:$0xf]
        %v6033 = vld [vmem:[%s13 + $0xc8] sm:$0xf]
        %v6034 = vld [vmem:[%s13 + $0xcc] sm:$0xf]
        %v6035 = vld [vmem:[%s13 + $0xd0] sm:$0xf]
        %v6036 = vld [vmem:[%s13 + $0xd4] sm:$0xf]
        %v6037 = vld [vmem:[%s13 + $0xd8] sm:$0xf]
        %v6038 = vld [vmem:[%s13 + $0xdc] sm:$0xf]
        %v6039 = vld [vmem:[%s13 + $0xe0] sm:$0xf]
        %v6040 = vld [vmem:[%s13 + $0xe4] sm:$0xf]
        %v6041 = vld [vmem:[%s13 + $0xe8] sm:$0xf]
        %v6042 = vld [vmem:[%s13 + $0xec] sm:$0xf]
        %v6043 = vld [vmem:[%s13 + $0xf0] sm:$0xf]
        %v6044 = vld [vmem:[%s13 + $0xf4] sm:$0xf]
        %v6045 = vld [vmem:[%s13 + $0xf8] sm:$0xf]
        %v6046 = vld [vmem:[%s13 + $0xfc] sm:$0xf]
        %v6047 = vld [vmem:[%s13 + $0x100] sm:$0xf]
        %v6048 = vld [vmem:[%s13 + $0x104] sm:$0xf]
        %v6049 = vld [vmem:[%s13 + $0x108] sm:$0xf]
        %v6050 = vld [vmem:[%s13 + $0x10c] sm:$0xf]
        %v6051 = vld [vmem:[%s13 + $0x110] sm:$0xf]
        %v6052 = vld [vmem:[%s13 + $0x114] sm:$0xf]
        %v6053 = vld [vmem:[%s13 + $0x118] sm:$0xf]
        %v6054 = vld [vmem:[%s13 + $0x11c] sm:$0xf]
        %v6055 = vld [vmem:[%s13 + $0x120] sm:$0xf]
        %v6056 = vld [vmem:[%s13 + $0x124] sm:$0xf]
        %v6057 = vld [vmem:[%s13 + $0x128] sm:$0xf]
        %v6058 = vld [vmem:[%s13 + $0x12c] sm:$0xf]
        %v6059 = vld [vmem:[%s13 + $0x130] sm:$0xf]
        %v6060 = vld [vmem:[%s13 + $0x134] sm:$0xf]
        %v6061 = vld [vmem:[%s13 + $0x138] sm:$0xf]
        %v6062 = vld [vmem:[%s13 + $0x13c] sm:$0xf]
        %v6063 = vld [vmem:[%s13 + $0x140] sm:$0xf]
        %v6064 = vld [vmem:[%s13 + $0x144] sm:$0xf]
        %v6065 = vld [vmem:[%s13 + $0x148] sm:$0xf]
        %v6066 = vld [vmem:[%s13 + $0x14c] sm:$0xf]
        %v6067 = vld [vmem:[%s13 + $0x150] sm:$0xf]
        %v6068 = vld [vmem:[%s13 + $0x154] sm:$0xf]
        %v6069 = vld [vmem:[%s13 + $0x158] sm:$0xf]
        %v6070 = vld [vmem:[%s13 + $0x15c] sm:$0xf]
        %v6071 = vld [vmem:[%s13 + $0x160] sm:$0xf]
        %v6072 = vld [vmem:[%s13 + $0x164] sm:$0xf]
        %v6073 = vld [vmem:[%s13 + $0x168] sm:$0xf]
        %v6074 = vld [vmem:[%s13 + $0x16c] sm:$0xf]
        %v6075 = vld [vmem:[%s13 + $0x170] sm:$0xf]
        %v6076 = vld [vmem:[%s13 + $0x174] sm:$0xf]
        %v6077 = vld [vmem:[%s13 + $0x178] sm:$0xf]
        %v6078 = vld [vmem:[%s13 + $0x17c] sm:$0xf]
        %v6079 = vld [vmem:[%s13 + $0x180] sm:$0xf]
        %v6080 = vld [vmem:[%s13 + $0x184] sm:$0xf]
        %v6081 = vld [vmem:[%s13 + $0x188] sm:$0xf]
        %v6082 = vld [vmem:[%s13 + $0x18c] sm:$0xf]
        %v6083 = vld [vmem:[%s13 + $0x190] sm:$0xf]
        %v6084 = vld [vmem:[%s13 + $0x194] sm:$0xf]
        %v6085 = vld [vmem:[%s13 + $0x198] sm:$0xf]
        %v6086 = vld [vmem:[%s13 + $0x19c] sm:$0xf]
        %v6087 = vld [vmem:[%s13 + $0x1a0] sm:$0xf]
        %v6088 = vld [vmem:[%s13 + $0x1a4] sm:$0xf]
        %v6089 = vld [vmem:[%s13 + $0x1a8] sm:$0xf]
        %v6090 = vld [vmem:[%s13 + $0x1ac] sm:$0xf]
        %v6091 = vld [vmem:[%s13 + $0x1b0] sm:$0xf]
        %v6092 = vld [vmem:[%s13 + $0x1b4] sm:$0xf]
        %v6093 = vld [vmem:[%s13 + $0x1b8] sm:$0xf]
        %v6094 = vld [vmem:[%s13 + $0x1bc] sm:$0xf]
        %v6095 = vld [vmem:[%s13 + $0x1c0] sm:$0xf]
        %v6096 = vld [vmem:[%s13 + $0x1c4] sm:$0xf]
        %v6097 = vld [vmem:[%s13 + $0x1c8] sm:$0xf]
        %v6098 = vld [vmem:[%s13 + $0x1cc] sm:$0xf]
        %v6099 = vld [vmem:[%s13 + $0x1d0] sm:$0xf]
        %v6100 = vld [vmem:[%s13 + $0x1d4] sm:$0xf]
        %v6101 = vld [vmem:[%s13 + $0x1d8] sm:$0xf]
        %v6102 = vld [vmem:[%s13 + $0x1dc] sm:$0xf]
        %v6103 = vld [vmem:[%s13 + $0x1e0] sm:$0xf]
        %v6104 = vld [vmem:[%s13 + $0x1e4] sm:$0xf]
        %v6105 = vld [vmem:[%s13 + $0x1e8] sm:$0xf]
        %v6106 = vld [vmem:[%s13 + $0x1ec] sm:$0xf]
        %v6107 = vld [vmem:[%s13 + $0x1f0] sm:$0xf]
        %v6108 = vld [vmem:[%s13 + $0x1f4] sm:$0xf]
        %v6109 = vld [vmem:[%s13 + $0x1f8] sm:$0xf]
        %v6110 = vld [vmem:[%s13 + $0x1fc] sm:$0xf]
        %v6111 = vld [vmem:[%s13 + $0x200] sm:$0xf]
        %v6112 = vld [vmem:[%s13 + $0x204] sm:$0xf]
        %v6113 = vld [vmem:[%s13 + $0x208] sm:$0xf]
        %v6114 = vld [vmem:[%s13 + $0x20c] sm:$0xf]
        %v6115 = vld [vmem:[%s13 + $0x210] sm:$0xf]
        %v6116 = vld [vmem:[%s13 + $0x214] sm:$0xf]
        %v6117 = vld [vmem:[%s13 + $0x218] sm:$0xf]
        %v6118 = vld [vmem:[%s13 + $0x21c] sm:$0xf]
        %v6119 = vld [vmem:[%s13 + $0x220] sm:$0xf]
        %v6120 = vld [vmem:[%s13 + $0x224] sm:$0xf]
        %v6121 = vld [vmem:[%s13 + $0x228] sm:$0xf]
        %v6122 = vld [vmem:[%s13 + $0x22c] sm:$0xf]
        %v6123 = vld [vmem:[%s13 + $0x230] sm:$0xf]
        %v6124 = vld [vmem:[%s13 + $0x234] sm:$0xf]
        %v6125 = vld [vmem:[%s13 + $0x238] sm:$0xf]
        %v6126 = vld [vmem:[%s13 + $0x23c] sm:$0xf]
        %v6127 = vld [vmem:[%s14] sm:$0x1]
        %v6129 = vlaneseq
        %v6130 = vshrl.u32 %v6129, 7
        %v6131 = vsub.s32 0, %v6130
        %v6132 = vrot.slane %v6127, %v6131
        %v6278 = vunpack.c.l.b16 %v5983
        %v6279 = vunpack.c.l.b16 %v5984
        %v6280 = vunpack.c.l.b16 %v5985
        %v6281 = vunpack.c.l.b16 %v5986
        %v6282 = vunpack.c.l.b16 %v5987
        %v6283 = vunpack.c.l.b16 %v5988
        %v6284 = vunpack.c.l.b16 %v5989
        %v6285 = vunpack.c.l.b16 %v5990
        %v6286 = vunpack.c.l.b16 %v5991
        %v6287 = vunpack.c.l.b16 %v5992
        %v6288 = vunpack.c.l.b16 %v5993
        %v6289 = vunpack.c.l.b16 %v5994
        %v6290 = vunpack.c.l.b16 %v5995
        %v6291 = vunpack.c.l.b16 %v5996
        %v6292 = vunpack.c.l.b16 %v5997
        %v6293 = vunpack.c.l.b16 %v5998
        %v6294 = vunpack.c.l.b16 %v5999
        %v6295 = vunpack.c.l.b16 %v6000
        %v6296 = vunpack.c.l.b16 %v6001
        %v6297 = vunpack.c.l.b16 %v6002
        %v6298 = vunpack.c.l.b16 %v6003
        %v6299 = vunpack.c.l.b16 %v6004
        %v6300 = vunpack.c.l.b16 %v6005
        %v6301 = vunpack.c.l.b16 %v6006
        %v6302 = vunpack.c.l.b16 %v6007
        %v6303 = vunpack.c.l.b16 %v6008
        %v6304 = vunpack.c.l.b16 %v6009
        %v6305 = vunpack.c.l.b16 %v6010
        %v6306 = vunpack.c.l.b16 %v6011
        %v6307 = vunpack.c.l.b16 %v6012
        %v6308 = vunpack.c.l.b16 %v6013
        %v6309 = vunpack.c.l.b16 %v6014
        %v6310 = vunpack.c.l.b16 %v6015
        %v6311 = vunpack.c.l.b16 %v6016
        %v6312 = vunpack.c.l.b16 %v6017
        %v6313 = vunpack.c.l.b16 %v6018
        %v6314 = vunpack.c.l.b16 %v6019
        %v6315 = vunpack.c.l.b16 %v6020
        %v6316 = vunpack.c.l.b16 %v6021
        %v6317 = vunpack.c.l.b16 %v6022
        %v6318 = vunpack.c.l.b16 %v6023
        %v6319 = vunpack.c.l.b16 %v6024
        %v6320 = vunpack.c.l.b16 %v6025
        %v6321 = vunpack.c.l.b16 %v6026
        %v6322 = vunpack.c.l.b16 %v6027
        %v6323 = vunpack.c.l.b16 %v6028
        %v6324 = vunpack.c.l.b16 %v6029
        %v6325 = vunpack.c.l.b16 %v6030
        %v6326 = vunpack.c.l.b16 %v6031
        %v6327 = vunpack.c.l.b16 %v6032
        %v6328 = vunpack.c.l.b16 %v6033
        %v6329 = vunpack.c.l.b16 %v6034
        %v6330 = vunpack.c.l.b16 %v6035
        %v6331 = vunpack.c.l.b16 %v6036
        %v6332 = vunpack.c.l.b16 %v6037
        %v6333 = vunpack.c.l.b16 %v6038
        %v6334 = vunpack.c.l.b16 %v6039
        %v6335 = vunpack.c.l.b16 %v6040
        %v6336 = vunpack.c.l.b16 %v6041
        %v6337 = vunpack.c.l.b16 %v6042
        %v6338 = vunpack.c.l.b16 %v6043
        %v6339 = vunpack.c.l.b16 %v6044
        %v6340 = vunpack.c.l.b16 %v6045
        %v6341 = vunpack.c.l.b16 %v6046
        %v6342 = vunpack.c.l.b16 %v6047
        %v6343 = vunpack.c.l.b16 %v6048
        %v6344 = vunpack.c.l.b16 %v6049
        %v6345 = vunpack.c.l.b16 %v6050
        %v6346 = vunpack.c.l.b16 %v6051
        %v6347 = vunpack.c.l.b16 %v6052
        %v6348 = vunpack.c.l.b16 %v6053
        %v6349 = vunpack.c.l.b16 %v6054
        %v6350 = vunpack.c.l.b16 %v6055
        %v6351 = vunpack.c.l.b16 %v6056
        %v6352 = vunpack.c.l.b16 %v6057
        %v6353 = vunpack.c.l.b16 %v6058
        %v6354 = vunpack.c.l.b16 %v6059
        %v6355 = vunpack.c.l.b16 %v6060
        %v6356 = vunpack.c.l.b16 %v6061
        %v6357 = vunpack.c.l.b16 %v6062
        %v6358 = vunpack.c.l.b16 %v6063
        %v6359 = vunpack.c.l.b16 %v6064
        %v6360 = vunpack.c.l.b16 %v6065
        %v6361 = vunpack.c.l.b16 %v6066
        %v6362 = vunpack.c.l.b16 %v6067
        %v6363 = vunpack.c.l.b16 %v6068
        %v6364 = vunpack.c.l.b16 %v6069
        %v6365 = vunpack.c.l.b16 %v6070
        %v6366 = vunpack.c.l.b16 %v6071
        %v6367 = vunpack.c.l.b16 %v6072
        %v6368 = vunpack.c.l.b16 %v6073
        %v6369 = vunpack.c.l.b16 %v6074
        %v6370 = vunpack.c.l.b16 %v6075
        %v6371 = vunpack.c.l.b16 %v6076
        %v6372 = vunpack.c.l.b16 %v6077
        %v6373 = vunpack.c.l.b16 %v6078
        %v6374 = vunpack.c.l.b16 %v6079
        %v6375 = vunpack.c.l.b16 %v6080
        %v6376 = vunpack.c.l.b16 %v6081
        %v6377 = vunpack.c.l.b16 %v6082
        %v6378 = vunpack.c.l.b16 %v6083
        %v6379 = vunpack.c.l.b16 %v6084
        %v6380 = vunpack.c.l.b16 %v6085
        %v6381 = vunpack.c.l.b16 %v6086
        %v6382 = vunpack.c.l.b16 %v6087
        %v6383 = vunpack.c.l.b16 %v6088
        %v6384 = vunpack.c.l.b16 %v6089
        %v6385 = vunpack.c.l.b16 %v6090
        %v6386 = vunpack.c.l.b16 %v6091
        %v6387 = vunpack.c.l.b16 %v6092
        %v6388 = vunpack.c.l.b16 %v6093
        %v6389 = vunpack.c.l.b16 %v6094
        %v6390 = vunpack.c.l.b16 %v6095
        %v6391 = vunpack.c.l.b16 %v6096
        %v6392 = vunpack.c.l.b16 %v6097
        %v6393 = vunpack.c.l.b16 %v6098
        %v6394 = vunpack.c.l.b16 %v6099
        %v6395 = vunpack.c.l.b16 %v6100
        %v6396 = vunpack.c.l.b16 %v6101
        %v6397 = vunpack.c.l.b16 %v6102
        %v6398 = vunpack.c.l.b16 %v6103
        %v6399 = vunpack.c.l.b16 %v6104
        %v6400 = vunpack.c.l.b16 %v6105
        %v6401 = vunpack.c.l.b16 %v6106
        %v6402 = vunpack.c.l.b16 %v6107
        %v6403 = vunpack.c.l.b16 %v6108
        %v6404 = vunpack.c.l.b16 %v6109
        %v6405 = vunpack.c.l.b16 %v6110
        %v6406 = vunpack.c.l.b16 %v6111
        %v6407 = vunpack.c.l.b16 %v6112
        %v6408 = vunpack.c.l.b16 %v6113
        %v6409 = vunpack.c.l.b16 %v6114
        %v6410 = vunpack.c.l.b16 %v6115
        %v6411 = vunpack.c.l.b16 %v6116
        %v6412 = vunpack.c.l.b16 %v6117
        %v6413 = vunpack.c.l.b16 %v6118
        %v6414 = vunpack.c.l.b16 %v6119
        %v6415 = vunpack.c.l.b16 %v6120
        %v6416 = vunpack.c.l.b16 %v6121
        %v6417 = vunpack.c.l.b16 %v6122
        %v6418 = vunpack.c.l.b16 %v6123
        %v6419 = vunpack.c.l.b16 %v6124
        %v6420 = vunpack.c.l.b16 %v6125
        %v6421 = vunpack.c.l.b16 %v6126
        %v6422 = vpack.c.b16 %v6279, %v6278
        %v6423 = vpack.c.b16 %v6281, %v6280
        %v6424 = vpack.c.b16 %v6283, %v6282
        %v6425 = vpack.c.b16 %v6285, %v6284
        %v6426 = vpack.c.b16 %v6287, %v6286
        %v6427 = vpack.c.b16 %v6289, %v6288
        %v6428 = vpack.c.b16 %v6291, %v6290
        %v6429 = vpack.c.b16 %v6293, %v6292
        %v6430 = vpack.c.b16 %v6295, %v6294
        %v6431 = vpack.c.b16 %v6297, %v6296
        %v6432 = vpack.c.b16 %v6299, %v6298
        %v6433 = vpack.c.b16 %v6301, %v6300
        %v6434 = vpack.c.b16 %v6303, %v6302
        %v6435 = vpack.c.b16 %v6305, %v6304
        %v6436 = vpack.c.b16 %v6307, %v6306
        %v6437 = vpack.c.b16 %v6309, %v6308
        %v6438 = vpack.c.b16 %v6311, %v6310
        %v6439 = vpack.c.b16 %v6313, %v6312
        %v6440 = vpack.c.b16 %v6315, %v6314
        %v6441 = vpack.c.b16 %v6317, %v6316
        %v6442 = vpack.c.b16 %v6319, %v6318
        %v6443 = vpack.c.b16 %v6321, %v6320
        %v6444 = vpack.c.b16 %v6323, %v6322
        %v6445 = vpack.c.b16 %v6325, %v6324
        %v6446 = vpack.c.b16 %v6327, %v6326
        %v6447 = vpack.c.b16 %v6329, %v6328
        %v6448 = vpack.c.b16 %v6331, %v6330
        %v6449 = vpack.c.b16 %v6333, %v6332
        %v6450 = vpack.c.b16 %v6335, %v6334
        %v6451 = vpack.c.b16 %v6337, %v6336
        %v6452 = vpack.c.b16 %v6339, %v6338
        %v6453 = vpack.c.b16 %v6341, %v6340
        %v6454 = vpack.c.b16 %v6343, %v6342
        %v6455 = vpack.c.b16 %v6345, %v6344
        %v6456 = vpack.c.b16 %v6347, %v6346
        %v6457 = vpack.c.b16 %v6349, %v6348
        %v6458 = vpack.c.b16 %v6351, %v6350
        %v6459 = vpack.c.b16 %v6353, %v6352
        %v6460 = vpack.c.b16 %v6355, %v6354
        %v6461 = vpack.c.b16 %v6357, %v6356
        %v6462 = vpack.c.b16 %v6359, %v6358
        %v6463 = vpack.c.b16 %v6361, %v6360
        %v6464 = vpack.c.b16 %v6363, %v6362
        %v6465 = vpack.c.b16 %v6365, %v6364
        %v6466 = vpack.c.b16 %v6367, %v6366
        %v6467 = vpack.c.b16 %v6369, %v6368
        %v6468 = vpack.c.b16 %v6371, %v6370
        %v6469 = vpack.c.b16 %v6373, %v6372
        %v6470 = vpack.c.b16 %v6375, %v6374
        %v6471 = vpack.c.b16 %v6377, %v6376
        %v6472 = vpack.c.b16 %v6379, %v6378
        %v6473 = vpack.c.b16 %v6381, %v6380
        %v6474 = vpack.c.b16 %v6383, %v6382
        %v6475 = vpack.c.b16 %v6385, %v6384
        %v6476 = vpack.c.b16 %v6387, %v6386
        %v6477 = vpack.c.b16 %v6389, %v6388
        %v6478 = vpack.c.b16 %v6391, %v6390
        %v6479 = vpack.c.b16 %v6393, %v6392
        %v6480 = vpack.c.b16 %v6395, %v6394
        %v6481 = vpack.c.b16 %v6397, %v6396
        %v6482 = vpack.c.b16 %v6399, %v6398
        %v6483 = vpack.c.b16 %v6401, %v6400
        %v6484 = vpack.c.b16 %v6403, %v6402
        %v6485 = vpack.c.b16 %v6405, %v6404
        %v6486 = vpack.c.b16 %v6407, %v6406
        %v6487 = vpack.c.b16 %v6409, %v6408
        %v6488 = vpack.c.b16 %v6411, %v6410
        %v6489 = vpack.c.b16 %v6413, %v6412
        %v6490 = vpack.c.b16 %v6415, %v6414
        %v6491 = vpack.c.b16 %v6417, %v6416
        %v6492 = vpack.c.b16 %v6419, %v6418
        %v6493 = vpack.c.b16 %v6421, %v6420
        %6566 = vmatprep.subr.bf16.mxu0 0
        %6567 = vmatpush1.bf16.msra.mxu0 %v6429
        %6568 = vmatprep.subr.bf16.mxu0 0
        %6569 = vmatpush1.bf16.msra.mxu0 %v6428
        %6570 = vmatprep.subr.bf16.mxu0 0
        %6571 = vmatpush1.bf16.msra.mxu0 %v6427
        %6572 = vmatprep.subr.bf16.mxu0 0
        %6573 = vmatpush1.bf16.msra.mxu0 %v6426
        %6574 = vmatprep.subr.bf16.mxu0 0
        %6575 = vmatpush1.bf16.msra.mxu0 %v6425
        %6576 = vmatprep.subr.bf16.mxu0 0
        %6577 = vmatpush1.bf16.msra.mxu0 %v6424
        %6578 = vmatprep.subr.bf16.mxu0 0
        %6579 = vmatpush1.bf16.msra.mxu0 %v6423
        %6580 = vmatprep.subr.bf16.mxu0 0
        %6581 = vmatpush1.bf16.msra.mxu0 %v6422
        %6582 = vmatprep.subr.bf16.mxu0 0
        %6583 = vmatpush2.bf16.msra.mxu0 %v6437
        %6584 = vmatprep.subr.bf16.mxu0 0
        %6585 = vmatpush2.bf16.msra.mxu0 %v6436
        %6586 = vmatprep.subr.bf16.mxu0 0
        %6587 = vmatpush2.bf16.msra.mxu0 %v6435
        %6588 = vmatprep.subr.bf16.mxu0 0
        %6589 = vmatpush2.bf16.msra.mxu0 %v6434
        %6590 = vmatprep.subr.bf16.mxu0 0
        %6591 = vmatpush2.bf16.msra.mxu0 %v6433
        %6592 = vmatprep.subr.bf16.mxu0 0
        %6593 = vmatpush2.bf16.msra.mxu0 %v6432
        %6594 = vmatprep.subr.bf16.mxu0 0
        %6595 = vmatpush2.bf16.msra.mxu0 %v6431
        %6596 = vmatprep.subr.bf16.mxu0 0
        %6597 = vmatpush2.bf16.msra.mxu0 %v6430
        %6598 = vmatprep.mubr.bf16.mxu0 %v5975
        %6599 = vmatmul.mubr.bf16.gmra.mxu0 %v5974
        %v6600 = vpop.f32.mrf.mxu0
        %v6601 = vadd.f32 %v6132, %v6600
        %v6602 = vpop.f32.mrf.mxu0
        %v6603 = vpop.f32.mrf.mxu0
        %v6604 = vadd.f32 %v6132, %v6603
        %v6605 = vpop.f32.mrf.mxu0
        %6606 = vdwg.mxu0
        %6607 = vmatprep.subr.bf16.mxu0 0
        %6608 = vmatpush1.bf16.msra.mxu0 %v6445
        %6609 = vmatprep.subr.bf16.mxu0 0
        %6610 = vmatpush1.bf16.msra.mxu0 %v6444
        %6611 = vmatprep.subr.bf16.mxu0 0
        %6612 = vmatpush1.bf16.msra.mxu0 %v6443
        %6613 = vmatprep.subr.bf16.mxu0 0
        %6614 = vmatpush1.bf16.msra.mxu0 %v6442
        %6615 = vmatprep.subr.bf16.mxu0 0
        %6616 = vmatpush1.bf16.msra.mxu0 %v6441
        %6617 = vmatprep.subr.bf16.mxu0 0
        %6618 = vmatpush1.bf16.msra.mxu0 %v6440
        %6619 = vmatprep.subr.bf16.mxu0 0
        %6620 = vmatpush1.bf16.msra.mxu0 %v6439
        %6621 = vmatprep.subr.bf16.mxu0 0
        %6622 = vmatpush1.bf16.msra.mxu0 %v6438
        %6623 = vmatprep.subr.bf16.mxu0 0
        %6624 = vmatpush2.bf16.msra.mxu0 %v6453
        %6625 = vmatprep.subr.bf16.mxu0 0
        %6626 = vmatpush2.bf16.msra.mxu0 %v6452
        %6627 = vmatprep.subr.bf16.mxu0 0
        %6628 = vmatpush2.bf16.msra.mxu0 %v6451
        %6629 = vmatprep.subr.bf16.mxu0 0
        %6630 = vmatpush2.bf16.msra.mxu0 %v6450
        %6631 = vmatprep.subr.bf16.mxu0 0
        %6632 = vmatpush2.bf16.msra.mxu0 %v6449
        %6633 = vmatprep.subr.bf16.mxu0 0
        %6634 = vmatpush2.bf16.msra.mxu0 %v6448
        %6635 = vmatprep.subr.bf16.mxu0 0
        %6636 = vmatpush2.bf16.msra.mxu0 %v6447
        %6637 = vmatprep.subr.bf16.mxu0 0
        %6638 = vmatpush2.bf16.msra.mxu0 %v6446
        %6639 = vmatprep.mubr.bf16.mxu0 %v5977
        %6640 = vmatmul.mubr.bf16.gmra.mxu0 %v5976
        %v6641 = vpop.f32.mrf.mxu0
        %v6642 = vadd.f32 %v6601, %v6641
        %v6643 = vpop.f32.mrf.mxu0
        %v6644 = vpop.f32.mrf.mxu0
        %v6645 = vadd.f32 %v6604, %v6644
        %v6646 = vpop.f32.mrf.mxu0
        %6647 = vdwg.mxu0
        %6648 = vmatprep.subr.bf16.mxu0 0
        %6649 = vmatpush1.bf16.msra.mxu0 %v6461
        %6650 = vmatprep.subr.bf16.mxu0 0
        %6651 = vmatpush1.bf16.msra.mxu0 %v6460
        %6652 = vmatprep.subr.bf16.mxu0 0
        %6653 = vmatpush1.bf16.msra.mxu0 %v6459
        %6654 = vmatprep.subr.bf16.mxu0 0
        %6655 = vmatpush1.bf16.msra.mxu0 %v6458
        %6656 = vmatprep.subr.bf16.mxu0 0
        %6657 = vmatpush1.bf16.msra.mxu0 %v6457
        %6658 = vmatprep.subr.bf16.mxu0 0
        %6659 = vmatpush1.bf16.msra.mxu0 %v6456
        %6660 = vmatprep.subr.bf16.mxu0 0
        %6661 = vmatpush1.bf16.msra.mxu0 %v6455
        %6662 = vmatprep.subr.bf16.mxu0 0
        %6663 = vmatpush1.bf16.msra.mxu0 %v6454
        %6664 = vmatprep.subr.bf16.mxu0 0
        %6665 = vmatpush2.bf16.msra.mxu0 %v6469
        %6666 = vmatprep.subr.bf16.mxu0 0
        %6667 = vmatpush2.bf16.msra.mxu0 %v6468
        %6668 = vmatprep.subr.bf16.mxu0 0
        %6669 = vmatpush2.bf16.msra.mxu0 %v6467
        %6670 = vmatprep.subr.bf16.mxu0 0
        %6671 = vmatpush2.bf16.msra.mxu0 %v6466
        %6672 = vmatprep.subr.bf16.mxu0 0
        %6673 = vmatpush2.bf16.msra.mxu0 %v6465
        %6674 = vmatprep.subr.bf16.mxu0 0
        %6675 = vmatpush2.bf16.msra.mxu0 %v6464
        %6676 = vmatprep.subr.bf16.mxu0 0
        %6677 = vmatpush2.bf16.msra.mxu0 %v6463
        %6678 = vmatprep.subr.bf16.mxu0 0
        %6679 = vmatpush2.bf16.msra.mxu0 %v6462
        %6680 = vmatprep.mubr.bf16.mxu0 %v5979
        %6681 = vmatmul.mubr.bf16.gmra.mxu0 %v5978
        %v6682 = vpop.f32.mrf.mxu0
        %v6683 = vadd.f32 %v6642, %v6682
        %v6684 = vpop.f32.mrf.mxu0
        %v6685 = vpop.f32.mrf.mxu0
        %v6686 = vadd.f32 %v6645, %v6685
        %v6687 = vpop.f32.mrf.mxu0
        %6688 = vdwg.mxu0
        %6689 = vmatprep.subr.bf16.mxu0 0
        %6690 = vmatpush1.bf16.msra.mxu0 %v6477
        %6691 = vmatprep.subr.bf16.mxu0 0
        %6692 = vmatpush1.bf16.msra.mxu0 %v6476
        %6693 = vmatprep.subr.bf16.mxu0 0
        %6694 = vmatpush1.bf16.msra.mxu0 %v6475
        %6695 = vmatprep.subr.bf16.mxu0 0
        %6696 = vmatpush1.bf16.msra.mxu0 %v6474
        %6697 = vmatprep.subr.bf16.mxu0 0
        %6698 = vmatpush1.bf16.msra.mxu0 %v6473
        %6699 = vmatprep.subr.bf16.mxu0 0
        %6700 = vmatpush1.bf16.msra.mxu0 %v6472
        %6701 = vmatprep.subr.bf16.mxu0 0
        %6702 = vmatpush1.bf16.msra.mxu0 %v6471
        %6703 = vmatprep.subr.bf16.mxu0 0
        %6704 = vmatpush1.bf16.msra.mxu0 %v6470
        %6705 = vmatprep.subr.bf16.mxu0 0
        %6706 = vmatpush2.bf16.msra.mxu0 %v6485
        %6707 = vmatprep.subr.bf16.mxu0 0
        %6708 = vmatpush2.bf16.msra.mxu0 %v6484
        %6709 = vmatprep.subr.bf16.mxu0 0
        %6710 = vmatpush2.bf16.msra.mxu0 %v6483
        %6711 = vmatprep.subr.bf16.mxu0 0
        %6712 = vmatpush2.bf16.msra.mxu0 %v6482
        %6713 = vmatprep.subr.bf16.mxu0 0
        %6714 = vmatpush2.bf16.msra.mxu0 %v6481
        %6715 = vmatprep.subr.bf16.mxu0 0
        %6716 = vmatpush2.bf16.msra.mxu0 %v6480
        %6717 = vmatprep.subr.bf16.mxu0 0
        %6718 = vmatpush2.bf16.msra.mxu0 %v6479
        %6719 = vmatprep.subr.bf16.mxu0 0
        %6720 = vmatpush2.bf16.msra.mxu0 %v6478
        %6721 = vmatprep.mubr.bf16.mxu0 %v5981
        %6722 = vmatmul.mubr.bf16.gmra.mxu0 %v5980
        %v6723 = vpop.f32.mrf.mxu0
        %v6724 = vadd.f32 %v6683, %v6723
        %v6725 = vpop.f32.mrf.mxu0
        %v6726 = vpop.f32.mrf.mxu0
        %v6727 = vadd.f32 %v6686, %v6726
        %v6728 = vpop.f32.mrf.mxu0
        %6729 = vdwg.mxu0
        %6730 = vmatprep.subr.bf16.mxu0 0
        %6731 = vmatpush1.bf16.msra.mxu0 %v6493
        %6732 = vmatprep.subr.bf16.mxu0 0
        %6733 = vmatpush1.bf16.msra.mxu0 %v6492
        %6734 = vmatprep.subr.bf16.mxu0 0
        %6735 = vmatpush1.bf16.msra.mxu0 %v6491
        %6736 = vmatprep.subr.bf16.mxu0 0
        %6737 = vmatpush1.bf16.msra.mxu0 %v6490
        %6738 = vmatprep.subr.bf16.mxu0 0
        %6739 = vmatpush1.bf16.msra.mxu0 %v6489
        %6740 = vmatprep.subr.bf16.mxu0 0
        %6741 = vmatpush1.bf16.msra.mxu0 %v6488
        %6742 = vmatprep.subr.bf16.mxu0 0
        %6743 = vmatpush1.bf16.msra.mxu0 %v6487
        %6744 = vmatprep.subr.bf16.mxu0 0
        %6745 = vmatpush1.bf16.msra.mxu0 %v6486
        %6746 = vmatprep.subr.bf16.mxu0 0
        %6747 = vmatpush2.bf16.msra.mxu0 0
        %6748 = vmatprep.subr.bf16.mxu0 0
        %6749 = vmatpush2.bf16.msra.mxu0 0
        %6750 = vmatprep.subr.bf16.mxu0 0
        %6751 = vmatpush2.bf16.msra.mxu0 0
        %6752 = vmatprep.subr.bf16.mxu0 0
        %6753 = vmatpush2.bf16.msra.mxu0 0
        %6754 = vmatprep.subr.bf16.mxu0 0
        %6755 = vmatpush2.bf16.msra.mxu0 0
        %6756 = vmatprep.subr.bf16.mxu0 0
        %6757 = vmatpush2.bf16.msra.mxu0 0
        %6758 = vmatprep.subr.bf16.mxu0 0
        %6759 = vmatpush2.bf16.msra.mxu0 0
        %6760 = vmatprep.subr.bf16.mxu0 0
        %6761 = vmatpush2.bf16.msra.mxu0 0
        %6762 = vmatprep.mubr.bf16.mxu0 0
        %6763 = vmatmul.mubr.bf16.gmra.mxu0 %v5982
        %v6764 = vpop.f32.mrf.mxu0
        %v6765 = vadd.f32 %v6724, %v6764
        %v6766 = vpop.f32.mrf.mxu0
        %v6767 = vpop.f32.mrf.mxu0
        %v6768 = vadd.f32 %v6727, %v6767
        %v6769 = vpop.f32.mrf.mxu0
        %6770 = vdwg.mxu0
        %v6771 = vmax.f32 %v6765, 0.0
        %v6772 = vmax.f32 %v6768, 0.0
        %v6775 = vcombine.high %v6771, %v6771
        %v6776 = vcombine.high %v6772, %v6772
        %s6779 = scalar_lea.vmem [#allocation9], 8
        %6780 = vst [vmem:[%s6779 + $0x1] sm:$0xf] %v6771
        %6781 = vst [vmem:[%s6779 + $0x9] sm:$0xf] %v6775
        %6782 = vst [vmem:[%s6779 + $0x11] sm:$0xf] %v6772
        %6783 = vst [vmem:[%s6779 + $0x19] sm:$0xf] %v6776
        %v6784 = vld [vmem:[#allocation9] sm:$0xf]
        %v6785 = vld [vmem:[#allocation9 + $0x8] sm:$0xf]
        %v6786 = vld [vmem:[#allocation9 + $0x10] sm:$0xf]
        %v6787 = vld [vmem:[#allocation9 + $0x18] sm:$0xf]
        %v6792 = vcombine.low %v6784, %v6785
        %v6793 = vcombine.low %v6786, %v6787
        %6796 = vst [vmem:[#allocation11] sm:$0xff] %v6792
        %6797 = vst [vmem:[#allocation11 + $0x48] sm:$0xff] %v6793
        %v6798 = vld [vmem:[#allocation9 + $0x1] sm:$0xf]
        %v6799 = vld [vmem:[#allocation9 + $0x9] sm:$0xf]
        %v6800 = vld [vmem:[#allocation9 + $0x11] sm:$0xf]
        %v6801 = vld [vmem:[#allocation9 + $0x19] sm:$0xf]
        %v6806 = vcombine.low %v6798, %v6799
        %v6807 = vcombine.low %v6800, %v6801
        %6810 = vst [vmem:[#allocation11 + $0x8] sm:$0xff] %v6806
        %6811 = vst [vmem:[#allocation11 + $0x50] sm:$0xff] %v6807
        %v6812 = vld [vmem:[#allocation9 + $0x2] sm:$0xf]
        %v6813 = vld [vmem:[#allocation9 + $0xa] sm:$0xf]
        %v6814 = vld [vmem:[#allocation9 + $0x12] sm:$0xf]
        %v6815 = vld [vmem:[#allocation9 + $0x1a] sm:$0xf]
        %v6820 = vcombine.low %v6812, %v6813
        %v6821 = vcombine.low %v6814, %v6815
        %6824 = vst [vmem:[#allocation11 + $0x10] sm:$0xff] %v6820
        %6825 = vst [vmem:[#allocation11 + $0x58] sm:$0xff] %v6821
        %v6826 = vld [vmem:[%s6779] sm:$0xf]
        %v6827 = vld [vmem:[%s6779 + $0x8] sm:$0xf]
        %v6828 = vld [vmem:[%s6779 + $0x10] sm:$0xf]
        %v6829 = vld [vmem:[%s6779 + $0x18] sm:$0xf]
        %v6834 = vcombine.low %v6826, %v6827
        %v6835 = vcombine.low %v6828, %v6829
        %6838 = vst [vmem:[#allocation11 + $0x18] sm:$0xff] %v6834
        %6839 = vst [vmem:[#allocation11 + $0x60] sm:$0xff] %v6835
        %v6840 = vld [vmem:[%s6779 + $0x1] sm:$0xf]
        %v6841 = vld [vmem:[%s6779 + $0x9] sm:$0xf]
        %v6842 = vld [vmem:[%s6779 + $0x11] sm:$0xf]
        %v6843 = vld [vmem:[%s6779 + $0x19] sm:$0xf]
        %v6848 = vcombine.low %v6840, %v6841
        %v6849 = vcombine.low %v6842, %v6843
        %6852 = vst [vmem:[#allocation11 + $0x20] sm:$0xff] %v6848
        %6853 = vst [vmem:[#allocation11 + $0x68] sm:$0xff] %v6849
        %v6854 = vld [vmem:[%s6779 + $0x2] sm:$0xf]
        %v6855 = vld [vmem:[%s6779 + $0xa] sm:$0xf]
        %v6856 = vld [vmem:[%s6779 + $0x12] sm:$0xf]
        %v6857 = vld [vmem:[%s6779 + $0x1a] sm:$0xf]
        %v6862 = vcombine.low %v6854, %v6855
        %v6863 = vcombine.low %v6856, %v6857
        %6866 = vst [vmem:[#allocation11 + $0x28] sm:$0xff] %v6862
        %6867 = vst [vmem:[#allocation11 + $0x70] sm:$0xff] %v6863
        %s6868 = scalar_lea.vmem [#allocation9], 16
        %v6869 = vld [vmem:[%s6868] sm:$0xf]
        %v6870 = vld [vmem:[%s6868 + $0x8] sm:$0xf]
        %v6871 = vld [vmem:[%s6868 + $0x10] sm:$0xf]
        %v6872 = vld [vmem:[%s6868 + $0x18] sm:$0xf]
        %v6877 = vcombine.low %v6869, %v6870
        %v6878 = vcombine.low %v6871, %v6872
        %6881 = vst [vmem:[#allocation11 + $0x30] sm:$0xff] %v6877
        %6882 = vst [vmem:[#allocation11 + $0x78] sm:$0xff] %v6878
        %v6883 = vld [vmem:[%s6868 + $0x1] sm:$0xf]
        %v6884 = vld [vmem:[%s6868 + $0x9] sm:$0xf]
        %v6885 = vld [vmem:[%s6868 + $0x11] sm:$0xf]
        %v6886 = vld [vmem:[%s6868 + $0x19] sm:$0xf]
        %v6891 = vcombine.low %v6883, %v6884
        %v6892 = vcombine.low %v6885, %v6886
        %6895 = vst [vmem:[#allocation11 + $0x38] sm:$0xff] %v6891
        %6896 = vst [vmem:[#allocation11 + $0x80] sm:$0xff] %v6892
        %v6897 = vld [vmem:[%s6868 + $0x2] sm:$0xf]
        %v6898 = vld [vmem:[%s6868 + $0xa] sm:$0xf]
        %v6899 = vld [vmem:[%s6868 + $0x12] sm:$0xf]
        %v6900 = vld [vmem:[%s6868 + $0x1a] sm:$0xf]
        %v6905 = vcombine.low %v6897, %v6898
        %v6906 = vcombine.low %v6899, %v6900
        %6909 = vst [vmem:[#allocation11 + $0x40] sm:$0xff] %v6905
        %6910 = vst [vmem:[#allocation11 + $0x88] sm:$0xff] %v6906
        %v6911 = vld [vmem:[#allocation11] sm:$0xff]
        %v6912 = vld [vmem:[#allocation11 + $0x8] sm:$0xff]
        %v6913 = vld [vmem:[#allocation11 + $0x10] sm:$0xff]
        %v6914 = vld [vmem:[#allocation11 + $0x18] sm:$0xff]
        %v6915 = vld [vmem:[#allocation11 + $0x20] sm:$0xff]
        %v6916 = vld [vmem:[#allocation11 + $0x28] sm:$0xff]
        %v6917 = vld [vmem:[#allocation11 + $0x30] sm:$0xff]
        %v6918 = vld [vmem:[#allocation11 + $0x38] sm:$0xff]
        %v6919 = vld [vmem:[#allocation11 + $0x40] sm:$0xff]
        %v6920 = vld [vmem:[#allocation11 + $0x48] sm:$0xff]
        %v6921 = vld [vmem:[#allocation11 + $0x50] sm:$0xff]
        %v6922 = vld [vmem:[#allocation11 + $0x58] sm:$0xff]
        %v6923 = vld [vmem:[#allocation11 + $0x60] sm:$0xff]
        %v6924 = vld [vmem:[#allocation11 + $0x68] sm:$0xff]
        %v6925 = vld [vmem:[#allocation11 + $0x70] sm:$0xff]
        %v6926 = vld [vmem:[#allocation11 + $0x78] sm:$0xff]
        %v6927 = vld [vmem:[#allocation11 + $0x80] sm:$0xff]
        %v6928 = vld [vmem:[#allocation11 + $0x88] sm:$0xff]
        %v6929 = vpack.c.bf16 %v6920, %v6911
        %v6930 = vpack.c.bf16 %v6921, %v6912
        %v6931 = vpack.c.bf16 %v6922, %v6913
        %v6932 = vpack.c.bf16 %v6923, %v6914
        %v6933 = vpack.c.bf16 %v6924, %v6915
        %v6934 = vpack.c.bf16 %v6925, %v6916
        %v6935 = vpack.c.bf16 %v6926, %v6917
        %v6936 = vpack.c.bf16 %v6927, %v6918
        %v6937 = vpack.c.bf16 %v6928, %v6919
        %v6938 = vld [vmem:[%s15] sm:$0xf]
        %v6939 = vld [vmem:[%s15 + $0x4] sm:$0xf]
        %v6940 = vld [vmem:[%s15 + $0x8] sm:$0xf]
        %v6941 = vld [vmem:[%s15 + $0xc] sm:$0xf]
        %v6942 = vld [vmem:[%s15 + $0x10] sm:$0xf]
        %v6943 = vld [vmem:[%s15 + $0x14] sm:$0xf]
        %v6944 = vld [vmem:[%s15 + $0x18] sm:$0xf]
        %v6945 = vld [vmem:[%s15 + $0x1c] sm:$0xf]
        %v6946 = vld [vmem:[%s15 + $0x20] sm:$0xf]
        %v6947 = vld [vmem:[%s15 + $0x24] sm:$0xf]
        %v6948 = vld [vmem:[%s15 + $0x28] sm:$0xf]
        %v6949 = vld [vmem:[%s15 + $0x2c] sm:$0xf]
        %v6950 = vld [vmem:[%s15 + $0x30] sm:$0xf]
        %v6951 = vld [vmem:[%s15 + $0x34] sm:$0xf]
        %v6952 = vld [vmem:[%s15 + $0x38] sm:$0xf]
        %v6953 = vld [vmem:[%s15 + $0x3c] sm:$0xf]
        %v6954 = vld [vmem:[%s15 + $0x40] sm:$0xf]
        %v6955 = vld [vmem:[%s15 + $0x44] sm:$0xf]
        %v6956 = vld [vmem:[%s15 + $0x48] sm:$0xf]
        %v6957 = vld [vmem:[%s15 + $0x4c] sm:$0xf]
        %v6958 = vld [vmem:[%s15 + $0x50] sm:$0xf]
        %v6959 = vld [vmem:[%s15 + $0x54] sm:$0xf]
        %v6960 = vld [vmem:[%s15 + $0x58] sm:$0xf]
        %v6961 = vld [vmem:[%s15 + $0x5c] sm:$0xf]
        %v6962 = vld [vmem:[%s15 + $0x60] sm:$0xf]
        %v6963 = vld [vmem:[%s15 + $0x64] sm:$0xf]
        %v6964 = vld [vmem:[%s15 + $0x68] sm:$0xf]
        %v6965 = vld [vmem:[%s15 + $0x6c] sm:$0xf]
        %v6966 = vld [vmem:[%s15 + $0x70] sm:$0xf]
        %v6967 = vld [vmem:[%s15 + $0x74] sm:$0xf]
        %v6968 = vld [vmem:[%s15 + $0x78] sm:$0xf]
        %v6969 = vld [vmem:[%s15 + $0x7c] sm:$0xf]
        %v6970 = vld [vmem:[%s15 + $0x80] sm:$0xf]
        %v6971 = vld [vmem:[%s15 + $0x84] sm:$0xf]
        %v6972 = vld [vmem:[%s15 + $0x88] sm:$0xf]
        %v6973 = vld [vmem:[%s15 + $0x8c] sm:$0xf]
        %v6974 = vld [vmem:[%s15 + $0x90] sm:$0xf]
        %v6975 = vld [vmem:[%s15 + $0x94] sm:$0xf]
        %v6976 = vld [vmem:[%s15 + $0x98] sm:$0xf]
        %v6977 = vld [vmem:[%s15 + $0x9c] sm:$0xf]
        %v6978 = vld [vmem:[%s15 + $0xa0] sm:$0xf]
        %v6979 = vld [vmem:[%s15 + $0xa4] sm:$0xf]
        %v6980 = vld [vmem:[%s15 + $0xa8] sm:$0xf]
        %v6981 = vld [vmem:[%s15 + $0xac] sm:$0xf]
        %v6982 = vld [vmem:[%s15 + $0xb0] sm:$0xf]
        %v6983 = vld [vmem:[%s15 + $0xb4] sm:$0xf]
        %v6984 = vld [vmem:[%s15 + $0xb8] sm:$0xf]
        %v6985 = vld [vmem:[%s15 + $0xbc] sm:$0xf]
        %v6986 = vld [vmem:[%s15 + $0xc0] sm:$0xf]
        %v6987 = vld [vmem:[%s15 + $0xc4] sm:$0xf]
        %v6988 = vld [vmem:[%s15 + $0xc8] sm:$0xf]
        %v6989 = vld [vmem:[%s15 + $0xcc] sm:$0xf]
        %v6990 = vld [vmem:[%s15 + $0xd0] sm:$0xf]
        %v6991 = vld [vmem:[%s15 + $0xd4] sm:$0xf]
        %v6992 = vld [vmem:[%s15 + $0xd8] sm:$0xf]
        %v6993 = vld [vmem:[%s15 + $0xdc] sm:$0xf]
        %v6994 = vld [vmem:[%s15 + $0xe0] sm:$0xf]
        %v6995 = vld [vmem:[%s15 + $0xe4] sm:$0xf]
        %v6996 = vld [vmem:[%s15 + $0xe8] sm:$0xf]
        %v6997 = vld [vmem:[%s15 + $0xec] sm:$0xf]
        %v6998 = vld [vmem:[%s15 + $0xf0] sm:$0xf]
        %v6999 = vld [vmem:[%s15 + $0xf4] sm:$0xf]
        %v7000 = vld [vmem:[%s15 + $0xf8] sm:$0xf]
        %v7001 = vld [vmem:[%s15 + $0xfc] sm:$0xf]
        %v7002 = vld [vmem:[%s15 + $0x100] sm:$0xf]
        %v7003 = vld [vmem:[%s15 + $0x104] sm:$0xf]
        %v7004 = vld [vmem:[%s15 + $0x108] sm:$0xf]
        %v7005 = vld [vmem:[%s15 + $0x10c] sm:$0xf]
        %v7006 = vld [vmem:[%s15 + $0x110] sm:$0xf]
        %v7007 = vld [vmem:[%s15 + $0x114] sm:$0xf]
        %v7008 = vld [vmem:[%s15 + $0x118] sm:$0xf]
        %v7009 = vld [vmem:[%s15 + $0x11c] sm:$0xf]
        %v7010 = vld [vmem:[%s15 + $0x120] sm:$0xf]
        %v7011 = vld [vmem:[%s15 + $0x124] sm:$0xf]
        %v7012 = vld [vmem:[%s15 + $0x128] sm:$0xf]
        %v7013 = vld [vmem:[%s15 + $0x12c] sm:$0xf]
        %v7014 = vld [vmem:[%s15 + $0x130] sm:$0xf]
        %v7015 = vld [vmem:[%s15 + $0x134] sm:$0xf]
        %v7016 = vld [vmem:[%s15 + $0x138] sm:$0xf]
        %v7017 = vld [vmem:[%s15 + $0x13c] sm:$0xf]
        %v7018 = vld [vmem:[%s15 + $0x140] sm:$0xf]
        %v7019 = vld [vmem:[%s15 + $0x144] sm:$0xf]
        %v7020 = vld [vmem:[%s15 + $0x148] sm:$0xf]
        %v7021 = vld [vmem:[%s15 + $0x14c] sm:$0xf]
        %v7022 = vld [vmem:[%s15 + $0x150] sm:$0xf]
        %v7023 = vld [vmem:[%s15 + $0x154] sm:$0xf]
        %v7024 = vld [vmem:[%s15 + $0x158] sm:$0xf]
        %v7025 = vld [vmem:[%s15 + $0x15c] sm:$0xf]
        %v7026 = vld [vmem:[%s15 + $0x160] sm:$0xf]
        %v7027 = vld [vmem:[%s15 + $0x164] sm:$0xf]
        %v7028 = vld [vmem:[%s15 + $0x168] sm:$0xf]
        %v7029 = vld [vmem:[%s15 + $0x16c] sm:$0xf]
        %v7030 = vld [vmem:[%s15 + $0x170] sm:$0xf]
        %v7031 = vld [vmem:[%s15 + $0x174] sm:$0xf]
        %v7032 = vld [vmem:[%s15 + $0x178] sm:$0xf]
        %v7033 = vld [vmem:[%s15 + $0x17c] sm:$0xf]
        %v7034 = vld [vmem:[%s15 + $0x180] sm:$0xf]
        %v7035 = vld [vmem:[%s15 + $0x184] sm:$0xf]
        %v7036 = vld [vmem:[%s15 + $0x188] sm:$0xf]
        %v7037 = vld [vmem:[%s15 + $0x18c] sm:$0xf]
        %v7038 = vld [vmem:[%s15 + $0x190] sm:$0xf]
        %v7039 = vld [vmem:[%s15 + $0x194] sm:$0xf]
        %v7040 = vld [vmem:[%s15 + $0x198] sm:$0xf]
        %v7041 = vld [vmem:[%s15 + $0x19c] sm:$0xf]
        %v7042 = vld [vmem:[%s15 + $0x1a0] sm:$0xf]
        %v7043 = vld [vmem:[%s15 + $0x1a4] sm:$0xf]
        %v7044 = vld [vmem:[%s15 + $0x1a8] sm:$0xf]
        %v7045 = vld [vmem:[%s15 + $0x1ac] sm:$0xf]
        %v7046 = vld [vmem:[%s15 + $0x1b0] sm:$0xf]
        %v7047 = vld [vmem:[%s15 + $0x1b4] sm:$0xf]
        %v7048 = vld [vmem:[%s15 + $0x1b8] sm:$0xf]
        %v7049 = vld [vmem:[%s15 + $0x1bc] sm:$0xf]
        %v7050 = vld [vmem:[%s15 + $0x1c0] sm:$0xf]
        %v7051 = vld [vmem:[%s15 + $0x1c4] sm:$0xf]
        %v7052 = vld [vmem:[%s15 + $0x1c8] sm:$0xf]
        %v7053 = vld [vmem:[%s15 + $0x1cc] sm:$0xf]
        %v7054 = vld [vmem:[%s15 + $0x1d0] sm:$0xf]
        %v7055 = vld [vmem:[%s15 + $0x1d4] sm:$0xf]
        %v7056 = vld [vmem:[%s15 + $0x1d8] sm:$0xf]
        %v7057 = vld [vmem:[%s15 + $0x1dc] sm:$0xf]
        %v7058 = vld [vmem:[%s15 + $0x1e0] sm:$0xf]
        %v7059 = vld [vmem:[%s15 + $0x1e4] sm:$0xf]
        %v7060 = vld [vmem:[%s15 + $0x1e8] sm:$0xf]
        %v7061 = vld [vmem:[%s15 + $0x1ec] sm:$0xf]
        %v7062 = vld [vmem:[%s15 + $0x1f0] sm:$0xf]
        %v7063 = vld [vmem:[%s15 + $0x1f4] sm:$0xf]
        %v7064 = vld [vmem:[%s15 + $0x1f8] sm:$0xf]
        %v7065 = vld [vmem:[%s15 + $0x1fc] sm:$0xf]
        %v7066 = vld [vmem:[%s15 + $0x200] sm:$0xf]
        %v7067 = vld [vmem:[%s15 + $0x204] sm:$0xf]
        %v7068 = vld [vmem:[%s15 + $0x208] sm:$0xf]
        %v7069 = vld [vmem:[%s15 + $0x20c] sm:$0xf]
        %v7070 = vld [vmem:[%s15 + $0x210] sm:$0xf]
        %v7071 = vld [vmem:[%s15 + $0x214] sm:$0xf]
        %v7072 = vld [vmem:[%s15 + $0x218] sm:$0xf]
        %v7073 = vld [vmem:[%s15 + $0x21c] sm:$0xf]
        %v7074 = vld [vmem:[%s15 + $0x220] sm:$0xf]
        %v7075 = vld [vmem:[%s15 + $0x224] sm:$0xf]
        %v7076 = vld [vmem:[%s15 + $0x228] sm:$0xf]
        %v7077 = vld [vmem:[%s15 + $0x22c] sm:$0xf]
        %v7078 = vld [vmem:[%s15 + $0x230] sm:$0xf]
        %v7079 = vld [vmem:[%s15 + $0x234] sm:$0xf]
        %v7080 = vld [vmem:[%s15 + $0x238] sm:$0xf]
        %v7081 = vld [vmem:[%s15 + $0x23c] sm:$0xf]
        %v7082 = vld [vmem:[%s16] sm:$0x1]
        %v7084 = vlaneseq
        %v7085 = vshrl.u32 %v7084, 7
        %v7086 = vsub.s32 0, %v7085
        %v7087 = vrot.slane %v7082, %v7086
        %v7233 = vunpack.c.l.b16 %v6938
        %v7234 = vunpack.c.l.b16 %v6939
        %v7235 = vunpack.c.l.b16 %v6940
        %v7236 = vunpack.c.l.b16 %v6941
        %v7237 = vunpack.c.l.b16 %v6942
        %v7238 = vunpack.c.l.b16 %v6943
        %v7239 = vunpack.c.l.b16 %v6944
        %v7240 = vunpack.c.l.b16 %v6945
        %v7241 = vunpack.c.l.b16 %v6946
        %v7242 = vunpack.c.l.b16 %v6947
        %v7243 = vunpack.c.l.b16 %v6948
        %v7244 = vunpack.c.l.b16 %v6949
        %v7245 = vunpack.c.l.b16 %v6950
        %v7246 = vunpack.c.l.b16 %v6951
        %v7247 = vunpack.c.l.b16 %v6952
        %v7248 = vunpack.c.l.b16 %v6953
        %v7249 = vunpack.c.l.b16 %v6954
        %v7250 = vunpack.c.l.b16 %v6955
        %v7251 = vunpack.c.l.b16 %v6956
        %v7252 = vunpack.c.l.b16 %v6957
        %v7253 = vunpack.c.l.b16 %v6958
        %v7254 = vunpack.c.l.b16 %v6959
        %v7255 = vunpack.c.l.b16 %v6960
        %v7256 = vunpack.c.l.b16 %v6961
        %v7257 = vunpack.c.l.b16 %v6962
        %v7258 = vunpack.c.l.b16 %v6963
        %v7259 = vunpack.c.l.b16 %v6964
        %v7260 = vunpack.c.l.b16 %v6965
        %v7261 = vunpack.c.l.b16 %v6966
        %v7262 = vunpack.c.l.b16 %v6967
        %v7263 = vunpack.c.l.b16 %v6968
        %v7264 = vunpack.c.l.b16 %v6969
        %v7265 = vunpack.c.l.b16 %v6970
        %v7266 = vunpack.c.l.b16 %v6971
        %v7267 = vunpack.c.l.b16 %v6972
        %v7268 = vunpack.c.l.b16 %v6973
        %v7269 = vunpack.c.l.b16 %v6974
        %v7270 = vunpack.c.l.b16 %v6975
        %v7271 = vunpack.c.l.b16 %v6976
        %v7272 = vunpack.c.l.b16 %v6977
        %v7273 = vunpack.c.l.b16 %v6978
        %v7274 = vunpack.c.l.b16 %v6979
        %v7275 = vunpack.c.l.b16 %v6980
        %v7276 = vunpack.c.l.b16 %v6981
        %v7277 = vunpack.c.l.b16 %v6982
        %v7278 = vunpack.c.l.b16 %v6983
        %v7279 = vunpack.c.l.b16 %v6984
        %v7280 = vunpack.c.l.b16 %v6985
        %v7281 = vunpack.c.l.b16 %v6986
        %v7282 = vunpack.c.l.b16 %v6987
        %v7283 = vunpack.c.l.b16 %v6988
        %v7284 = vunpack.c.l.b16 %v6989
        %v7285 = vunpack.c.l.b16 %v6990
        %v7286 = vunpack.c.l.b16 %v6991
        %v7287 = vunpack.c.l.b16 %v6992
        %v7288 = vunpack.c.l.b16 %v6993
        %v7289 = vunpack.c.l.b16 %v6994
        %v7290 = vunpack.c.l.b16 %v6995
        %v7291 = vunpack.c.l.b16 %v6996
        %v7292 = vunpack.c.l.b16 %v6997
        %v7293 = vunpack.c.l.b16 %v6998
        %v7294 = vunpack.c.l.b16 %v6999
        %v7295 = vunpack.c.l.b16 %v7000
        %v7296 = vunpack.c.l.b16 %v7001
        %v7297 = vunpack.c.l.b16 %v7002
        %v7298 = vunpack.c.l.b16 %v7003
        %v7299 = vunpack.c.l.b16 %v7004
        %v7300 = vunpack.c.l.b16 %v7005
        %v7301 = vunpack.c.l.b16 %v7006
        %v7302 = vunpack.c.l.b16 %v7007
        %v7303 = vunpack.c.l.b16 %v7008
        %v7304 = vunpack.c.l.b16 %v7009
        %v7305 = vunpack.c.l.b16 %v7010
        %v7306 = vunpack.c.l.b16 %v7011
        %v7307 = vunpack.c.l.b16 %v7012
        %v7308 = vunpack.c.l.b16 %v7013
        %v7309 = vunpack.c.l.b16 %v7014
        %v7310 = vunpack.c.l.b16 %v7015
        %v7311 = vunpack.c.l.b16 %v7016
        %v7312 = vunpack.c.l.b16 %v7017
        %v7313 = vunpack.c.l.b16 %v7018
        %v7314 = vunpack.c.l.b16 %v7019
        %v7315 = vunpack.c.l.b16 %v7020
        %v7316 = vunpack.c.l.b16 %v7021
        %v7317 = vunpack.c.l.b16 %v7022
        %v7318 = vunpack.c.l.b16 %v7023
        %v7319 = vunpack.c.l.b16 %v7024
        %v7320 = vunpack.c.l.b16 %v7025
        %v7321 = vunpack.c.l.b16 %v7026
        %v7322 = vunpack.c.l.b16 %v7027
        %v7323 = vunpack.c.l.b16 %v7028
        %v7324 = vunpack.c.l.b16 %v7029
        %v7325 = vunpack.c.l.b16 %v7030
        %v7326 = vunpack.c.l.b16 %v7031
        %v7327 = vunpack.c.l.b16 %v7032
        %v7328 = vunpack.c.l.b16 %v7033
        %v7329 = vunpack.c.l.b16 %v7034
        %v7330 = vunpack.c.l.b16 %v7035
        %v7331 = vunpack.c.l.b16 %v7036
        %v7332 = vunpack.c.l.b16 %v7037
        %v7333 = vunpack.c.l.b16 %v7038
        %v7334 = vunpack.c.l.b16 %v7039
        %v7335 = vunpack.c.l.b16 %v7040
        %v7336 = vunpack.c.l.b16 %v7041
        %v7337 = vunpack.c.l.b16 %v7042
        %v7338 = vunpack.c.l.b16 %v7043
        %v7339 = vunpack.c.l.b16 %v7044
        %v7340 = vunpack.c.l.b16 %v7045
        %v7341 = vunpack.c.l.b16 %v7046
        %v7342 = vunpack.c.l.b16 %v7047
        %v7343 = vunpack.c.l.b16 %v7048
        %v7344 = vunpack.c.l.b16 %v7049
        %v7345 = vunpack.c.l.b16 %v7050
        %v7346 = vunpack.c.l.b16 %v7051
        %v7347 = vunpack.c.l.b16 %v7052
        %v7348 = vunpack.c.l.b16 %v7053
        %v7349 = vunpack.c.l.b16 %v7054
        %v7350 = vunpack.c.l.b16 %v7055
        %v7351 = vunpack.c.l.b16 %v7056
        %v7352 = vunpack.c.l.b16 %v7057
        %v7353 = vunpack.c.l.b16 %v7058
        %v7354 = vunpack.c.l.b16 %v7059
        %v7355 = vunpack.c.l.b16 %v7060
        %v7356 = vunpack.c.l.b16 %v7061
        %v7357 = vunpack.c.l.b16 %v7062
        %v7358 = vunpack.c.l.b16 %v7063
        %v7359 = vunpack.c.l.b16 %v7064
        %v7360 = vunpack.c.l.b16 %v7065
        %v7361 = vunpack.c.l.b16 %v7066
        %v7362 = vunpack.c.l.b16 %v7067
        %v7363 = vunpack.c.l.b16 %v7068
        %v7364 = vunpack.c.l.b16 %v7069
        %v7365 = vunpack.c.l.b16 %v7070
        %v7366 = vunpack.c.l.b16 %v7071
        %v7367 = vunpack.c.l.b16 %v7072
        %v7368 = vunpack.c.l.b16 %v7073
        %v7369 = vunpack.c.l.b16 %v7074
        %v7370 = vunpack.c.l.b16 %v7075
        %v7371 = vunpack.c.l.b16 %v7076
        %v7372 = vunpack.c.l.b16 %v7077
        %v7373 = vunpack.c.l.b16 %v7078
        %v7374 = vunpack.c.l.b16 %v7079
        %v7375 = vunpack.c.l.b16 %v7080
        %v7376 = vunpack.c.l.b16 %v7081
        %v7377 = vpack.c.b16 %v7234, %v7233
        %v7378 = vpack.c.b16 %v7236, %v7235
        %v7379 = vpack.c.b16 %v7238, %v7237
        %v7380 = vpack.c.b16 %v7240, %v7239
        %v7381 = vpack.c.b16 %v7242, %v7241
        %v7382 = vpack.c.b16 %v7244, %v7243
        %v7383 = vpack.c.b16 %v7246, %v7245
        %v7384 = vpack.c.b16 %v7248, %v7247
        %v7385 = vpack.c.b16 %v7250, %v7249
        %v7386 = vpack.c.b16 %v7252, %v7251
        %v7387 = vpack.c.b16 %v7254, %v7253
        %v7388 = vpack.c.b16 %v7256, %v7255
        %v7389 = vpack.c.b16 %v7258, %v7257
        %v7390 = vpack.c.b16 %v7260, %v7259
        %v7391 = vpack.c.b16 %v7262, %v7261
        %v7392 = vpack.c.b16 %v7264, %v7263
        %v7393 = vpack.c.b16 %v7266, %v7265
        %v7394 = vpack.c.b16 %v7268, %v7267
        %v7395 = vpack.c.b16 %v7270, %v7269
        %v7396 = vpack.c.b16 %v7272, %v7271
        %v7397 = vpack.c.b16 %v7274, %v7273
        %v7398 = vpack.c.b16 %v7276, %v7275
        %v7399 = vpack.c.b16 %v7278, %v7277
        %v7400 = vpack.c.b16 %v7280, %v7279
        %v7401 = vpack.c.b16 %v7282, %v7281
        %v7402 = vpack.c.b16 %v7284, %v7283
        %v7403 = vpack.c.b16 %v7286, %v7285
        %v7404 = vpack.c.b16 %v7288, %v7287
        %v7405 = vpack.c.b16 %v7290, %v7289
        %v7406 = vpack.c.b16 %v7292, %v7291
        %v7407 = vpack.c.b16 %v7294, %v7293
        %v7408 = vpack.c.b16 %v7296, %v7295
        %v7409 = vpack.c.b16 %v7298, %v7297
        %v7410 = vpack.c.b16 %v7300, %v7299
        %v7411 = vpack.c.b16 %v7302, %v7301
        %v7412 = vpack.c.b16 %v7304, %v7303
        %v7413 = vpack.c.b16 %v7306, %v7305
        %v7414 = vpack.c.b16 %v7308, %v7307
        %v7415 = vpack.c.b16 %v7310, %v7309
        %v7416 = vpack.c.b16 %v7312, %v7311
        %v7417 = vpack.c.b16 %v7314, %v7313
        %v7418 = vpack.c.b16 %v7316, %v7315
        %v7419 = vpack.c.b16 %v7318, %v7317
        %v7420 = vpack.c.b16 %v7320, %v7319
        %v7421 = vpack.c.b16 %v7322, %v7321
        %v7422 = vpack.c.b16 %v7324, %v7323
        %v7423 = vpack.c.b16 %v7326, %v7325
        %v7424 = vpack.c.b16 %v7328, %v7327
        %v7425 = vpack.c.b16 %v7330, %v7329
        %v7426 = vpack.c.b16 %v7332, %v7331
        %v7427 = vpack.c.b16 %v7334, %v7333
        %v7428 = vpack.c.b16 %v7336, %v7335
        %v7429 = vpack.c.b16 %v7338, %v7337
        %v7430 = vpack.c.b16 %v7340, %v7339
        %v7431 = vpack.c.b16 %v7342, %v7341
        %v7432 = vpack.c.b16 %v7344, %v7343
        %v7433 = vpack.c.b16 %v7346, %v7345
        %v7434 = vpack.c.b16 %v7348, %v7347
        %v7435 = vpack.c.b16 %v7350, %v7349
        %v7436 = vpack.c.b16 %v7352, %v7351
        %v7437 = vpack.c.b16 %v7354, %v7353
        %v7438 = vpack.c.b16 %v7356, %v7355
        %v7439 = vpack.c.b16 %v7358, %v7357
        %v7440 = vpack.c.b16 %v7360, %v7359
        %v7441 = vpack.c.b16 %v7362, %v7361
        %v7442 = vpack.c.b16 %v7364, %v7363
        %v7443 = vpack.c.b16 %v7366, %v7365
        %v7444 = vpack.c.b16 %v7368, %v7367
        %v7445 = vpack.c.b16 %v7370, %v7369
        %v7446 = vpack.c.b16 %v7372, %v7371
        %v7447 = vpack.c.b16 %v7374, %v7373
        %v7448 = vpack.c.b16 %v7376, %v7375
        %7521 = vmatprep.subr.bf16.mxu0 0
        %7522 = vmatpush1.bf16.msra.mxu0 %v7384
        %7523 = vmatprep.subr.bf16.mxu0 0
        %7524 = vmatpush1.bf16.msra.mxu0 %v7383
        %7525 = vmatprep.subr.bf16.mxu0 0
        %7526 = vmatpush1.bf16.msra.mxu0 %v7382
        %7527 = vmatprep.subr.bf16.mxu0 0
        %7528 = vmatpush1.bf16.msra.mxu0 %v7381
        %7529 = vmatprep.subr.bf16.mxu0 0
        %7530 = vmatpush1.bf16.msra.mxu0 %v7380
        %7531 = vmatprep.subr.bf16.mxu0 0
        %7532 = vmatpush1.bf16.msra.mxu0 %v7379
        %7533 = vmatprep.subr.bf16.mxu0 0
        %7534 = vmatpush1.bf16.msra.mxu0 %v7378
        %7535 = vmatprep.subr.bf16.mxu0 0
        %7536 = vmatpush1.bf16.msra.mxu0 %v7377
        %7537 = vmatprep.subr.bf16.mxu0 0
        %7538 = vmatpush2.bf16.msra.mxu0 %v7392
        %7539 = vmatprep.subr.bf16.mxu0 0
        %7540 = vmatpush2.bf16.msra.mxu0 %v7391
        %7541 = vmatprep.subr.bf16.mxu0 0
        %7542 = vmatpush2.bf16.msra.mxu0 %v7390
        %7543 = vmatprep.subr.bf16.mxu0 0
        %7544 = vmatpush2.bf16.msra.mxu0 %v7389
        %7545 = vmatprep.subr.bf16.mxu0 0
        %7546 = vmatpush2.bf16.msra.mxu0 %v7388
        %7547 = vmatprep.subr.bf16.mxu0 0
        %7548 = vmatpush2.bf16.msra.mxu0 %v7387
        %7549 = vmatprep.subr.bf16.mxu0 0
        %7550 = vmatpush2.bf16.msra.mxu0 %v7386
        %7551 = vmatprep.subr.bf16.mxu0 0
        %7552 = vmatpush2.bf16.msra.mxu0 %v7385
        %7553 = vmatprep.mubr.bf16.mxu0 %v6930
        %7554 = vmatmul.mubr.bf16.gmra.mxu0 %v6929
        %v7555 = vpop.f32.mrf.mxu0
        %v7556 = vadd.f32 %v7087, %v7555
        %v7557 = vpop.f32.mrf.mxu0
        %v7558 = vpop.f32.mrf.mxu0
        %v7559 = vadd.f32 %v7087, %v7558
        %v7560 = vpop.f32.mrf.mxu0
        %7561 = vdwg.mxu0
        %7562 = vmatprep.subr.bf16.mxu0 0
        %7563 = vmatpush1.bf16.msra.mxu0 %v7400
        %7564 = vmatprep.subr.bf16.mxu0 0
        %7565 = vmatpush1.bf16.msra.mxu0 %v7399
        %7566 = vmatprep.subr.bf16.mxu0 0
        %7567 = vmatpush1.bf16.msra.mxu0 %v7398
        %7568 = vmatprep.subr.bf16.mxu0 0
        %7569 = vmatpush1.bf16.msra.mxu0 %v7397
        %7570 = vmatprep.subr.bf16.mxu0 0
        %7571 = vmatpush1.bf16.msra.mxu0 %v7396
        %7572 = vmatprep.subr.bf16.mxu0 0
        %7573 = vmatpush1.bf16.msra.mxu0 %v7395
        %7574 = vmatprep.subr.bf16.mxu0 0
        %7575 = vmatpush1.bf16.msra.mxu0 %v7394
        %7576 = vmatprep.subr.bf16.mxu0 0
        %7577 = vmatpush1.bf16.msra.mxu0 %v7393
        %7578 = vmatprep.subr.bf16.mxu0 0
        %7579 = vmatpush2.bf16.msra.mxu0 %v7408
        %7580 = vmatprep.subr.bf16.mxu0 0
        %7581 = vmatpush2.bf16.msra.mxu0 %v7407
        %7582 = vmatprep.subr.bf16.mxu0 0
        %7583 = vmatpush2.bf16.msra.mxu0 %v7406
        %7584 = vmatprep.subr.bf16.mxu0 0
        %7585 = vmatpush2.bf16.msra.mxu0 %v7405
        %7586 = vmatprep.subr.bf16.mxu0 0
        %7587 = vmatpush2.bf16.msra.mxu0 %v7404
        %7588 = vmatprep.subr.bf16.mxu0 0
        %7589 = vmatpush2.bf16.msra.mxu0 %v7403
        %7590 = vmatprep.subr.bf16.mxu0 0
        %7591 = vmatpush2.bf16.msra.mxu0 %v7402
        %7592 = vmatprep.subr.bf16.mxu0 0
        %7593 = vmatpush2.bf16.msra.mxu0 %v7401
        %7594 = vmatprep.mubr.bf16.mxu0 %v6932
        %7595 = vmatmul.mubr.bf16.gmra.mxu0 %v6931
        %v7596 = vpop.f32.mrf.mxu0
        %v7597 = vadd.f32 %v7556, %v7596
        %v7598 = vpop.f32.mrf.mxu0
        %v7599 = vpop.f32.mrf.mxu0
        %v7600 = vadd.f32 %v7559, %v7599
        %v7601 = vpop.f32.mrf.mxu0
        %7602 = vdwg.mxu0
        %7603 = vmatprep.subr.bf16.mxu0 0
        %7604 = vmatpush1.bf16.msra.mxu0 %v7416
        %7605 = vmatprep.subr.bf16.mxu0 0
        %7606 = vmatpush1.bf16.msra.mxu0 %v7415
        %7607 = vmatprep.subr.bf16.mxu0 0
        %7608 = vmatpush1.bf16.msra.mxu0 %v7414
        %7609 = vmatprep.subr.bf16.mxu0 0
        %7610 = vmatpush1.bf16.msra.mxu0 %v7413
        %7611 = vmatprep.subr.bf16.mxu0 0
        %7612 = vmatpush1.bf16.msra.mxu0 %v7412
        %7613 = vmatprep.subr.bf16.mxu0 0
        %7614 = vmatpush1.bf16.msra.mxu0 %v7411
        %7615 = vmatprep.subr.bf16.mxu0 0
        %7616 = vmatpush1.bf16.msra.mxu0 %v7410
        %7617 = vmatprep.subr.bf16.mxu0 0
        %7618 = vmatpush1.bf16.msra.mxu0 %v7409
        %7619 = vmatprep.subr.bf16.mxu0 0
        %7620 = vmatpush2.bf16.msra.mxu0 %v7424
        %7621 = vmatprep.subr.bf16.mxu0 0
        %7622 = vmatpush2.bf16.msra.mxu0 %v7423
        %7623 = vmatprep.subr.bf16.mxu0 0
        %7624 = vmatpush2.bf16.msra.mxu0 %v7422
        %7625 = vmatprep.subr.bf16.mxu0 0
        %7626 = vmatpush2.bf16.msra.mxu0 %v7421
        %7627 = vmatprep.subr.bf16.mxu0 0
        %7628 = vmatpush2.bf16.msra.mxu0 %v7420
        %7629 = vmatprep.subr.bf16.mxu0 0
        %7630 = vmatpush2.bf16.msra.mxu0 %v7419
        %7631 = vmatprep.subr.bf16.mxu0 0
        %7632 = vmatpush2.bf16.msra.mxu0 %v7418
        %7633 = vmatprep.subr.bf16.mxu0 0
        %7634 = vmatpush2.bf16.msra.mxu0 %v7417
        %7635 = vmatprep.mubr.bf16.mxu0 %v6934
        %7636 = vmatmul.mubr.bf16.gmra.mxu0 %v6933
        %v7637 = vpop.f32.mrf.mxu0
        %v7638 = vadd.f32 %v7597, %v7637
        %v7639 = vpop.f32.mrf.mxu0
        %v7640 = vpop.f32.mrf.mxu0
        %v7641 = vadd.f32 %v7600, %v7640
        %v7642 = vpop.f32.mrf.mxu0
        %7643 = vdwg.mxu0
        %7644 = vmatprep.subr.bf16.mxu0 0
        %7645 = vmatpush1.bf16.msra.mxu0 %v7432
        %7646 = vmatprep.subr.bf16.mxu0 0
        %7647 = vmatpush1.bf16.msra.mxu0 %v7431
        %7648 = vmatprep.subr.bf16.mxu0 0
        %7649 = vmatpush1.bf16.msra.mxu0 %v7430
        %7650 = vmatprep.subr.bf16.mxu0 0
        %7651 = vmatpush1.bf16.msra.mxu0 %v7429
        %7652 = vmatprep.subr.bf16.mxu0 0
        %7653 = vmatpush1.bf16.msra.mxu0 %v7428
        %7654 = vmatprep.subr.bf16.mxu0 0
        %7655 = vmatpush1.bf16.msra.mxu0 %v7427
        %7656 = vmatprep.subr.bf16.mxu0 0
        %7657 = vmatpush1.bf16.msra.mxu0 %v7426
        %7658 = vmatprep.subr.bf16.mxu0 0
        %7659 = vmatpush1.bf16.msra.mxu0 %v7425
        %7660 = vmatprep.subr.bf16.mxu0 0
        %7661 = vmatpush2.bf16.msra.mxu0 %v7440
        %7662 = vmatprep.subr.bf16.mxu0 0
        %7663 = vmatpush2.bf16.msra.mxu0 %v7439
        %7664 = vmatprep.subr.bf16.mxu0 0
        %7665 = vmatpush2.bf16.msra.mxu0 %v7438
        %7666 = vmatprep.subr.bf16.mxu0 0
        %7667 = vmatpush2.bf16.msra.mxu0 %v7437
        %7668 = vmatprep.subr.bf16.mxu0 0
        %7669 = vmatpush2.bf16.msra.mxu0 %v7436
        %7670 = vmatprep.subr.bf16.mxu0 0
        %7671 = vmatpush2.bf16.msra.mxu0 %v7435
        %7672 = vmatprep.subr.bf16.mxu0 0
        %7673 = vmatpush2.bf16.msra.mxu0 %v7434
        %7674 = vmatprep.subr.bf16.mxu0 0
        %7675 = vmatpush2.bf16.msra.mxu0 %v7433
        %7676 = vmatprep.mubr.bf16.mxu0 %v6936
        %7677 = vmatmul.mubr.bf16.gmra.mxu0 %v6935
        %v7678 = vpop.f32.mrf.mxu0
        %v7679 = vadd.f32 %v7638, %v7678
        %v7680 = vpop.f32.mrf.mxu0
        %v7681 = vpop.f32.mrf.mxu0
        %v7682 = vadd.f32 %v7641, %v7681
        %v7683 = vpop.f32.mrf.mxu0
        %7684 = vdwg.mxu0
        %7685 = vmatprep.subr.bf16.mxu0 0
        %7686 = vmatpush1.bf16.msra.mxu0 %v7448
        %7687 = vmatprep.subr.bf16.mxu0 0
        %7688 = vmatpush1.bf16.msra.mxu0 %v7447
        %7689 = vmatprep.subr.bf16.mxu0 0
        %7690 = vmatpush1.bf16.msra.mxu0 %v7446
        %7691 = vmatprep.subr.bf16.mxu0 0
        %7692 = vmatpush1.bf16.msra.mxu0 %v7445
        %7693 = vmatprep.subr.bf16.mxu0 0
        %7694 = vmatpush1.bf16.msra.mxu0 %v7444
        %7695 = vmatprep.subr.bf16.mxu0 0
        %7696 = vmatpush1.bf16.msra.mxu0 %v7443
        %7697 = vmatprep.subr.bf16.mxu0 0
        %7698 = vmatpush1.bf16.msra.mxu0 %v7442
        %7699 = vmatprep.subr.bf16.mxu0 0
        %7700 = vmatpush1.bf16.msra.mxu0 %v7441
        %7701 = vmatprep.subr.bf16.mxu0 0
        %7702 = vmatpush2.bf16.msra.mxu0 0
        %7703 = vmatprep.subr.bf16.mxu0 0
        %7704 = vmatpush2.bf16.msra.mxu0 0
        %7705 = vmatprep.subr.bf16.mxu0 0
        %7706 = vmatpush2.bf16.msra.mxu0 0
        %7707 = vmatprep.subr.bf16.mxu0 0
        %7708 = vmatpush2.bf16.msra.mxu0 0
        %7709 = vmatprep.subr.bf16.mxu0 0
        %7710 = vmatpush2.bf16.msra.mxu0 0
        %7711 = vmatprep.subr.bf16.mxu0 0
        %7712 = vmatpush2.bf16.msra.mxu0 0
        %7713 = vmatprep.subr.bf16.mxu0 0
        %7714 = vmatpush2.bf16.msra.mxu0 0
        %7715 = vmatprep.subr.bf16.mxu0 0
        %7716 = vmatpush2.bf16.msra.mxu0 0
        %7717 = vmatprep.mubr.bf16.mxu0 0
        %7718 = vmatmul.mubr.bf16.gmra.mxu0 %v6937
        %v7719 = vpop.f32.mrf.mxu0
        %v7720 = vadd.f32 %v7679, %v7719
        %v7721 = vpop.f32.mrf.mxu0
        %v7722 = vpop.f32.mrf.mxu0
        %v7723 = vadd.f32 %v7682, %v7722
        %v7724 = vpop.f32.mrf.mxu0
        %7725 = vdwg.mxu0
        %v7726 = vadd.f32 %v5812, %v7720
        %v7727 = vadd.f32 %v5815, %v7723
        %v7728 = vmax.f32 %v7726, 0.0
        %v7729 = vmax.f32 %v7727, 0.0
        %v7732 = vcombine.high %v7728, %v7728
        %v7733 = vcombine.high %v7729, %v7729
        %7736 = vst [vmem:[%s541] sm:$0xf] %v7728
        %7737 = vst [vmem:[%s541 + $0x4] sm:$0xf] %v7732
        %7738 = vst [vmem:[%s541 + $0x8] sm:$0xf] %v7729
        %7739 = vst [vmem:[%s541 + $0xc] sm:$0xf] %v7733
        %s7740 = sand.u32 %s401, 1
        %s7741 = scalar_lea.sflag [#allocation13], %s7740
        %s7742 = sand.u32 %s401, 1
        %s7743 = smul.addr %s7742, 16
        %s7744 = scalar_lea.vmem [#allocation12], %s7743
        // Predicated region
        $region89: #{_lambda_.1} parent=87 // pred_check
          %p7745 = pneg %p411
        $region90: #{_lambda_.1} parent=87 // pred_check_branch
          %7747 = sbr.rel (%p7745) target = $region92
        $region91: #{_lambda_.1} parent=87 // pred_region
          %s7749 = ssub.s32 256, 256
          %7750 = vsyncadd %s7741, %s7749
          %s7751 = smul.addr %s31, 4
          %s7752 = smul.addr %s7751, 64
          %s7753 = scalar_lea.hbm %s17, %s7752
          %s7754 = sshll.u32 %s7744, 4
          %s7755 = int_to_ptr.vmem [resolvable:$true] %s7754
          %7760 = dma.vmem_to_hbm [thread:$0]  %s7755, 256, %s7753, %s7741, 64, 64, 4
        $region92: #{_lambda_.1} parent=87 // pred_fallthru
          _
      $region88: #{_lambda_.1} parent=5 // pred_fallthru
        _
      %p7761 = scmp.le.s32.totalorder 2, %s26
      // Predicated region
      $region93: #{_lambda_.1} parent=5 // pred_check
        %p7762 = pneg %p7761
      $region94: #{_lambda_.1} parent=5 // pred_check_branch
        %7764 = sbr.rel (%p7762) target = $region96
      $region95: #{_lambda_.1} parent=5 // pred_region
        %s7765 = ssub.s32 %s26, 2
        // Predicated region
        $region97: #{_lambda_.1} parent=95 // pred_check
          %p7766 = pneg %p417
        $region98: #{_lambda_.1} parent=95 // pred_check_branch
          %7768 = sbr.rel (%p7766) target = $region100
        $region99: #{_lambda_.1} parent=95 // pred_region
          %s7769 = sand.u32 %s402, 1
          %s7770 = scalar_lea.sflag [#allocation13], %s7769
          %s7771 = sand.u32 %s402, 1
          %s7772 = smul.addr %s7771, 16
          %s7773 = scalar_lea.vmem [#allocation12], %s7772
          %7774 = dma.done %s7770, 256
        $region100: #{_lambda_.1} parent=95 // pred_fallthru
          _
      $region96: #{_lambda_.1} parent=5 // pred_fallthru
        _
    $region6: #{_lambda_.1} parent=1 // loop_footer
      %s30 = sadd.s32 1, %s26
    $region7: #{_lambda_.1} parent=1 // loop_footer_branch
      %25 = sbr.rel target = $region3
    $region8: #{_lambda_.1} parent=1 // loop_exit
      _
    %7775 = vsyncpa [#allocation13], 1
    %s7776 = scalar_lea.sflag [#allocation13], 1
    %7777 = vsyncpa %s7776, 1

</llo_original>
